<compile_context>
chip_gen: v7x
topology: tpu7x:2x2x1
jax: 0.10.0
libtpu: 0.0.40
codegen_flags: <defaults>
</compile_context>

<pallas_src>
import functools

import numpy as np
import jax
import jax.numpy as jnp
from jax.experimental import pallas as pl
from jax.experimental.pallas import tpu as pltpu


# ---------------------------------------------------------------------------
# Pallas kernel: fused [2x2 max-pool] + 3x3 conv (+concat) + bias + ReLU
#                [+ fused following 1x1 conv + bias (+ sigmoid)]
# ---------------------------------------------------------------------------
def _fused_conv_kernel(*refs, taps, act, has_proj, proj_act):
    """One batch element per grid step.

    Inputs (per group g): `taps[g]` refs of shape (1, H+2, (W+2)*Cin_g) holding the
    zero-padded, lane-folded input; 4 taps encode a fused 2x2 max-pool (their
    elementwise max equals pad1(maxpool2(x))).
    Weights (per group): (3, (W+2)*Cin_g, W*Cout) banded matrices (bf16), one per
    kernel row dy, so the whole 3x3 conv is 3 MXU dots per group.
    Optional projection: (W*Cout, W*Cproj) block-diagonal 1x1-conv weight fused
    into the epilogue (the '1x1 after upsample' run at low resolution instead).
    """
    n_groups = len(taps)
    pos = 0
    xs = []
    for t in taps:
        x = refs[pos][0]                          # (H+2, (W+2)*Cin) f32
        for k in range(1, t):                     # fused 2x2 max-pool (4 taps)
            x = jnp.maximum(x, refs[pos + k][0])
        xs.append(x)
        pos += t
    w_refs = refs[pos:pos + n_groups]
    pos += n_groups
    b_ref = refs[pos]
    pos += 1
    if has_proj:
        wp_ref = refs[pos]
        bp_ref = refs[pos + 1]
        pos += 2
    out_ref = refs[pos]

    H = out_ref.shape[1]
    n_mid = w_refs[0].shape[-1]                   # W*Cout (128 here -> dense lanes)

    acc = jnp.zeros((H, n_mid), jnp.float32)
    for g in range(n_groups):                     # concat fusion: one group / input
        xg = xs[g]
        wg = w_refs[g]
        for dy in range(wg.shape[0]):             # the 3 row-taps of the stencil
            lhs = xg[dy:dy + H, :].astype(jnp.bfloat16)   # bf16 MXU operand
            acc = acc + jnp.dot(lhs, wg[dy],
                                preferred_element_type=jnp.float32)
    h = acc + b_ref[...]                          # (1, n_mid) broadcasts over rows
    if act == "relu":
        h = jnp.maximum(h, 0.0)
    if has_proj:                                  # fused 1x1 conv epilogue
        h = jnp.dot(h.astype(jnp.bfloat16), wp_ref[...],
                    preferred_element_type=jnp.float32)
        h = h + bp_ref[...]
        if proj_act == "sigmoid":
            h = jax.nn.sigmoid(h)
    out_ref[0] = h.astype(out_ref.dtype)


def fused_conv(tap_groups, w_folded, b_folded, *, H, act="relu",
               wproj=None, bproj=None, proj_act="none"):
    """tap_groups: list of groups; each group is a list of (N, H+2, (W+2)*Cin) arrays."""
    taps = tuple(len(g) for g in tap_groups)
    has_proj = wproj is not None
    flat = [a for g in tap_groups for a in g]
    N = flat[0].shape[0]
    n_final = wproj.shape[-1] if has_proj else w_folded[0].shape[-1]

    operands, in_specs = [], []
    for a in flat:
        operands.append(a)
        in_specs.append(pl.BlockSpec((1,) + a.shape[1:], lambda n: (n, 0, 0)))
    for wf in w_folded:
        operands.append(wf)
        in_specs.append(pl.BlockSpec(wf.shape, lambda n: (0, 0, 0)))
    operands.append(b_folded)
    in_specs.append(pl.BlockSpec(b_folded.shape, lambda n: (0, 0)))
    if has_proj:
        operands += [wproj, bproj]
        in_specs += [pl.BlockSpec(wproj.shape, lambda n: (0, 0)),
                     pl.BlockSpec(bproj.shape, lambda n: (0, 0))]

    kernel = functools.partial(_fused_conv_kernel, taps=taps, act=act,
                               has_proj=has_proj, proj_act=proj_act)
    return pl.pallas_call(
        kernel,
        out_shape=jax.ShapeDtypeStruct((N, H, n_final), jnp.float32),
        grid_spec=pltpu.PrefetchScalarGridSpec(
            num_scalar_prefetch=0,
            grid=(N,),                       # >= 2 parallel steps (v7x megacore)
            in_specs=in_specs,
            out_specs=pl.BlockSpec((1, H, n_final), lambda n: (n, 0, 0)),
        ),
        compiler_params=pltpu.CompilerParams(
            dimension_semantics=("parallel",)),
    )(*operands)


# ---------------------------------------------------------------------------
# Weight folding (tiny, done on the parameters with jnp; legit weight packing)
# ---------------------------------------------------------------------------
def _fold_conv3x3_w(w, W):
    """(3,3,Cin,Cout) -> (3, (W+2)*Cin, W*Cout) banded matrices, bf16 MXU operand."""
    Wp = W + 2
    cin, cout = w.shape[2], w.shape[3]
    rows = []
    for dy in range(3):
        m = jnp.zeros((Wp * cin, W * cout), w.dtype)
        for dx in range(3):
            m = m + jnp.kron(jnp.eye(Wp, W, k=-dx, dtype=w.dtype), w[dy, dx])
        rows.append(m)
    return jnp.stack(rows).astype(jnp.bfloat16)


def _fold_conv1x1_w(w, W):
    """(Cin,Cout) -> block-diagonal (W*Cin, W*Cout) bf16 (per-pixel channel mix)."""
    return jnp.kron(jnp.eye(W, dtype=w.dtype), w).astype(jnp.bfloat16)


def _fold_bias(b, W):
    return jnp.tile(b, W).reshape(1, -1).astype(jnp.float32)


# ---------------------------------------------------------------------------
# Input prep (XLA glue: zero-pad + free lane-folding reshapes)
# ---------------------------------------------------------------------------
def _pad_fold(x):
    """NHWC (N,H,W,C) -> zero-pad 1 and fold width into lanes: (N, H+2, (W+2)*C)."""
    N, H, W, C = x.shape
    xp = jnp.pad(x, ((0, 0), (1, 1), (1, 1), (0, 0)))
    return xp.reshape(N, H + 2, (W + 2) * C)


def _pool_taps_pad_fold(x):
    """Feed for the fused 2x2 max-pool: pad full-res map by 2, take the four
    stride-2 taps; their elementwise max == zero-pad1(maxpool2x2(x)) exactly."""
    N, H2, W2, C = x.shape
    assert H2 % 2 == 0 and W2 % 2 == 0, "spatial dims must be even for 2x2 pooling"
    H, W = H2 // 2, W2 // 2
    g = jnp.pad(x, ((0, 0), (2, 2), (2, 2), (0, 0)))
    # TODO(synk): stride-2 tap extraction stays in XLA (Mosaic strided value
    # slices are not portable); the max-reduce + conv are fused in the kernel.
    return [g[:, i::2, j::2, :].reshape(N, H + 2, (W + 2) * C)
            for i in (0, 1) for j in (0, 1)]


# ---------------------------------------------------------------------------
# Bilinear x2 upsample (exact PyTorch align_corners=False semantics)
# ---------------------------------------------------------------------------
def _upsample_matrix(s):
    o = np.arange(2 * s, dtype=np.float64)
    src = np.maximum((o + 0.5) / 2.0 - 0.5, 0.0)
    i0 = np.floor(src).astype(np.int64)
    frac = src - i0
    i1 = np.minimum(i0 + 1, s - 1)
    U = np.zeros((2 * s, s), dtype=np.float32)
    U[np.arange(2 * s), i0] += (1.0 - frac).astype(np.float32)
    U[np.arange(2 * s), i1] += frac.astype(np.float32)
    return jnp.asarray(U)


def upsample_bilinear_x2(x):
    # TODO(synk): negligible FLOPs next to the convs; left as XLA einsum glue.
    N, H, W, C = x.shape
    y = jnp.einsum('Hh,nhwc->nHwc', _upsample_matrix(H), x)
    y = jnp.einsum('Ww,nHwc->nHWc', _upsample_matrix(W), y)
    return y


# ---------------------------------------------------------------------------
# Parameters (deterministic, PyTorch Conv2d-style uniform init)
# ---------------------------------------------------------------------------
def init_params(key, in_channels=1, m_channels=8, out_channels=2, n_levels=3):
    channels = [(2 ** i) * m_channels for i in range(n_levels + 1)]

    def nxt():
        nonlocal key
        key, sub = jax.random.split(key)
        return sub

    def conv_w(kh, kw, cin, cout):
        bound = 1.0 / np.sqrt(kh * kw * cin)
        w = jax.random.uniform(nxt(), (kh, kw, cin, cout), jnp.float32, -bound, bound)
        b = jax.random.uniform(nxt(), (cout,), jnp.float32, -bound, bound)
        return w, b

    params = {}
    down = []
    cin = in_channels
    for cout in channels[:-1]:                       # down path (3x3 conv + ReLU)
        down.append(conv_w(3, 3, cin, cout))
        cin = cout
    params['down'] = down
    params['bottom'] = conv_w(3, 3, channels[-2], channels[-1])

    ups = []
    for ch in reversed(channels[1:]):                # up path
        out_ch = ch // 2
        w1, b1 = conv_w(1, 1, ch, out_ch)            # 1x1 conv after upsample
        w3, b3 = conv_w(3, 3, ch, out_ch)            # 3x3 conv after concat
        ups.append({'up_w': w1.reshape(ch, out_ch), 'up_b': b1,
                    'conv_w': w3, 'conv_b': b3})
    params['up'] = ups

    wl, bl = conv_w(1, 1, channels[0], out_channels)
    params['last'] = (wl.reshape(channels[0], out_channels), bl)
    return params


# ---------------------------------------------------------------------------
# UNetBin forward (Pallas path)
# ---------------------------------------------------------------------------
def unet_bin_forward(params, x_nchw):
    x = jnp.transpose(x_nchw, (0, 2, 3, 1)).astype(jnp.float32)  # NCHW -> NHWC
    N, H, W, _ = x.shape

    # ---- down path: [MaxPool2 (fused)] + Conv3x3 + ReLU per level ----------
    fmaps = []
    h = x
    for i, (w3, b3) in enumerate(params['down']):
        if i == 0:
            taps = [_pad_fold(h)]
        else:
            H, W = H // 2, W // 2
            taps = _pool_taps_pad_fold(h)            # pool fused into this conv
        cout = w3.shape[-1]
        out = fused_conv([taps], [_fold_conv3x3_w(w3, W)], _fold_bias(b3, W),
                         H=H, act="relu")
        h = out.reshape(N, H, W, cout)
        fmaps.append(h)

    # ---- bottom block (+ fused 1x1 up-projection of the first UpBlock) -----
    wb, bb = params['bottom']
    up0 = params['up'][0]
    H, W = H // 2, W // 2
    c_low = up0['up_w'].shape[-1]
    u_low = fused_conv(
        [_pool_taps_pad_fold(fmaps[-1])],
        [_fold_conv3x3_w(wb, W)], _fold_bias(bb, W), H=H, act="relu",
        wproj=_fold_conv1x1_w(up0['up_w'], W), bproj=_fold_bias(up0['up_b'], W),
        proj_act="none",
    ).reshape(N, H, W, c_low)

    # ---- up path: upsample, then fused [concat + Conv3x3 + ReLU + next 1x1] -
    n_up = len(params['up'])
    for i in range(n_up):
        up = params['up'][i]
        skip = fmaps[len(fmaps) - i - 1]
        H, W = H * 2, W * 2
        u = upsample_bilinear_x2(u_low)              # (N, H, W, c_low)
        c_skip = skip.shape[-1]
        w3 = up['conv_w']                            # (3, 3, c_skip + c_low, cmid)
        if i + 1 < n_up:                             # fuse next UpBlock's 1x1
            proj_w, proj_b = params['up'][i + 1]['up_w'], params['up'][i + 1]['up_b']
            proj_act = "none"
        else:                                        # fuse last 1x1 + sigmoid
            proj_w, proj_b = params['last']
            proj_act = "sigmoid"
        c_next = proj_w.shape[-1]
        out = fused_conv(
            [[_pad_fold(skip)], [_pad_fold(u)]],     # concat order: [skip, up]
            [_fold_conv3x3_w(w3[:, :, :c_skip, :], W),
             _fold_conv3x3_w(w3[:, :, c_skip:, :], W)],
            _fold_bias(up['conv_b'], W), H=H, act="relu",
            wproj=_fold_conv1x1_w(proj_w, W), bproj=_fold_bias(proj_b, W),
            proj_act=proj_act)
        u_low = out.reshape(N, H, W, c_next)

    return jnp.transpose(u_low, (0, 3, 1, 2))        # NHWC -> NCHW


# ---------------------------------------------------------------------------
# Pure-XLA reference (follows the PyTorch op order exactly) for validation
# ---------------------------------------------------------------------------
def _conv3x3_ref(x, w, b):
    y = jax.lax.conv_general_dilated(
        x, w, window_strides=(1, 1), padding=((1, 1), (1, 1)),
        dimension_numbers=('NHWC', 'HWIO', 'NHWC'))
    return y + b


def _maxpool_ref(x):
    return jax.lax.reduce_window(x, -jnp.inf, jax.lax.max,
                                 (1, 2, 2, 1), (1, 2, 2, 1), 'VALID')


def unet_bin_reference(params, x_nchw):
    x = jnp.transpose(x_nchw, (0, 2, 3, 1)).astype(jnp.float32)
    fmaps = []
    h = x
    for i, (w3, b3) in enumerate(params['down']):
        if i > 0:
            h = _maxpool_ref(h)
        h = jax.nn.relu(_conv3x3_ref(h, w3, b3))
        fmaps.append(h)
    wb, bb = params['bottom']
    h = jax.nn.relu(_conv3x3_ref(_maxpool_ref(fmaps[-1]), wb, bb))
    for i, up in enumerate(params['up']):
        skip = fmaps[len(fmaps) - i - 1]
        u = upsample_bilinear_x2(h)                       # PyTorch order
        u = jnp.einsum('nhwc,co->nhwo', u, up['up_w']) + up['up_b']
        h = jnp.concatenate([skip, u], axis=-1)
        h = jax.nn.relu(_conv3x3_ref(h, up['conv_w'], up['conv_b']))
    wl, bl = params['last']
    out = jax.nn.sigmoid(jnp.einsum('nhwc,co->nhwo', h, wl) + bl)
    return jnp.transpose(out, (0, 3, 1, 2))


# ---------------------------------------------------------------------------
if __name__ == "__main__":
    key = jax.random.PRNGKey(0)
    pkey, xkey = jax.random.split(key)

    # in_channels=1, m_channels=8, out_channels=2, n_levels=3, spatial 16.
    params = init_params(pkey, in_channels=1, m_channels=8,
                         out_channels=2, n_levels=3)
    x = jax.random.normal(xkey, (2, 1, 16, 16), jnp.float32)   # NCHW like torch

    fwd = jax.jit(unet_bin_forward)
    y = jax.block_until_ready(fwd(params, x))

    assert y.shape == (2, 2, 16, 16), y.shape
    assert bool(jnp.all(jnp.isfinite(y)))
    assert bool(jnp.all((y >= 0.0) & (y <= 1.0)))    # sigmoid output range

    # Cross-check against the XLA reference (loose tolerance: both paths use
    # bf16 matmul operands on TPU).
    y_ref = jax.block_until_ready(jax.jit(unet_bin_reference)(params, x))
    err = float(jnp.max(jnp.abs(y - y_ref)))
    assert err < 1e-1, f"max abs err vs reference: {err}"

    print("KERNEL_OK")
</pallas_src>

<mosaic_0001>
module attributes {stable_mosaic.version = 11 : i64} {
  func.func @_fused_conv_kernel(%arg0: i32, %arg1: memref<1x18x18xf32, #tpu.memory_space<vmem>>, %arg2: memref<3x18x128xbf16, #tpu.memory_space<vmem>>, %arg3: memref<1x128xf32, #tpu.memory_space<vmem>>, %arg4: memref<1x16x128xf32, #tpu.memory_space<vmem>>) attributes {dimension_semantics = [#tpu.dimension_semantics<parallel>], iteration_bounds = array<i64: 2>, scalar_prefetch = 0 : i64, scratch_operands = 0 : i64, tpu.core_type = #tpu.core_type<tc>, window_params = [{transform_indices = @transform_0, window_bounds = array<i64: 1, 18, 18>}, {pipeline_mode = #tpu.pipeline_mode<synchronous>, transform_indices = @transform_1, window_bounds = array<i64: 3, 18, 128>}, {pipeline_mode = #tpu.pipeline_mode<synchronous>, transform_indices = @transform_2, window_bounds = array<i64: 1, 128>}, {transform_indices = @transform_3, window_bounds = array<i64: 1, 16, 128>}]} {
    %c0 = arith.constant 0 : index
    %c0_0 = arith.constant 0 : index
    %c0_1 = arith.constant 0 : index
    %0 = vector.load %arg1[%c0, %c0_0, %c0_1] : memref<1x18x18xf32, #tpu.memory_space<vmem>>, vector<1x18x18xf32>
    %1 = vector.shape_cast %0 : vector<1x18x18xf32> to vector<18x18xf32>
    %cst = arith.constant 0.000000e+00 : f32
    %2 = vector.broadcast %cst : f32 to vector<16x128xf32>
    %3 = vector.extract_strided_slice %1 {offsets = [0, 0], sizes = [16, 18], strides = [1, 1]} : vector<18x18xf32> to vector<16x18xf32>
    %4 = arith.truncf %3 : vector<16x18xf32> to vector<16x18xbf16>
    %c0_2 = arith.constant 0 : index
    %c0_3 = arith.constant 0 : index
    %c0_4 = arith.constant 0 : index
    %5 = vector.load %arg2[%c0_2, %c0_3, %c0_4] : memref<3x18x128xbf16, #tpu.memory_space<vmem>>, vector<1x18x128xbf16>
    %6 = vector.shape_cast %5 : vector<1x18x128xbf16> to vector<18x128xbf16>
    %cst_5 = arith.constant dense<0.000000e+00> : vector<16x128xf32>
    %7 = tpu.matmul %4, %6, %cst_5 {dimension_numbers = #tpu.dot_dimension_numbers<[1], [0], [0], [1], [0, 0, 1, 1], [], []>} : vector<16x18xbf16>, vector<18x128xbf16>, vector<16x128xf32> -> vector<16x128xf32>
    %8 = arith.addf %2, %7 : vector<16x128xf32>
    %9 = vector.extract_strided_slice %1 {offsets = [1, 0], sizes = [16, 18], strides = [1, 1]} : vector<18x18xf32> to vector<16x18xf32>
    %10 = arith.truncf %9 : vector<16x18xf32> to vector<16x18xbf16>
    %c1 = arith.constant 1 : index
    %c0_6 = arith.constant 0 : index
    %c0_7 = arith.constant 0 : index
    %11 = vector.load %arg2[%c1, %c0_6, %c0_7] : memref<3x18x128xbf16, #tpu.memory_space<vmem>>, vector<1x18x128xbf16>
    %12 = vector.shape_cast %11 : vector<1x18x128xbf16> to vector<18x128xbf16>
    %cst_8 = arith.constant dense<0.000000e+00> : vector<16x128xf32>
    %13 = tpu.matmul %10, %12, %cst_8 {dimension_numbers = #tpu.dot_dimension_numbers<[1], [0], [0], [1], [0, 0, 1, 1], [], []>} : vector<16x18xbf16>, vector<18x128xbf16>, vector<16x128xf32> -> vector<16x128xf32>
    %14 = arith.addf %8, %13 : vector<16x128xf32>
    %15 = vector.extract_strided_slice %1 {offsets = [2, 0], sizes = [16, 18], strides = [1, 1]} : vector<18x18xf32> to vector<16x18xf32>
    %16 = arith.truncf %15 : vector<16x18xf32> to vector<16x18xbf16>
    %c2 = arith.constant 2 : index
    %c0_9 = arith.constant 0 : index
    %c0_10 = arith.constant 0 : index
    %17 = vector.load %arg2[%c2, %c0_9, %c0_10] : memref<3x18x128xbf16, #tpu.memory_space<vmem>>, vector<1x18x128xbf16>
    %18 = vector.shape_cast %17 : vector<1x18x128xbf16> to vector<18x128xbf16>
    %cst_11 = arith.constant dense<0.000000e+00> : vector<16x128xf32>
    %19 = tpu.matmul %16, %18, %cst_11 {dimension_numbers = #tpu.dot_dimension_numbers<[1], [0], [0], [1], [0, 0, 1, 1], [], []>} : vector<16x18xbf16>, vector<18x128xbf16>, vector<16x128xf32> -> vector<16x128xf32>
    %20 = arith.addf %14, %19 : vector<16x128xf32>
    %c0_12 = arith.constant 0 : index
    %c0_13 = arith.constant 0 : index
    %21 = vector.load %arg3[%c0_12, %c0_13] : memref<1x128xf32, #tpu.memory_space<vmem>>, vector<1x128xf32>
    %22 = vector.broadcast %21 : vector<1x128xf32> to vector<16x128xf32>
    %23 = arith.addf %20, %22 : vector<16x128xf32>
    %cst_14 = arith.constant 0.000000e+00 : f32
    %24 = vector.broadcast %cst_14 : f32 to vector<16x128xf32>
    %25 = arith.maximumf %23, %24 : vector<16x128xf32>
    %c0_15 = arith.constant 0 : index
    %c0_16 = arith.constant 0 : index
    %c0_17 = arith.constant 0 : index
    %26 = vector.load %arg4[%c0_15, %c0_16, %c0_17] : memref<1x16x128xf32, #tpu.memory_space<vmem>>, vector<1x16x128xf32>
    %27 = vector.shape_cast %26 : vector<1x16x128xf32> to vector<16x128xf32>
    %28 = vector.shape_cast %25 : vector<16x128xf32> to vector<1x16x128xf32>
    tpu.vector_store %arg4[%c0_15, %c0_16, %c0_17], %28 {strides = array<i32>} : memref<1x16x128xf32, #tpu.memory_space<vmem>>, vector<1x16x128xf32>,
    return
  }
  func.func @transform_0(%arg0: i32) -> (i32, i32, i32) {
    %c0_i32 = arith.constant 0 : i32
    %c0_i32_0 = arith.constant 0 : i32
    %c0_i32_1 = arith.constant 0 : i32
    return %arg0, %c0_i32, %c0_i32_0 : i32, i32, i32
  }
  func.func @transform_1(%arg0: i32) -> (i32, i32, i32) {
    %c0_i32 = arith.constant 0 : i32
    %c0_i32_0 = arith.constant 0 : i32
    %c0_i32_1 = arith.constant 0 : i32
    %c0_i32_2 = arith.constant 0 : i32
    return %c0_i32, %c0_i32_0, %c0_i32_1 : i32, i32, i32
  }
  func.func @transform_2(%arg0: i32) -> (i32, i32) {
    %c0_i32 = arith.constant 0 : i32
    %c0_i32_0 = arith.constant 0 : i32
    %c0_i32_1 = arith.constant 0 : i32
    return %c0_i32, %c0_i32_0 : i32, i32
  }
  func.func @transform_3(%arg0: i32) -> (i32, i32, i32) {
    %c0_i32 = arith.constant 0 : i32
    %c0_i32_0 = arith.constant 0 : i32
    %c0_i32_1 = arith.constant 0 : i32
    return %arg0, %c0_i32, %c0_i32_0 : i32, i32, i32
  }
}

module attributes {stable_mosaic.version = 11 : i64} {
  func.func @_fused_conv_kernel(%arg0: i32, %arg1: memref<1x10x80xf32, #tpu.memory_space<vmem>>, %arg2: memref<1x10x80xf32, #tpu.memory_space<vmem>>, %arg3: memref<1x10x80xf32, #tpu.memory_space<vmem>>, %arg4: memref<1x10x80xf32, #tpu.memory_space<vmem>>, %arg5: memref<3x80x128xbf16, #tpu.memory_space<vmem>>, %arg6: memref<1x128xf32, #tpu.memory_space<vmem>>, %arg7: memref<1x8x128xf32, #tpu.memory_space<vmem>>) attributes {dimension_semantics = [#tpu.dimension_semantics<parallel>], iteration_bounds = array<i64: 2>, scalar_prefetch = 0 : i64, scratch_operands = 0 : i64, tpu.core_type = #tpu.core_type<tc>, window_params = [{transform_indices = @transform_0, window_bounds = array<i64: 1, 10, 80>}, {transform_indices = @transform_1, window_bounds = array<i64: 1, 10, 80>}, {transform_indices = @transform_2, window_bounds = array<i64: 1, 10, 80>}, {transform_indices = @transform_3, window_bounds = array<i64: 1, 10, 80>}, {pipeline_mode = #tpu.pipeline_mode<synchronous>, transform_indices = @transform_4, window_bounds = array<i64: 3, 80, 128>}, {pipeline_mode = #tpu.pipeline_mode<synchronous>, transform_indices = @transform_5, window_bounds = array<i64: 1, 128>}, {transform_indices = @transform_6, window_bounds = array<i64: 1, 8, 128>}]} {
    %c0 = arith.constant 0 : index
    %c0_0 = arith.constant 0 : index
    %c0_1 = arith.constant 0 : index
    %0 = vector.load %arg1[%c0, %c0_0, %c0_1] : memref<1x10x80xf32, #tpu.memory_space<vmem>>, vector<1x10x80xf32>
    %1 = vector.shape_cast %0 : vector<1x10x80xf32> to vector<10x80xf32>
    %c0_2 = arith.constant 0 : index
    %c0_3 = arith.constant 0 : index
    %c0_4 = arith.constant 0 : index
    %2 = vector.load %arg2[%c0_2, %c0_3, %c0_4] : memref<1x10x80xf32, #tpu.memory_space<vmem>>, vector<1x10x80xf32>
    %3 = vector.shape_cast %2 : vector<1x10x80xf32> to vector<10x80xf32>
    %4 = arith.maximumf %1, %3 : vector<10x80xf32>
    %c0_5 = arith.constant 0 : index
    %c0_6 = arith.constant 0 : index
    %c0_7 = arith.constant 0 : index
    %5 = vector.load %arg3[%c0_5, %c0_6, %c0_7] : memref<1x10x80xf32, #tpu.memory_space<vmem>>, vector<1x10x80xf32>
    %6 = vector.shape_cast %5 : vector<1x10x80xf32> to vector<10x80xf32>
    %7 = arith.maximumf %4, %6 : vector<10x80xf32>
    %c0_8 = arith.constant 0 : index
    %c0_9 = arith.constant 0 : index
    %c0_10 = arith.constant 0 : index
    %8 = vector.load %arg4[%c0_8, %c0_9, %c0_10] : memref<1x10x80xf32, #tpu.memory_space<vmem>>, vector<1x10x80xf32>
    %9 = vector.shape_cast %8 : vector<1x10x80xf32> to vector<10x80xf32>
    %10 = arith.maximumf %7, %9 : vector<10x80xf32>
    %cst = arith.constant 0.000000e+00 : f32
    %11 = vector.broadcast %cst : f32 to vector<8x128xf32>
    %12 = vector.extract_strided_slice %10 {offsets = [0, 0], sizes = [8, 80], strides = [1, 1]} : vector<10x80xf32> to vector<8x80xf32>
    %13 = arith.truncf %12 : vector<8x80xf32> to vector<8x80xbf16>
    %c0_11 = arith.constant 0 : index
    %c0_12 = arith.constant 0 : index
    %c0_13 = arith.constant 0 : index
    %14 = vector.load %arg5[%c0_11, %c0_12, %c0_13] : memref<3x80x128xbf16, #tpu.memory_space<vmem>>, vector<1x80x128xbf16>
    %15 = vector.shape_cast %14 : vector<1x80x128xbf16> to vector<80x128xbf16>
    %cst_14 = arith.constant dense<0.000000e+00> : vector<8x128xf32>
    %16 = tpu.matmul %13, %15, %cst_14 {dimension_numbers = #tpu.dot_dimension_numbers<[1], [0], [0], [1], [0, 0, 1, 1], [], []>} : vector<8x80xbf16>, vector<80x128xbf16>, vector<8x128xf32> -> vector<8x128xf32>
    %17 = arith.addf %11, %16 : vector<8x128xf32>
    %18 = vector.extract_strided_slice %10 {offsets = [1, 0], sizes = [8, 80], strides = [1, 1]} : vector<10x80xf32> to vector<8x80xf32>
    %19 = arith.truncf %18 : vector<8x80xf32> to vector<8x80xbf16>
    %c1 = arith.constant 1 : index
    %c0_15 = arith.constant 0 : index
    %c0_16 = arith.constant 0 : index
    %20 = vector.load %arg5[%c1, %c0_15, %c0_16] : memref<3x80x128xbf16, #tpu.memory_space<vmem>>, vector<1x80x128xbf16>
    %21 = vector.shape_cast %20 : vector<1x80x128xbf16> to vector<80x128xbf16>
    %cst_17 = arith.constant dense<0.000000e+00> : vector<8x128xf32>
    %22 = tpu.matmul %19, %21, %cst_17 {dimension_numbers = #tpu.dot_dimension_numbers<[1], [0], [0], [1], [0, 0, 1, 1], [], []>} : vector<8x80xbf16>, vector<80x128xbf16>, vector<8x128xf32> -> vector<8x128xf32>
    %23 = arith.addf %17, %22 : vector<8x128xf32>
    %24 = vector.extract_strided_slice %10 {offsets = [2, 0], sizes = [8, 80], strides = [1, 1]} : vector<10x80xf32> to vector<8x80xf32>
    %25 = arith.truncf %24 : vector<8x80xf32> to vector<8x80xbf16>
    %c2 = arith.constant 2 : index
    %c0_18 = arith.constant 0 : index
    %c0_19 = arith.constant 0 : index
    %26 = vector.load %arg5[%c2, %c0_18, %c0_19] : memref<3x80x128xbf16, #tpu.memory_space<vmem>>, vector<1x80x128xbf16>
    %27 = vector.shape_cast %26 : vector<1x80x128xbf16> to vector<80x128xbf16>
    %cst_20 = arith.constant dense<0.000000e+00> : vector<8x128xf32>
    %28 = tpu.matmul %25, %27, %cst_20 {dimension_numbers = #tpu.dot_dimension_numbers<[1], [0], [0], [1], [0, 0, 1, 1], [], []>} : vector<8x80xbf16>, vector<80x128xbf16>, vector<8x128xf32> -> vector<8x128xf32>
    %29 = arith.addf %23, %28 : vector<8x128xf32>
    %c0_21 = arith.constant 0 : index
    %c0_22 = arith.constant 0 : index
    %30 = vector.load %arg6[%c0_21, %c0_22] : memref<1x128xf32, #tpu.memory_space<vmem>>, vector<1x128xf32>
    %31 = vector.broadcast %30 : vector<1x128xf32> to vector<8x128xf32>
    %32 = arith.addf %29, %31 : vector<8x128xf32>
    %cst_23 = arith.constant 0.000000e+00 : f32
    %33 = vector.broadcast %cst_23 : f32 to vector<8x128xf32>
    %34 = arith.maximumf %32, %33 : vector<8x128xf32>
    %c0_24 = arith.constant 0 : index
    %c0_25 = arith.constant 0 : index
    %c0_26 = arith.constant 0 : index
    %35 = vector.load %arg7[%c0_24, %c0_25, %c0_26] : memref<1x8x128xf32, #tpu.memory_space<vmem>>, vector<1x8x128xf32>
    %36 = vector.shape_cast %35 : vector<1x8x128xf32> to vector<8x128xf32>
    %37 = vector.shape_cast %34 : vector<8x128xf32> to vector<1x8x128xf32>
    tpu.vector_store %arg7[%c0_24, %c0_25, %c0_26], %37 {strides = array<i32>} : memref<1x8x128xf32, #tpu.memory_space<vmem>>, vector<1x8x128xf32>,
    return
  }
  func.func @transform_0(%arg0: i32) -> (i32, i32, i32) {
    %c0_i32 = arith.constant 0 : i32
    %c0_i32_0 = arith.constant 0 : i32
    %c0_i32_1 = arith.constant 0 : i32
    return %arg0, %c0_i32, %c0_i32_0 : i32, i32, i32
  }
  func.func @transform_1(%arg0: i32) -> (i32, i32, i32) {
    %c0_i32 = arith.constant 0 : i32
    %c0_i32_0 = arith.constant 0 : i32
    %c0_i32_1 = arith.constant 0 : i32
    return %arg0, %c0_i32, %c0_i32_0 : i32, i32, i32
  }
  func.func @transform_2(%arg0: i32) -> (i32, i32, i32) {
    %c0_i32 = arith.constant 0 : i32
    %c0_i32_0 = arith.constant 0 : i32
    %c0_i32_1 = arith.constant 0 : i32
    return %arg0, %c0_i32, %c0_i32_0 : i32, i32, i32
  }
  func.func @transform_3(%arg0: i32) -> (i32, i32, i32) {
    %c0_i32 = arith.constant 0 : i32
    %c0_i32_0 = arith.constant 0 : i32
    %c0_i32_1 = arith.constant 0 : i32
    return %arg0, %c0_i32, %c0_i32_0 : i32, i32, i32
  }
  func.func @transform_4(%arg0: i32) -> (i32, i32, i32) {
    %c0_i32 = arith.constant 0 : i32
    %c0_i32_0 = arith.constant 0 : i32
    %c0_i32_1 = arith.constant 0 : i32
    %c0_i32_2 = arith.constant 0 : i32
    return %c0_i32, %c0_i32_0, %c0_i32_1 : i32, i32, i32
  }
  func.func @transform_5(%arg0: i32) -> (i32, i32) {
    %c0_i32 = arith.constant 0 : i32
    %c0_i32_0 = arith.constant 0 : i32
    %c0_i32_1 = arith.constant 0 : i32
    return %c0_i32, %c0_i32_0 : i32, i32
  }
  func.func @transform_6(%arg0: i32) -> (i32, i32, i32) {
    %c0_i32 = arith.constant 0 : i32
    %c0_i32_0 = arith.constant 0 : i32
    %c0_i32_1 = arith.constant 0 : i32
    return %arg0, %c0_i32, %c0_i32_0 : i32, i32, i32
  }
}

module attributes {stable_mosaic.version = 11 : i64} {
  func.func @_fused_conv_kernel(%arg0: i32, %arg1: memref<1x6x96xf32, #tpu.memory_space<vmem>>, %arg2: memref<1x6x96xf32, #tpu.memory_space<vmem>>, %arg3: memref<1x6x96xf32, #tpu.memory_space<vmem>>, %arg4: memref<1x6x96xf32, #tpu.memory_space<vmem>>, %arg5: memref<3x96x128xbf16, #tpu.memory_space<vmem>>, %arg6: memref<1x128xf32, #tpu.memory_space<vmem>>, %arg7: memref<1x4x128xf32, #tpu.memory_space<vmem>>) attributes {dimension_semantics = [#tpu.dimension_semantics<parallel>], iteration_bounds = array<i64: 2>, scalar_prefetch = 0 : i64, scratch_operands = 0 : i64, tpu.core_type = #tpu.core_type<tc>, window_params = [{transform_indices = @transform_0, window_bounds = array<i64: 1, 6, 96>}, {transform_indices = @transform_1, window_bounds = array<i64: 1, 6, 96>}, {transform_indices = @transform_2, window_bounds = array<i64: 1, 6, 96>}, {transform_indices = @transform_3, window_bounds = array<i64: 1, 6, 96>}, {pipeline_mode = #tpu.pipeline_mode<synchronous>, transform_indices = @transform_4, window_bounds = array<i64: 3, 96, 128>}, {pipeline_mode = #tpu.pipeline_mode<synchronous>, transform_indices = @transform_5, window_bounds = array<i64: 1, 128>}, {transform_indices = @transform_6, window_bounds = array<i64: 1, 4, 128>}]} {
    %c0 = arith.constant 0 : index
    %c0_0 = arith.constant 0 : index
    %c0_1 = arith.constant 0 : index
    %0 = vector.load %arg1[%c0, %c0_0, %c0_1] : memref<1x6x96xf32, #tpu.memory_space<vmem>>, vector<1x6x96xf32>
    %1 = vector.shape_cast %0 : vector<1x6x96xf32> to vector<6x96xf32>
    %c0_2 = arith.constant 0 : index
    %c0_3 = arith.constant 0 : index
    %c0_4 = arith.constant 0 : index
    %2 = vector.load %arg2[%c0_2, %c0_3, %c0_4] : memref<1x6x96xf32, #tpu.memory_space<vmem>>, vector<1x6x96xf32>
    %3 = vector.shape_cast %2 : vector<1x6x96xf32> to vector<6x96xf32>
    %4 = arith.maximumf %1, %3 : vector<6x96xf32>
    %c0_5 = arith.constant 0 : index
    %c0_6 = arith.constant 0 : index
    %c0_7 = arith.constant 0 : index
    %5 = vector.load %arg3[%c0_5, %c0_6, %c0_7] : memref<1x6x96xf32, #tpu.memory_space<vmem>>, vector<1x6x96xf32>
    %6 = vector.shape_cast %5 : vector<1x6x96xf32> to vector<6x96xf32>
    %7 = arith.maximumf %4, %6 : vector<6x96xf32>
    %c0_8 = arith.constant 0 : index
    %c0_9 = arith.constant 0 : index
    %c0_10 = arith.constant 0 : index
    %8 = vector.load %arg4[%c0_8, %c0_9, %c0_10] : memref<1x6x96xf32, #tpu.memory_space<vmem>>, vector<1x6x96xf32>
    %9 = vector.shape_cast %8 : vector<1x6x96xf32> to vector<6x96xf32>
    %10 = arith.maximumf %7, %9 : vector<6x96xf32>
    %cst = arith.constant 0.000000e+00 : f32
    %11 = vector.broadcast %cst : f32 to vector<4x128xf32>
    %12 = vector.extract_strided_slice %10 {offsets = [0, 0], sizes = [4, 96], strides = [1, 1]} : vector<6x96xf32> to vector<4x96xf32>
    %13 = arith.truncf %12 : vector<4x96xf32> to vector<4x96xbf16>
    %c0_11 = arith.constant 0 : index
    %c0_12 = arith.constant 0 : index
    %c0_13 = arith.constant 0 : index
    %14 = vector.load %arg5[%c0_11, %c0_12, %c0_13] : memref<3x96x128xbf16, #tpu.memory_space<vmem>>, vector<1x96x128xbf16>
    %15 = vector.shape_cast %14 : vector<1x96x128xbf16> to vector<96x128xbf16>
    %cst_14 = arith.constant dense<0.000000e+00> : vector<4x128xf32>
    %16 = tpu.matmul %13, %15, %cst_14 {dimension_numbers = #tpu.dot_dimension_numbers<[1], [0], [0], [1], [0, 0, 1, 1], [], []>} : vector<4x96xbf16>, vector<96x128xbf16>, vector<4x128xf32> -> vector<4x128xf32>
    %17 = arith.addf %11, %16 : vector<4x128xf32>
    %18 = vector.extract_strided_slice %10 {offsets = [1, 0], sizes = [4, 96], strides = [1, 1]} : vector<6x96xf32> to vector<4x96xf32>
    %19 = arith.truncf %18 : vector<4x96xf32> to vector<4x96xbf16>
    %c1 = arith.constant 1 : index
    %c0_15 = arith.constant 0 : index
    %c0_16 = arith.constant 0 : index
    %20 = vector.load %arg5[%c1, %c0_15, %c0_16] : memref<3x96x128xbf16, #tpu.memory_space<vmem>>, vector<1x96x128xbf16>
    %21 = vector.shape_cast %20 : vector<1x96x128xbf16> to vector<96x128xbf16>
    %cst_17 = arith.constant dense<0.000000e+00> : vector<4x128xf32>
    %22 = tpu.matmul %19, %21, %cst_17 {dimension_numbers = #tpu.dot_dimension_numbers<[1], [0], [0], [1], [0, 0, 1, 1], [], []>} : vector<4x96xbf16>, vector<96x128xbf16>, vector<4x128xf32> -> vector<4x128xf32>
    %23 = arith.addf %17, %22 : vector<4x128xf32>
    %24 = vector.extract_strided_slice %10 {offsets = [2, 0], sizes = [4, 96], strides = [1, 1]} : vector<6x96xf32> to vector<4x96xf32>
    %25 = arith.truncf %24 : vector<4x96xf32> to vector<4x96xbf16>
    %c2 = arith.constant 2 : index
    %c0_18 = arith.constant 0 : index
    %c0_19 = arith.constant 0 : index
    %26 = vector.load %arg5[%c2, %c0_18, %c0_19] : memref<3x96x128xbf16, #tpu.memory_space<vmem>>, vector<1x96x128xbf16>
    %27 = vector.shape_cast %26 : vector<1x96x128xbf16> to vector<96x128xbf16>
    %cst_20 = arith.constant dense<0.000000e+00> : vector<4x128xf32>
    %28 = tpu.matmul %25, %27, %cst_20 {dimension_numbers = #tpu.dot_dimension_numbers<[1], [0], [0], [1], [0, 0, 1, 1], [], []>} : vector<4x96xbf16>, vector<96x128xbf16>, vector<4x128xf32> -> vector<4x128xf32>
    %29 = arith.addf %23, %28 : vector<4x128xf32>
    %c0_21 = arith.constant 0 : index
    %c0_22 = arith.constant 0 : index
    %30 = vector.load %arg6[%c0_21, %c0_22] : memref<1x128xf32, #tpu.memory_space<vmem>>, vector<1x128xf32>
    %31 = vector.broadcast %30 : vector<1x128xf32> to vector<4x128xf32>
    %32 = arith.addf %29, %31 : vector<4x128xf32>
    %cst_23 = arith.constant 0.000000e+00 : f32
    %33 = vector.broadcast %cst_23 : f32 to vector<4x128xf32>
    %34 = arith.maximumf %32, %33 : vector<4x128xf32>
    %c0_24 = arith.constant 0 : index
    %c0_25 = arith.constant 0 : index
    %c0_26 = arith.constant 0 : index
    %35 = vector.load %arg7[%c0_24, %c0_25, %c0_26] : memref<1x4x128xf32, #tpu.memory_space<vmem>>, vector<1x4x128xf32>
    %36 = vector.shape_cast %35 : vector<1x4x128xf32> to vector<4x128xf32>
    %37 = vector.shape_cast %34 : vector<4x128xf32> to vector<1x4x128xf32>
    tpu.vector_store %arg7[%c0_24, %c0_25, %c0_26], %37 {strides = array<i32>} : memref<1x4x128xf32, #tpu.memory_space<vmem>>, vector<1x4x128xf32>,
    return
  }
  func.func @transform_0(%arg0: i32) -> (i32, i32, i32) {
    %c0_i32 = arith.constant 0 : i32
    %c0_i32_0 = arith.constant 0 : i32
    %c0_i32_1 = arith.constant 0 : i32
    return %arg0, %c0_i32, %c0_i32_0 : i32, i32, i32
  }
  func.func @transform_1(%arg0: i32) -> (i32, i32, i32) {
    %c0_i32 = arith.constant 0 : i32
    %c0_i32_0 = arith.constant 0 : i32
    %c0_i32_1 = arith.constant 0 : i32
    return %arg0, %c0_i32, %c0_i32_0 : i32, i32, i32
  }
  func.func @transform_2(%arg0: i32) -> (i32, i32, i32) {
    %c0_i32 = arith.constant 0 : i32
    %c0_i32_0 = arith.constant 0 : i32
    %c0_i32_1 = arith.constant 0 : i32
    return %arg0, %c0_i32, %c0_i32_0 : i32, i32, i32
  }
  func.func @transform_3(%arg0: i32) -> (i32, i32, i32) {
    %c0_i32 = arith.constant 0 : i32
    %c0_i32_0 = arith.constant 0 : i32
    %c0_i32_1 = arith.constant 0 : i32
    return %arg0, %c0_i32, %c0_i32_0 : i32, i32, i32
  }
  func.func @transform_4(%arg0: i32) -> (i32, i32, i32) {
    %c0_i32 = arith.constant 0 : i32
    %c0_i32_0 = arith.constant 0 : i32
    %c0_i32_1 = arith.constant 0 : i32
    %c0_i32_2 = arith.constant 0 : i32
    return %c0_i32, %c0_i32_0, %c0_i32_1 : i32, i32, i32
  }
  func.func @transform_5(%arg0: i32) -> (i32, i32) {
    %c0_i32 = arith.constant 0 : i32
    %c0_i32_0 = arith.constant 0 : i32
    %c0_i32_1 = arith.constant 0 : i32
    return %c0_i32, %c0_i32_0 : i32, i32
  }
  func.func @transform_6(%arg0: i32) -> (i32, i32, i32) {
    %c0_i32 = arith.constant 0 : i32
    %c0_i32_0 = arith.constant 0 : i32
    %c0_i32_1 = arith.constant 0 : i32
    return %arg0, %c0_i32, %c0_i32_0 : i32, i32, i32
  }
}

module attributes {stable_mosaic.version = 11 : i64} {
  func.func @_fused_conv_kernel(%arg0: i32, %arg1: memref<1x4x128xf32, #tpu.memory_space<vmem>>, %arg2: memref<1x4x128xf32, #tpu.memory_space<vmem>>, %arg3: memref<1x4x128xf32, #tpu.memory_space<vmem>>, %arg4: memref<1x4x128xf32, #tpu.memory_space<vmem>>, %arg5: memref<3x128x128xbf16, #tpu.memory_space<vmem>>, %arg6: memref<1x128xf32, #tpu.memory_space<vmem>>, %arg7: memref<128x64xbf16, #tpu.memory_space<vmem>>, %arg8: memref<1x64xf32, #tpu.memory_space<vmem>>, %arg9: memref<1x2x64xf32, #tpu.memory_space<vmem>>) attributes {dimension_semantics = [#tpu.dimension_semantics<parallel>], iteration_bounds = array<i64: 2>, scalar_prefetch = 0 : i64, scratch_operands = 0 : i64, tpu.core_type = #tpu.core_type<tc>, window_params = [{transform_indices = @transform_0, window_bounds = array<i64: 1, 4, 128>}, {transform_indices = @transform_1, window_bounds = array<i64: 1, 4, 128>}, {transform_indices = @transform_2, window_bounds = array<i64: 1, 4, 128>}, {transform_indices = @transform_3, window_bounds = array<i64: 1, 4, 128>}, {pipeline_mode = #tpu.pipeline_mode<synchronous>, transform_indices = @transform_4, window_bounds = array<i64: 3, 128, 128>}, {pipeline_mode = #tpu.pipeline_mode<synchronous>, transform_indices = @transform_5, window_bounds = array<i64: 1, 128>}, {pipeline_mode = #tpu.pipeline_mode<synchronous>, transform_indices = @transform_6, window_bounds = array<i64: 128, 64>}, {pipeline_mode = #tpu.pipeline_mode<synchronous>, transform_indices = @transform_7, window_bounds = array<i64: 1, 64>}, {transform_indices = @transform_8, window_bounds = array<i64: 1, 2, 64>}]} {
    %c0 = arith.constant 0 : index
    %c0_0 = arith.constant 0 : index
    %c0_1 = arith.constant 0 : index
    %0 = vector.load %arg1[%c0, %c0_0, %c0_1] : memref<1x4x128xf32, #tpu.memory_space<vmem>>, vector<1x4x128xf32>
    %1 = vector.shape_cast %0 : vector<1x4x128xf32> to vector<4x128xf32>
    %c0_2 = arith.constant 0 : index
    %c0_3 = arith.constant 0 : index
    %c0_4 = arith.constant 0 : index
    %2 = vector.load %arg2[%c0_2, %c0_3, %c0_4] : memref<1x4x128xf32, #tpu.memory_space<vmem>>, vector<1x4x128xf32>
    %3 = vector.shape_cast %2 : vector<1x4x128xf32> to vector<4x128xf32>
    %4 = arith.maximumf %1, %3 : vector<4x128xf32>
    %c0_5 = arith.constant 0 : index
    %c0_6 = arith.constant 0 : index
    %c0_7 = arith.constant 0 : index
    %5 = vector.load %arg3[%c0_5, %c0_6, %c0_7] : memref<1x4x128xf32, #tpu.memory_space<vmem>>, vector<1x4x128xf32>
    %6 = vector.shape_cast %5 : vector<1x4x128xf32> to vector<4x128xf32>
    %7 = arith.maximumf %4, %6 : vector<4x128xf32>
    %c0_8 = arith.constant 0 : index
    %c0_9 = arith.constant 0 : index
    %c0_10 = arith.constant 0 : index
    %8 = vector.load %arg4[%c0_8, %c0_9, %c0_10] : memref<1x4x128xf32, #tpu.memory_space<vmem>>, vector<1x4x128xf32>
    %9 = vector.shape_cast %8 : vector<1x4x128xf32> to vector<4x128xf32>
    %10 = arith.maximumf %7, %9 : vector<4x128xf32>
    %cst = arith.constant 0.000000e+00 : f32
    %11 = vector.broadcast %cst : f32 to vector<2x128xf32>
    %12 = vector.extract_strided_slice %10 {offsets = [0, 0], sizes = [2, 128], strides = [1, 1]} : vector<4x128xf32> to vector<2x128xf32>
    %13 = arith.truncf %12 : vector<2x128xf32> to vector<2x128xbf16>
    %c0_11 = arith.constant 0 : index
    %c0_12 = arith.constant 0 : index
    %c0_13 = arith.constant 0 : index
    %14 = vector.load %arg5[%c0_11, %c0_12, %c0_13] : memref<3x128x128xbf16, #tpu.memory_space<vmem>>, vector<1x128x128xbf16>
    %15 = vector.shape_cast %14 : vector<1x128x128xbf16> to vector<128x128xbf16>
    %cst_14 = arith.constant dense<0.000000e+00> : vector<2x128xf32>
    %16 = tpu.matmul %13, %15, %cst_14 {dimension_numbers = #tpu.dot_dimension_numbers<[1], [0], [0], [1], [0, 0, 1, 1], [], []>} : vector<2x128xbf16>, vector<128x128xbf16>, vector<2x128xf32> -> vector<2x128xf32>
    %17 = arith.addf %11, %16 : vector<2x128xf32>
    %18 = vector.extract_strided_slice %10 {offsets = [1, 0], sizes = [2, 128], strides = [1, 1]} : vector<4x128xf32> to vector<2x128xf32>
    %19 = arith.truncf %18 : vector<2x128xf32> to vector<2x128xbf16>
    %c1 = arith.constant 1 : index
    %c0_15 = arith.constant 0 : index
    %c0_16 = arith.constant 0 : index
    %20 = vector.load %arg5[%c1, %c0_15, %c0_16] : memref<3x128x128xbf16, #tpu.memory_space<vmem>>, vector<1x128x128xbf16>
    %21 = vector.shape_cast %20 : vector<1x128x128xbf16> to vector<128x128xbf16>
    %cst_17 = arith.constant dense<0.000000e+00> : vector<2x128xf32>
    %22 = tpu.matmul %19, %21, %cst_17 {dimension_numbers = #tpu.dot_dimension_numbers<[1], [0], [0], [1], [0, 0, 1, 1], [], []>} : vector<2x128xbf16>, vector<128x128xbf16>, vector<2x128xf32> -> vector<2x128xf32>
    %23 = arith.addf %17, %22 : vector<2x128xf32>
    %24 = vector.extract_strided_slice %10 {offsets = [2, 0], sizes = [2, 128], strides = [1, 1]} : vector<4x128xf32> to vector<2x128xf32>
    %25 = arith.truncf %24 : vector<2x128xf32> to vector<2x128xbf16>
    %c2 = arith.constant 2 : index
    %c0_18 = arith.constant 0 : index
    %c0_19 = arith.constant 0 : index
    %26 = vector.load %arg5[%c2, %c0_18, %c0_19] : memref<3x128x128xbf16, #tpu.memory_space<vmem>>, vector<1x128x128xbf16>
    %27 = vector.shape_cast %26 : vector<1x128x128xbf16> to vector<128x128xbf16>
    %cst_20 = arith.constant dense<0.000000e+00> : vector<2x128xf32>
    %28 = tpu.matmul %25, %27, %cst_20 {dimension_numbers = #tpu.dot_dimension_numbers<[1], [0], [0], [1], [0, 0, 1, 1], [], []>} : vector<2x128xbf16>, vector<128x128xbf16>, vector<2x128xf32> -> vector<2x128xf32>
    %29 = arith.addf %23, %28 : vector<2x128xf32>
    %c0_21 = arith.constant 0 : index
    %c0_22 = arith.constant 0 : index
    %30 = vector.load %arg6[%c0_21, %c0_22] : memref<1x128xf32, #tpu.memory_space<vmem>>, vector<1x128xf32>
    %31 = vector.broadcast %30 : vector<1x128xf32> to vector<2x128xf32>
    %32 = arith.addf %29, %31 : vector<2x128xf32>
    %cst_23 = arith.constant 0.000000e+00 : f32
    %33 = vector.broadcast %cst_23 : f32 to vector<2x128xf32>
    %34 = arith.maximumf %32, %33 : vector<2x128xf32>
    %35 = arith.truncf %34 : vector<2x128xf32> to vector<2x128xbf16>
    %c0_24 = arith.constant 0 : index
    %c0_25 = arith.constant 0 : index
    %36 = vector.load %arg7[%c0_24, %c0_25] : memref<128x64xbf16, #tpu.memory_space<vmem>>, vector<128x64xbf16>
    %cst_26 = arith.constant dense<0.000000e+00> : vector<2x64xf32>
    %37 = tpu.matmul %35, %36, %cst_26 {dimension_numbers = #tpu.dot_dimension_numbers<[1], [0], [0], [1], [0, 0, 1, 1], [], []>} : vector<2x128xbf16>, vector<128x64xbf16>, vector<2x64xf32> -> vector<2x64xf32>
    %c0_27 = arith.constant 0 : index
    %c0_28 = arith.constant 0 : index
    %38 = vector.load %arg8[%c0_27, %c0_28] : memref<1x64xf32, #tpu.memory_space<vmem>>, vector<1x64xf32>
    %39 = vector.broadcast %38 : vector<1x64xf32> to vector<2x64xf32>
    %40 = arith.addf %37, %39 : vector<2x64xf32>
    %c0_29 = arith.constant 0 : index
    %c0_30 = arith.constant 0 : index
    %c0_31 = arith.constant 0 : index
    %41 = vector.load %arg9[%c0_29, %c0_30, %c0_31] : memref<1x2x64xf32, #tpu.memory_space<vmem>>, vector<1x2x64xf32>
    %42 = vector.shape_cast %41 : vector<1x2x64xf32> to vector<2x64xf32>
    %43 = vector.shape_cast %40 : vector<2x64xf32> to vector<1x2x64xf32>
    tpu.vector_store %arg9[%c0_29, %c0_30, %c0_31], %43 {strides = array<i32>} : memref<1x2x64xf32, #tpu.memory_space<vmem>>, vector<1x2x64xf32>,
    return
  }
  func.func @transform_0(%arg0: i32) -> (i32, i32, i32) {
    %c0_i32 = arith.constant 0 : i32
    %c0_i32_0 = arith.constant 0 : i32
    %c0_i32_1 = arith.constant 0 : i32
    return %arg0, %c0_i32, %c0_i32_0 : i32, i32, i32
  }
  func.func @transform_1(%arg0: i32) -> (i32, i32, i32) {
    %c0_i32 = arith.constant 0 : i32
    %c0_i32_0 = arith.constant 0 : i32
    %c0_i32_1 = arith.constant 0 : i32
    return %arg0, %c0_i32, %c0_i32_0 : i32, i32, i32
  }
  func.func @transform_2(%arg0: i32) -> (i32, i32, i32) {
    %c0_i32 = arith.constant 0 : i32
    %c0_i32_0 = arith.constant 0 : i32
    %c0_i32_1 = arith.constant 0 : i32
    return %arg0, %c0_i32, %c0_i32_0 : i32, i32, i32
  }
  func.func @transform_3(%arg0: i32) -> (i32, i32, i32) {
    %c0_i32 = arith.constant 0 : i32
    %c0_i32_0 = arith.constant 0 : i32
    %c0_i32_1 = arith.constant 0 : i32
    return %arg0, %c0_i32, %c0_i32_0 : i32, i32, i32
  }
  func.func @transform_4(%arg0: i32) -> (i32, i32, i32) {
    %c0_i32 = arith.constant 0 : i32
    %c0_i32_0 = arith.constant 0 : i32
    %c0_i32_1 = arith.constant 0 : i32
    %c0_i32_2 = arith.constant 0 : i32
    return %c0_i32, %c0_i32_0, %c0_i32_1 : i32, i32, i32
  }
  func.func @transform_5(%arg0: i32) -> (i32, i32) {
    %c0_i32 = arith.constant 0 : i32
    %c0_i32_0 = arith.constant 0 : i32
    %c0_i32_1 = arith.constant 0 : i32
    return %c0_i32, %c0_i32_0 : i32, i32
  }
  func.func @transform_6(%arg0: i32) -> (i32, i32) {
    %c0_i32 = arith.constant 0 : i32
    %c0_i32_0 = arith.constant 0 : i32
    %c0_i32_1 = arith.constant 0 : i32
    return %c0_i32, %c0_i32_0 : i32, i32
  }
  func.func @transform_7(%arg0: i32) -> (i32, i32) {
    %c0_i32 = arith.constant 0 : i32
    %c0_i32_0 = arith.constant 0 : i32
    %c0_i32_1 = arith.constant 0 : i32
    return %c0_i32, %c0_i32_0 : i32, i32
  }
  func.func @transform_8(%arg0: i32) -> (i32, i32, i32) {
    %c0_i32 = arith.constant 0 : i32
    %c0_i32_0 = arith.constant 0 : i32
    %c0_i32_1 = arith.constant 0 : i32
    return %arg0, %c0_i32, %c0_i32_0 : i32, i32, i32
  }
}

module attributes {stable_mosaic.version = 11 : i64} {
  func.func @_fused_conv_kernel(%arg0: i32, %arg1: memref<1x6x192xf32, #tpu.memory_space<vmem>>, %arg2: memref<1x6x192xf32, #tpu.memory_space<vmem>>, %arg3: memref<3x192x128xbf16, #tpu.memory_space<vmem>>, %arg4: memref<3x192x128xbf16, #tpu.memory_space<vmem>>, %arg5: memref<1x128xf32, #tpu.memory_space<vmem>>, %arg6: memref<128x64xbf16, #tpu.memory_space<vmem>>, %arg7: memref<1x64xf32, #tpu.memory_space<vmem>>, %arg8: memref<1x4x64xf32, #tpu.memory_space<vmem>>) attributes {dimension_semantics = [#tpu.dimension_semantics<parallel>], iteration_bounds = array<i64: 2>, scalar_prefetch = 0 : i64, scratch_operands = 0 : i64, tpu.core_type = #tpu.core_type<tc>, window_params = [{transform_indices = @transform_0, window_bounds = array<i64: 1, 6, 192>}, {transform_indices = @transform_1, window_bounds = array<i64: 1, 6, 192>}, {pipeline_mode = #tpu.pipeline_mode<synchronous>, transform_indices = @transform_2, window_bounds = array<i64: 3, 192, 128>}, {pipeline_mode = #tpu.pipeline_mode<synchronous>, transform_indices = @transform_3, window_bounds = array<i64: 3, 192, 128>}, {pipeline_mode = #tpu.pipeline_mode<synchronous>, transform_indices = @transform_4, window_bounds = array<i64: 1, 128>}, {pipeline_mode = #tpu.pipeline_mode<synchronous>, transform_indices = @transform_5, window_bounds = array<i64: 128, 64>}, {pipeline_mode = #tpu.pipeline_mode<synchronous>, transform_indices = @transform_6, window_bounds = array<i64: 1, 64>}, {transform_indices = @transform_7, window_bounds = array<i64: 1, 4, 64>}]} {
    %c0 = arith.constant 0 : index
    %c0_0 = arith.constant 0 : index
    %c0_1 = arith.constant 0 : index
    %0 = vector.load %arg1[%c0, %c0_0, %c0_1] : memref<1x6x192xf32, #tpu.memory_space<vmem>>, vector<1x6x192xf32>
    %1 = vector.shape_cast %0 : vector<1x6x192xf32> to vector<6x192xf32>
    %c0_2 = arith.constant 0 : index
    %c0_3 = arith.constant 0 : index
    %c0_4 = arith.constant 0 : index
    %2 = vector.load %arg2[%c0_2, %c0_3, %c0_4] : memref<1x6x192xf32, #tpu.memory_space<vmem>>, vector<1x6x192xf32>
    %3 = vector.shape_cast %2 : vector<1x6x192xf32> to vector<6x192xf32>
    %cst = arith.constant 0.000000e+00 : f32
    %4 = vector.broadcast %cst : f32 to vector<4x128xf32>
    %5 = vector.extract_strided_slice %1 {offsets = [0, 0], sizes = [4, 192], strides = [1, 1]} : vector<6x192xf32> to vector<4x192xf32>
    %6 = arith.truncf %5 : vector<4x192xf32> to vector<4x192xbf16>
    %c0_5 = arith.constant 0 : index
    %c0_6 = arith.constant 0 : index
    %c0_7 = arith.constant 0 : index
    %7 = vector.load %arg3[%c0_5, %c0_6, %c0_7] : memref<3x192x128xbf16, #tpu.memory_space<vmem>>, vector<1x192x128xbf16>
    %8 = vector.shape_cast %7 : vector<1x192x128xbf16> to vector<192x128xbf16>
    %cst_8 = arith.constant dense<0.000000e+00> : vector<4x128xf32>
    %9 = tpu.matmul %6, %8, %cst_8 {dimension_numbers = #tpu.dot_dimension_numbers<[1], [0], [0], [1], [0, 0, 1, 1], [], []>} : vector<4x192xbf16>, vector<192x128xbf16>, vector<4x128xf32> -> vector<4x128xf32>
    %10 = arith.addf %4, %9 : vector<4x128xf32>
    %11 = vector.extract_strided_slice %1 {offsets = [1, 0], sizes = [4, 192], strides = [1, 1]} : vector<6x192xf32> to vector<4x192xf32>
    %12 = arith.truncf %11 : vector<4x192xf32> to vector<4x192xbf16>
    %c1 = arith.constant 1 : index
    %c0_9 = arith.constant 0 : index
    %c0_10 = arith.constant 0 : index
    %13 = vector.load %arg3[%c1, %c0_9, %c0_10] : memref<3x192x128xbf16, #tpu.memory_space<vmem>>, vector<1x192x128xbf16>
    %14 = vector.shape_cast %13 : vector<1x192x128xbf16> to vector<192x128xbf16>
    %cst_11 = arith.constant dense<0.000000e+00> : vector<4x128xf32>
    %15 = tpu.matmul %12, %14, %cst_11 {dimension_numbers = #tpu.dot_dimension_numbers<[1], [0], [0], [1], [0, 0, 1, 1], [], []>} : vector<4x192xbf16>, vector<192x128xbf16>, vector<4x128xf32> -> vector<4x128xf32>
    %16 = arith.addf %10, %15 : vector<4x128xf32>
    %17 = vector.extract_strided_slice %1 {offsets = [2, 0], sizes = [4, 192], strides = [1, 1]} : vector<6x192xf32> to vector<4x192xf32>
    %18 = arith.truncf %17 : vector<4x192xf32> to vector<4x192xbf16>
    %c2 = arith.constant 2 : index
    %c0_12 = arith.constant 0 : index
    %c0_13 = arith.constant 0 : index
    %19 = vector.load %arg3[%c2, %c0_12, %c0_13] : memref<3x192x128xbf16, #tpu.memory_space<vmem>>, vector<1x192x128xbf16>
    %20 = vector.shape_cast %19 : vector<1x192x128xbf16> to vector<192x128xbf16>
    %cst_14 = arith.constant dense<0.000000e+00> : vector<4x128xf32>
    %21 = tpu.matmul %18, %20, %cst_14 {dimension_numbers = #tpu.dot_dimension_numbers<[1], [0], [0], [1], [0, 0, 1, 1], [], []>} : vector<4x192xbf16>, vector<192x128xbf16>, vector<4x128xf32> -> vector<4x128xf32>
    %22 = arith.addf %16, %21 : vector<4x128xf32>
    %23 = vector.extract_strided_slice %3 {offsets = [0, 0], sizes = [4, 192], strides = [1, 1]} : vector<6x192xf32> to vector<4x192xf32>
    %24 = arith.truncf %23 : vector<4x192xf32> to vector<4x192xbf16>
    %c0_15 = arith.constant 0 : index
    %c0_16 = arith.constant 0 : index
    %c0_17 = arith.constant 0 : index
    %25 = vector.load %arg4[%c0_15, %c0_16, %c0_17] : memref<3x192x128xbf16, #tpu.memory_space<vmem>>, vector<1x192x128xbf16>
    %26 = vector.shape_cast %25 : vector<1x192x128xbf16> to vector<192x128xbf16>
    %cst_18 = arith.constant dense<0.000000e+00> : vector<4x128xf32>
    %27 = tpu.matmul %24, %26, %cst_18 {dimension_numbers = #tpu.dot_dimension_numbers<[1], [0], [0], [1], [0, 0, 1, 1], [], []>} : vector<4x192xbf16>, vector<192x128xbf16>, vector<4x128xf32> -> vector<4x128xf32>
    %28 = arith.addf %22, %27 : vector<4x128xf32>
    %29 = vector.extract_strided_slice %3 {offsets = [1, 0], sizes = [4, 192], strides = [1, 1]} : vector<6x192xf32> to vector<4x192xf32>
    %30 = arith.truncf %29 : vector<4x192xf32> to vector<4x192xbf16>
    %c1_19 = arith.constant 1 : index
    %c0_20 = arith.constant 0 : index
    %c0_21 = arith.constant 0 : index
    %31 = vector.load %arg4[%c1_19, %c0_20, %c0_21] : memref<3x192x128xbf16, #tpu.memory_space<vmem>>, vector<1x192x128xbf16>
    %32 = vector.shape_cast %31 : vector<1x192x128xbf16> to vector<192x128xbf16>
    %cst_22 = arith.constant dense<0.000000e+00> : vector<4x128xf32>
    %33 = tpu.matmul %30, %32, %cst_22 {dimension_numbers = #tpu.dot_dimension_numbers<[1], [0], [0], [1], [0, 0, 1, 1], [], []>} : vector<4x192xbf16>, vector<192x128xbf16>, vector<4x128xf32> -> vector<4x128xf32>
    %34 = arith.addf %28, %33 : vector<4x128xf32>
    %35 = vector.extract_strided_slice %3 {offsets = [2, 0], sizes = [4, 192], strides = [1, 1]} : vector<6x192xf32> to vector<4x192xf32>
    %36 = arith.truncf %35 : vector<4x192xf32> to vector<4x192xbf16>
    %c2_23 = arith.constant 2 : index
    %c0_24 = arith.constant 0 : index
    %c0_25 = arith.constant 0 : index
    %37 = vector.load %arg4[%c2_23, %c0_24, %c0_25] : memref<3x192x128xbf16, #tpu.memory_space<vmem>>, vector<1x192x128xbf16>
    %38 = vector.shape_cast %37 : vector<1x192x128xbf16> to vector<192x128xbf16>
    %cst_26 = arith.constant dense<0.000000e+00> : vector<4x128xf32>
    %39 = tpu.matmul %36, %38, %cst_26 {dimension_numbers = #tpu.dot_dimension_numbers<[1], [0], [0], [1], [0, 0, 1, 1], [], []>} : vector<4x192xbf16>, vector<192x128xbf16>, vector<4x128xf32> -> vector<4x128xf32>
    %40 = arith.addf %34, %39 : vector<4x128xf32>
    %c0_27 = arith.constant 0 : index
    %c0_28 = arith.constant 0 : index
    %41 = vector.load %arg5[%c0_27, %c0_28] : memref<1x128xf32, #tpu.memory_space<vmem>>, vector<1x128xf32>
    %42 = vector.broadcast %41 : vector<1x128xf32> to vector<4x128xf32>
    %43 = arith.addf %40, %42 : vector<4x128xf32>
    %cst_29 = arith.constant 0.000000e+00 : f32
    %44 = vector.broadcast %cst_29 : f32 to vector<4x128xf32>
    %45 = arith.maximumf %43, %44 : vector<4x128xf32>
    %46 = arith.truncf %45 : vector<4x128xf32> to vector<4x128xbf16>
    %c0_30 = arith.constant 0 : index
    %c0_31 = arith.constant 0 : index
    %47 = vector.load %arg6[%c0_30, %c0_31] : memref<128x64xbf16, #tpu.memory_space<vmem>>, vector<128x64xbf16>
    %cst_32 = arith.constant dense<0.000000e+00> : vector<4x64xf32>
    %48 = tpu.matmul %46, %47, %cst_32 {dimension_numbers = #tpu.dot_dimension_numbers<[1], [0], [0], [1], [0, 0, 1, 1], [], []>} : vector<4x128xbf16>, vector<128x64xbf16>, vector<4x64xf32> -> vector<4x64xf32>
    %c0_33 = arith.constant 0 : index
    %c0_34 = arith.constant 0 : index
    %49 = vector.load %arg7[%c0_33, %c0_34] : memref<1x64xf32, #tpu.memory_space<vmem>>, vector<1x64xf32>
    %50 = vector.broadcast %49 : vector<1x64xf32> to vector<4x64xf32>
    %51 = arith.addf %48, %50 : vector<4x64xf32>
    %c0_35 = arith.constant 0 : index
    %c0_36 = arith.constant 0 : index
    %c0_37 = arith.constant 0 : index
    %52 = vector.load %arg8[%c0_35, %c0_36, %c0_37] : memref<1x4x64xf32, #tpu.memory_space<vmem>>, vector<1x4x64xf32>
    %53 = vector.shape_cast %52 : vector<1x4x64xf32> to vector<4x64xf32>
    %54 = vector.shape_cast %51 : vector<4x64xf32> to vector<1x4x64xf32>
    tpu.vector_store %arg8[%c0_35, %c0_36, %c0_37], %54 {strides = array<i32>} : memref<1x4x64xf32, #tpu.memory_space<vmem>>, vector<1x4x64xf32>,
    return
  }
  func.func @transform_0(%arg0: i32) -> (i32, i32, i32) {
    %c0_i32 = arith.constant 0 : i32
    %c0_i32_0 = arith.constant 0 : i32
    %c0_i32_1 = arith.constant 0 : i32
    return %arg0, %c0_i32, %c0_i32_0 : i32, i32, i32
  }
  func.func @transform_1(%arg0: i32) -> (i32, i32, i32) {
    %c0_i32 = arith.constant 0 : i32
    %c0_i32_0 = arith.constant 0 : i32
    %c0_i32_1 = arith.constant 0 : i32
    return %arg0, %c0_i32, %c0_i32_0 : i32, i32, i32
  }
  func.func @transform_2(%arg0: i32) -> (i32, i32, i32) {
    %c0_i32 = arith.constant 0 : i32
    %c0_i32_0 = arith.constant 0 : i32
    %c0_i32_1 = arith.constant 0 : i32
    %c0_i32_2 = arith.constant 0 : i32
    return %c0_i32, %c0_i32_0, %c0_i32_1 : i32, i32, i32
  }
  func.func @transform_3(%arg0: i32) -> (i32, i32, i32) {
    %c0_i32 = arith.constant 0 : i32
    %c0_i32_0 = arith.constant 0 : i32
    %c0_i32_1 = arith.constant 0 : i32
    %c0_i32_2 = arith.constant 0 : i32
    return %c0_i32, %c0_i32_0, %c0_i32_1 : i32, i32, i32
  }
  func.func @transform_4(%arg0: i32) -> (i32, i32) {
    %c0_i32 = arith.constant 0 : i32
    %c0_i32_0 = arith.constant 0 : i32
    %c0_i32_1 = arith.constant 0 : i32
    return %c0_i32, %c0_i32_0 : i32, i32
  }
  func.func @transform_5(%arg0: i32) -> (i32, i32) {
    %c0_i32 = arith.constant 0 : i32
    %c0_i32_0 = arith.constant 0 : i32
    %c0_i32_1 = arith.constant 0 : i32
    return %c0_i32, %c0_i32_0 : i32, i32
  }
  func.func @transform_6(%arg0: i32) -> (i32, i32) {
    %c0_i32 = arith.constant 0 : i32
    %c0_i32_0 = arith.constant 0 : i32
    %c0_i32_1 = arith.constant 0 : i32
    return %c0_i32, %c0_i32_0 : i32, i32
  }
  func.func @transform_7(%arg0: i32) -> (i32, i32, i32) {
    %c0_i32 = arith.constant 0 : i32
    %c0_i32_0 = arith.constant 0 : i32
    %c0_i32_1 = arith.constant 0 : i32
    return %arg0, %c0_i32, %c0_i32_0 : i32, i32, i32
  }
}

module attributes {stable_mosaic.version = 11 : i64} {
  func.func @_fused_conv_kernel(%arg0: i32, %arg1: memref<1x10x160xf32, #tpu.memory_space<vmem>>, %arg2: memref<1x10x160xf32, #tpu.memory_space<vmem>>, %arg3: memref<3x160x128xbf16, #tpu.memory_space<vmem>>, %arg4: memref<3x160x128xbf16, #tpu.memory_space<vmem>>, %arg5: memref<1x128xf32, #tpu.memory_space<vmem>>, %arg6: memref<128x64xbf16, #tpu.memory_space<vmem>>, %arg7: memref<1x64xf32, #tpu.memory_space<vmem>>, %arg8: memref<1x8x64xf32, #tpu.memory_space<vmem>>) attributes {dimension_semantics = [#tpu.dimension_semantics<parallel>], iteration_bounds = array<i64: 2>, scalar_prefetch = 0 : i64, scratch_operands = 0 : i64, tpu.core_type = #tpu.core_type<tc>, window_params = [{transform_indices = @transform_0, window_bounds = array<i64: 1, 10, 160>}, {transform_indices = @transform_1, window_bounds = array<i64: 1, 10, 160>}, {pipeline_mode = #tpu.pipeline_mode<synchronous>, transform_indices = @transform_2, window_bounds = array<i64: 3, 160, 128>}, {pipeline_mode = #tpu.pipeline_mode<synchronous>, transform_indices = @transform_3, window_bounds = array<i64: 3, 160, 128>}, {pipeline_mode = #tpu.pipeline_mode<synchronous>, transform_indices = @transform_4, window_bounds = array<i64: 1, 128>}, {pipeline_mode = #tpu.pipeline_mode<synchronous>, transform_indices = @transform_5, window_bounds = array<i64: 128, 64>}, {pipeline_mode = #tpu.pipeline_mode<synchronous>, transform_indices = @transform_6, window_bounds = array<i64: 1, 64>}, {transform_indices = @transform_7, window_bounds = array<i64: 1, 8, 64>}]} {
    %c0 = arith.constant 0 : index
    %c0_0 = arith.constant 0 : index
    %c0_1 = arith.constant 0 : index
    %0 = vector.load %arg1[%c0, %c0_0, %c0_1] : memref<1x10x160xf32, #tpu.memory_space<vmem>>, vector<1x10x160xf32>
    %1 = vector.shape_cast %0 : vector<1x10x160xf32> to vector<10x160xf32>
    %c0_2 = arith.constant 0 : index
    %c0_3 = arith.constant 0 : index
    %c0_4 = arith.constant 0 : index
    %2 = vector.load %arg2[%c0_2, %c0_3, %c0_4] : memref<1x10x160xf32, #tpu.memory_space<vmem>>, vector<1x10x160xf32>
    %3 = vector.shape_cast %2 : vector<1x10x160xf32> to vector<10x160xf32>
    %cst = arith.constant 0.000000e+00 : f32
    %4 = vector.broadcast %cst : f32 to vector<8x128xf32>
    %5 = vector.extract_strided_slice %1 {offsets = [0, 0], sizes = [8, 160], strides = [1, 1]} : vector<10x160xf32> to vector<8x160xf32>
    %6 = arith.truncf %5 : vector<8x160xf32> to vector<8x160xbf16>
    %c0_5 = arith.constant 0 : index
    %c0_6 = arith.constant 0 : index
    %c0_7 = arith.constant 0 : index
    %7 = vector.load %arg3[%c0_5, %c0_6, %c0_7] : memref<3x160x128xbf16, #tpu.memory_space<vmem>>, vector<1x160x128xbf16>
    %8 = vector.shape_cast %7 : vector<1x160x128xbf16> to vector<160x128xbf16>
    %cst_8 = arith.constant dense<0.000000e+00> : vector<8x128xf32>
    %9 = tpu.matmul %6, %8, %cst_8 {dimension_numbers = #tpu.dot_dimension_numbers<[1], [0], [0], [1], [0, 0, 1, 1], [], []>} : vector<8x160xbf16>, vector<160x128xbf16>, vector<8x128xf32> -> vector<8x128xf32>
    %10 = arith.addf %4, %9 : vector<8x128xf32>
    %11 = vector.extract_strided_slice %1 {offsets = [1, 0], sizes = [8, 160], strides = [1, 1]} : vector<10x160xf32> to vector<8x160xf32>
    %12 = arith.truncf %11 : vector<8x160xf32> to vector<8x160xbf16>
    %c1 = arith.constant 1 : index
    %c0_9 = arith.constant 0 : index
    %c0_10 = arith.constant 0 : index
    %13 = vector.load %arg3[%c1, %c0_9, %c0_10] : memref<3x160x128xbf16, #tpu.memory_space<vmem>>, vector<1x160x128xbf16>
    %14 = vector.shape_cast %13 : vector<1x160x128xbf16> to vector<160x128xbf16>
    %cst_11 = arith.constant dense<0.000000e+00> : vector<8x128xf32>
    %15 = tpu.matmul %12, %14, %cst_11 {dimension_numbers = #tpu.dot_dimension_numbers<[1], [0], [0], [1], [0, 0, 1, 1], [], []>} : vector<8x160xbf16>, vector<160x128xbf16>, vector<8x128xf32> -> vector<8x128xf32>
    %16 = arith.addf %10, %15 : vector<8x128xf32>
    %17 = vector.extract_strided_slice %1 {offsets = [2, 0], sizes = [8, 160], strides = [1, 1]} : vector<10x160xf32> to vector<8x160xf32>
    %18 = arith.truncf %17 : vector<8x160xf32> to vector<8x160xbf16>
    %c2 = arith.constant 2 : index
    %c0_12 = arith.constant 0 : index
    %c0_13 = arith.constant 0 : index
    %19 = vector.load %arg3[%c2, %c0_12, %c0_13] : memref<3x160x128xbf16, #tpu.memory_space<vmem>>, vector<1x160x128xbf16>
    %20 = vector.shape_cast %19 : vector<1x160x128xbf16> to vector<160x128xbf16>
    %cst_14 = arith.constant dense<0.000000e+00> : vector<8x128xf32>
    %21 = tpu.matmul %18, %20, %cst_14 {dimension_numbers = #tpu.dot_dimension_numbers<[1], [0], [0], [1], [0, 0, 1, 1], [], []>} : vector<8x160xbf16>, vector<160x128xbf16>, vector<8x128xf32> -> vector<8x128xf32>
    %22 = arith.addf %16, %21 : vector<8x128xf32>
    %23 = vector.extract_strided_slice %3 {offsets = [0, 0], sizes = [8, 160], strides = [1, 1]} : vector<10x160xf32> to vector<8x160xf32>
    %24 = arith.truncf %23 : vector<8x160xf32> to vector<8x160xbf16>
    %c0_15 = arith.constant 0 : index
    %c0_16 = arith.constant 0 : index
    %c0_17 = arith.constant 0 : index
    %25 = vector.load %arg4[%c0_15, %c0_16, %c0_17] : memref<3x160x128xbf16, #tpu.memory_space<vmem>>, vector<1x160x128xbf16>
    %26 = vector.shape_cast %25 : vector<1x160x128xbf16> to vector<160x128xbf16>
    %cst_18 = arith.constant dense<0.000000e+00> : vector<8x128xf32>
    %27 = tpu.matmul %24, %26, %cst_18 {dimension_numbers = #tpu.dot_dimension_numbers<[1], [0], [0], [1], [0, 0, 1, 1], [], []>} : vector<8x160xbf16>, vector<160x128xbf16>, vector<8x128xf32> -> vector<8x128xf32>
    %28 = arith.addf %22, %27 : vector<8x128xf32>
    %29 = vector.extract_strided_slice %3 {offsets = [1, 0], sizes = [8, 160], strides = [1, 1]} : vector<10x160xf32> to vector<8x160xf32>
    %30 = arith.truncf %29 : vector<8x160xf32> to vector<8x160xbf16>
    %c1_19 = arith.constant 1 : index
    %c0_20 = arith.constant 0 : index
    %c0_21 = arith.constant 0 : index
    %31 = vector.load %arg4[%c1_19, %c0_20, %c0_21] : memref<3x160x128xbf16, #tpu.memory_space<vmem>>, vector<1x160x128xbf16>
    %32 = vector.shape_cast %31 : vector<1x160x128xbf16> to vector<160x128xbf16>
    %cst_22 = arith.constant dense<0.000000e+00> : vector<8x128xf32>
    %33 = tpu.matmul %30, %32, %cst_22 {dimension_numbers = #tpu.dot_dimension_numbers<[1], [0], [0], [1], [0, 0, 1, 1], [], []>} : vector<8x160xbf16>, vector<160x128xbf16>, vector<8x128xf32> -> vector<8x128xf32>
    %34 = arith.addf %28, %33 : vector<8x128xf32>
    %35 = vector.extract_strided_slice %3 {offsets = [2, 0], sizes = [8, 160], strides = [1, 1]} : vector<10x160xf32> to vector<8x160xf32>
    %36 = arith.truncf %35 : vector<8x160xf32> to vector<8x160xbf16>
    %c2_23 = arith.constant 2 : index
    %c0_24 = arith.constant 0 : index
    %c0_25 = arith.constant 0 : index
    %37 = vector.load %arg4[%c2_23, %c0_24, %c0_25] : memref<3x160x128xbf16, #tpu.memory_space<vmem>>, vector<1x160x128xbf16>
    %38 = vector.shape_cast %37 : vector<1x160x128xbf16> to vector<160x128xbf16>
    %cst_26 = arith.constant dense<0.000000e+00> : vector<8x128xf32>
    %39 = tpu.matmul %36, %38, %cst_26 {dimension_numbers = #tpu.dot_dimension_numbers<[1], [0], [0], [1], [0, 0, 1, 1], [], []>} : vector<8x160xbf16>, vector<160x128xbf16>, vector<8x128xf32> -> vector<8x128xf32>
    %40 = arith.addf %34, %39 : vector<8x128xf32>
    %c0_27 = arith.constant 0 : index
    %c0_28 = arith.constant 0 : index
    %41 = vector.load %arg5[%c0_27, %c0_28] : memref<1x128xf32, #tpu.memory_space<vmem>>, vector<1x128xf32>
    %42 = vector.broadcast %41 : vector<1x128xf32> to vector<8x128xf32>
    %43 = arith.addf %40, %42 : vector<8x128xf32>
    %cst_29 = arith.constant 0.000000e+00 : f32
    %44 = vector.broadcast %cst_29 : f32 to vector<8x128xf32>
    %45 = arith.maximumf %43, %44 : vector<8x128xf32>
    %46 = arith.truncf %45 : vector<8x128xf32> to vector<8x128xbf16>
    %c0_30 = arith.constant 0 : index
    %c0_31 = arith.constant 0 : index
    %47 = vector.load %arg6[%c0_30, %c0_31] : memref<128x64xbf16, #tpu.memory_space<vmem>>, vector<128x64xbf16>
    %cst_32 = arith.constant dense<0.000000e+00> : vector<8x64xf32>
    %48 = tpu.matmul %46, %47, %cst_32 {dimension_numbers = #tpu.dot_dimension_numbers<[1], [0], [0], [1], [0, 0, 1, 1], [], []>} : vector<8x128xbf16>, vector<128x64xbf16>, vector<8x64xf32> -> vector<8x64xf32>
    %c0_33 = arith.constant 0 : index
    %c0_34 = arith.constant 0 : index
    %49 = vector.load %arg7[%c0_33, %c0_34] : memref<1x64xf32, #tpu.memory_space<vmem>>, vector<1x64xf32>
    %50 = vector.broadcast %49 : vector<1x64xf32> to vector<8x64xf32>
    %51 = arith.addf %48, %50 : vector<8x64xf32>
    %c0_35 = arith.constant 0 : index
    %c0_36 = arith.constant 0 : index
    %c0_37 = arith.constant 0 : index
    %52 = vector.load %arg8[%c0_35, %c0_36, %c0_37] : memref<1x8x64xf32, #tpu.memory_space<vmem>>, vector<1x8x64xf32>
    %53 = vector.shape_cast %52 : vector<1x8x64xf32> to vector<8x64xf32>
    %54 = vector.shape_cast %51 : vector<8x64xf32> to vector<1x8x64xf32>
    tpu.vector_store %arg8[%c0_35, %c0_36, %c0_37], %54 {strides = array<i32>} : memref<1x8x64xf32, #tpu.memory_space<vmem>>, vector<1x8x64xf32>,
    return
  }
  func.func @transform_0(%arg0: i32) -> (i32, i32, i32) {
    %c0_i32 = arith.constant 0 : i32
    %c0_i32_0 = arith.constant 0 : i32
    %c0_i32_1 = arith.constant 0 : i32
    return %arg0, %c0_i32, %c0_i32_0 : i32, i32, i32
  }
  func.func @transform_1(%arg0: i32) -> (i32, i32, i32) {
    %c0_i32 = arith.constant 0 : i32
    %c0_i32_0 = arith.constant 0 : i32
    %c0_i32_1 = arith.constant 0 : i32
    return %arg0, %c0_i32, %c0_i32_0 : i32, i32, i32
  }
  func.func @transform_2(%arg0: i32) -> (i32, i32, i32) {
    %c0_i32 = arith.constant 0 : i32
    %c0_i32_0 = arith.constant 0 : i32
    %c0_i32_1 = arith.constant 0 : i32
    %c0_i32_2 = arith.constant 0 : i32
    return %c0_i32, %c0_i32_0, %c0_i32_1 : i32, i32, i32
  }
  func.func @transform_3(%arg0: i32) -> (i32, i32, i32) {
    %c0_i32 = arith.constant 0 : i32
    %c0_i32_0 = arith.constant 0 : i32
    %c0_i32_1 = arith.constant 0 : i32
    %c0_i32_2 = arith.constant 0 : i32
    return %c0_i32, %c0_i32_0, %c0_i32_1 : i32, i32, i32
  }
  func.func @transform_4(%arg0: i32) -> (i32, i32) {
    %c0_i32 = arith.constant 0 : i32
    %c0_i32_0 = arith.constant 0 : i32
    %c0_i32_1 = arith.constant 0 : i32
    return %c0_i32, %c0_i32_0 : i32, i32
  }
  func.func @transform_5(%arg0: i32) -> (i32, i32) {
    %c0_i32 = arith.constant 0 : i32
    %c0_i32_0 = arith.constant 0 : i32
    %c0_i32_1 = arith.constant 0 : i32
    return %c0_i32, %c0_i32_0 : i32, i32
  }
  func.func @transform_6(%arg0: i32) -> (i32, i32) {
    %c0_i32 = arith.constant 0 : i32
    %c0_i32_0 = arith.constant 0 : i32
    %c0_i32_1 = arith.constant 0 : i32
    return %c0_i32, %c0_i32_0 : i32, i32
  }
  func.func @transform_7(%arg0: i32) -> (i32, i32, i32) {
    %c0_i32 = arith.constant 0 : i32
    %c0_i32_0 = arith.constant 0 : i32
    %c0_i32_1 = arith.constant 0 : i32
    return %arg0, %c0_i32, %c0_i32_0 : i32, i32, i32
  }
}

module attributes {stable_mosaic.version = 11 : i64} {
  func.func @_fused_conv_kernel(%arg0: i32, %arg1: memref<1x18x144xf32, #tpu.memory_space<vmem>>, %arg2: memref<1x18x144xf32, #tpu.memory_space<vmem>>, %arg3: memref<3x144x128xbf16, #tpu.memory_space<vmem>>, %arg4: memref<3x144x128xbf16, #tpu.memory_space<vmem>>, %arg5: memref<1x128xf32, #tpu.memory_space<vmem>>, %arg6: memref<128x32xbf16, #tpu.memory_space<vmem>>, %arg7: memref<1x32xf32, #tpu.memory_space<vmem>>, %arg8: memref<1x16x32xf32, #tpu.memory_space<vmem>>) attributes {dimension_semantics = [#tpu.dimension_semantics<parallel>], iteration_bounds = array<i64: 2>, scalar_prefetch = 0 : i64, scratch_operands = 0 : i64, tpu.core_type = #tpu.core_type<tc>, window_params = [{transform_indices = @transform_0, window_bounds = array<i64: 1, 18, 144>}, {transform_indices = @transform_1, window_bounds = array<i64: 1, 18, 144>}, {pipeline_mode = #tpu.pipeline_mode<synchronous>, transform_indices = @transform_2, window_bounds = array<i64: 3, 144, 128>}, {pipeline_mode = #tpu.pipeline_mode<synchronous>, transform_indices = @transform_3, window_bounds = array<i64: 3, 144, 128>}, {pipeline_mode = #tpu.pipeline_mode<synchronous>, transform_indices = @transform_4, window_bounds = array<i64: 1, 128>}, {pipeline_mode = #tpu.pipeline_mode<synchronous>, transform_indices = @transform_5, window_bounds = array<i64: 128, 32>}, {pipeline_mode = #tpu.pipeline_mode<synchronous>, transform_indices = @transform_6, window_bounds = array<i64: 1, 32>}, {transform_indices = @transform_7, window_bounds = array<i64: 1, 16, 32>}]} {
    %c0 = arith.constant 0 : index
    %c0_0 = arith.constant 0 : index
    %c0_1 = arith.constant 0 : index
    %0 = vector.load %arg1[%c0, %c0_0, %c0_1] : memref<1x18x144xf32, #tpu.memory_space<vmem>>, vector<1x18x144xf32>
    %1 = vector.shape_cast %0 : vector<1x18x144xf32> to vector<18x144xf32>
    %c0_2 = arith.constant 0 : index
    %c0_3 = arith.constant 0 : index
    %c0_4 = arith.constant 0 : index
    %2 = vector.load %arg2[%c0_2, %c0_3, %c0_4] : memref<1x18x144xf32, #tpu.memory_space<vmem>>, vector<1x18x144xf32>
    %3 = vector.shape_cast %2 : vector<1x18x144xf32> to vector<18x144xf32>
    %cst = arith.constant 0.000000e+00 : f32
    %4 = vector.broadcast %cst : f32 to vector<16x128xf32>
    %5 = vector.extract_strided_slice %1 {offsets = [0, 0], sizes = [16, 144], strides = [1, 1]} : vector<18x144xf32> to vector<16x144xf32>
    %6 = arith.truncf %5 : vector<16x144xf32> to vector<16x144xbf16>
    %c0_5 = arith.constant 0 : index
    %c0_6 = arith.constant 0 : index
    %c0_7 = arith.constant 0 : index
    %7 = vector.load %arg3[%c0_5, %c0_6, %c0_7] : memref<3x144x128xbf16, #tpu.memory_space<vmem>>, vector<1x144x128xbf16>
    %8 = vector.shape_cast %7 : vector<1x144x128xbf16> to vector<144x128xbf16>
    %cst_8 = arith.constant dense<0.000000e+00> : vector<16x128xf32>
    %9 = tpu.matmul %6, %8, %cst_8 {dimension_numbers = #tpu.dot_dimension_numbers<[1], [0], [0], [1], [0, 0, 1, 1], [], []>} : vector<16x144xbf16>, vector<144x128xbf16>, vector<16x128xf32> -> vector<16x128xf32>
    %10 = arith.addf %4, %9 : vector<16x128xf32>
    %11 = vector.extract_strided_slice %1 {offsets = [1, 0], sizes = [16, 144], strides = [1, 1]} : vector<18x144xf32> to vector<16x144xf32>
    %12 = arith.truncf %11 : vector<16x144xf32> to vector<16x144xbf16>
    %c1 = arith.constant 1 : index
    %c0_9 = arith.constant 0 : index
    %c0_10 = arith.constant 0 : index
    %13 = vector.load %arg3[%c1, %c0_9, %c0_10] : memref<3x144x128xbf16, #tpu.memory_space<vmem>>, vector<1x144x128xbf16>
    %14 = vector.shape_cast %13 : vector<1x144x128xbf16> to vector<144x128xbf16>
    %cst_11 = arith.constant dense<0.000000e+00> : vector<16x128xf32>
    %15 = tpu.matmul %12, %14, %cst_11 {dimension_numbers = #tpu.dot_dimension_numbers<[1], [0], [0], [1], [0, 0, 1, 1], [], []>} : vector<16x144xbf16>, vector<144x128xbf16>, vector<16x128xf32> -> vector<16x128xf32>
    %16 = arith.addf %10, %15 : vector<16x128xf32>
    %17 = vector.extract_strided_slice %1 {offsets = [2, 0], sizes = [16, 144], strides = [1, 1]} : vector<18x144xf32> to vector<16x144xf32>
    %18 = arith.truncf %17 : vector<16x144xf32> to vector<16x144xbf16>
    %c2 = arith.constant 2 : index
    %c0_12 = arith.constant 0 : index
    %c0_13 = arith.constant 0 : index
    %19 = vector.load %arg3[%c2, %c0_12, %c0_13] : memref<3x144x128xbf16, #tpu.memory_space<vmem>>, vector<1x144x128xbf16>
    %20 = vector.shape_cast %19 : vector<1x144x128xbf16> to vector<144x128xbf16>
    %cst_14 = arith.constant dense<0.000000e+00> : vector<16x128xf32>
    %21 = tpu.matmul %18, %20, %cst_14 {dimension_numbers = #tpu.dot_dimension_numbers<[1], [0], [0], [1], [0, 0, 1, 1], [], []>} : vector<16x144xbf16>, vector<144x128xbf16>, vector<16x128xf32> -> vector<16x128xf32>
    %22 = arith.addf %16, %21 : vector<16x128xf32>
    %23 = vector.extract_strided_slice %3 {offsets = [0, 0], sizes = [16, 144], strides = [1, 1]} : vector<18x144xf32> to vector<16x144xf32>
    %24 = arith.truncf %23 : vector<16x144xf32> to vector<16x144xbf16>
    %c0_15 = arith.constant 0 : index
    %c0_16 = arith.constant 0 : index
    %c0_17 = arith.constant 0 : index
    %25 = vector.load %arg4[%c0_15, %c0_16, %c0_17] : memref<3x144x128xbf16, #tpu.memory_space<vmem>>, vector<1x144x128xbf16>
    %26 = vector.shape_cast %25 : vector<1x144x128xbf16> to vector<144x128xbf16>
    %cst_18 = arith.constant dense<0.000000e+00> : vector<16x128xf32>
    %27 = tpu.matmul %24, %26, %cst_18 {dimension_numbers = #tpu.dot_dimension_numbers<[1], [0], [0], [1], [0, 0, 1, 1], [], []>} : vector<16x144xbf16>, vector<144x128xbf16>, vector<16x128xf32> -> vector<16x128xf32>
    %28 = arith.addf %22, %27 : vector<16x128xf32>
    %29 = vector.extract_strided_slice %3 {offsets = [1, 0], sizes = [16, 144], strides = [1, 1]} : vector<18x144xf32> to vector<16x144xf32>
    %30 = arith.truncf %29 : vector<16x144xf32> to vector<16x144xbf16>
    %c1_19 = arith.constant 1 : index
    %c0_20 = arith.constant 0 : index
    %c0_21 = arith.constant 0 : index
    %31 = vector.load %arg4[%c1_19, %c0_20, %c0_21] : memref<3x144x128xbf16, #tpu.memory_space<vmem>>, vector<1x144x128xbf16>
    %32 = vector.shape_cast %31 : vector<1x144x128xbf16> to vector<144x128xbf16>
    %cst_22 = arith.constant dense<0.000000e+00> : vector<16x128xf32>
    %33 = tpu.matmul %30, %32, %cst_22 {dimension_numbers = #tpu.dot_dimension_numbers<[1], [0], [0], [1], [0, 0, 1, 1], [], []>} : vector<16x144xbf16>, vector<144x128xbf16>, vector<16x128xf32> -> vector<16x128xf32>
    %34 = arith.addf %28, %33 : vector<16x128xf32>
    %35 = vector.extract_strided_slice %3 {offsets = [2, 0], sizes = [16, 144], strides = [1, 1]} : vector<18x144xf32> to vector<16x144xf32>
    %36 = arith.truncf %35 : vector<16x144xf32> to vector<16x144xbf16>
    %c2_23 = arith.constant 2 : index
    %c0_24 = arith.constant 0 : index
    %c0_25 = arith.constant 0 : index
    %37 = vector.load %arg4[%c2_23, %c0_24, %c0_25] : memref<3x144x128xbf16, #tpu.memory_space<vmem>>, vector<1x144x128xbf16>
    %38 = vector.shape_cast %37 : vector<1x144x128xbf16> to vector<144x128xbf16>
    %cst_26 = arith.constant dense<0.000000e+00> : vector<16x128xf32>
    %39 = tpu.matmul %36, %38, %cst_26 {dimension_numbers = #tpu.dot_dimension_numbers<[1], [0], [0], [1], [0, 0, 1, 1], [], []>} : vector<16x144xbf16>, vector<144x128xbf16>, vector<16x128xf32> -> vector<16x128xf32>
    %40 = arith.addf %34, %39 : vector<16x128xf32>
    %c0_27 = arith.constant 0 : index
    %c0_28 = arith.constant 0 : index
    %41 = vector.load %arg5[%c0_27, %c0_28] : memref<1x128xf32, #tpu.memory_space<vmem>>, vector<1x128xf32>
    %42 = vector.broadcast %41 : vector<1x128xf32> to vector<16x128xf32>
    %43 = arith.addf %40, %42 : vector<16x128xf32>
    %cst_29 = arith.constant 0.000000e+00 : f32
    %44 = vector.broadcast %cst_29 : f32 to vector<16x128xf32>
    %45 = arith.maximumf %43, %44 : vector<16x128xf32>
    %46 = arith.truncf %45 : vector<16x128xf32> to vector<16x128xbf16>
    %c0_30 = arith.constant 0 : index
    %c0_31 = arith.constant 0 : index
    %47 = vector.load %arg6[%c0_30, %c0_31] : memref<128x32xbf16, #tpu.memory_space<vmem>>, vector<128x32xbf16>
    %cst_32 = arith.constant dense<0.000000e+00> : vector<16x32xf32>
    %48 = tpu.matmul %46, %47, %cst_32 {dimension_numbers = #tpu.dot_dimension_numbers<[1], [0], [0], [1], [0, 0, 1, 1], [], []>} : vector<16x128xbf16>, vector<128x32xbf16>, vector<16x32xf32> -> vector<16x32xf32>
    %c0_33 = arith.constant 0 : index
    %c0_34 = arith.constant 0 : index
    %49 = vector.load %arg7[%c0_33, %c0_34] : memref<1x32xf32, #tpu.memory_space<vmem>>, vector<1x32xf32>
    %50 = vector.broadcast %49 : vector<1x32xf32> to vector<16x32xf32>
    %51 = arith.addf %48, %50 : vector<16x32xf32>
    %52 = arith.negf %51 : vector<16x32xf32>
    %53 = math.exp %52 : vector<16x32xf32>
    %cst_35 = arith.constant 1.000000e+00 : f32
    %54 = vector.broadcast %cst_35 : f32 to vector<16x32xf32>
    %55 = arith.addf %54, %53 : vector<16x32xf32>
    %56 = arith.divf %54, %55 : vector<16x32xf32>
    %c0_36 = arith.constant 0 : index
    %c0_37 = arith.constant 0 : index
    %c0_38 = arith.constant 0 : index
    %57 = vector.load %arg8[%c0_36, %c0_37, %c0_38] : memref<1x16x32xf32, #tpu.memory_space<vmem>>, vector<1x16x32xf32>
    %58 = vector.shape_cast %57 : vector<1x16x32xf32> to vector<16x32xf32>
    %59 = vector.shape_cast %56 : vector<16x32xf32> to vector<1x16x32xf32>
    tpu.vector_store %arg8[%c0_36, %c0_37, %c0_38], %59 {strides = array<i32>} : memref<1x16x32xf32, #tpu.memory_space<vmem>>, vector<1x16x32xf32>,
    return
  }
  func.func @transform_0(%arg0: i32) -> (i32, i32, i32) {
    %c0_i32 = arith.constant 0 : i32
    %c0_i32_0 = arith.constant 0 : i32
    %c0_i32_1 = arith.constant 0 : i32
    return %arg0, %c0_i32, %c0_i32_0 : i32, i32, i32
  }
  func.func @transform_1(%arg0: i32) -> (i32, i32, i32) {
    %c0_i32 = arith.constant 0 : i32
    %c0_i32_0 = arith.constant 0 : i32
    %c0_i32_1 = arith.constant 0 : i32
    return %arg0, %c0_i32, %c0_i32_0 : i32, i32, i32
  }
  func.func @transform_2(%arg0: i32) -> (i32, i32, i32) {
    %c0_i32 = arith.constant 0 : i32
    %c0_i32_0 = arith.constant 0 : i32
    %c0_i32_1 = arith.constant 0 : i32
    %c0_i32_2 = arith.constant 0 : i32
    return %c0_i32, %c0_i32_0, %c0_i32_1 : i32, i32, i32
  }
  func.func @transform_3(%arg0: i32) -> (i32, i32, i32) {
    %c0_i32 = arith.constant 0 : i32
    %c0_i32_0 = arith.constant 0 : i32
    %c0_i32_1 = arith.constant 0 : i32
    %c0_i32_2 = arith.constant 0 : i32
    return %c0_i32, %c0_i32_0, %c0_i32_1 : i32, i32, i32
  }
  func.func @transform_4(%arg0: i32) -> (i32, i32) {
    %c0_i32 = arith.constant 0 : i32
    %c0_i32_0 = arith.constant 0 : i32
    %c0_i32_1 = arith.constant 0 : i32
    return %c0_i32, %c0_i32_0 : i32, i32
  }
  func.func @transform_5(%arg0: i32) -> (i32, i32) {
    %c0_i32 = arith.constant 0 : i32
    %c0_i32_0 = arith.constant 0 : i32
    %c0_i32_1 = arith.constant 0 : i32
    return %c0_i32, %c0_i32_0 : i32, i32
  }
  func.func @transform_6(%arg0: i32) -> (i32, i32) {
    %c0_i32 = arith.constant 0 : i32
    %c0_i32_0 = arith.constant 0 : i32
    %c0_i32_1 = arith.constant 0 : i32
    return %c0_i32, %c0_i32_0 : i32, i32
  }
  func.func @transform_7(%arg0: i32) -> (i32, i32, i32) {
    %c0_i32 = arith.constant 0 : i32
    %c0_i32_0 = arith.constant 0 : i32
    %c0_i32_1 = arith.constant 0 : i32
    return %arg0, %c0_i32, %c0_i32_0 : i32, i32, i32
  }
}

</mosaic_0001>

<llo_original>
// kernel: tile.59
$region0: #{tile.59}
  %s0 = inlined_call_operand.vmem [shape: f32[16,8], index: 0, kind: input, shape index: {}]
  %s1 = inlined_call_operand.vmem [shape: f32[1,128], index: 1, kind: output, shape index: {}]
  $region1: #{tile.59} parent=0
    #allocation0 [shape = 'u8[4096]{0}', space=vmem, size = 0x1000, scoped, tag = 'scoped mem for output reshape']
    %v2 = vld [vmem:[%s0] sm:$0x1]
    %vm3 = vcmask 64512
    %4 = vst.msk [vmem:[#allocation0] sm:$0x1] %vm3, %v2
    %s5 = scalar_lea.vmem %s0, 15
    %v6 = vld [vmem:[%s5] sm:$0x1]
    %7 = vrot.lane.b32.xlu0 %v6, 120
    %v8 = vpop.permute.xlu0 %7
    %vm9 = vcmask 1048512
    %10 = vst.msk [vmem:[#allocation0] sm:$0x1] %vm9, %v8
    %s11 = scalar_lea.vmem %s0, 14
    %v12 = vld [vmem:[%s11] sm:$0x1]
    %13 = vrot.lane.b32.xlu0 %v12, 112
    %v14 = vpop.permute.xlu0 %13
    %vm15 = vcmask 982912
    %16 = vst.msk [vmem:[#allocation0] sm:$0x1] %vm15, %v14
    %s17 = scalar_lea.vmem %s0, 13
    %v18 = vld [vmem:[%s17] sm:$0x1]
    %19 = vrot.lane.b32.xlu0 %v18, 104
    %v20 = vpop.permute.xlu0 %19
    %vm21 = vcmask 917312
    %22 = vst.msk [vmem:[#allocation0] sm:$0x1] %vm21, %v20
    %s23 = scalar_lea.vmem %s0, 12
    %v24 = vld [vmem:[%s23] sm:$0x1]
    %25 = vrot.lane.b32.xlu0 %v24, 96
    %v26 = vpop.permute.xlu0 %25
    %vm27 = vcmask 851712
    %28 = vst.msk [vmem:[#allocation0] sm:$0x1] %vm27, %v26
    %s29 = scalar_lea.vmem %s0, 11
    %v30 = vld [vmem:[%s29] sm:$0x1]
    %31 = vrot.lane.b32.xlu0 %v30, 88
    %v32 = vpop.permute.xlu0 %31
    %vm33 = vcmask 786112
    %34 = vst.msk [vmem:[#allocation0] sm:$0x1] %vm33, %v32
    %s35 = scalar_lea.vmem %s0, 10
    %v36 = vld [vmem:[%s35] sm:$0x1]
    %37 = vrot.lane.b32.xlu0 %v36, 80
    %v38 = vpop.permute.xlu0 %37
    %vm39 = vcmask 720512
    %40 = vst.msk [vmem:[#allocation0] sm:$0x1] %vm39, %v38
    %s41 = scalar_lea.vmem %s0, 9
    %v42 = vld [vmem:[%s41] sm:$0x1]
    %43 = vrot.lane.b32.xlu0 %v42, 72
    %v44 = vpop.permute.xlu0 %43
    %vm45 = vcmask 654912
    %46 = vst.msk [vmem:[#allocation0] sm:$0x1] %vm45, %v44
    %s47 = scalar_lea.vmem %s0, 8
    %v48 = vld [vmem:[%s47] sm:$0x1]
    %49 = vrot.lane.b32.xlu0 %v48, 64
    %v50 = vpop.permute.xlu0 %49
    %vm51 = vcmask 589312
    %52 = vst.msk [vmem:[#allocation0] sm:$0x1] %vm51, %v50
    %s53 = scalar_lea.vmem %s0, 7
    %v54 = vld [vmem:[%s53] sm:$0x1]
    %55 = vrot.lane.b32.xlu0 %v54, 56
    %v56 = vpop.permute.xlu0 %55
    %vm57 = vcmask 523712
    %58 = vst.msk [vmem:[#allocation0] sm:$0x1] %vm57, %v56
    %s59 = scalar_lea.vmem %s0, 6
    %v60 = vld [vmem:[%s59] sm:$0x1]
    %61 = vrot.lane.b32.xlu0 %v60, 48
    %v62 = vpop.permute.xlu0 %61
    %vm63 = vcmask 458112
    %64 = vst.msk [vmem:[#allocation0] sm:$0x1] %vm63, %v62
    %s65 = scalar_lea.vmem %s0, 5
    %v66 = vld [vmem:[%s65] sm:$0x1]
    %67 = vrot.lane.b32.xlu0 %v66, 40
    %v68 = vpop.permute.xlu0 %67
    %vm69 = vcmask 392512
    %70 = vst.msk [vmem:[#allocation0] sm:$0x1] %vm69, %v68
    %s71 = scalar_lea.vmem %s0, 4
    %v72 = vld [vmem:[%s71] sm:$0x1]
    %73 = vrot.lane.b32.xlu0 %v72, 32
    %v74 = vpop.permute.xlu0 %73
    %vm75 = vcmask 326912
    %76 = vst.msk [vmem:[#allocation0] sm:$0x1] %vm75, %v74
    %s77 = scalar_lea.vmem %s0, 3
    %v78 = vld [vmem:[%s77] sm:$0x1]
    %79 = vrot.lane.b32.xlu0 %v78, 24
    %v80 = vpop.permute.xlu0 %79
    %vm81 = vcmask 261312
    %82 = vst.msk [vmem:[#allocation0] sm:$0x1] %vm81, %v80
    %s83 = scalar_lea.vmem %s0, 2
    %v84 = vld [vmem:[%s83] sm:$0x1]
    %85 = vrot.lane.b32.xlu0 %v84, 16
    %v86 = vpop.permute.xlu0 %85
    %vm87 = vcmask 195712
    %88 = vst.msk [vmem:[#allocation0] sm:$0x1] %vm87, %v86
    %s89 = scalar_lea.vmem %s0, 1
    %v90 = vld [vmem:[%s89] sm:$0x1]
    %91 = vrot.lane.b32.xlu0 %v90, 8
    %v92 = vpop.permute.xlu0 %91
    %vm93 = vcmask 130112
    %94 = vst.msk [vmem:[#allocation0] sm:$0x1] %vm93, %v92
    %s96 = sshllo.u32 0, 1
    %v98 = vld [vmem:[#allocation0] sm:%s96]
    %s99 = sshllo.u32 0, 1
    %100 = vst [vmem:[%s1] sm:%s99] %v98

// kernel: unet_bin_forward.7
$region0: #{unet_bin_forward.7}
  #allocation0 [shape = 'u32[]', space=smem, size = 0x4, offset = 0x4, fixed_abs, tag = 'smem constant byte address 0x4 - core index']
  #allocation1 [shape = 'u32[144,128]{1,0:T(1,128)}', space=vmem, size = 0x12000, scoped, tag = 'internal scratch']
  %s0 = inlined_call_operand.vmem [shape: f32[2,18,18], index: 0, kind: input, shape index: {}]
  %s1 = inlined_call_operand.vmem [shape: bf16[3,18,128], index: 1, kind: input, shape index: {}]
  %s2 = inlined_call_operand.vmem [shape: f32[1,128], index: 2, kind: input, shape index: {}]
  %s3 = inlined_call_operand.vmem [shape: f32[2,16,128], index: 3, kind: output, shape index: {}]
  %s4 = sld [smem:[#allocation0]]
  $region45: #{unet_bin_forward.7} parent=0
    _
  %s6 = ssub.s32 1, %s4
  %s7 = scalar_select 0, %s6, %s4
  loop: start=0, step=1, limit=4
  $region2: #{unet_bin_forward.7} parent=0 // loop_pre_header
    _
  $region3: #{unet_bin_forward.7} parent=0 // loop_header
    %s9 = sphi 0, %s13
    %p10 = scmp.ge.s32.totalorder %s9, 4
    %s19 = sphi 0, %s21
    %s22 = sphi 0, %s19
    %s23 = sphi 0, %s22
    %s39 = sphi 0, %s23
    %s43 = sphi 0, %s43
    %s45 = sphi 0, %s43
    %s46 = sphi 0, %s45
    %s60 = sphi 0, %s46
    %s64 = sphi 0, %s64
    %s66 = sphi 0, %s64
    %s67 = sphi 0, %s66
    %s81 = sphi 0, %s67
    %s87 = sphi 0, %s89
    %s90 = sphi 0, %s87
    %s91 = sphi 0, %s90
    %s107 = sphi 0, %s91
  $region4: #{unet_bin_forward.7} parent=0 // loop_header_branch
    %12 = sbr.rel (%p10) target = $region8
  $region5: #{unet_bin_forward.7} parent=0 // loop_body
    %s14 = ssub.s32 %s9, 1
    %s15 = ssub.s32 %s9, 2
    %s16 = sadd.s32 %s9, 1
    %s17 = ssub.s32 %s9, %s16
    %p18 = scmp.eq.s32.totalorder %s17, 0
    %s20 = sadd.s32 %s19, 1
    %s21 = scalar_select %p18, %s19, %s20
    %p24 = pneg %p18
    %p25 = scmp.eq.s32.totalorder %s9, 1
    %p26 = por %p24, %p25
    %p27 = scmp.ne.s32.totalorder %s19, %s22
    %p28 = scmp.eq.s32.totalorder %s9, 0
    %p29 = por %p27, %p28
    %p30 = scmp.ne.s32.totalorder %s19, %s22
    %p31 = scmp.eq.s32.totalorder %s14, 1
    %p32 = por %p30, %p31
    %p33 = scmp.ne.s32.totalorder %s22, %s23
    %p34 = scmp.eq.s32.totalorder %s14, 0
    %p35 = por %p33, %p34
    %p36 = scmp.ne.s32.totalorder %s22, %s23
    %p37 = scmp.eq.s32.totalorder %s15, 1
    %p38 = por %p36, %p37
    %p40 = scmp.ne.s32.totalorder %s23, %s39
    %p41 = scmp.eq.s32.totalorder %s15, 0
    %p42 = por %p40, %p41
    %s44 = sadd.s32 %s43, 1
    %p47 = scmp.eq.s32.totalorder %s9, 1
    %p48 = scmp.ne.s32.totalorder %s43, %s45
    %p49 = scmp.eq.s32.totalorder %s9, 0
    %p50 = por %p48, %p49
    %p51 = scmp.ne.s32.totalorder %s43, %s45
    %p52 = scmp.eq.s32.totalorder %s14, 1
    %p53 = por %p51, %p52
    %p54 = scmp.ne.s32.totalorder %s45, %s46
    %p55 = scmp.eq.s32.totalorder %s14, 0
    %p56 = por %p54, %p55
    %p57 = scmp.ne.s32.totalorder %s45, %s46
    %p58 = scmp.eq.s32.totalorder %s15, 1
    %p59 = por %p57, %p58
    %p61 = scmp.ne.s32.totalorder %s46, %s60
    %p62 = scmp.eq.s32.totalorder %s15, 0
    %p63 = por %p61, %p62
    %s65 = sadd.s32 %s64, 1
    %p68 = scmp.eq.s32.totalorder %s9, 1
    %p69 = scmp.ne.s32.totalorder %s64, %s66
    %p70 = scmp.eq.s32.totalorder %s9, 0
    %p71 = por %p69, %p70
    %p72 = scmp.ne.s32.totalorder %s64, %s66
    %p73 = scmp.eq.s32.totalorder %s14, 1
    %p74 = por %p72, %p73
    %p75 = scmp.ne.s32.totalorder %s66, %s67
    %p76 = scmp.eq.s32.totalorder %s14, 0
    %p77 = por %p75, %p76
    %p78 = scmp.ne.s32.totalorder %s66, %s67
    %p79 = scmp.eq.s32.totalorder %s15, 1
    %p80 = por %p78, %p79
    %p82 = scmp.ne.s32.totalorder %s67, %s81
    %p83 = scmp.eq.s32.totalorder %s15, 0
    %p84 = por %p82, %p83
    %s85 = ssub.s32 %s9, %s16
    %p86 = scmp.eq.s32.totalorder %s85, 0
    %s88 = sadd.s32 %s87, 1
    %s89 = scalar_select %p86, %s87, %s88
    %p92 = pneg %p86
    %p93 = scmp.eq.s32.totalorder %s9, 1
    %p94 = por %p92, %p93
    %p95 = scmp.ne.s32.totalorder %s87, %s90
    %p96 = scmp.eq.s32.totalorder %s9, 0
    %p97 = por %p95, %p96
    %p98 = scmp.ne.s32.totalorder %s87, %s90
    %p99 = scmp.eq.s32.totalorder %s14, 1
    %p100 = por %p98, %p99
    %p101 = scmp.ne.s32.totalorder %s90, %s91
    %p102 = scmp.eq.s32.totalorder %s14, 0
    %p103 = por %p101, %p102
    %p104 = scmp.ne.s32.totalorder %s90, %s91
    %p105 = scmp.eq.s32.totalorder %s15, 1
    %p106 = por %p104, %p105
    %p108 = scmp.ne.s32.totalorder %s91, %s107
    %p109 = scmp.eq.s32.totalorder %s15, 0
    %p110 = por %p108, %p109
    %p111 = scmp.le.s32.totalorder 1, %s9
    %p112 = scmp.lt.s32.totalorder %s9, 3
    %p113 = pnand %p111, %p112
    %p114 = pneg %p113
    // Predicated region
    $region9: #{unet_bin_forward.7} parent=5 // pred_check
      _
    $region10: #{unet_bin_forward.7} parent=5 // pred_check_branch
      %116 = sbr.rel (%p113) target = $region12
    $region11: #{unet_bin_forward.7} parent=5 // pred_region
      %s117 = ssub.s32 %s9, 1
      // Predicated region
      $region13: #{unet_bin_forward.7} parent=11 // pred_check
        %p118 = pneg %p56
      $region14: #{unet_bin_forward.7} parent=11 // pred_check_branch
        %120 = sbr.rel (%p118) target = $region16
      $region15: #{unet_bin_forward.7} parent=11 // pred_region
        _
      $region16: #{unet_bin_forward.7} parent=11 // pred_fallthru
        _
      // Predicated region
      $region17: #{unet_bin_forward.7} parent=11 // pred_check
        %p121 = pneg %p77
      $region18: #{unet_bin_forward.7} parent=11 // pred_check_branch
        %123 = sbr.rel (%p121) target = $region20
      $region19: #{unet_bin_forward.7} parent=11 // pred_region
        _
      $region20: #{unet_bin_forward.7} parent=11 // pred_fallthru
        _
    $region12: #{unet_bin_forward.7} parent=5 // pred_fallthru
      _
    %p124 = scmp.lt.s32.totalorder %s9, 2
    // Predicated region
    $region21: #{unet_bin_forward.7} parent=5 // pred_check
      %p125 = pneg %p124
    $region22: #{unet_bin_forward.7} parent=5 // pred_check_branch
      %127 = sbr.rel (%p125) target = $region24
    $region23: #{unet_bin_forward.7} parent=5 // pred_region
      // Predicated region
      $region25: #{unet_bin_forward.7} parent=23 // pred_check
        %p128 = pneg %p29
      $region26: #{unet_bin_forward.7} parent=23 // pred_check_branch
        %130 = sbr.rel (%p128) target = $region28
      $region27: #{unet_bin_forward.7} parent=23 // pred_region
        %p131 = scmp.lt.s32.totalorder %s9, 1
        %s132 = scalar_select %p131, %s9, 1
        %s133 = smul.addr %s132, 3
        %s134 = smul.addr %s133, 8
        %s135 = scalar_lea.vmem %s0, %s134
      $region28: #{unet_bin_forward.7} parent=23 // pred_fallthru
        _
    $region24: #{unet_bin_forward.7} parent=5 // pred_fallthru
      _
    %p136 = scmp.le.s32.totalorder 1, %s9
    %p137 = scmp.lt.s32.totalorder %s9, 3
    %p138 = pnand %p136, %p137
    %p139 = pneg %p138
    // Predicated region
    $region29: #{unet_bin_forward.7} parent=5 // pred_check
      _
    $region30: #{unet_bin_forward.7} parent=5 // pred_check_branch
      %141 = sbr.rel (%p138) target = $region32
    $region31: #{unet_bin_forward.7} parent=5 // pred_region
      %s142 = ssub.s32 %s9, 1
      %p143 = scmp.lt.s32.totalorder %s14, 1
      %s144 = scalar_select %p143, %s14, 1
      %s145 = smul.addr %s144, 3
      %s146 = smul.addr %s145, 8
      %s147 = scalar_lea.vmem %s0, %s146
      %p148 = pneg %p35
      %p149 = pneg %p32
      %p150 = pneg %p56
      %p151 = pneg %p53
      %p152 = pneg %p77
      %p153 = pneg %p74
      %p154 = pneg %p103
      %p155 = pneg %p100
      %p156 = scmp.lt.s32.totalorder %s14, 1
      %s157 = scalar_select %p156, %s14, 1
      %s158 = smul.addr %s157, 2
      %s159 = smul.addr %s158, 8
      %s160 = scalar_lea.vmem %s3, %s159
      %p161 = scmp.lt.s32.totalorder %s14, 1
      %s162 = scalar_select %p161, %s14, 1
      %s163 = smul.addr %s162, 3
      %s164 = smul.addr %s163, 8
      %s165 = scalar_lea.vmem %s0, %s164
      %p166 = scmp.lt.s32.totalorder %s14, 1
      %s167 = scalar_select %p166, %s14, 1
      %s168 = smul.addr %s167, 2
      %s169 = smul.addr %s168, 8
      %s170 = scalar_lea.vmem %s3, %s169
      %v172 = vld [vmem:[%s165] sm:$0xff]
      %v173 = vld [vmem:[%s165 + $0x8] sm:$0xff]
      %v174 = vld [vmem:[%s165 + $0x10] sm:$0x3]
      %v175 = vpack.c.bf16 %v173, %v172
      %v176 = vld [vmem:[%s1] sm:$0xf]
      %v177 = vld [vmem:[%s1 + $0x4] sm:$0xf]
      %v178 = vld [vmem:[%s1 + $0x8] sm:$0x1]
      %v179 = vpack.c.bf16 %v174, %v174
      %s180 = scalar_lea.vmem %s1, 12
      %v181 = vld [vmem:[%s180] sm:$0xf]
      %v182 = vld [vmem:[%s180 + $0x4] sm:$0xf]
      %v183 = vld [vmem:[%s180 + $0x8] sm:$0x1]
      %vm184 = vsmask.f32 7424
      %v186 = vshrl.u32 %v175, 16
      %v188 = vshll.u32 %v175, 16
      %v190 = vrot.slane %v188, 1
      %v191 = vor.u32 %v186, %v190
      %v193 = vshll.u32 %v179, 16
      %v195 = vrot.slane %v193, 1
      %v196 = vsel %vm184, %v191, %v195
      %v200 = vunpack.c.l.b16 %v181
      %v201 = vunpack.c.l.b16 %v182
      %v202 = vunpack.c.l.b16 %v183
      %v203 = vpack.c.b16 %v201, %v200
      %v204 = vpack.c.b16 %v202, %v202
      %vm206 = vcmask 146432
      %v208 = vsel %vm206, %v196, 0
      %vm210 = vcmask 1040384
      %v212 = vsel %vm210, %v204, 0
      %214 = vmatprep.subr.bf16.mxu0 0
      %215 = vmatpush1.bf16.msra.mxu0 %v203
      %216 = vmatprep.subr.bf16.mxu0 0
      %217 = vmatpush1.bf16.msra.mxu0 %v212
      %218 = vmatprep.subr.bf16.mxu0 0
      %219 = vmatpush1.bf16.msra.mxu0 0
      %220 = vmatprep.subr.bf16.mxu0 0
      %221 = vmatpush1.bf16.msra.mxu0 0
      %222 = vmatprep.subr.bf16.mxu0 0
      %223 = vmatpush1.bf16.msra.mxu0 0
      %224 = vmatprep.subr.bf16.mxu0 0
      %225 = vmatpush1.bf16.msra.mxu0 0
      %226 = vmatprep.subr.bf16.mxu0 0
      %227 = vmatpush1.bf16.msra.mxu0 0
      %228 = vmatprep.subr.bf16.mxu0 0
      %229 = vmatpush1.bf16.msra.mxu0 0
      %230 = vmatprep.subr.bf16.mxu0 0
      %231 = vmatpush1.bf16.msra.mxu0 0
      %232 = vmatprep.subr.bf16.mxu0 0
      %233 = vmatpush1.bf16.msra.mxu0 0
      %234 = vmatprep.subr.bf16.mxu0 0
      %235 = vmatpush1.bf16.msra.mxu0 0
      %236 = vmatprep.subr.bf16.mxu0 0
      %237 = vmatpush1.bf16.msra.mxu0 0
      %238 = vmatprep.subr.bf16.mxu0 0
      %239 = vmatpush1.bf16.msra.mxu0 0
      %240 = vmatprep.subr.bf16.mxu0 0
      %241 = vmatpush1.bf16.msra.mxu0 0
      %242 = vmatprep.subr.bf16.mxu0 0
      %243 = vmatpush1.bf16.msra.mxu0 0
      %244 = vmatprep.subr.bf16.mxu0 0
      %245 = vmatpush1.bf16.msra.mxu0 0
      %246 = vmatprep.mubr.bf16.mxu0 0
      %247 = vmatmul.mubr.bf16.gmra.mrb[0].mxu0 %v208
      %v248 = vpop.f32.mrb[0].mxu0
      %v249 = vadd.f32 0.0, %v248
      %v250 = vpop.f32.mrb[0].mxu0
      %v251 = vpop.f32.mrb[0].mxu0
      %v252 = vadd.f32 0.0, %v251
      %v253 = vpop.f32.mrb[0].mxu0
      %254 = vdwg.mxu0
      %v258 = vunpack.c.l.b16 %v176
      %v259 = vunpack.c.l.b16 %v177
      %v260 = vunpack.c.l.b16 %v178
      %v261 = vpack.c.b16 %v259, %v258
      %v262 = vpack.c.b16 %v260, %v260
      %v264 = vsel %vm206, %v175, 0
      %v267 = vsel %vm210, %v262, 0
      %269 = vmatprep.subr.bf16.mxu0 0
      %270 = vmatpush1.bf16.msra.mxu0 %v261
      %271 = vmatprep.subr.bf16.mxu0 0
      %272 = vmatpush1.bf16.msra.mxu0 %v267
      %273 = vmatprep.subr.bf16.mxu0 0
      %274 = vmatpush1.bf16.msra.mxu0 0
      %275 = vmatprep.subr.bf16.mxu0 0
      %276 = vmatpush1.bf16.msra.mxu0 0
      %277 = vmatprep.subr.bf16.mxu0 0
      %278 = vmatpush1.bf16.msra.mxu0 0
      %279 = vmatprep.subr.bf16.mxu0 0
      %280 = vmatpush1.bf16.msra.mxu0 0
      %281 = vmatprep.subr.bf16.mxu0 0
      %282 = vmatpush1.bf16.msra.mxu0 0
      %283 = vmatprep.subr.bf16.mxu0 0
      %284 = vmatpush1.bf16.msra.mxu0 0
      %285 = vmatprep.subr.bf16.mxu0 0
      %286 = vmatpush1.bf16.msra.mxu0 0
      %287 = vmatprep.subr.bf16.mxu0 0
      %288 = vmatpush1.bf16.msra.mxu0 0
      %289 = vmatprep.subr.bf16.mxu0 0
      %290 = vmatpush1.bf16.msra.mxu0 0
      %291 = vmatprep.subr.bf16.mxu0 0
      %292 = vmatpush1.bf16.msra.mxu0 0
      %293 = vmatprep.subr.bf16.mxu0 0
      %294 = vmatpush1.bf16.msra.mxu0 0
      %295 = vmatprep.subr.bf16.mxu0 0
      %296 = vmatpush1.bf16.msra.mxu0 0
      %297 = vmatprep.subr.bf16.mxu0 0
      %298 = vmatpush1.bf16.msra.mxu0 0
      %299 = vmatprep.subr.bf16.mxu0 0
      %300 = vmatpush1.bf16.msra.mxu0 0
      %301 = vmatprep.mubr.bf16.mxu0 0
      %302 = vmatmul.mubr.bf16.gmra.mrb[0].mxu0 %v264
      %v303 = vpop.f32.mrb[0].mxu0
      %v304 = vadd.f32 %v249, %v303
      %v305 = vpop.f32.mrb[0].mxu0
      %v306 = vpop.f32.mrb[0].mxu0
      %v307 = vadd.f32 %v252, %v306
      %v308 = vpop.f32.mrb[0].mxu0
      %309 = vdwg.mxu0
      %s310 = scalar_lea.vmem %s1, 24
      %v311 = vld [vmem:[%s310] sm:$0xf]
      %v312 = vld [vmem:[%s310 + $0x4] sm:$0xf]
      %v313 = vld [vmem:[%s310 + $0x8] sm:$0x1]
      %vm316 = vcmask 1046528
      %v317 = vrot.slane %v175, 1
      %v318 = vrot.slane %v179, 1
      %v319 = vsel %vm316, %v317, %v318
      %v323 = vunpack.c.l.b16 %v311
      %v324 = vunpack.c.l.b16 %v312
      %v325 = vunpack.c.l.b16 %v313
      %v326 = vpack.c.b16 %v324, %v323
      %v327 = vpack.c.b16 %v325, %v325
      %v330 = vsel %vm206, %v319, 0
      %v333 = vsel %vm210, %v327, 0
      %335 = vmatprep.subr.bf16.mxu0 0
      %336 = vmatpush1.bf16.msra.mxu0 %v326
      %337 = vmatprep.subr.bf16.mxu0 0
      %338 = vmatpush1.bf16.msra.mxu0 %v333
      %339 = vmatprep.subr.bf16.mxu0 0
      %340 = vmatpush1.bf16.msra.mxu0 0
      %341 = vmatprep.subr.bf16.mxu0 0
      %342 = vmatpush1.bf16.msra.mxu0 0
      %343 = vmatprep.subr.bf16.mxu0 0
      %344 = vmatpush1.bf16.msra.mxu0 0
      %345 = vmatprep.subr.bf16.mxu0 0
      %346 = vmatpush1.bf16.msra.mxu0 0
      %347 = vmatprep.subr.bf16.mxu0 0
      %348 = vmatpush1.bf16.msra.mxu0 0
      %349 = vmatprep.subr.bf16.mxu0 0
      %350 = vmatpush1.bf16.msra.mxu0 0
      %351 = vmatprep.subr.bf16.mxu0 0
      %352 = vmatpush1.bf16.msra.mxu0 0
      %353 = vmatprep.subr.bf16.mxu0 0
      %354 = vmatpush1.bf16.msra.mxu0 0
      %355 = vmatprep.subr.bf16.mxu0 0
      %356 = vmatpush1.bf16.msra.mxu0 0
      %357 = vmatprep.subr.bf16.mxu0 0
      %358 = vmatpush1.bf16.msra.mxu0 0
      %359 = vmatprep.subr.bf16.mxu0 0
      %360 = vmatpush1.bf16.msra.mxu0 0
      %361 = vmatprep.subr.bf16.mxu0 0
      %362 = vmatpush1.bf16.msra.mxu0 0
      %363 = vmatprep.subr.bf16.mxu0 0
      %364 = vmatpush1.bf16.msra.mxu0 0
      %365 = vmatprep.subr.bf16.mxu0 0
      %366 = vmatpush1.bf16.msra.mxu0 0
      %367 = vmatprep.mubr.bf16.mxu0 0
      %368 = vmatmul.mubr.bf16.gmra.mrb[0].mxu0 %v330
      %v369 = vpop.f32.mrb[0].mxu0
      %v370 = vadd.f32 0.0, %v369
      %v371 = vpop.f32.mrb[0].mxu0
      %v372 = vpop.f32.mrb[0].mxu0
      %v373 = vadd.f32 0.0, %v372
      %v374 = vpop.f32.mrb[0].mxu0
      %375 = vdwg.mxu0
      %v376 = vadd.f32 %v304, %v370
      %v377 = vadd.f32 %v307, %v373
      %v378 = vld [vmem:[%s2] sm:$0x1]
      %v380 = vlaneseq
      %v381 = vshrl.u32 %v380, 7
      %v382 = vsub.s32 0, %v381
      %v383 = vrot.slane %v378, %v382
      %v385 = vadd.f32 %v376, %v383
      %v386 = vadd.f32 %v377, %v383
      %v387 = vmax.f32 %v385, 0.0
      %v388 = vmax.f32 %v386, 0.0
      %389 = vst [vmem:[%s170] sm:$0xff] %v387
      %390 = vst [vmem:[%s170 + $0x8] sm:$0xff] %v388
      %p391 = scmp.lt.s32.totalorder %s14, 1
      %s392 = scalar_select %p391, %s14, 1
      %s393 = smul.addr %s392, 2
      %s394 = smul.addr %s393, 8
      %s395 = scalar_lea.vmem %s3, %s394
      // Predicated region
      $region33: #{unet_bin_forward.7} parent=31 // pred_check
        %p396 = pneg %p100
      $region34: #{unet_bin_forward.7} parent=31 // pred_check_branch
        %398 = sbr.rel (%p396) target = $region36
      $region35: #{unet_bin_forward.7} parent=31 // pred_region
        _
      $region36: #{unet_bin_forward.7} parent=31 // pred_fallthru
        _
    $region32: #{unet_bin_forward.7} parent=5 // pred_fallthru
      _
    %p399 = scmp.le.s32.totalorder 2, %s9
    // Predicated region
    $region37: #{unet_bin_forward.7} parent=5 // pred_check
      %p400 = pneg %p399
    $region38: #{unet_bin_forward.7} parent=5 // pred_check_branch
      %402 = sbr.rel (%p400) target = $region40
    $region39: #{unet_bin_forward.7} parent=5 // pred_region
      %s403 = ssub.s32 %s9, 2
      // Predicated region
      $region41: #{unet_bin_forward.7} parent=39 // pred_check
        %p404 = pneg %p106
      $region42: #{unet_bin_forward.7} parent=39 // pred_check_branch
        %406 = sbr.rel (%p404) target = $region44
      $region43: #{unet_bin_forward.7} parent=39 // pred_region
        %p407 = scmp.lt.s32.totalorder %s15, 1
        %s408 = scalar_select %p407, %s15, 1
        %s409 = smul.addr %s408, 2
        %s410 = smul.addr %s409, 8
        %s411 = scalar_lea.vmem %s3, %s410
      $region44: #{unet_bin_forward.7} parent=39 // pred_fallthru
        _
    $region40: #{unet_bin_forward.7} parent=5 // pred_fallthru
      _
  $region6: #{unet_bin_forward.7} parent=0 // loop_footer
    %s13 = sadd.s32 1, %s9
  $region7: #{unet_bin_forward.7} parent=0 // loop_footer_branch
    %8 = sbr.rel target = $region3
  $region8: #{unet_bin_forward.7} parent=0 // loop_exit
    _

// kernel: tile.63
$region0: #{tile.63}
  #allocation0 [shape = 's32[1]{0}', space=sflag, size = 0x4, scoped, tag = 'scoped memory for tile.63']
  %s0 = inlined_call_operand.vmem [shape: f32[16], index: 0, kind: input, shape index: {}]
  %s1 = inlined_call_operand.vmem [shape: f32[8,16], index: 1, kind: output, shape index: {}]
  // Predicated region
  $region2: #{tile.63} parent=0 // pred_check
    _
  $region3: #{tile.63} parent=0 // pred_check_branch
    %3 = sbr.rel (0) target = $region5
  $region4: #{tile.63} parent=0 // pred_region
    _
  $region5: #{tile.63} parent=0 // pred_fallthru
    _
  %v4 = vld [vmem:[%s0] ss:$0 sm:$0xff]
  %5 = vst [vmem:[%s1] sm:$0xff] %v4

// kernel: tile.64
$region0: #{tile.64}
  %s0 = inlined_call_operand.vmem [shape: f32[8,16], index: 0, kind: input, shape index: {}]
  %s1 = inlined_call_operand.vmem [shape: f32[1,128], index: 1, kind: output, shape index: {}]
  $region1: #{tile.64} parent=0
    #allocation0 [shape = 'u8[4096]{0}', space=vmem, size = 0x1000, scoped, tag = 'scoped mem for output reshape']
    %v2 = vld [vmem:[%s0] sm:$0x1]
    %vm3 = vcmask 130048
    %4 = vst.msk [vmem:[#allocation0] sm:$0x1] %vm3, %v2
    %s5 = scalar_lea.vmem %s0, 7
    %v6 = vld [vmem:[%s5] sm:$0x1]
    %7 = vrot.lane.b32.xlu0 %v6, 112
    %v8 = vpop.permute.xlu0 %7
    %vm9 = vcmask 1048448
    %10 = vst.msk [vmem:[#allocation0] sm:$0x1] %vm9, %v8
    %s11 = scalar_lea.vmem %s0, 6
    %v12 = vld [vmem:[%s11] sm:$0x1]
    %13 = vrot.lane.b32.xlu0 %v12, 96
    %v14 = vpop.permute.xlu0 %13
    %vm15 = vcmask 917248
    %16 = vst.msk [vmem:[#allocation0] sm:$0x1] %vm15, %v14
    %s17 = scalar_lea.vmem %s0, 5
    %v18 = vld [vmem:[%s17] sm:$0x1]
    %19 = vrot.lane.b32.xlu0 %v18, 80
    %v20 = vpop.permute.xlu0 %19
    %vm21 = vcmask 786048
    %22 = vst.msk [vmem:[#allocation0] sm:$0x1] %vm21, %v20
    %s23 = scalar_lea.vmem %s0, 4
    %v24 = vld [vmem:[%s23] sm:$0x1]
    %25 = vrot.lane.b32.xlu0 %v24, 64
    %v26 = vpop.permute.xlu0 %25
    %vm27 = vcmask 654848
    %28 = vst.msk [vmem:[#allocation0] sm:$0x1] %vm27, %v26
    %s29 = scalar_lea.vmem %s0, 3
    %v30 = vld [vmem:[%s29] sm:$0x1]
    %31 = vrot.lane.b32.xlu0 %v30, 48
    %v32 = vpop.permute.xlu0 %31
    %vm33 = vcmask 523648
    %34 = vst.msk [vmem:[#allocation0] sm:$0x1] %vm33, %v32
    %s35 = scalar_lea.vmem %s0, 2
    %v36 = vld [vmem:[%s35] sm:$0x1]
    %37 = vrot.lane.b32.xlu0 %v36, 32
    %v38 = vpop.permute.xlu0 %37
    %vm39 = vcmask 392448
    %40 = vst.msk [vmem:[#allocation0] sm:$0x1] %vm39, %v38
    %s41 = scalar_lea.vmem %s0, 1
    %v42 = vld [vmem:[%s41] sm:$0x1]
    %43 = vrot.lane.b32.xlu0 %v42, 16
    %v44 = vpop.permute.xlu0 %43
    %vm45 = vcmask 261248
    %46 = vst.msk [vmem:[#allocation0] sm:$0x1] %vm45, %v44
    %s48 = sshllo.u32 0, 1
    %v50 = vld [vmem:[#allocation0] sm:%s48]
    %s51 = sshllo.u32 0, 1
    %52 = vst [vmem:[%s1] sm:%s51] %v50

// kernel: unet_bin_forward.8
$region0: #{unet_bin_forward.8}
  #allocation0 [shape = 'u32[]', space=smem, size = 0x4, offset = 0x4, fixed_abs, tag = 'smem constant byte address 0x4 - core index']
  #allocation1 [shape = 'u32[144,128]{1,0:T(1,128)}', space=vmem, size = 0x12000, scoped, tag = 'internal scratch']
  %s0 = inlined_call_operand.vmem [shape: f32[2,10,80], index: 0, kind: input, shape index: {}]
  %s1 = inlined_call_operand.vmem [shape: f32[2,10,80], index: 1, kind: input, shape index: {}]
  %s2 = inlined_call_operand.vmem [shape: f32[2,10,80], index: 2, kind: input, shape index: {}]
  %s3 = inlined_call_operand.vmem [shape: f32[2,10,80], index: 3, kind: input, shape index: {}]
  %s4 = inlined_call_operand.vmem [shape: bf16[3,80,128], index: 4, kind: input, shape index: {}]
  %s5 = inlined_call_operand.vmem [shape: f32[1,128], index: 5, kind: input, shape index: {}]
  %s6 = inlined_call_operand.vmem [shape: f32[2,8,128], index: 6, kind: output, shape index: {}]
  %s7 = sld [smem:[#allocation0]]
  $region57: #{unet_bin_forward.8} parent=0
    _
  %s9 = ssub.s32 1, %s7
  %s10 = scalar_select 0, %s9, %s7
  loop: start=0, step=1, limit=4
  $region2: #{unet_bin_forward.8} parent=0 // loop_pre_header
    _
  $region3: #{unet_bin_forward.8} parent=0 // loop_header
    %s12 = sphi 0, %s16
    %p13 = scmp.ge.s32.totalorder %s12, 4
    %s22 = sphi 0, %s24
    %s25 = sphi 0, %s22
    %s26 = sphi 0, %s25
    %s42 = sphi 0, %s26
    %s48 = sphi 0, %s50
    %s51 = sphi 0, %s48
    %s52 = sphi 0, %s51
    %s68 = sphi 0, %s52
    %s74 = sphi 0, %s76
    %s77 = sphi 0, %s74
    %s78 = sphi 0, %s77
    %s94 = sphi 0, %s78
    %s100 = sphi 0, %s102
    %s103 = sphi 0, %s100
    %s104 = sphi 0, %s103
    %s120 = sphi 0, %s104
    %s124 = sphi 0, %s124
    %s126 = sphi 0, %s124
    %s127 = sphi 0, %s126
    %s141 = sphi 0, %s127
    %s145 = sphi 0, %s145
    %s147 = sphi 0, %s145
    %s148 = sphi 0, %s147
    %s162 = sphi 0, %s148
    %s168 = sphi 0, %s170
    %s171 = sphi 0, %s168
    %s172 = sphi 0, %s171
    %s188 = sphi 0, %s172
  $region4: #{unet_bin_forward.8} parent=0 // loop_header_branch
    %15 = sbr.rel (%p13) target = $region8
  $region5: #{unet_bin_forward.8} parent=0 // loop_body
    %s17 = ssub.s32 %s12, 1
    %s18 = ssub.s32 %s12, 2
    %s19 = sadd.s32 %s12, 1
    %s20 = ssub.s32 %s12, %s19
    %p21 = scmp.eq.s32.totalorder %s20, 0
    %s23 = sadd.s32 %s22, 1
    %s24 = scalar_select %p21, %s22, %s23
    %p27 = pneg %p21
    %p28 = scmp.eq.s32.totalorder %s12, 1
    %p29 = por %p27, %p28
    %p30 = scmp.ne.s32.totalorder %s22, %s25
    %p31 = scmp.eq.s32.totalorder %s12, 0
    %p32 = por %p30, %p31
    %p33 = scmp.ne.s32.totalorder %s22, %s25
    %p34 = scmp.eq.s32.totalorder %s17, 1
    %p35 = por %p33, %p34
    %p36 = scmp.ne.s32.totalorder %s25, %s26
    %p37 = scmp.eq.s32.totalorder %s17, 0
    %p38 = por %p36, %p37
    %p39 = scmp.ne.s32.totalorder %s25, %s26
    %p40 = scmp.eq.s32.totalorder %s18, 1
    %p41 = por %p39, %p40
    %p43 = scmp.ne.s32.totalorder %s26, %s42
    %p44 = scmp.eq.s32.totalorder %s18, 0
    %p45 = por %p43, %p44
    %s46 = ssub.s32 %s12, %s19
    %p47 = scmp.eq.s32.totalorder %s46, 0
    %s49 = sadd.s32 %s48, 1
    %s50 = scalar_select %p47, %s48, %s49
    %p53 = pneg %p47
    %p54 = scmp.eq.s32.totalorder %s12, 1
    %p55 = por %p53, %p54
    %p56 = scmp.ne.s32.totalorder %s48, %s51
    %p57 = scmp.eq.s32.totalorder %s12, 0
    %p58 = por %p56, %p57
    %p59 = scmp.ne.s32.totalorder %s48, %s51
    %p60 = scmp.eq.s32.totalorder %s17, 1
    %p61 = por %p59, %p60
    %p62 = scmp.ne.s32.totalorder %s51, %s52
    %p63 = scmp.eq.s32.totalorder %s17, 0
    %p64 = por %p62, %p63
    %p65 = scmp.ne.s32.totalorder %s51, %s52
    %p66 = scmp.eq.s32.totalorder %s18, 1
    %p67 = por %p65, %p66
    %p69 = scmp.ne.s32.totalorder %s52, %s68
    %p70 = scmp.eq.s32.totalorder %s18, 0
    %p71 = por %p69, %p70
    %s72 = ssub.s32 %s12, %s19
    %p73 = scmp.eq.s32.totalorder %s72, 0
    %s75 = sadd.s32 %s74, 1
    %s76 = scalar_select %p73, %s74, %s75
    %p79 = pneg %p73
    %p80 = scmp.eq.s32.totalorder %s12, 1
    %p81 = por %p79, %p80
    %p82 = scmp.ne.s32.totalorder %s74, %s77
    %p83 = scmp.eq.s32.totalorder %s12, 0
    %p84 = por %p82, %p83
    %p85 = scmp.ne.s32.totalorder %s74, %s77
    %p86 = scmp.eq.s32.totalorder %s17, 1
    %p87 = por %p85, %p86
    %p88 = scmp.ne.s32.totalorder %s77, %s78
    %p89 = scmp.eq.s32.totalorder %s17, 0
    %p90 = por %p88, %p89
    %p91 = scmp.ne.s32.totalorder %s77, %s78
    %p92 = scmp.eq.s32.totalorder %s18, 1
    %p93 = por %p91, %p92
    %p95 = scmp.ne.s32.totalorder %s78, %s94
    %p96 = scmp.eq.s32.totalorder %s18, 0
    %p97 = por %p95, %p96
    %s98 = ssub.s32 %s12, %s19
    %p99 = scmp.eq.s32.totalorder %s98, 0
    %s101 = sadd.s32 %s100, 1
    %s102 = scalar_select %p99, %s100, %s101
    %p105 = pneg %p99
    %p106 = scmp.eq.s32.totalorder %s12, 1
    %p107 = por %p105, %p106
    %p108 = scmp.ne.s32.totalorder %s100, %s103
    %p109 = scmp.eq.s32.totalorder %s12, 0
    %p110 = por %p108, %p109
    %p111 = scmp.ne.s32.totalorder %s100, %s103
    %p112 = scmp.eq.s32.totalorder %s17, 1
    %p113 = por %p111, %p112
    %p114 = scmp.ne.s32.totalorder %s103, %s104
    %p115 = scmp.eq.s32.totalorder %s17, 0
    %p116 = por %p114, %p115
    %p117 = scmp.ne.s32.totalorder %s103, %s104
    %p118 = scmp.eq.s32.totalorder %s18, 1
    %p119 = por %p117, %p118
    %p121 = scmp.ne.s32.totalorder %s104, %s120
    %p122 = scmp.eq.s32.totalorder %s18, 0
    %p123 = por %p121, %p122
    %s125 = sadd.s32 %s124, 1
    %p128 = scmp.eq.s32.totalorder %s12, 1
    %p129 = scmp.ne.s32.totalorder %s124, %s126
    %p130 = scmp.eq.s32.totalorder %s12, 0
    %p131 = por %p129, %p130
    %p132 = scmp.ne.s32.totalorder %s124, %s126
    %p133 = scmp.eq.s32.totalorder %s17, 1
    %p134 = por %p132, %p133
    %p135 = scmp.ne.s32.totalorder %s126, %s127
    %p136 = scmp.eq.s32.totalorder %s17, 0
    %p137 = por %p135, %p136
    %p138 = scmp.ne.s32.totalorder %s126, %s127
    %p139 = scmp.eq.s32.totalorder %s18, 1
    %p140 = por %p138, %p139
    %p142 = scmp.ne.s32.totalorder %s127, %s141
    %p143 = scmp.eq.s32.totalorder %s18, 0
    %p144 = por %p142, %p143
    %s146 = sadd.s32 %s145, 1
    %p149 = scmp.eq.s32.totalorder %s12, 1
    %p150 = scmp.ne.s32.totalorder %s145, %s147
    %p151 = scmp.eq.s32.totalorder %s12, 0
    %p152 = por %p150, %p151
    %p153 = scmp.ne.s32.totalorder %s145, %s147
    %p154 = scmp.eq.s32.totalorder %s17, 1
    %p155 = por %p153, %p154
    %p156 = scmp.ne.s32.totalorder %s147, %s148
    %p157 = scmp.eq.s32.totalorder %s17, 0
    %p158 = por %p156, %p157
    %p159 = scmp.ne.s32.totalorder %s147, %s148
    %p160 = scmp.eq.s32.totalorder %s18, 1
    %p161 = por %p159, %p160
    %p163 = scmp.ne.s32.totalorder %s148, %s162
    %p164 = scmp.eq.s32.totalorder %s18, 0
    %p165 = por %p163, %p164
    %s166 = ssub.s32 %s12, %s19
    %p167 = scmp.eq.s32.totalorder %s166, 0
    %s169 = sadd.s32 %s168, 1
    %s170 = scalar_select %p167, %s168, %s169
    %p173 = pneg %p167
    %p174 = scmp.eq.s32.totalorder %s12, 1
    %p175 = por %p173, %p174
    %p176 = scmp.ne.s32.totalorder %s168, %s171
    %p177 = scmp.eq.s32.totalorder %s12, 0
    %p178 = por %p176, %p177
    %p179 = scmp.ne.s32.totalorder %s168, %s171
    %p180 = scmp.eq.s32.totalorder %s17, 1
    %p181 = por %p179, %p180
    %p182 = scmp.ne.s32.totalorder %s171, %s172
    %p183 = scmp.eq.s32.totalorder %s17, 0
    %p184 = por %p182, %p183
    %p185 = scmp.ne.s32.totalorder %s171, %s172
    %p186 = scmp.eq.s32.totalorder %s18, 1
    %p187 = por %p185, %p186
    %p189 = scmp.ne.s32.totalorder %s172, %s188
    %p190 = scmp.eq.s32.totalorder %s18, 0
    %p191 = por %p189, %p190
    %p192 = scmp.le.s32.totalorder 1, %s12
    %p193 = scmp.lt.s32.totalorder %s12, 3
    %p194 = pnand %p192, %p193
    %p195 = pneg %p194
    // Predicated region
    $region9: #{unet_bin_forward.8} parent=5 // pred_check
      _
    $region10: #{unet_bin_forward.8} parent=5 // pred_check_branch
      %197 = sbr.rel (%p194) target = $region12
    $region11: #{unet_bin_forward.8} parent=5 // pred_region
      %s198 = ssub.s32 %s12, 1
      // Predicated region
      $region13: #{unet_bin_forward.8} parent=11 // pred_check
        %p199 = pneg %p137
      $region14: #{unet_bin_forward.8} parent=11 // pred_check_branch
        %201 = sbr.rel (%p199) target = $region16
      $region15: #{unet_bin_forward.8} parent=11 // pred_region
        _
      $region16: #{unet_bin_forward.8} parent=11 // pred_fallthru
        _
      // Predicated region
      $region17: #{unet_bin_forward.8} parent=11 // pred_check
        %p202 = pneg %p158
      $region18: #{unet_bin_forward.8} parent=11 // pred_check_branch
        %204 = sbr.rel (%p202) target = $region20
      $region19: #{unet_bin_forward.8} parent=11 // pred_region
        _
      $region20: #{unet_bin_forward.8} parent=11 // pred_fallthru
        _
    $region12: #{unet_bin_forward.8} parent=5 // pred_fallthru
      _
    %p205 = scmp.lt.s32.totalorder %s12, 2
    // Predicated region
    $region21: #{unet_bin_forward.8} parent=5 // pred_check
      %p206 = pneg %p205
    $region22: #{unet_bin_forward.8} parent=5 // pred_check_branch
      %208 = sbr.rel (%p206) target = $region24
    $region23: #{unet_bin_forward.8} parent=5 // pred_region
      // Predicated region
      $region25: #{unet_bin_forward.8} parent=23 // pred_check
        %p209 = pneg %p32
      $region26: #{unet_bin_forward.8} parent=23 // pred_check_branch
        %211 = sbr.rel (%p209) target = $region28
      $region27: #{unet_bin_forward.8} parent=23 // pred_region
        %p212 = scmp.lt.s32.totalorder %s12, 1
        %s213 = scalar_select %p212, %s12, 1
        %s214 = smul.addr %s213, 2
        %s215 = smul.addr %s214, 8
        %s216 = scalar_lea.vmem %s0, %s215
      $region28: #{unet_bin_forward.8} parent=23 // pred_fallthru
        _
      // Predicated region
      $region29: #{unet_bin_forward.8} parent=23 // pred_check
        %p217 = pneg %p58
      $region30: #{unet_bin_forward.8} parent=23 // pred_check_branch
        %219 = sbr.rel (%p217) target = $region32
      $region31: #{unet_bin_forward.8} parent=23 // pred_region
        %p220 = scmp.lt.s32.totalorder %s12, 1
        %s221 = scalar_select %p220, %s12, 1
        %s222 = smul.addr %s221, 2
        %s223 = smul.addr %s222, 8
        %s224 = scalar_lea.vmem %s1, %s223
      $region32: #{unet_bin_forward.8} parent=23 // pred_fallthru
        _
      // Predicated region
      $region33: #{unet_bin_forward.8} parent=23 // pred_check
        %p225 = pneg %p84
      $region34: #{unet_bin_forward.8} parent=23 // pred_check_branch
        %227 = sbr.rel (%p225) target = $region36
      $region35: #{unet_bin_forward.8} parent=23 // pred_region
        %p228 = scmp.lt.s32.totalorder %s12, 1
        %s229 = scalar_select %p228, %s12, 1
        %s230 = smul.addr %s229, 2
        %s231 = smul.addr %s230, 8
        %s232 = scalar_lea.vmem %s2, %s231
      $region36: #{unet_bin_forward.8} parent=23 // pred_fallthru
        _
      // Predicated region
      $region37: #{unet_bin_forward.8} parent=23 // pred_check
        %p233 = pneg %p110
      $region38: #{unet_bin_forward.8} parent=23 // pred_check_branch
        %235 = sbr.rel (%p233) target = $region40
      $region39: #{unet_bin_forward.8} parent=23 // pred_region
        %p236 = scmp.lt.s32.totalorder %s12, 1
        %s237 = scalar_select %p236, %s12, 1
        %s238 = smul.addr %s237, 2
        %s239 = smul.addr %s238, 8
        %s240 = scalar_lea.vmem %s3, %s239
      $region40: #{unet_bin_forward.8} parent=23 // pred_fallthru
        _
    $region24: #{unet_bin_forward.8} parent=5 // pred_fallthru
      _
    %p241 = scmp.le.s32.totalorder 1, %s12
    %p242 = scmp.lt.s32.totalorder %s12, 3
    %p243 = pnand %p241, %p242
    %p244 = pneg %p243
    // Predicated region
    $region41: #{unet_bin_forward.8} parent=5 // pred_check
      _
    $region42: #{unet_bin_forward.8} parent=5 // pred_check_branch
      %246 = sbr.rel (%p243) target = $region44
    $region43: #{unet_bin_forward.8} parent=5 // pred_region
      %s247 = ssub.s32 %s12, 1
      %p248 = scmp.lt.s32.totalorder %s17, 1
      %s249 = scalar_select %p248, %s17, 1
      %s250 = smul.addr %s249, 2
      %s251 = smul.addr %s250, 8
      %s252 = scalar_lea.vmem %s0, %s251
      %p253 = pneg %p38
      %p254 = pneg %p35
      %p255 = scmp.lt.s32.totalorder %s17, 1
      %s256 = scalar_select %p255, %s17, 1
      %s257 = smul.addr %s256, 2
      %s258 = smul.addr %s257, 8
      %s259 = scalar_lea.vmem %s1, %s258
      %p260 = pneg %p64
      %p261 = pneg %p61
      %p262 = scmp.lt.s32.totalorder %s17, 1
      %s263 = scalar_select %p262, %s17, 1
      %s264 = smul.addr %s263, 2
      %s265 = smul.addr %s264, 8
      %s266 = scalar_lea.vmem %s2, %s265
      %p267 = pneg %p90
      %p268 = pneg %p87
      %p269 = scmp.lt.s32.totalorder %s17, 1
      %s270 = scalar_select %p269, %s17, 1
      %s271 = smul.addr %s270, 2
      %s272 = smul.addr %s271, 8
      %s273 = scalar_lea.vmem %s3, %s272
      %p274 = pneg %p116
      %p275 = pneg %p113
      %p276 = pneg %p137
      %p277 = pneg %p134
      %p278 = pneg %p158
      %p279 = pneg %p155
      %p280 = pneg %p184
      %p281 = pneg %p181
      %p282 = scmp.lt.s32.totalorder %s17, 1
      %s283 = scalar_select %p282, %s17, 1
      %s284 = smul.addr %s283, 8
      %s285 = scalar_lea.vmem %s6, %s284
      %p286 = scmp.lt.s32.totalorder %s17, 1
      %s287 = scalar_select %p286, %s17, 1
      %s288 = smul.addr %s287, 2
      %s289 = smul.addr %s288, 8
      %s290 = scalar_lea.vmem %s0, %s289
      %p291 = scmp.lt.s32.totalorder %s17, 1
      %s292 = scalar_select %p291, %s17, 1
      %s293 = smul.addr %s292, 2
      %s294 = smul.addr %s293, 8
      %s295 = scalar_lea.vmem %s1, %s294
      %p296 = scmp.lt.s32.totalorder %s17, 1
      %s297 = scalar_select %p296, %s17, 1
      %s298 = smul.addr %s297, 2
      %s299 = smul.addr %s298, 8
      %s300 = scalar_lea.vmem %s2, %s299
      %p301 = scmp.lt.s32.totalorder %s17, 1
      %s302 = scalar_select %p301, %s17, 1
      %s303 = smul.addr %s302, 2
      %s304 = smul.addr %s303, 8
      %s305 = scalar_lea.vmem %s3, %s304
      %p306 = scmp.lt.s32.totalorder %s17, 1
      %s307 = scalar_select %p306, %s17, 1
      %s308 = smul.addr %s307, 8
      %s309 = scalar_lea.vmem %s6, %s308
      %v311 = vld [vmem:[%s290] sm:$0xff]
      %v312 = vld [vmem:[%s290 + $0x8] sm:$0x3]
      %v313 = vld [vmem:[%s295] sm:$0xff]
      %v314 = vld [vmem:[%s295 + $0x8] sm:$0x3]
      %v315 = vmax.f32 %v311, %v313
      %v316 = vmax.f32 %v312, %v314
      %v317 = vld [vmem:[%s300] sm:$0xff]
      %v318 = vld [vmem:[%s300 + $0x8] sm:$0x3]
      %v319 = vmax.f32 %v315, %v317
      %v320 = vmax.f32 %v316, %v318
      %v321 = vld [vmem:[%s305] sm:$0xff]
      %v322 = vld [vmem:[%s305 + $0x8] sm:$0x3]
      %v323 = vmax.f32 %v319, %v321
      %v324 = vmax.f32 %v320, %v322
      %v325 = vpack.c.bf16 %v323, %v323
      %v326 = vld [vmem:[%s4] sm:$0xf]
      %v327 = vld [vmem:[%s4 + $0x4] sm:$0xf]
      %v328 = vld [vmem:[%s4 + $0x8] sm:$0xf]
      %v329 = vld [vmem:[%s4 + $0xc] sm:$0xf]
      %v330 = vld [vmem:[%s4 + $0x10] sm:$0xf]
      %v331 = vld [vmem:[%s4 + $0x14] sm:$0xf]
      %v332 = vld [vmem:[%s4 + $0x18] sm:$0xf]
      %v333 = vld [vmem:[%s4 + $0x1c] sm:$0xf]
      %v334 = vld [vmem:[%s4 + $0x20] sm:$0xf]
      %v335 = vld [vmem:[%s4 + $0x24] sm:$0xf]
      %v336 = vpack.c.bf16 %v324, %v323
      %s337 = scalar_lea.vmem %s4, 40
      %v338 = vld [vmem:[%s337] sm:$0xf]
      %v339 = vld [vmem:[%s337 + $0x4] sm:$0xf]
      %v340 = vld [vmem:[%s337 + $0x8] sm:$0xf]
      %v341 = vld [vmem:[%s337 + $0xc] sm:$0xf]
      %v342 = vld [vmem:[%s337 + $0x10] sm:$0xf]
      %v343 = vld [vmem:[%s337 + $0x14] sm:$0xf]
      %v344 = vld [vmem:[%s337 + $0x18] sm:$0xf]
      %v345 = vld [vmem:[%s337 + $0x1c] sm:$0xf]
      %v346 = vld [vmem:[%s337 + $0x20] sm:$0xf]
      %v347 = vld [vmem:[%s337 + $0x24] sm:$0xf]
      %v349 = vshrl.u32 %v336, 16
      %v351 = vshll.u32 %v336, 16
      %v353 = vrot.slane %v351, 1
      %v354 = vor.u32 %v349, %v353
      %v365 = vunpack.c.l.b16 %v338
      %v366 = vunpack.c.l.b16 %v339
      %v367 = vunpack.c.l.b16 %v340
      %v368 = vunpack.c.l.b16 %v341
      %v369 = vunpack.c.l.b16 %v342
      %v370 = vunpack.c.l.b16 %v343
      %v371 = vunpack.c.l.b16 %v344
      %v372 = vunpack.c.l.b16 %v345
      %v373 = vunpack.c.l.b16 %v346
      %v374 = vunpack.c.l.b16 %v347
      %v375 = vpack.c.b16 %v366, %v365
      %v376 = vpack.c.b16 %v368, %v367
      %v377 = vpack.c.b16 %v370, %v369
      %v378 = vpack.c.b16 %v372, %v371
      %v379 = vpack.c.b16 %v374, %v373
      %vm385 = vcmask 654336
      %v387 = vsel %vm385, %v354, 0
      %389 = vmatprep.subr.bf16.mxu0 0
      %390 = vmatpush1.bf16.msra.mxu0 %v375
      %391 = vmatprep.subr.bf16.mxu0 0
      %392 = vmatpush1.bf16.msra.mxu0 %v376
      %393 = vmatprep.subr.bf16.mxu0 0
      %394 = vmatpush1.bf16.msra.mxu0 %v377
      %395 = vmatprep.subr.bf16.mxu0 0
      %396 = vmatpush1.bf16.msra.mxu0 %v378
      %397 = vmatprep.subr.bf16.mxu0 0
      %398 = vmatpush1.bf16.msra.mxu0 %v379
      %399 = vmatprep.subr.bf16.mxu0 0
      %400 = vmatpush1.bf16.msra.mxu0 0
      %401 = vmatprep.subr.bf16.mxu0 0
      %402 = vmatpush1.bf16.msra.mxu0 0
      %403 = vmatprep.subr.bf16.mxu0 0
      %404 = vmatpush1.bf16.msra.mxu0 0
      %405 = vmatprep.subr.bf16.mxu0 0
      %406 = vmatpush1.bf16.msra.mxu0 0
      %407 = vmatprep.subr.bf16.mxu0 0
      %408 = vmatpush1.bf16.msra.mxu0 0
      %409 = vmatprep.subr.bf16.mxu0 0
      %410 = vmatpush1.bf16.msra.mxu0 0
      %411 = vmatprep.subr.bf16.mxu0 0
      %412 = vmatpush1.bf16.msra.mxu0 0
      %413 = vmatprep.subr.bf16.mxu0 0
      %414 = vmatpush1.bf16.msra.mxu0 0
      %415 = vmatprep.subr.bf16.mxu0 0
      %416 = vmatpush1.bf16.msra.mxu0 0
      %417 = vmatprep.subr.bf16.mxu0 0
      %418 = vmatpush1.bf16.msra.mxu0 0
      %419 = vmatprep.subr.bf16.mxu0 0
      %420 = vmatpush1.bf16.msra.mxu0 0
      %421 = vmatprep.mubr.bf16.mxu0 0
      %422 = vmatmul.mubr.bf16.gmra.mrb[0].mxu0 %v387
      %v423 = vpop.f32.mrb[0].mxu0
      %v424 = vadd.f32 0.0, %v423
      %v425 = vpop.f32.mrb[0].mxu0
      %v426 = vpop.f32.mrb[0].mxu0
      %v427 = vpop.f32.mrb[0].mxu0
      %428 = vdwg.mxu0
      %v439 = vunpack.c.l.b16 %v326
      %v440 = vunpack.c.l.b16 %v327
      %v441 = vunpack.c.l.b16 %v328
      %v442 = vunpack.c.l.b16 %v329
      %v443 = vunpack.c.l.b16 %v330
      %v444 = vunpack.c.l.b16 %v331
      %v445 = vunpack.c.l.b16 %v332
      %v446 = vunpack.c.l.b16 %v333
      %v447 = vunpack.c.l.b16 %v334
      %v448 = vunpack.c.l.b16 %v335
      %v449 = vpack.c.b16 %v440, %v439
      %v450 = vpack.c.b16 %v442, %v441
      %v451 = vpack.c.b16 %v444, %v443
      %v452 = vpack.c.b16 %v446, %v445
      %v453 = vpack.c.b16 %v448, %v447
      %v460 = vsel %vm385, %v325, 0
      %462 = vmatprep.subr.bf16.mxu0 0
      %463 = vmatpush1.bf16.msra.mxu0 %v449
      %464 = vmatprep.subr.bf16.mxu0 0
      %465 = vmatpush1.bf16.msra.mxu0 %v450
      %466 = vmatprep.subr.bf16.mxu0 0
      %467 = vmatpush1.bf16.msra.mxu0 %v451
      %468 = vmatprep.subr.bf16.mxu0 0
      %469 = vmatpush1.bf16.msra.mxu0 %v452
      %470 = vmatprep.subr.bf16.mxu0 0
      %471 = vmatpush1.bf16.msra.mxu0 %v453
      %472 = vmatprep.subr.bf16.mxu0 0
      %473 = vmatpush1.bf16.msra.mxu0 0
      %474 = vmatprep.subr.bf16.mxu0 0
      %475 = vmatpush1.bf16.msra.mxu0 0
      %476 = vmatprep.subr.bf16.mxu0 0
      %477 = vmatpush1.bf16.msra.mxu0 0
      %478 = vmatprep.subr.bf16.mxu0 0
      %479 = vmatpush1.bf16.msra.mxu0 0
      %480 = vmatprep.subr.bf16.mxu0 0
      %481 = vmatpush1.bf16.msra.mxu0 0
      %482 = vmatprep.subr.bf16.mxu0 0
      %483 = vmatpush1.bf16.msra.mxu0 0
      %484 = vmatprep.subr.bf16.mxu0 0
      %485 = vmatpush1.bf16.msra.mxu0 0
      %486 = vmatprep.subr.bf16.mxu0 0
      %487 = vmatpush1.bf16.msra.mxu0 0
      %488 = vmatprep.subr.bf16.mxu0 0
      %489 = vmatpush1.bf16.msra.mxu0 0
      %490 = vmatprep.subr.bf16.mxu0 0
      %491 = vmatpush1.bf16.msra.mxu0 0
      %492 = vmatprep.subr.bf16.mxu0 0
      %493 = vmatpush1.bf16.msra.mxu0 0
      %494 = vmatprep.mubr.bf16.mxu0 0
      %495 = vmatmul.mubr.bf16.gmra.mrb[0].mxu0 %v460
      %v496 = vpop.f32.mrb[0].mxu0
      %v497 = vadd.f32 %v424, %v496
      %v498 = vpop.f32.mrb[0].mxu0
      %v499 = vpop.f32.mrb[0].mxu0
      %v500 = vpop.f32.mrb[0].mxu0
      %501 = vdwg.mxu0
      %s502 = scalar_lea.vmem %s4, 80
      %v503 = vld [vmem:[%s502] sm:$0xf]
      %v504 = vld [vmem:[%s502 + $0x4] sm:$0xf]
      %v505 = vld [vmem:[%s502 + $0x8] sm:$0xf]
      %v506 = vld [vmem:[%s502 + $0xc] sm:$0xf]
      %v507 = vld [vmem:[%s502 + $0x10] sm:$0xf]
      %v508 = vld [vmem:[%s502 + $0x14] sm:$0xf]
      %v509 = vld [vmem:[%s502 + $0x18] sm:$0xf]
      %v510 = vld [vmem:[%s502 + $0x1c] sm:$0xf]
      %v511 = vld [vmem:[%s502 + $0x20] sm:$0xf]
      %v512 = vld [vmem:[%s502 + $0x24] sm:$0xf]
      %v514 = vrot.slane %v336, 1
      %v525 = vunpack.c.l.b16 %v503
      %v526 = vunpack.c.l.b16 %v504
      %v527 = vunpack.c.l.b16 %v505
      %v528 = vunpack.c.l.b16 %v506
      %v529 = vunpack.c.l.b16 %v507
      %v530 = vunpack.c.l.b16 %v508
      %v531 = vunpack.c.l.b16 %v509
      %v532 = vunpack.c.l.b16 %v510
      %v533 = vunpack.c.l.b16 %v511
      %v534 = vunpack.c.l.b16 %v512
      %v535 = vpack.c.b16 %v526, %v525
      %v536 = vpack.c.b16 %v528, %v527
      %v537 = vpack.c.b16 %v530, %v529
      %v538 = vpack.c.b16 %v532, %v531
      %v539 = vpack.c.b16 %v534, %v533
      %v546 = vsel %vm385, %v514, 0
      %548 = vmatprep.subr.bf16.mxu0 0
      %549 = vmatpush1.bf16.msra.mxu0 %v535
      %550 = vmatprep.subr.bf16.mxu0 0
      %551 = vmatpush1.bf16.msra.mxu0 %v536
      %552 = vmatprep.subr.bf16.mxu0 0
      %553 = vmatpush1.bf16.msra.mxu0 %v537
      %554 = vmatprep.subr.bf16.mxu0 0
      %555 = vmatpush1.bf16.msra.mxu0 %v538
      %556 = vmatprep.subr.bf16.mxu0 0
      %557 = vmatpush1.bf16.msra.mxu0 %v539
      %558 = vmatprep.subr.bf16.mxu0 0
      %559 = vmatpush1.bf16.msra.mxu0 0
      %560 = vmatprep.subr.bf16.mxu0 0
      %561 = vmatpush1.bf16.msra.mxu0 0
      %562 = vmatprep.subr.bf16.mxu0 0
      %563 = vmatpush1.bf16.msra.mxu0 0
      %564 = vmatprep.subr.bf16.mxu0 0
      %565 = vmatpush1.bf16.msra.mxu0 0
      %566 = vmatprep.subr.bf16.mxu0 0
      %567 = vmatpush1.bf16.msra.mxu0 0
      %568 = vmatprep.subr.bf16.mxu0 0
      %569 = vmatpush1.bf16.msra.mxu0 0
      %570 = vmatprep.subr.bf16.mxu0 0
      %571 = vmatpush1.bf16.msra.mxu0 0
      %572 = vmatprep.subr.bf16.mxu0 0
      %573 = vmatpush1.bf16.msra.mxu0 0
      %574 = vmatprep.subr.bf16.mxu0 0
      %575 = vmatpush1.bf16.msra.mxu0 0
      %576 = vmatprep.subr.bf16.mxu0 0
      %577 = vmatpush1.bf16.msra.mxu0 0
      %578 = vmatprep.subr.bf16.mxu0 0
      %579 = vmatpush1.bf16.msra.mxu0 0
      %580 = vmatprep.mubr.bf16.mxu0 0
      %581 = vmatmul.mubr.bf16.gmra.mrb[0].mxu0 %v546
      %v582 = vpop.f32.mrb[0].mxu0
      %v583 = vadd.f32 0.0, %v582
      %v584 = vpop.f32.mrb[0].mxu0
      %v585 = vpop.f32.mrb[0].mxu0
      %v586 = vpop.f32.mrb[0].mxu0
      %587 = vdwg.mxu0
      %v588 = vadd.f32 %v497, %v583
      %v589 = vld [vmem:[%s5] sm:$0x1]
      %v591 = vlaneseq
      %v592 = vshrl.u32 %v591, 7
      %v593 = vsub.s32 0, %v592
      %v594 = vrot.slane %v589, %v593
      %v596 = vadd.f32 %v588, %v594
      %v597 = vmax.f32 %v596, 0.0
      %598 = vst [vmem:[%s309] sm:$0xff] %v597
      %p599 = scmp.lt.s32.totalorder %s17, 1
      %s600 = scalar_select %p599, %s17, 1
      %s601 = smul.addr %s600, 8
      %s602 = scalar_lea.vmem %s6, %s601
      // Predicated region
      $region45: #{unet_bin_forward.8} parent=43 // pred_check
        %p603 = pneg %p181
      $region46: #{unet_bin_forward.8} parent=43 // pred_check_branch
        %605 = sbr.rel (%p603) target = $region48
      $region47: #{unet_bin_forward.8} parent=43 // pred_region
        _
      $region48: #{unet_bin_forward.8} parent=43 // pred_fallthru
        _
    $region44: #{unet_bin_forward.8} parent=5 // pred_fallthru
      _
    %p606 = scmp.le.s32.totalorder 2, %s12
    // Predicated region
    $region49: #{unet_bin_forward.8} parent=5 // pred_check
      %p607 = pneg %p606
    $region50: #{unet_bin_forward.8} parent=5 // pred_check_branch
      %609 = sbr.rel (%p607) target = $region52
    $region51: #{unet_bin_forward.8} parent=5 // pred_region
      %s610 = ssub.s32 %s12, 2
      // Predicated region
      $region53: #{unet_bin_forward.8} parent=51 // pred_check
        %p611 = pneg %p187
      $region54: #{unet_bin_forward.8} parent=51 // pred_check_branch
        %613 = sbr.rel (%p611) target = $region56
      $region55: #{unet_bin_forward.8} parent=51 // pred_region
        %p614 = scmp.lt.s32.totalorder %s18, 1
        %s615 = scalar_select %p614, %s18, 1
        %s616 = smul.addr %s615, 8
        %s617 = scalar_lea.vmem %s6, %s616
      $region56: #{unet_bin_forward.8} parent=51 // pred_fallthru
        _
    $region52: #{unet_bin_forward.8} parent=5 // pred_fallthru
      _
  $region6: #{unet_bin_forward.8} parent=0 // loop_footer
    %s16 = sadd.s32 1, %s12
  $region7: #{unet_bin_forward.8} parent=0 // loop_footer_branch
    %11 = sbr.rel target = $region3
  $region8: #{unet_bin_forward.8} parent=0 // loop_exit
    _

// kernel: tile.68
$region0: #{tile.68}
  #allocation0 [shape = 's32[1]{0}', space=sflag, size = 0x4, scoped, tag = 'scoped memory for tile.68']
  %s0 = inlined_call_operand.vmem [shape: f32[32], index: 0, kind: input, shape index: {}]
  %s1 = inlined_call_operand.vmem [shape: f32[4,32], index: 1, kind: output, shape index: {}]
  // Predicated region
  $region2: #{tile.68} parent=0 // pred_check
    _
  $region3: #{tile.68} parent=0 // pred_check_branch
    %3 = sbr.rel (0) target = $region5
  $region4: #{tile.68} parent=0 // pred_region
    _
  $region5: #{tile.68} parent=0 // pred_fallthru
    _
  %v4 = vld [vmem:[%s0] ss:$0 sm:$0xff]
  %5 = vst [vmem:[%s1] sm:$0xf] %v4

// kernel: tile.69
$region0: #{tile.69}
  %s0 = inlined_call_operand.vmem [shape: f32[4,32], index: 0, kind: input, shape index: {}]
  %s1 = inlined_call_operand.vmem [shape: f32[1,128], index: 1, kind: output, shape index: {}]
  $region1: #{tile.69} parent=0
    #allocation0 [shape = 'u8[4096]{0}', space=vmem, size = 0x1000, scoped, tag = 'scoped mem for output reshape']
    #allocation1 [shape = 'u8[4096]{0}', space=vmem, size = 0x1000, scoped, tag = 'scoped mem for input reshape']
    %s3 = sshllo.u32 0, 4
    %v4 = vld [vmem:[%s0] sm:%s3]
    %5 = vst [vmem:[#allocation1] sm:%s3] %v4
    %v6 = vld [vmem:[#allocation1] sm:$0x1]
    %vm7 = vcmask 261120
    %8 = vst.msk [vmem:[#allocation0] sm:$0x1] %vm7, %v6
    %s9 = scalar_lea.vmem [#allocation1], 3
    %v10 = vld [vmem:[%s9] sm:$0x1]
    %11 = vrot.lane.b32.xlu0 %v10, 96
    %v12 = vpop.permute.xlu0 %11
    %vm13 = vcmask 1048320
    %14 = vst.msk [vmem:[#allocation0] sm:$0x1] %vm13, %v12
    %s15 = scalar_lea.vmem [#allocation1], 2
    %v16 = vld [vmem:[%s15] sm:$0x1]
    %17 = vrot.lane.b32.xlu0 %v16, 64
    %v18 = vpop.permute.xlu0 %17
    %vm19 = vcmask 785920
    %20 = vst.msk [vmem:[#allocation0] sm:$0x1] %vm19, %v18
    %s21 = scalar_lea.vmem [#allocation1], 1
    %v22 = vld [vmem:[%s21] sm:$0x1]
    %23 = vrot.lane.b32.xlu0 %v22, 32
    %v24 = vpop.permute.xlu0 %23
    %vm25 = vcmask 523520
    %26 = vst.msk [vmem:[#allocation0] sm:$0x1] %vm25, %v24
    %s28 = sshllo.u32 0, 1
    %v30 = vld [vmem:[#allocation0] sm:%s28]
    %s31 = sshllo.u32 0, 1
    %32 = vst [vmem:[%s1] sm:%s31] %v30

// kernel: unet_bin_forward.9
$region0: #{unet_bin_forward.9}
  #allocation0 [shape = 'u32[]', space=smem, size = 0x4, offset = 0x4, fixed_abs, tag = 'smem constant byte address 0x4 - core index']
  #allocation1 [shape = 'u32[144,128]{1,0:T(1,128)}', space=vmem, size = 0x12000, scoped, tag = 'internal scratch']
  %s0 = inlined_call_operand.vmem [shape: f32[2,6,96], index: 0, kind: input, shape index: {}]
  %s1 = inlined_call_operand.vmem [shape: f32[2,6,96], index: 1, kind: input, shape index: {}]
  %s2 = inlined_call_operand.vmem [shape: f32[2,6,96], index: 2, kind: input, shape index: {}]
  %s3 = inlined_call_operand.vmem [shape: f32[2,6,96], index: 3, kind: input, shape index: {}]
  %s4 = inlined_call_operand.vmem [shape: bf16[3,96,128], index: 4, kind: input, shape index: {}]
  %s5 = inlined_call_operand.vmem [shape: f32[1,128], index: 5, kind: input, shape index: {}]
  %s6 = inlined_call_operand.vmem [shape: f32[2,4,128], index: 6, kind: output, shape index: {}]
  %s7 = sld [smem:[#allocation0]]
  $region57: #{unet_bin_forward.9} parent=0
    _
  %s9 = ssub.s32 1, %s7
  %s10 = scalar_select 0, %s9, %s7
  loop: start=0, step=1, limit=4
  $region2: #{unet_bin_forward.9} parent=0 // loop_pre_header
    _
  $region3: #{unet_bin_forward.9} parent=0 // loop_header
    %s12 = sphi 0, %s16
    %p13 = scmp.ge.s32.totalorder %s12, 4
    %s22 = sphi 0, %s24
    %s25 = sphi 0, %s22
    %s26 = sphi 0, %s25
    %s42 = sphi 0, %s26
    %s48 = sphi 0, %s50
    %s51 = sphi 0, %s48
    %s52 = sphi 0, %s51
    %s68 = sphi 0, %s52
    %s74 = sphi 0, %s76
    %s77 = sphi 0, %s74
    %s78 = sphi 0, %s77
    %s94 = sphi 0, %s78
    %s100 = sphi 0, %s102
    %s103 = sphi 0, %s100
    %s104 = sphi 0, %s103
    %s120 = sphi 0, %s104
    %s124 = sphi 0, %s124
    %s126 = sphi 0, %s124
    %s127 = sphi 0, %s126
    %s141 = sphi 0, %s127
    %s145 = sphi 0, %s145
    %s147 = sphi 0, %s145
    %s148 = sphi 0, %s147
    %s162 = sphi 0, %s148
    %s168 = sphi 0, %s170
    %s171 = sphi 0, %s168
    %s172 = sphi 0, %s171
    %s188 = sphi 0, %s172
  $region4: #{unet_bin_forward.9} parent=0 // loop_header_branch
    %15 = sbr.rel (%p13) target = $region8
  $region5: #{unet_bin_forward.9} parent=0 // loop_body
    %s17 = ssub.s32 %s12, 1
    %s18 = ssub.s32 %s12, 2
    %s19 = sadd.s32 %s12, 1
    %s20 = ssub.s32 %s12, %s19
    %p21 = scmp.eq.s32.totalorder %s20, 0
    %s23 = sadd.s32 %s22, 1
    %s24 = scalar_select %p21, %s22, %s23
    %p27 = pneg %p21
    %p28 = scmp.eq.s32.totalorder %s12, 1
    %p29 = por %p27, %p28
    %p30 = scmp.ne.s32.totalorder %s22, %s25
    %p31 = scmp.eq.s32.totalorder %s12, 0
    %p32 = por %p30, %p31
    %p33 = scmp.ne.s32.totalorder %s22, %s25
    %p34 = scmp.eq.s32.totalorder %s17, 1
    %p35 = por %p33, %p34
    %p36 = scmp.ne.s32.totalorder %s25, %s26
    %p37 = scmp.eq.s32.totalorder %s17, 0
    %p38 = por %p36, %p37
    %p39 = scmp.ne.s32.totalorder %s25, %s26
    %p40 = scmp.eq.s32.totalorder %s18, 1
    %p41 = por %p39, %p40
    %p43 = scmp.ne.s32.totalorder %s26, %s42
    %p44 = scmp.eq.s32.totalorder %s18, 0
    %p45 = por %p43, %p44
    %s46 = ssub.s32 %s12, %s19
    %p47 = scmp.eq.s32.totalorder %s46, 0
    %s49 = sadd.s32 %s48, 1
    %s50 = scalar_select %p47, %s48, %s49
    %p53 = pneg %p47
    %p54 = scmp.eq.s32.totalorder %s12, 1
    %p55 = por %p53, %p54
    %p56 = scmp.ne.s32.totalorder %s48, %s51
    %p57 = scmp.eq.s32.totalorder %s12, 0
    %p58 = por %p56, %p57
    %p59 = scmp.ne.s32.totalorder %s48, %s51
    %p60 = scmp.eq.s32.totalorder %s17, 1
    %p61 = por %p59, %p60
    %p62 = scmp.ne.s32.totalorder %s51, %s52
    %p63 = scmp.eq.s32.totalorder %s17, 0
    %p64 = por %p62, %p63
    %p65 = scmp.ne.s32.totalorder %s51, %s52
    %p66 = scmp.eq.s32.totalorder %s18, 1
    %p67 = por %p65, %p66
    %p69 = scmp.ne.s32.totalorder %s52, %s68
    %p70 = scmp.eq.s32.totalorder %s18, 0
    %p71 = por %p69, %p70
    %s72 = ssub.s32 %s12, %s19
    %p73 = scmp.eq.s32.totalorder %s72, 0
    %s75 = sadd.s32 %s74, 1
    %s76 = scalar_select %p73, %s74, %s75
    %p79 = pneg %p73
    %p80 = scmp.eq.s32.totalorder %s12, 1
    %p81 = por %p79, %p80
    %p82 = scmp.ne.s32.totalorder %s74, %s77
    %p83 = scmp.eq.s32.totalorder %s12, 0
    %p84 = por %p82, %p83
    %p85 = scmp.ne.s32.totalorder %s74, %s77
    %p86 = scmp.eq.s32.totalorder %s17, 1
    %p87 = por %p85, %p86
    %p88 = scmp.ne.s32.totalorder %s77, %s78
    %p89 = scmp.eq.s32.totalorder %s17, 0
    %p90 = por %p88, %p89
    %p91 = scmp.ne.s32.totalorder %s77, %s78
    %p92 = scmp.eq.s32.totalorder %s18, 1
    %p93 = por %p91, %p92
    %p95 = scmp.ne.s32.totalorder %s78, %s94
    %p96 = scmp.eq.s32.totalorder %s18, 0
    %p97 = por %p95, %p96
    %s98 = ssub.s32 %s12, %s19
    %p99 = scmp.eq.s32.totalorder %s98, 0
    %s101 = sadd.s32 %s100, 1
    %s102 = scalar_select %p99, %s100, %s101
    %p105 = pneg %p99
    %p106 = scmp.eq.s32.totalorder %s12, 1
    %p107 = por %p105, %p106
    %p108 = scmp.ne.s32.totalorder %s100, %s103
    %p109 = scmp.eq.s32.totalorder %s12, 0
    %p110 = por %p108, %p109
    %p111 = scmp.ne.s32.totalorder %s100, %s103
    %p112 = scmp.eq.s32.totalorder %s17, 1
    %p113 = por %p111, %p112
    %p114 = scmp.ne.s32.totalorder %s103, %s104
    %p115 = scmp.eq.s32.totalorder %s17, 0
    %p116 = por %p114, %p115
    %p117 = scmp.ne.s32.totalorder %s103, %s104
    %p118 = scmp.eq.s32.totalorder %s18, 1
    %p119 = por %p117, %p118
    %p121 = scmp.ne.s32.totalorder %s104, %s120
    %p122 = scmp.eq.s32.totalorder %s18, 0
    %p123 = por %p121, %p122
    %s125 = sadd.s32 %s124, 1
    %p128 = scmp.eq.s32.totalorder %s12, 1
    %p129 = scmp.ne.s32.totalorder %s124, %s126
    %p130 = scmp.eq.s32.totalorder %s12, 0
    %p131 = por %p129, %p130
    %p132 = scmp.ne.s32.totalorder %s124, %s126
    %p133 = scmp.eq.s32.totalorder %s17, 1
    %p134 = por %p132, %p133
    %p135 = scmp.ne.s32.totalorder %s126, %s127
    %p136 = scmp.eq.s32.totalorder %s17, 0
    %p137 = por %p135, %p136
    %p138 = scmp.ne.s32.totalorder %s126, %s127
    %p139 = scmp.eq.s32.totalorder %s18, 1
    %p140 = por %p138, %p139
    %p142 = scmp.ne.s32.totalorder %s127, %s141
    %p143 = scmp.eq.s32.totalorder %s18, 0
    %p144 = por %p142, %p143
    %s146 = sadd.s32 %s145, 1
    %p149 = scmp.eq.s32.totalorder %s12, 1
    %p150 = scmp.ne.s32.totalorder %s145, %s147
    %p151 = scmp.eq.s32.totalorder %s12, 0
    %p152 = por %p150, %p151
    %p153 = scmp.ne.s32.totalorder %s145, %s147
    %p154 = scmp.eq.s32.totalorder %s17, 1
    %p155 = por %p153, %p154
    %p156 = scmp.ne.s32.totalorder %s147, %s148
    %p157 = scmp.eq.s32.totalorder %s17, 0
    %p158 = por %p156, %p157
    %p159 = scmp.ne.s32.totalorder %s147, %s148
    %p160 = scmp.eq.s32.totalorder %s18, 1
    %p161 = por %p159, %p160
    %p163 = scmp.ne.s32.totalorder %s148, %s162
    %p164 = scmp.eq.s32.totalorder %s18, 0
    %p165 = por %p163, %p164
    %s166 = ssub.s32 %s12, %s19
    %p167 = scmp.eq.s32.totalorder %s166, 0
    %s169 = sadd.s32 %s168, 1
    %s170 = scalar_select %p167, %s168, %s169
    %p173 = pneg %p167
    %p174 = scmp.eq.s32.totalorder %s12, 1
    %p175 = por %p173, %p174
    %p176 = scmp.ne.s32.totalorder %s168, %s171
    %p177 = scmp.eq.s32.totalorder %s12, 0
    %p178 = por %p176, %p177
    %p179 = scmp.ne.s32.totalorder %s168, %s171
    %p180 = scmp.eq.s32.totalorder %s17, 1
    %p181 = por %p179, %p180
    %p182 = scmp.ne.s32.totalorder %s171, %s172
    %p183 = scmp.eq.s32.totalorder %s17, 0
    %p184 = por %p182, %p183
    %p185 = scmp.ne.s32.totalorder %s171, %s172
    %p186 = scmp.eq.s32.totalorder %s18, 1
    %p187 = por %p185, %p186
    %p189 = scmp.ne.s32.totalorder %s172, %s188
    %p190 = scmp.eq.s32.totalorder %s18, 0
    %p191 = por %p189, %p190
    %p192 = scmp.le.s32.totalorder 1, %s12
    %p193 = scmp.lt.s32.totalorder %s12, 3
    %p194 = pnand %p192, %p193
    %p195 = pneg %p194
    // Predicated region
    $region9: #{unet_bin_forward.9} parent=5 // pred_check
      _
    $region10: #{unet_bin_forward.9} parent=5 // pred_check_branch
      %197 = sbr.rel (%p194) target = $region12
    $region11: #{unet_bin_forward.9} parent=5 // pred_region
      %s198 = ssub.s32 %s12, 1
      // Predicated region
      $region13: #{unet_bin_forward.9} parent=11 // pred_check
        %p199 = pneg %p137
      $region14: #{unet_bin_forward.9} parent=11 // pred_check_branch
        %201 = sbr.rel (%p199) target = $region16
      $region15: #{unet_bin_forward.9} parent=11 // pred_region
        _
      $region16: #{unet_bin_forward.9} parent=11 // pred_fallthru
        _
      // Predicated region
      $region17: #{unet_bin_forward.9} parent=11 // pred_check
        %p202 = pneg %p158
      $region18: #{unet_bin_forward.9} parent=11 // pred_check_branch
        %204 = sbr.rel (%p202) target = $region20
      $region19: #{unet_bin_forward.9} parent=11 // pred_region
        _
      $region20: #{unet_bin_forward.9} parent=11 // pred_fallthru
        _
    $region12: #{unet_bin_forward.9} parent=5 // pred_fallthru
      _
    %p205 = scmp.lt.s32.totalorder %s12, 2
    // Predicated region
    $region21: #{unet_bin_forward.9} parent=5 // pred_check
      %p206 = pneg %p205
    $region22: #{unet_bin_forward.9} parent=5 // pred_check_branch
      %208 = sbr.rel (%p206) target = $region24
    $region23: #{unet_bin_forward.9} parent=5 // pred_region
      // Predicated region
      $region25: #{unet_bin_forward.9} parent=23 // pred_check
        %p209 = pneg %p32
      $region26: #{unet_bin_forward.9} parent=23 // pred_check_branch
        %211 = sbr.rel (%p209) target = $region28
      $region27: #{unet_bin_forward.9} parent=23 // pred_region
        %p212 = scmp.lt.s32.totalorder %s12, 1
        %s213 = scalar_select %p212, %s12, 1
        %s214 = smul.addr %s213, 8
        %s215 = scalar_lea.vmem %s0, %s214
      $region28: #{unet_bin_forward.9} parent=23 // pred_fallthru
        _
      // Predicated region
      $region29: #{unet_bin_forward.9} parent=23 // pred_check
        %p216 = pneg %p58
      $region30: #{unet_bin_forward.9} parent=23 // pred_check_branch
        %218 = sbr.rel (%p216) target = $region32
      $region31: #{unet_bin_forward.9} parent=23 // pred_region
        %p219 = scmp.lt.s32.totalorder %s12, 1
        %s220 = scalar_select %p219, %s12, 1
        %s221 = smul.addr %s220, 8
        %s222 = scalar_lea.vmem %s1, %s221
      $region32: #{unet_bin_forward.9} parent=23 // pred_fallthru
        _
      // Predicated region
      $region33: #{unet_bin_forward.9} parent=23 // pred_check
        %p223 = pneg %p84
      $region34: #{unet_bin_forward.9} parent=23 // pred_check_branch
        %225 = sbr.rel (%p223) target = $region36
      $region35: #{unet_bin_forward.9} parent=23 // pred_region
        %p226 = scmp.lt.s32.totalorder %s12, 1
        %s227 = scalar_select %p226, %s12, 1
        %s228 = smul.addr %s227, 8
        %s229 = scalar_lea.vmem %s2, %s228
      $region36: #{unet_bin_forward.9} parent=23 // pred_fallthru
        _
      // Predicated region
      $region37: #{unet_bin_forward.9} parent=23 // pred_check
        %p230 = pneg %p110
      $region38: #{unet_bin_forward.9} parent=23 // pred_check_branch
        %232 = sbr.rel (%p230) target = $region40
      $region39: #{unet_bin_forward.9} parent=23 // pred_region
        %p233 = scmp.lt.s32.totalorder %s12, 1
        %s234 = scalar_select %p233, %s12, 1
        %s235 = smul.addr %s234, 8
        %s236 = scalar_lea.vmem %s3, %s235
      $region40: #{unet_bin_forward.9} parent=23 // pred_fallthru
        _
    $region24: #{unet_bin_forward.9} parent=5 // pred_fallthru
      _
    %p237 = scmp.le.s32.totalorder 1, %s12
    %p238 = scmp.lt.s32.totalorder %s12, 3
    %p239 = pnand %p237, %p238
    %p240 = pneg %p239
    // Predicated region
    $region41: #{unet_bin_forward.9} parent=5 // pred_check
      _
    $region42: #{unet_bin_forward.9} parent=5 // pred_check_branch
      %242 = sbr.rel (%p239) target = $region44
    $region43: #{unet_bin_forward.9} parent=5 // pred_region
      %s243 = ssub.s32 %s12, 1
      %p244 = scmp.lt.s32.totalorder %s17, 1
      %s245 = scalar_select %p244, %s17, 1
      %s246 = smul.addr %s245, 8
      %s247 = scalar_lea.vmem %s0, %s246
      %p248 = pneg %p38
      %p249 = pneg %p35
      %p250 = scmp.lt.s32.totalorder %s17, 1
      %s251 = scalar_select %p250, %s17, 1
      %s252 = smul.addr %s251, 8
      %s253 = scalar_lea.vmem %s1, %s252
      %p254 = pneg %p64
      %p255 = pneg %p61
      %p256 = scmp.lt.s32.totalorder %s17, 1
      %s257 = scalar_select %p256, %s17, 1
      %s258 = smul.addr %s257, 8
      %s259 = scalar_lea.vmem %s2, %s258
      %p260 = pneg %p90
      %p261 = pneg %p87
      %p262 = scmp.lt.s32.totalorder %s17, 1
      %s263 = scalar_select %p262, %s17, 1
      %s264 = smul.addr %s263, 8
      %s265 = scalar_lea.vmem %s3, %s264
      %p266 = pneg %p116
      %p267 = pneg %p113
      %p268 = pneg %p137
      %p269 = pneg %p134
      %p270 = pneg %p158
      %p271 = pneg %p155
      %p272 = pneg %p184
      %p273 = pneg %p181
      %p274 = scmp.lt.s32.totalorder %s17, 1
      %s275 = scalar_select %p274, %s17, 1
      %s276 = smul.addr %s275, 4
      %s277 = scalar_lea.vmem %s6, %s276
      %p278 = scmp.lt.s32.totalorder %s17, 1
      %s279 = scalar_select %p278, %s17, 1
      %s280 = smul.addr %s279, 8
      %s281 = scalar_lea.vmem %s0, %s280
      %p282 = scmp.lt.s32.totalorder %s17, 1
      %s283 = scalar_select %p282, %s17, 1
      %s284 = smul.addr %s283, 8
      %s285 = scalar_lea.vmem %s1, %s284
      %p286 = scmp.lt.s32.totalorder %s17, 1
      %s287 = scalar_select %p286, %s17, 1
      %s288 = smul.addr %s287, 8
      %s289 = scalar_lea.vmem %s2, %s288
      %p290 = scmp.lt.s32.totalorder %s17, 1
      %s291 = scalar_select %p290, %s17, 1
      %s292 = smul.addr %s291, 8
      %s293 = scalar_lea.vmem %s3, %s292
      %p294 = scmp.lt.s32.totalorder %s17, 1
      %s295 = scalar_select %p294, %s17, 1
      %s296 = smul.addr %s295, 4
      %s297 = scalar_lea.vmem %s6, %s296
      %v299 = vld [vmem:[%s281] sm:$0x3f]
      %v300 = vld [vmem:[%s285] sm:$0x3f]
      %v301 = vmax.f32 %v299, %v300
      %v302 = vld [vmem:[%s289] sm:$0x3f]
      %v303 = vmax.f32 %v301, %v302
      %v304 = vld [vmem:[%s293] sm:$0x3f]
      %v305 = vmax.f32 %v303, %v304
      %v306 = vpack.c.bf16 %v305, %v305
      %v307 = vld [vmem:[%s4] sm:$0xf]
      %v308 = vld [vmem:[%s4 + $0x4] sm:$0xf]
      %v309 = vld [vmem:[%s4 + $0x8] sm:$0xf]
      %v310 = vld [vmem:[%s4 + $0xc] sm:$0xf]
      %v311 = vld [vmem:[%s4 + $0x10] sm:$0xf]
      %v312 = vld [vmem:[%s4 + $0x14] sm:$0xf]
      %v313 = vld [vmem:[%s4 + $0x18] sm:$0xf]
      %v314 = vld [vmem:[%s4 + $0x1c] sm:$0xf]
      %v315 = vld [vmem:[%s4 + $0x20] sm:$0xf]
      %v316 = vld [vmem:[%s4 + $0x24] sm:$0xf]
      %v317 = vld [vmem:[%s4 + $0x28] sm:$0xf]
      %v318 = vld [vmem:[%s4 + $0x2c] sm:$0xf]
      %s319 = scalar_lea.vmem %s4, 48
      %v320 = vld [vmem:[%s319] sm:$0xf]
      %v321 = vld [vmem:[%s319 + $0x4] sm:$0xf]
      %v322 = vld [vmem:[%s319 + $0x8] sm:$0xf]
      %v323 = vld [vmem:[%s319 + $0xc] sm:$0xf]
      %v324 = vld [vmem:[%s319 + $0x10] sm:$0xf]
      %v325 = vld [vmem:[%s319 + $0x14] sm:$0xf]
      %v326 = vld [vmem:[%s319 + $0x18] sm:$0xf]
      %v327 = vld [vmem:[%s319 + $0x1c] sm:$0xf]
      %v328 = vld [vmem:[%s319 + $0x20] sm:$0xf]
      %v329 = vld [vmem:[%s319 + $0x24] sm:$0xf]
      %v330 = vld [vmem:[%s319 + $0x28] sm:$0xf]
      %v331 = vld [vmem:[%s319 + $0x2c] sm:$0xf]
      %v333 = vshrl.u32 %v306, 16
      %v335 = vshll.u32 %v306, 16
      %v337 = vrot.slane %v335, 1
      %v338 = vor.u32 %v333, %v337
      %v351 = vunpack.c.l.b16 %v320
      %v352 = vunpack.c.l.b16 %v321
      %v353 = vunpack.c.l.b16 %v322
      %v354 = vunpack.c.l.b16 %v323
      %v355 = vunpack.c.l.b16 %v324
      %v356 = vunpack.c.l.b16 %v325
      %v357 = vunpack.c.l.b16 %v326
      %v358 = vunpack.c.l.b16 %v327
      %v359 = vunpack.c.l.b16 %v328
      %v360 = vunpack.c.l.b16 %v329
      %v361 = vunpack.c.l.b16 %v330
      %v362 = vunpack.c.l.b16 %v331
      %v363 = vpack.c.b16 %v352, %v351
      %v364 = vpack.c.b16 %v354, %v353
      %v365 = vpack.c.b16 %v356, %v355
      %v366 = vpack.c.b16 %v358, %v357
      %v367 = vpack.c.b16 %v360, %v359
      %v368 = vpack.c.b16 %v362, %v361
      %vm375 = vcmask 785408
      %v377 = vsel %vm375, %v338, 0
      %379 = vmatprep.subr.bf16.mxu0 0
      %380 = vmatpush1.bf16.msra.mxu0 %v363
      %381 = vmatprep.subr.bf16.mxu0 0
      %382 = vmatpush1.bf16.msra.mxu0 %v364
      %383 = vmatprep.subr.bf16.mxu0 0
      %384 = vmatpush1.bf16.msra.mxu0 %v365
      %385 = vmatprep.subr.bf16.mxu0 0
      %386 = vmatpush1.bf16.msra.mxu0 %v366
      %387 = vmatprep.subr.bf16.mxu0 0
      %388 = vmatpush1.bf16.msra.mxu0 %v367
      %389 = vmatprep.subr.bf16.mxu0 0
      %390 = vmatpush1.bf16.msra.mxu0 %v368
      %391 = vmatprep.subr.bf16.mxu0 0
      %392 = vmatpush1.bf16.msra.mxu0 0
      %393 = vmatprep.subr.bf16.mxu0 0
      %394 = vmatpush1.bf16.msra.mxu0 0
      %395 = vmatprep.subr.bf16.mxu0 0
      %396 = vmatpush1.bf16.msra.mxu0 0
      %397 = vmatprep.subr.bf16.mxu0 0
      %398 = vmatpush1.bf16.msra.mxu0 0
      %399 = vmatprep.subr.bf16.mxu0 0
      %400 = vmatpush1.bf16.msra.mxu0 0
      %401 = vmatprep.subr.bf16.mxu0 0
      %402 = vmatpush1.bf16.msra.mxu0 0
      %403 = vmatprep.subr.bf16.mxu0 0
      %404 = vmatpush1.bf16.msra.mxu0 0
      %405 = vmatprep.subr.bf16.mxu0 0
      %406 = vmatpush1.bf16.msra.mxu0 0
      %407 = vmatprep.subr.bf16.mxu0 0
      %408 = vmatpush1.bf16.msra.mxu0 0
      %409 = vmatprep.subr.bf16.mxu0 0
      %410 = vmatpush1.bf16.msra.mxu0 0
      %411 = vmatprep.mubr.bf16.mxu0 0
      %412 = vmatmul.mubr.bf16.gmra.mrb[0].mxu0 %v377
      %v413 = vpop.f32.mrb[0].mxu0
      %v414 = vadd.f32 0.0, %v413
      %v415 = vpop.f32.mrb[0].mxu0
      %v416 = vpop.f32.mrb[0].mxu0
      %v417 = vpop.f32.mrb[0].mxu0
      %418 = vdwg.mxu0
      %v431 = vunpack.c.l.b16 %v307
      %v432 = vunpack.c.l.b16 %v308
      %v433 = vunpack.c.l.b16 %v309
      %v434 = vunpack.c.l.b16 %v310
      %v435 = vunpack.c.l.b16 %v311
      %v436 = vunpack.c.l.b16 %v312
      %v437 = vunpack.c.l.b16 %v313
      %v438 = vunpack.c.l.b16 %v314
      %v439 = vunpack.c.l.b16 %v315
      %v440 = vunpack.c.l.b16 %v316
      %v441 = vunpack.c.l.b16 %v317
      %v442 = vunpack.c.l.b16 %v318
      %v443 = vpack.c.b16 %v432, %v431
      %v444 = vpack.c.b16 %v434, %v433
      %v445 = vpack.c.b16 %v436, %v435
      %v446 = vpack.c.b16 %v438, %v437
      %v447 = vpack.c.b16 %v440, %v439
      %v448 = vpack.c.b16 %v442, %v441
      %v455 = vsel %vm375, %v306, 0
      %457 = vmatprep.subr.bf16.mxu0 0
      %458 = vmatpush1.bf16.msra.mxu0 %v443
      %459 = vmatprep.subr.bf16.mxu0 0
      %460 = vmatpush1.bf16.msra.mxu0 %v444
      %461 = vmatprep.subr.bf16.mxu0 0
      %462 = vmatpush1.bf16.msra.mxu0 %v445
      %463 = vmatprep.subr.bf16.mxu0 0
      %464 = vmatpush1.bf16.msra.mxu0 %v446
      %465 = vmatprep.subr.bf16.mxu0 0
      %466 = vmatpush1.bf16.msra.mxu0 %v447
      %467 = vmatprep.subr.bf16.mxu0 0
      %468 = vmatpush1.bf16.msra.mxu0 %v448
      %469 = vmatprep.subr.bf16.mxu0 0
      %470 = vmatpush1.bf16.msra.mxu0 0
      %471 = vmatprep.subr.bf16.mxu0 0
      %472 = vmatpush1.bf16.msra.mxu0 0
      %473 = vmatprep.subr.bf16.mxu0 0
      %474 = vmatpush1.bf16.msra.mxu0 0
      %475 = vmatprep.subr.bf16.mxu0 0
      %476 = vmatpush1.bf16.msra.mxu0 0
      %477 = vmatprep.subr.bf16.mxu0 0
      %478 = vmatpush1.bf16.msra.mxu0 0
      %479 = vmatprep.subr.bf16.mxu0 0
      %480 = vmatpush1.bf16.msra.mxu0 0
      %481 = vmatprep.subr.bf16.mxu0 0
      %482 = vmatpush1.bf16.msra.mxu0 0
      %483 = vmatprep.subr.bf16.mxu0 0
      %484 = vmatpush1.bf16.msra.mxu0 0
      %485 = vmatprep.subr.bf16.mxu0 0
      %486 = vmatpush1.bf16.msra.mxu0 0
      %487 = vmatprep.subr.bf16.mxu0 0
      %488 = vmatpush1.bf16.msra.mxu0 0
      %489 = vmatprep.mubr.bf16.mxu0 0
      %490 = vmatmul.mubr.bf16.gmra.mrb[0].mxu0 %v455
      %v491 = vpop.f32.mrb[0].mxu0
      %v492 = vadd.f32 %v414, %v491
      %v493 = vpop.f32.mrb[0].mxu0
      %v494 = vpop.f32.mrb[0].mxu0
      %v495 = vpop.f32.mrb[0].mxu0
      %496 = vdwg.mxu0
      %s497 = scalar_lea.vmem %s4, 96
      %v498 = vld [vmem:[%s497] sm:$0xf]
      %v499 = vld [vmem:[%s497 + $0x4] sm:$0xf]
      %v500 = vld [vmem:[%s497 + $0x8] sm:$0xf]
      %v501 = vld [vmem:[%s497 + $0xc] sm:$0xf]
      %v502 = vld [vmem:[%s497 + $0x10] sm:$0xf]
      %v503 = vld [vmem:[%s497 + $0x14] sm:$0xf]
      %v504 = vld [vmem:[%s497 + $0x18] sm:$0xf]
      %v505 = vld [vmem:[%s497 + $0x1c] sm:$0xf]
      %v506 = vld [vmem:[%s497 + $0x20] sm:$0xf]
      %v507 = vld [vmem:[%s497 + $0x24] sm:$0xf]
      %v508 = vld [vmem:[%s497 + $0x28] sm:$0xf]
      %v509 = vld [vmem:[%s497 + $0x2c] sm:$0xf]
      %v511 = vrot.slane %v306, 1
      %v524 = vunpack.c.l.b16 %v498
      %v525 = vunpack.c.l.b16 %v499
      %v526 = vunpack.c.l.b16 %v500
      %v527 = vunpack.c.l.b16 %v501
      %v528 = vunpack.c.l.b16 %v502
      %v529 = vunpack.c.l.b16 %v503
      %v530 = vunpack.c.l.b16 %v504
      %v531 = vunpack.c.l.b16 %v505
      %v532 = vunpack.c.l.b16 %v506
      %v533 = vunpack.c.l.b16 %v507
      %v534 = vunpack.c.l.b16 %v508
      %v535 = vunpack.c.l.b16 %v509
      %v536 = vpack.c.b16 %v525, %v524
      %v537 = vpack.c.b16 %v527, %v526
      %v538 = vpack.c.b16 %v529, %v528
      %v539 = vpack.c.b16 %v531, %v530
      %v540 = vpack.c.b16 %v533, %v532
      %v541 = vpack.c.b16 %v535, %v534
      %v549 = vsel %vm375, %v511, 0
      %551 = vmatprep.subr.bf16.mxu0 0
      %552 = vmatpush1.bf16.msra.mxu0 %v536
      %553 = vmatprep.subr.bf16.mxu0 0
      %554 = vmatpush1.bf16.msra.mxu0 %v537
      %555 = vmatprep.subr.bf16.mxu0 0
      %556 = vmatpush1.bf16.msra.mxu0 %v538
      %557 = vmatprep.subr.bf16.mxu0 0
      %558 = vmatpush1.bf16.msra.mxu0 %v539
      %559 = vmatprep.subr.bf16.mxu0 0
      %560 = vmatpush1.bf16.msra.mxu0 %v540
      %561 = vmatprep.subr.bf16.mxu0 0
      %562 = vmatpush1.bf16.msra.mxu0 %v541
      %563 = vmatprep.subr.bf16.mxu0 0
      %564 = vmatpush1.bf16.msra.mxu0 0
      %565 = vmatprep.subr.bf16.mxu0 0
      %566 = vmatpush1.bf16.msra.mxu0 0
      %567 = vmatprep.subr.bf16.mxu0 0
      %568 = vmatpush1.bf16.msra.mxu0 0
      %569 = vmatprep.subr.bf16.mxu0 0
      %570 = vmatpush1.bf16.msra.mxu0 0
      %571 = vmatprep.subr.bf16.mxu0 0
      %572 = vmatpush1.bf16.msra.mxu0 0
      %573 = vmatprep.subr.bf16.mxu0 0
      %574 = vmatpush1.bf16.msra.mxu0 0
      %575 = vmatprep.subr.bf16.mxu0 0
      %576 = vmatpush1.bf16.msra.mxu0 0
      %577 = vmatprep.subr.bf16.mxu0 0
      %578 = vmatpush1.bf16.msra.mxu0 0
      %579 = vmatprep.subr.bf16.mxu0 0
      %580 = vmatpush1.bf16.msra.mxu0 0
      %581 = vmatprep.subr.bf16.mxu0 0
      %582 = vmatpush1.bf16.msra.mxu0 0
      %583 = vmatprep.mubr.bf16.mxu0 0
      %584 = vmatmul.mubr.bf16.gmra.mrb[0].mxu0 %v549
      %v585 = vpop.f32.mrb[0].mxu0
      %v586 = vadd.f32 0.0, %v585
      %v587 = vpop.f32.mrb[0].mxu0
      %v588 = vpop.f32.mrb[0].mxu0
      %v589 = vpop.f32.mrb[0].mxu0
      %590 = vdwg.mxu0
      %v591 = vadd.f32 %v492, %v586
      %v592 = vld [vmem:[%s5] sm:$0x1]
      %v594 = vlaneseq
      %v595 = vshrl.u32 %v594, 7
      %v596 = vsub.s32 0, %v595
      %v597 = vrot.slane %v592, %v596
      %v599 = vadd.f32 %v591, %v597
      %v600 = vmax.f32 %v599, 0.0
      %601 = vst [vmem:[%s297] sm:$0xf] %v600
      %p602 = scmp.lt.s32.totalorder %s17, 1
      %s603 = scalar_select %p602, %s17, 1
      %s604 = smul.addr %s603, 4
      %s605 = scalar_lea.vmem %s6, %s604
      // Predicated region
      $region45: #{unet_bin_forward.9} parent=43 // pred_check
        %p606 = pneg %p181
      $region46: #{unet_bin_forward.9} parent=43 // pred_check_branch
        %608 = sbr.rel (%p606) target = $region48
      $region47: #{unet_bin_forward.9} parent=43 // pred_region
        _
      $region48: #{unet_bin_forward.9} parent=43 // pred_fallthru
        _
    $region44: #{unet_bin_forward.9} parent=5 // pred_fallthru
      _
    %p609 = scmp.le.s32.totalorder 2, %s12
    // Predicated region
    $region49: #{unet_bin_forward.9} parent=5 // pred_check
      %p610 = pneg %p609
    $region50: #{unet_bin_forward.9} parent=5 // pred_check_branch
      %612 = sbr.rel (%p610) target = $region52
    $region51: #{unet_bin_forward.9} parent=5 // pred_region
      %s613 = ssub.s32 %s12, 2
      // Predicated region
      $region53: #{unet_bin_forward.9} parent=51 // pred_check
        %p614 = pneg %p187
      $region54: #{unet_bin_forward.9} parent=51 // pred_check_branch
        %616 = sbr.rel (%p614) target = $region56
      $region55: #{unet_bin_forward.9} parent=51 // pred_region
        %p617 = scmp.lt.s32.totalorder %s18, 1
        %s618 = scalar_select %p617, %s18, 1
        %s619 = smul.addr %s618, 4
        %s620 = scalar_lea.vmem %s6, %s619
      $region56: #{unet_bin_forward.9} parent=51 // pred_fallthru
        _
    $region52: #{unet_bin_forward.9} parent=5 // pred_fallthru
      _
  $region6: #{unet_bin_forward.9} parent=0 // loop_footer
    %s16 = sadd.s32 1, %s12
  $region7: #{unet_bin_forward.9} parent=0 // loop_footer_branch
    %11 = sbr.rel target = $region3
  $region8: #{unet_bin_forward.9} parent=0 // loop_exit
    _

// kernel: tile.73
$region0: #{tile.73}
  #allocation0 [shape = 's32[1]{0}', space=sflag, size = 0x4, scoped, tag = 'scoped memory for tile.73']
  %s0 = inlined_call_operand.vmem [shape: f32[64], index: 0, kind: input, shape index: {}]
  %s1 = inlined_call_operand.vmem [shape: f32[2,64], index: 1, kind: output, shape index: {}]
  // Predicated region
  $region2: #{tile.73} parent=0 // pred_check
    _
  $region3: #{tile.73} parent=0 // pred_check_branch
    %3 = sbr.rel (0) target = $region5
  $region4: #{tile.73} parent=0 // pred_region
    _
  $region5: #{tile.73} parent=0 // pred_fallthru
    _
  %v4 = vld [vmem:[%s0] ss:$0 sm:$0xff]
  %5 = vst [vmem:[%s1] sm:$0x3] %v4

// kernel: tile.74
$region0: #{tile.74}
  %s0 = inlined_call_operand.vmem [shape: f32[2,64], index: 0, kind: input, shape index: {}]
  %s1 = inlined_call_operand.vmem [shape: f32[1,128], index: 1, kind: output, shape index: {}]
  $region1: #{tile.74} parent=0
    #allocation0 [shape = 'u8[4096]{0}', space=vmem, size = 0x1000, scoped, tag = 'scoped mem for output reshape']
    #allocation1 [shape = 'u8[4096]{0}', space=vmem, size = 0x1000, scoped, tag = 'scoped mem for input reshape']
    %s3 = sshllo.u32 0, 2
    %v4 = vld [vmem:[%s0] sm:%s3]
    %5 = vst [vmem:[#allocation1] sm:%s3] %v4
    %v6 = vld [vmem:[#allocation1] sm:$0x1]
    %vm7 = vcmask 523264
    %8 = vst.msk [vmem:[#allocation0] sm:$0x1] %vm7, %v6
    %s9 = scalar_lea.vmem [#allocation1], 1
    %v10 = vld [vmem:[%s9] sm:$0x1]
    %11 = vrot.lane.b32.xlu0 %v10, 64
    %v12 = vpop.permute.xlu0 %11
    %vm13 = vcmask 1048064
    %14 = vst.msk [vmem:[#allocation0] sm:$0x1] %vm13, %v12
    %s16 = sshllo.u32 0, 1
    %v18 = vld [vmem:[#allocation0] sm:%s16]
    %s19 = sshllo.u32 0, 1
    %20 = vst [vmem:[%s1] sm:%s19] %v18

// kernel: tile.78
$region0: #{tile.78}
  #allocation0 [shape = 's32[1]{0}', space=sflag, size = 0x4, scoped, tag = 'scoped memory for tile.78']
  %s0 = inlined_call_operand.vmem [shape: f32[32], index: 0, kind: input, shape index: {}]
  %s1 = inlined_call_operand.vmem [shape: f32[2,32], index: 1, kind: output, shape index: {}]
  // Predicated region
  $region2: #{tile.78} parent=0 // pred_check
    _
  $region3: #{tile.78} parent=0 // pred_check_branch
    %3 = sbr.rel (0) target = $region5
  $region4: #{tile.78} parent=0 // pred_region
    _
  $region5: #{tile.78} parent=0 // pred_fallthru
    _
  %v4 = vld [vmem:[%s0] ss:$0 sm:$0xff]
  %5 = vst [vmem:[%s1] sm:$0x3] %v4

// kernel: tile.79
$region0: #{tile.79}
  %s0 = inlined_call_operand.vmem [shape: f32[2,32], index: 0, kind: input, shape index: {}]
  %s1 = inlined_call_operand.vmem [shape: f32[1,64], index: 1, kind: output, shape index: {}]
  $region1: #{tile.79} parent=0
    #allocation0 [shape = 'u8[4096]{0}', space=vmem, size = 0x1000, scoped, tag = 'scoped mem for output reshape']
    #allocation1 [shape = 'u8[4096]{0}', space=vmem, size = 0x1000, scoped, tag = 'scoped mem for input reshape']
    %s3 = sshllo.u32 0, 2
    %v4 = vld [vmem:[%s0] sm:%s3]
    %5 = vst [vmem:[#allocation1] sm:%s3] %v4
    %v6 = vld [vmem:[#allocation1] sm:$0x1]
    %vm7 = vcmask 261120
    %8 = vst.msk [vmem:[#allocation0] sm:$0x1] %vm7, %v6
    %s9 = scalar_lea.vmem [#allocation1], 1
    %v10 = vld [vmem:[%s9] sm:$0x1]
    %11 = vrot.lane.b32.xlu0 %v10, 32
    %v12 = vpop.permute.xlu0 %11
    %vm13 = vcmask 523520
    %14 = vst.msk [vmem:[#allocation0] sm:$0x1] %vm13, %v12
    %s16 = sshllo.u32 0, 1
    %v18 = vld [vmem:[#allocation0] sm:%s16]
    %s19 = sshllo.u32 0, 1
    %20 = vst [vmem:[%s1] sm:%s19] %v18

// kernel: tile.88
$region0: #{tile.88}
  #allocation0 [shape = 's32[1]{0}', space=sflag, size = 0x4, scoped, tag = 'scoped memory for tile.88']
  %s0 = inlined_call_operand.vmem [shape: f32[16], index: 0, kind: input, shape index: {}]
  %s1 = inlined_call_operand.vmem [shape: f32[4,16], index: 1, kind: output, shape index: {}]
  // Predicated region
  $region2: #{tile.88} parent=0 // pred_check
    _
  $region3: #{tile.88} parent=0 // pred_check_branch
    %3 = sbr.rel (0) target = $region5
  $region4: #{tile.88} parent=0 // pred_region
    _
  $region5: #{tile.88} parent=0 // pred_fallthru
    _
  %v4 = vld [vmem:[%s0] ss:$0 sm:$0xff]
  %5 = vst [vmem:[%s1] sm:$0xf] %v4

// kernel: tile.89
$region0: #{tile.89}
  %s0 = inlined_call_operand.vmem [shape: f32[4,16], index: 0, kind: input, shape index: {}]
  %s1 = inlined_call_operand.vmem [shape: f32[1,64], index: 1, kind: output, shape index: {}]
  $region1: #{tile.89} parent=0
    #allocation0 [shape = 'u8[4096]{0}', space=vmem, size = 0x1000, scoped, tag = 'scoped mem for output reshape']
    #allocation1 [shape = 'u8[4096]{0}', space=vmem, size = 0x1000, scoped, tag = 'scoped mem for input reshape']
    %s3 = sshllo.u32 0, 4
    %v4 = vld [vmem:[%s0] sm:%s3]
    %5 = vst [vmem:[#allocation1] sm:%s3] %v4
    %v6 = vld [vmem:[#allocation1] sm:$0x1]
    %vm7 = vcmask 130048
    %8 = vst.msk [vmem:[#allocation0] sm:$0x1] %vm7, %v6
    %s9 = scalar_lea.vmem [#allocation1], 3
    %v10 = vld [vmem:[%s9] sm:$0x1]
    %11 = vrot.lane.b32.xlu0 %v10, 48
    %v12 = vpop.permute.xlu0 %11
    %vm13 = vcmask 523648
    %14 = vst.msk [vmem:[#allocation0] sm:$0x1] %vm13, %v12
    %s15 = scalar_lea.vmem [#allocation1], 2
    %v16 = vld [vmem:[%s15] sm:$0x1]
    %17 = vrot.lane.b32.xlu0 %v16, 32
    %v18 = vpop.permute.xlu0 %17
    %vm19 = vcmask 392448
    %20 = vst.msk [vmem:[#allocation0] sm:$0x1] %vm19, %v18
    %s21 = scalar_lea.vmem [#allocation1], 1
    %v22 = vld [vmem:[%s21] sm:$0x1]
    %23 = vrot.lane.b32.xlu0 %v22, 16
    %v24 = vpop.permute.xlu0 %23
    %vm25 = vcmask 261248
    %26 = vst.msk [vmem:[#allocation0] sm:$0x1] %vm25, %v24
    %s28 = sshllo.u32 0, 1
    %v30 = vld [vmem:[#allocation0] sm:%s28]
    %s31 = sshllo.u32 0, 1
    %32 = vst [vmem:[%s1] sm:%s31] %v30

// kernel: unet_bin_forward.10
$region0: #{unet_bin_forward.10}
  #allocation0 [shape = 'u32[]', space=smem, size = 0x4, offset = 0x4, fixed_abs, tag = 'smem constant byte address 0x4 - core index']
  #allocation1 [shape = 'u32[144,128]{1,0:T(1,128)}', space=vmem, size = 0x12000, scoped, tag = 'internal scratch']
  %s0 = inlined_call_operand.vmem [shape: f32[2,4,128], index: 0, kind: input, shape index: {}]
  %s1 = inlined_call_operand.vmem [shape: f32[2,4,128], index: 1, kind: input, shape index: {}]
  %s2 = inlined_call_operand.vmem [shape: f32[2,4,128], index: 2, kind: input, shape index: {}]
  %s3 = inlined_call_operand.vmem [shape: f32[2,4,128], index: 3, kind: input, shape index: {}]
  %s4 = inlined_call_operand.vmem [shape: bf16[3,128,128], index: 4, kind: input, shape index: {}]
  %s5 = inlined_call_operand.vmem [shape: f32[1,128], index: 5, kind: input, shape index: {}]
  %s6 = inlined_call_operand.vmem [shape: bf16[128,64], index: 6, kind: input, shape index: {}]
  %s7 = inlined_call_operand.vmem [shape: f32[1,64], index: 7, kind: input, shape index: {}]
  %s8 = inlined_call_operand.vmem [shape: f32[2,2,64], index: 8, kind: output, shape index: {}]
  %s9 = sld [smem:[#allocation0]]
  $region65: #{unet_bin_forward.10} parent=0
    _
  %s11 = ssub.s32 1, %s9
  %s12 = scalar_select 0, %s11, %s9
  loop: start=0, step=1, limit=4
  $region2: #{unet_bin_forward.10} parent=0 // loop_pre_header
    _
  $region3: #{unet_bin_forward.10} parent=0 // loop_header
    %s14 = sphi 0, %s18
    %p15 = scmp.ge.s32.totalorder %s14, 4
    %s24 = sphi 0, %s26
    %s27 = sphi 0, %s24
    %s28 = sphi 0, %s27
    %s44 = sphi 0, %s28
    %s50 = sphi 0, %s52
    %s53 = sphi 0, %s50
    %s54 = sphi 0, %s53
    %s70 = sphi 0, %s54
    %s76 = sphi 0, %s78
    %s79 = sphi 0, %s76
    %s80 = sphi 0, %s79
    %s96 = sphi 0, %s80
    %s102 = sphi 0, %s104
    %s105 = sphi 0, %s102
    %s106 = sphi 0, %s105
    %s122 = sphi 0, %s106
    %s126 = sphi 0, %s126
    %s128 = sphi 0, %s126
    %s129 = sphi 0, %s128
    %s143 = sphi 0, %s129
    %s147 = sphi 0, %s147
    %s149 = sphi 0, %s147
    %s150 = sphi 0, %s149
    %s164 = sphi 0, %s150
    %s168 = sphi 0, %s168
    %s170 = sphi 0, %s168
    %s171 = sphi 0, %s170
    %s185 = sphi 0, %s171
    %s189 = sphi 0, %s189
    %s191 = sphi 0, %s189
    %s192 = sphi 0, %s191
    %s206 = sphi 0, %s192
    %s212 = sphi 0, %s214
    %s215 = sphi 0, %s212
    %s216 = sphi 0, %s215
    %s232 = sphi 0, %s216
  $region4: #{unet_bin_forward.10} parent=0 // loop_header_branch
    %17 = sbr.rel (%p15) target = $region8
  $region5: #{unet_bin_forward.10} parent=0 // loop_body
    %s19 = ssub.s32 %s14, 1
    %s20 = ssub.s32 %s14, 2
    %s21 = sadd.s32 %s14, 1
    %s22 = ssub.s32 %s14, %s21
    %p23 = scmp.eq.s32.totalorder %s22, 0
    %s25 = sadd.s32 %s24, 1
    %s26 = scalar_select %p23, %s24, %s25
    %p29 = pneg %p23
    %p30 = scmp.eq.s32.totalorder %s14, 1
    %p31 = por %p29, %p30
    %p32 = scmp.ne.s32.totalorder %s24, %s27
    %p33 = scmp.eq.s32.totalorder %s14, 0
    %p34 = por %p32, %p33
    %p35 = scmp.ne.s32.totalorder %s24, %s27
    %p36 = scmp.eq.s32.totalorder %s19, 1
    %p37 = por %p35, %p36
    %p38 = scmp.ne.s32.totalorder %s27, %s28
    %p39 = scmp.eq.s32.totalorder %s19, 0
    %p40 = por %p38, %p39
    %p41 = scmp.ne.s32.totalorder %s27, %s28
    %p42 = scmp.eq.s32.totalorder %s20, 1
    %p43 = por %p41, %p42
    %p45 = scmp.ne.s32.totalorder %s28, %s44
    %p46 = scmp.eq.s32.totalorder %s20, 0
    %p47 = por %p45, %p46
    %s48 = ssub.s32 %s14, %s21
    %p49 = scmp.eq.s32.totalorder %s48, 0
    %s51 = sadd.s32 %s50, 1
    %s52 = scalar_select %p49, %s50, %s51
    %p55 = pneg %p49
    %p56 = scmp.eq.s32.totalorder %s14, 1
    %p57 = por %p55, %p56
    %p58 = scmp.ne.s32.totalorder %s50, %s53
    %p59 = scmp.eq.s32.totalorder %s14, 0
    %p60 = por %p58, %p59
    %p61 = scmp.ne.s32.totalorder %s50, %s53
    %p62 = scmp.eq.s32.totalorder %s19, 1
    %p63 = por %p61, %p62
    %p64 = scmp.ne.s32.totalorder %s53, %s54
    %p65 = scmp.eq.s32.totalorder %s19, 0
    %p66 = por %p64, %p65
    %p67 = scmp.ne.s32.totalorder %s53, %s54
    %p68 = scmp.eq.s32.totalorder %s20, 1
    %p69 = por %p67, %p68
    %p71 = scmp.ne.s32.totalorder %s54, %s70
    %p72 = scmp.eq.s32.totalorder %s20, 0
    %p73 = por %p71, %p72
    %s74 = ssub.s32 %s14, %s21
    %p75 = scmp.eq.s32.totalorder %s74, 0
    %s77 = sadd.s32 %s76, 1
    %s78 = scalar_select %p75, %s76, %s77
    %p81 = pneg %p75
    %p82 = scmp.eq.s32.totalorder %s14, 1
    %p83 = por %p81, %p82
    %p84 = scmp.ne.s32.totalorder %s76, %s79
    %p85 = scmp.eq.s32.totalorder %s14, 0
    %p86 = por %p84, %p85
    %p87 = scmp.ne.s32.totalorder %s76, %s79
    %p88 = scmp.eq.s32.totalorder %s19, 1
    %p89 = por %p87, %p88
    %p90 = scmp.ne.s32.totalorder %s79, %s80
    %p91 = scmp.eq.s32.totalorder %s19, 0
    %p92 = por %p90, %p91
    %p93 = scmp.ne.s32.totalorder %s79, %s80
    %p94 = scmp.eq.s32.totalorder %s20, 1
    %p95 = por %p93, %p94
    %p97 = scmp.ne.s32.totalorder %s80, %s96
    %p98 = scmp.eq.s32.totalorder %s20, 0
    %p99 = por %p97, %p98
    %s100 = ssub.s32 %s14, %s21
    %p101 = scmp.eq.s32.totalorder %s100, 0
    %s103 = sadd.s32 %s102, 1
    %s104 = scalar_select %p101, %s102, %s103
    %p107 = pneg %p101
    %p108 = scmp.eq.s32.totalorder %s14, 1
    %p109 = por %p107, %p108
    %p110 = scmp.ne.s32.totalorder %s102, %s105
    %p111 = scmp.eq.s32.totalorder %s14, 0
    %p112 = por %p110, %p111
    %p113 = scmp.ne.s32.totalorder %s102, %s105
    %p114 = scmp.eq.s32.totalorder %s19, 1
    %p115 = por %p113, %p114
    %p116 = scmp.ne.s32.totalorder %s105, %s106
    %p117 = scmp.eq.s32.totalorder %s19, 0
    %p118 = por %p116, %p117
    %p119 = scmp.ne.s32.totalorder %s105, %s106
    %p120 = scmp.eq.s32.totalorder %s20, 1
    %p121 = por %p119, %p120
    %p123 = scmp.ne.s32.totalorder %s106, %s122
    %p124 = scmp.eq.s32.totalorder %s20, 0
    %p125 = por %p123, %p124
    %s127 = sadd.s32 %s126, 1
    %p130 = scmp.eq.s32.totalorder %s14, 1
    %p131 = scmp.ne.s32.totalorder %s126, %s128
    %p132 = scmp.eq.s32.totalorder %s14, 0
    %p133 = por %p131, %p132
    %p134 = scmp.ne.s32.totalorder %s126, %s128
    %p135 = scmp.eq.s32.totalorder %s19, 1
    %p136 = por %p134, %p135
    %p137 = scmp.ne.s32.totalorder %s128, %s129
    %p138 = scmp.eq.s32.totalorder %s19, 0
    %p139 = por %p137, %p138
    %p140 = scmp.ne.s32.totalorder %s128, %s129
    %p141 = scmp.eq.s32.totalorder %s20, 1
    %p142 = por %p140, %p141
    %p144 = scmp.ne.s32.totalorder %s129, %s143
    %p145 = scmp.eq.s32.totalorder %s20, 0
    %p146 = por %p144, %p145
    %s148 = sadd.s32 %s147, 1
    %p151 = scmp.eq.s32.totalorder %s14, 1
    %p152 = scmp.ne.s32.totalorder %s147, %s149
    %p153 = scmp.eq.s32.totalorder %s14, 0
    %p154 = por %p152, %p153
    %p155 = scmp.ne.s32.totalorder %s147, %s149
    %p156 = scmp.eq.s32.totalorder %s19, 1
    %p157 = por %p155, %p156
    %p158 = scmp.ne.s32.totalorder %s149, %s150
    %p159 = scmp.eq.s32.totalorder %s19, 0
    %p160 = por %p158, %p159
    %p161 = scmp.ne.s32.totalorder %s149, %s150
    %p162 = scmp.eq.s32.totalorder %s20, 1
    %p163 = por %p161, %p162
    %p165 = scmp.ne.s32.totalorder %s150, %s164
    %p166 = scmp.eq.s32.totalorder %s20, 0
    %p167 = por %p165, %p166
    %s169 = sadd.s32 %s168, 1
    %p172 = scmp.eq.s32.totalorder %s14, 1
    %p173 = scmp.ne.s32.totalorder %s168, %s170
    %p174 = scmp.eq.s32.totalorder %s14, 0
    %p175 = por %p173, %p174
    %p176 = scmp.ne.s32.totalorder %s168, %s170
    %p177 = scmp.eq.s32.totalorder %s19, 1
    %p178 = por %p176, %p177
    %p179 = scmp.ne.s32.totalorder %s170, %s171
    %p180 = scmp.eq.s32.totalorder %s19, 0
    %p181 = por %p179, %p180
    %p182 = scmp.ne.s32.totalorder %s170, %s171
    %p183 = scmp.eq.s32.totalorder %s20, 1
    %p184 = por %p182, %p183
    %p186 = scmp.ne.s32.totalorder %s171, %s185
    %p187 = scmp.eq.s32.totalorder %s20, 0
    %p188 = por %p186, %p187
    %s190 = sadd.s32 %s189, 1
    %p193 = scmp.eq.s32.totalorder %s14, 1
    %p194 = scmp.ne.s32.totalorder %s189, %s191
    %p195 = scmp.eq.s32.totalorder %s14, 0
    %p196 = por %p194, %p195
    %p197 = scmp.ne.s32.totalorder %s189, %s191
    %p198 = scmp.eq.s32.totalorder %s19, 1
    %p199 = por %p197, %p198
    %p200 = scmp.ne.s32.totalorder %s191, %s192
    %p201 = scmp.eq.s32.totalorder %s19, 0
    %p202 = por %p200, %p201
    %p203 = scmp.ne.s32.totalorder %s191, %s192
    %p204 = scmp.eq.s32.totalorder %s20, 1
    %p205 = por %p203, %p204
    %p207 = scmp.ne.s32.totalorder %s192, %s206
    %p208 = scmp.eq.s32.totalorder %s20, 0
    %p209 = por %p207, %p208
    %s210 = ssub.s32 %s14, %s21
    %p211 = scmp.eq.s32.totalorder %s210, 0
    %s213 = sadd.s32 %s212, 1
    %s214 = scalar_select %p211, %s212, %s213
    %p217 = pneg %p211
    %p218 = scmp.eq.s32.totalorder %s14, 1
    %p219 = por %p217, %p218
    %p220 = scmp.ne.s32.totalorder %s212, %s215
    %p221 = scmp.eq.s32.totalorder %s14, 0
    %p222 = por %p220, %p221
    %p223 = scmp.ne.s32.totalorder %s212, %s215
    %p224 = scmp.eq.s32.totalorder %s19, 1
    %p225 = por %p223, %p224
    %p226 = scmp.ne.s32.totalorder %s215, %s216
    %p227 = scmp.eq.s32.totalorder %s19, 0
    %p228 = por %p226, %p227
    %p229 = scmp.ne.s32.totalorder %s215, %s216
    %p230 = scmp.eq.s32.totalorder %s20, 1
    %p231 = por %p229, %p230
    %p233 = scmp.ne.s32.totalorder %s216, %s232
    %p234 = scmp.eq.s32.totalorder %s20, 0
    %p235 = por %p233, %p234
    %p236 = scmp.le.s32.totalorder 1, %s14
    %p237 = scmp.lt.s32.totalorder %s14, 3
    %p238 = pnand %p236, %p237
    %p239 = pneg %p238
    // Predicated region
    $region9: #{unet_bin_forward.10} parent=5 // pred_check
      _
    $region10: #{unet_bin_forward.10} parent=5 // pred_check_branch
      %241 = sbr.rel (%p238) target = $region12
    $region11: #{unet_bin_forward.10} parent=5 // pred_region
      %s242 = ssub.s32 %s14, 1
      // Predicated region
      $region13: #{unet_bin_forward.10} parent=11 // pred_check
        %p243 = pneg %p139
      $region14: #{unet_bin_forward.10} parent=11 // pred_check_branch
        %245 = sbr.rel (%p243) target = $region16
      $region15: #{unet_bin_forward.10} parent=11 // pred_region
        _
      $region16: #{unet_bin_forward.10} parent=11 // pred_fallthru
        _
      // Predicated region
      $region17: #{unet_bin_forward.10} parent=11 // pred_check
        %p246 = pneg %p160
      $region18: #{unet_bin_forward.10} parent=11 // pred_check_branch
        %248 = sbr.rel (%p246) target = $region20
      $region19: #{unet_bin_forward.10} parent=11 // pred_region
        _
      $region20: #{unet_bin_forward.10} parent=11 // pred_fallthru
        _
      // Predicated region
      $region21: #{unet_bin_forward.10} parent=11 // pred_check
        %p249 = pneg %p181
      $region22: #{unet_bin_forward.10} parent=11 // pred_check_branch
        %251 = sbr.rel (%p249) target = $region24
      $region23: #{unet_bin_forward.10} parent=11 // pred_region
        _
      $region24: #{unet_bin_forward.10} parent=11 // pred_fallthru
        _
      // Predicated region
      $region25: #{unet_bin_forward.10} parent=11 // pred_check
        %p252 = pneg %p202
      $region26: #{unet_bin_forward.10} parent=11 // pred_check_branch
        %254 = sbr.rel (%p252) target = $region28
      $region27: #{unet_bin_forward.10} parent=11 // pred_region
        _
      $region28: #{unet_bin_forward.10} parent=11 // pred_fallthru
        _
    $region12: #{unet_bin_forward.10} parent=5 // pred_fallthru
      _
    %p255 = scmp.lt.s32.totalorder %s14, 2
    // Predicated region
    $region29: #{unet_bin_forward.10} parent=5 // pred_check
      %p256 = pneg %p255
    $region30: #{unet_bin_forward.10} parent=5 // pred_check_branch
      %258 = sbr.rel (%p256) target = $region32
    $region31: #{unet_bin_forward.10} parent=5 // pred_region
      // Predicated region
      $region33: #{unet_bin_forward.10} parent=31 // pred_check
        %p259 = pneg %p34
      $region34: #{unet_bin_forward.10} parent=31 // pred_check_branch
        %261 = sbr.rel (%p259) target = $region36
      $region35: #{unet_bin_forward.10} parent=31 // pred_region
        %p262 = scmp.lt.s32.totalorder %s14, 1
        %s263 = scalar_select %p262, %s14, 1
        %s264 = smul.addr %s263, 4
        %s265 = scalar_lea.vmem %s0, %s264
      $region36: #{unet_bin_forward.10} parent=31 // pred_fallthru
        _
      // Predicated region
      $region37: #{unet_bin_forward.10} parent=31 // pred_check
        %p266 = pneg %p60
      $region38: #{unet_bin_forward.10} parent=31 // pred_check_branch
        %268 = sbr.rel (%p266) target = $region40
      $region39: #{unet_bin_forward.10} parent=31 // pred_region
        %p269 = scmp.lt.s32.totalorder %s14, 1
        %s270 = scalar_select %p269, %s14, 1
        %s271 = smul.addr %s270, 4
        %s272 = scalar_lea.vmem %s1, %s271
      $region40: #{unet_bin_forward.10} parent=31 // pred_fallthru
        _
      // Predicated region
      $region41: #{unet_bin_forward.10} parent=31 // pred_check
        %p273 = pneg %p86
      $region42: #{unet_bin_forward.10} parent=31 // pred_check_branch
        %275 = sbr.rel (%p273) target = $region44
      $region43: #{unet_bin_forward.10} parent=31 // pred_region
        %p276 = scmp.lt.s32.totalorder %s14, 1
        %s277 = scalar_select %p276, %s14, 1
        %s278 = smul.addr %s277, 4
        %s279 = scalar_lea.vmem %s2, %s278
      $region44: #{unet_bin_forward.10} parent=31 // pred_fallthru
        _
      // Predicated region
      $region45: #{unet_bin_forward.10} parent=31 // pred_check
        %p280 = pneg %p112
      $region46: #{unet_bin_forward.10} parent=31 // pred_check_branch
        %282 = sbr.rel (%p280) target = $region48
      $region47: #{unet_bin_forward.10} parent=31 // pred_region
        %p283 = scmp.lt.s32.totalorder %s14, 1
        %s284 = scalar_select %p283, %s14, 1
        %s285 = smul.addr %s284, 4
        %s286 = scalar_lea.vmem %s3, %s285
      $region48: #{unet_bin_forward.10} parent=31 // pred_fallthru
        _
    $region32: #{unet_bin_forward.10} parent=5 // pred_fallthru
      _
    %p287 = scmp.le.s32.totalorder 1, %s14
    %p288 = scmp.lt.s32.totalorder %s14, 3
    %p289 = pnand %p287, %p288
    %p290 = pneg %p289
    // Predicated region
    $region49: #{unet_bin_forward.10} parent=5 // pred_check
      _
    $region50: #{unet_bin_forward.10} parent=5 // pred_check_branch
      %292 = sbr.rel (%p289) target = $region52
    $region51: #{unet_bin_forward.10} parent=5 // pred_region
      %s293 = ssub.s32 %s14, 1
      %p294 = scmp.lt.s32.totalorder %s19, 1
      %s295 = scalar_select %p294, %s19, 1
      %s296 = smul.addr %s295, 4
      %s297 = scalar_lea.vmem %s0, %s296
      %p298 = pneg %p40
      %p299 = pneg %p37
      %p300 = scmp.lt.s32.totalorder %s19, 1
      %s301 = scalar_select %p300, %s19, 1
      %s302 = smul.addr %s301, 4
      %s303 = scalar_lea.vmem %s1, %s302
      %p304 = pneg %p66
      %p305 = pneg %p63
      %p306 = scmp.lt.s32.totalorder %s19, 1
      %s307 = scalar_select %p306, %s19, 1
      %s308 = smul.addr %s307, 4
      %s309 = scalar_lea.vmem %s2, %s308
      %p310 = pneg %p92
      %p311 = pneg %p89
      %p312 = scmp.lt.s32.totalorder %s19, 1
      %s313 = scalar_select %p312, %s19, 1
      %s314 = smul.addr %s313, 4
      %s315 = scalar_lea.vmem %s3, %s314
      %p316 = pneg %p118
      %p317 = pneg %p115
      %p318 = pneg %p139
      %p319 = pneg %p136
      %p320 = pneg %p160
      %p321 = pneg %p157
      %p322 = pneg %p181
      %p323 = pneg %p178
      %p324 = pneg %p202
      %p325 = pneg %p199
      %p326 = pneg %p228
      %p327 = pneg %p225
      %p328 = scmp.lt.s32.totalorder %s19, 1
      %s329 = scalar_select %p328, %s19, 1
      %s330 = smul.addr %s329, 2
      %s331 = scalar_lea.vmem %s8, %s330
      %p332 = scmp.lt.s32.totalorder %s19, 1
      %s333 = scalar_select %p332, %s19, 1
      %s334 = smul.addr %s333, 4
      %s335 = scalar_lea.vmem %s0, %s334
      %p336 = scmp.lt.s32.totalorder %s19, 1
      %s337 = scalar_select %p336, %s19, 1
      %s338 = smul.addr %s337, 4
      %s339 = scalar_lea.vmem %s1, %s338
      %p340 = scmp.lt.s32.totalorder %s19, 1
      %s341 = scalar_select %p340, %s19, 1
      %s342 = smul.addr %s341, 4
      %s343 = scalar_lea.vmem %s2, %s342
      %p344 = scmp.lt.s32.totalorder %s19, 1
      %s345 = scalar_select %p344, %s19, 1
      %s346 = smul.addr %s345, 4
      %s347 = scalar_lea.vmem %s3, %s346
      %p348 = scmp.lt.s32.totalorder %s19, 1
      %s349 = scalar_select %p348, %s19, 1
      %s350 = smul.addr %s349, 2
      %s351 = scalar_lea.vmem %s8, %s350
      %v353 = vld [vmem:[%s335] sm:$0xf]
      %v354 = vld [vmem:[%s339] sm:$0xf]
      %v355 = vmax.f32 %v353, %v354
      %v356 = vld [vmem:[%s343] sm:$0xf]
      %v357 = vmax.f32 %v355, %v356
      %v358 = vld [vmem:[%s347] sm:$0xf]
      %v359 = vmax.f32 %v357, %v358
      %v360 = vpack.c.bf16 %v359, %v359
      %v361 = vld [vmem:[%s4] sm:$0xf]
      %v362 = vld [vmem:[%s4 + $0x4] sm:$0xf]
      %v363 = vld [vmem:[%s4 + $0x8] sm:$0xf]
      %v364 = vld [vmem:[%s4 + $0xc] sm:$0xf]
      %v365 = vld [vmem:[%s4 + $0x10] sm:$0xf]
      %v366 = vld [vmem:[%s4 + $0x14] sm:$0xf]
      %v367 = vld [vmem:[%s4 + $0x18] sm:$0xf]
      %v368 = vld [vmem:[%s4 + $0x1c] sm:$0xf]
      %v369 = vld [vmem:[%s4 + $0x20] sm:$0xf]
      %v370 = vld [vmem:[%s4 + $0x24] sm:$0xf]
      %v371 = vld [vmem:[%s4 + $0x28] sm:$0xf]
      %v372 = vld [vmem:[%s4 + $0x2c] sm:$0xf]
      %v373 = vld [vmem:[%s4 + $0x30] sm:$0xf]
      %v374 = vld [vmem:[%s4 + $0x34] sm:$0xf]
      %v375 = vld [vmem:[%s4 + $0x38] sm:$0xf]
      %v376 = vld [vmem:[%s4 + $0x3c] sm:$0xf]
      %s377 = scalar_lea.vmem %s4, 64
      %v378 = vld [vmem:[%s377] sm:$0xf]
      %v379 = vld [vmem:[%s377 + $0x4] sm:$0xf]
      %v380 = vld [vmem:[%s377 + $0x8] sm:$0xf]
      %v381 = vld [vmem:[%s377 + $0xc] sm:$0xf]
      %v382 = vld [vmem:[%s377 + $0x10] sm:$0xf]
      %v383 = vld [vmem:[%s377 + $0x14] sm:$0xf]
      %v384 = vld [vmem:[%s377 + $0x18] sm:$0xf]
      %v385 = vld [vmem:[%s377 + $0x1c] sm:$0xf]
      %v386 = vld [vmem:[%s377 + $0x20] sm:$0xf]
      %v387 = vld [vmem:[%s377 + $0x24] sm:$0xf]
      %v388 = vld [vmem:[%s377 + $0x28] sm:$0xf]
      %v389 = vld [vmem:[%s377 + $0x2c] sm:$0xf]
      %v390 = vld [vmem:[%s377 + $0x30] sm:$0xf]
      %v391 = vld [vmem:[%s377 + $0x34] sm:$0xf]
      %v392 = vld [vmem:[%s377 + $0x38] sm:$0xf]
      %v393 = vld [vmem:[%s377 + $0x3c] sm:$0xf]
      %v395 = vshrl.u32 %v360, 16
      %v397 = vshll.u32 %v360, 16
      %v399 = vrot.slane %v397, 1
      %v400 = vor.u32 %v395, %v399
      %v418 = vunpack.c.l.b16 %v378
      %v419 = vunpack.c.l.b16 %v379
      %v420 = vunpack.c.l.b16 %v380
      %v421 = vunpack.c.l.b16 %v381
      %v422 = vunpack.c.l.b16 %v382
      %v423 = vunpack.c.l.b16 %v383
      %v424 = vunpack.c.l.b16 %v384
      %v425 = vunpack.c.l.b16 %v385
      %v426 = vunpack.c.l.b16 %v386
      %v427 = vunpack.c.l.b16 %v387
      %v428 = vunpack.c.l.b16 %v388
      %v429 = vunpack.c.l.b16 %v389
      %v430 = vunpack.c.l.b16 %v390
      %v431 = vunpack.c.l.b16 %v391
      %v432 = vunpack.c.l.b16 %v392
      %v433 = vunpack.c.l.b16 %v393
      %v434 = vpack.c.b16 %v419, %v418
      %v435 = vpack.c.b16 %v421, %v420
      %v436 = vpack.c.b16 %v423, %v422
      %v437 = vpack.c.b16 %v425, %v424
      %v438 = vpack.c.b16 %v427, %v426
      %v439 = vpack.c.b16 %v429, %v428
      %v440 = vpack.c.b16 %v431, %v430
      %v441 = vpack.c.b16 %v433, %v432
      %450 = vmatprep.subr.bf16.mxu0 0
      %451 = vmatpush1.bf16.msra.mxu0 %v434
      %452 = vmatprep.subr.bf16.mxu0 0
      %453 = vmatpush1.bf16.msra.mxu0 %v435
      %454 = vmatprep.subr.bf16.mxu0 0
      %455 = vmatpush1.bf16.msra.mxu0 %v436
      %456 = vmatprep.subr.bf16.mxu0 0
      %457 = vmatpush1.bf16.msra.mxu0 %v437
      %458 = vmatprep.subr.bf16.mxu0 0
      %459 = vmatpush1.bf16.msra.mxu0 %v438
      %460 = vmatprep.subr.bf16.mxu0 0
      %461 = vmatpush1.bf16.msra.mxu0 %v439
      %462 = vmatprep.subr.bf16.mxu0 0
      %463 = vmatpush1.bf16.msra.mxu0 %v440
      %464 = vmatprep.subr.bf16.mxu0 0
      %465 = vmatpush1.bf16.msra.mxu0 %v441
      %466 = vmatprep.subr.bf16.mxu0 0
      %467 = vmatpush1.bf16.msra.mxu0 0
      %468 = vmatprep.subr.bf16.mxu0 0
      %469 = vmatpush1.bf16.msra.mxu0 0
      %470 = vmatprep.subr.bf16.mxu0 0
      %471 = vmatpush1.bf16.msra.mxu0 0
      %472 = vmatprep.subr.bf16.mxu0 0
      %473 = vmatpush1.bf16.msra.mxu0 0
      %474 = vmatprep.subr.bf16.mxu0 0
      %475 = vmatpush1.bf16.msra.mxu0 0
      %476 = vmatprep.subr.bf16.mxu0 0
      %477 = vmatpush1.bf16.msra.mxu0 0
      %478 = vmatprep.subr.bf16.mxu0 0
      %479 = vmatpush1.bf16.msra.mxu0 0
      %480 = vmatprep.subr.bf16.mxu0 0
      %481 = vmatpush1.bf16.msra.mxu0 0
      %482 = vmatprep.mubr.bf16.mxu0 0
      %483 = vmatmul.mubr.bf16.gmra.mrb[0].mxu0 %v400
      %v484 = vpop.f32.mrb[0].mxu0
      %v485 = vadd.f32 0.0, %v484
      %v486 = vpop.f32.mrb[0].mxu0
      %v487 = vpop.f32.mrb[0].mxu0
      %v488 = vpop.f32.mrb[0].mxu0
      %489 = vdwg.mxu0
      %v506 = vunpack.c.l.b16 %v361
      %v507 = vunpack.c.l.b16 %v362
      %v508 = vunpack.c.l.b16 %v363
      %v509 = vunpack.c.l.b16 %v364
      %v510 = vunpack.c.l.b16 %v365
      %v511 = vunpack.c.l.b16 %v366
      %v512 = vunpack.c.l.b16 %v367
      %v513 = vunpack.c.l.b16 %v368
      %v514 = vunpack.c.l.b16 %v369
      %v515 = vunpack.c.l.b16 %v370
      %v516 = vunpack.c.l.b16 %v371
      %v517 = vunpack.c.l.b16 %v372
      %v518 = vunpack.c.l.b16 %v373
      %v519 = vunpack.c.l.b16 %v374
      %v520 = vunpack.c.l.b16 %v375
      %v521 = vunpack.c.l.b16 %v376
      %v522 = vpack.c.b16 %v507, %v506
      %v523 = vpack.c.b16 %v509, %v508
      %v524 = vpack.c.b16 %v511, %v510
      %v525 = vpack.c.b16 %v513, %v512
      %v526 = vpack.c.b16 %v515, %v514
      %v527 = vpack.c.b16 %v517, %v516
      %v528 = vpack.c.b16 %v519, %v518
      %v529 = vpack.c.b16 %v521, %v520
      %538 = vmatprep.subr.bf16.mxu0 0
      %539 = vmatpush1.bf16.msra.mxu0 %v522
      %540 = vmatprep.subr.bf16.mxu0 0
      %541 = vmatpush1.bf16.msra.mxu0 %v523
      %542 = vmatprep.subr.bf16.mxu0 0
      %543 = vmatpush1.bf16.msra.mxu0 %v524
      %544 = vmatprep.subr.bf16.mxu0 0
      %545 = vmatpush1.bf16.msra.mxu0 %v525
      %546 = vmatprep.subr.bf16.mxu0 0
      %547 = vmatpush1.bf16.msra.mxu0 %v526
      %548 = vmatprep.subr.bf16.mxu0 0
      %549 = vmatpush1.bf16.msra.mxu0 %v527
      %550 = vmatprep.subr.bf16.mxu0 0
      %551 = vmatpush1.bf16.msra.mxu0 %v528
      %552 = vmatprep.subr.bf16.mxu0 0
      %553 = vmatpush1.bf16.msra.mxu0 %v529
      %554 = vmatprep.subr.bf16.mxu0 0
      %555 = vmatpush1.bf16.msra.mxu0 0
      %556 = vmatprep.subr.bf16.mxu0 0
      %557 = vmatpush1.bf16.msra.mxu0 0
      %558 = vmatprep.subr.bf16.mxu0 0
      %559 = vmatpush1.bf16.msra.mxu0 0
      %560 = vmatprep.subr.bf16.mxu0 0
      %561 = vmatpush1.bf16.msra.mxu0 0
      %562 = vmatprep.subr.bf16.mxu0 0
      %563 = vmatpush1.bf16.msra.mxu0 0
      %564 = vmatprep.subr.bf16.mxu0 0
      %565 = vmatpush1.bf16.msra.mxu0 0
      %566 = vmatprep.subr.bf16.mxu0 0
      %567 = vmatpush1.bf16.msra.mxu0 0
      %568 = vmatprep.subr.bf16.mxu0 0
      %569 = vmatpush1.bf16.msra.mxu0 0
      %570 = vmatprep.mubr.bf16.mxu0 0
      %571 = vmatmul.mubr.bf16.gmra.mrb[0].mxu0 %v360
      %v572 = vpop.f32.mrb[0].mxu0
      %v573 = vadd.f32 %v485, %v572
      %v574 = vpop.f32.mrb[0].mxu0
      %v575 = vpop.f32.mrb[0].mxu0
      %v576 = vpop.f32.mrb[0].mxu0
      %577 = vdwg.mxu0
      %s578 = scalar_lea.vmem %s4, 128
      %v579 = vld [vmem:[%s578] sm:$0xf]
      %v580 = vld [vmem:[%s578 + $0x4] sm:$0xf]
      %v581 = vld [vmem:[%s578 + $0x8] sm:$0xf]
      %v582 = vld [vmem:[%s578 + $0xc] sm:$0xf]
      %v583 = vld [vmem:[%s578 + $0x10] sm:$0xf]
      %v584 = vld [vmem:[%s578 + $0x14] sm:$0xf]
      %v585 = vld [vmem:[%s578 + $0x18] sm:$0xf]
      %v586 = vld [vmem:[%s578 + $0x1c] sm:$0xf]
      %v587 = vld [vmem:[%s578 + $0x20] sm:$0xf]
      %v588 = vld [vmem:[%s578 + $0x24] sm:$0xf]
      %v589 = vld [vmem:[%s578 + $0x28] sm:$0xf]
      %v590 = vld [vmem:[%s578 + $0x2c] sm:$0xf]
      %v591 = vld [vmem:[%s578 + $0x30] sm:$0xf]
      %v592 = vld [vmem:[%s578 + $0x34] sm:$0xf]
      %v593 = vld [vmem:[%s578 + $0x38] sm:$0xf]
      %v594 = vld [vmem:[%s578 + $0x3c] sm:$0xf]
      %v596 = vrot.slane %v360, 1
      %v614 = vunpack.c.l.b16 %v579
      %v615 = vunpack.c.l.b16 %v580
      %v616 = vunpack.c.l.b16 %v581
      %v617 = vunpack.c.l.b16 %v582
      %v618 = vunpack.c.l.b16 %v583
      %v619 = vunpack.c.l.b16 %v584
      %v620 = vunpack.c.l.b16 %v585
      %v621 = vunpack.c.l.b16 %v586
      %v622 = vunpack.c.l.b16 %v587
      %v623 = vunpack.c.l.b16 %v588
      %v624 = vunpack.c.l.b16 %v589
      %v625 = vunpack.c.l.b16 %v590
      %v626 = vunpack.c.l.b16 %v591
      %v627 = vunpack.c.l.b16 %v592
      %v628 = vunpack.c.l.b16 %v593
      %v629 = vunpack.c.l.b16 %v594
      %v630 = vpack.c.b16 %v615, %v614
      %v631 = vpack.c.b16 %v617, %v616
      %v632 = vpack.c.b16 %v619, %v618
      %v633 = vpack.c.b16 %v621, %v620
      %v634 = vpack.c.b16 %v623, %v622
      %v635 = vpack.c.b16 %v625, %v624
      %v636 = vpack.c.b16 %v627, %v626
      %v637 = vpack.c.b16 %v629, %v628
      %646 = vmatprep.subr.bf16.mxu0 0
      %647 = vmatpush1.bf16.msra.mxu0 %v630
      %648 = vmatprep.subr.bf16.mxu0 0
      %649 = vmatpush1.bf16.msra.mxu0 %v631
      %650 = vmatprep.subr.bf16.mxu0 0
      %651 = vmatpush1.bf16.msra.mxu0 %v632
      %652 = vmatprep.subr.bf16.mxu0 0
      %653 = vmatpush1.bf16.msra.mxu0 %v633
      %654 = vmatprep.subr.bf16.mxu0 0
      %655 = vmatpush1.bf16.msra.mxu0 %v634
      %656 = vmatprep.subr.bf16.mxu0 0
      %657 = vmatpush1.bf16.msra.mxu0 %v635
      %658 = vmatprep.subr.bf16.mxu0 0
      %659 = vmatpush1.bf16.msra.mxu0 %v636
      %660 = vmatprep.subr.bf16.mxu0 0
      %661 = vmatpush1.bf16.msra.mxu0 %v637
      %662 = vmatprep.subr.bf16.mxu0 0
      %663 = vmatpush1.bf16.msra.mxu0 0
      %664 = vmatprep.subr.bf16.mxu0 0
      %665 = vmatpush1.bf16.msra.mxu0 0
      %666 = vmatprep.subr.bf16.mxu0 0
      %667 = vmatpush1.bf16.msra.mxu0 0
      %668 = vmatprep.subr.bf16.mxu0 0
      %669 = vmatpush1.bf16.msra.mxu0 0
      %670 = vmatprep.subr.bf16.mxu0 0
      %671 = vmatpush1.bf16.msra.mxu0 0
      %672 = vmatprep.subr.bf16.mxu0 0
      %673 = vmatpush1.bf16.msra.mxu0 0
      %674 = vmatprep.subr.bf16.mxu0 0
      %675 = vmatpush1.bf16.msra.mxu0 0
      %676 = vmatprep.subr.bf16.mxu0 0
      %677 = vmatpush1.bf16.msra.mxu0 0
      %678 = vmatprep.mubr.bf16.mxu0 0
      %679 = vmatmul.mubr.bf16.gmra.mrb[0].mxu0 %v596
      %v680 = vpop.f32.mrb[0].mxu0
      %v681 = vadd.f32 0.0, %v680
      %v682 = vpop.f32.mrb[0].mxu0
      %v683 = vpop.f32.mrb[0].mxu0
      %v684 = vpop.f32.mrb[0].mxu0
      %685 = vdwg.mxu0
      %v686 = vadd.f32 %v573, %v681
      %v687 = vld [vmem:[%s5] sm:$0x1]
      %v689 = vlaneseq
      %v690 = vshrl.u32 %v689, 7
      %v691 = vsub.s32 0, %v690
      %v692 = vrot.slane %v687, %v691
      %v694 = vadd.f32 %v686, %v692
      %v695 = vmax.f32 %v694, 0.0
      %v696 = vpack.c.bf16 %v695, %v695
      %v697 = vld [vmem:[%s6] sm:$0xf]
      %v698 = vld [vmem:[%s6 + $0x4] sm:$0xf]
      %v699 = vld [vmem:[%s6 + $0x8] sm:$0xf]
      %v700 = vld [vmem:[%s6 + $0xc] sm:$0xf]
      %v701 = vld [vmem:[%s6 + $0x10] sm:$0xf]
      %v702 = vld [vmem:[%s6 + $0x14] sm:$0xf]
      %v703 = vld [vmem:[%s6 + $0x18] sm:$0xf]
      %v704 = vld [vmem:[%s6 + $0x1c] sm:$0xf]
      %v705 = vld [vmem:[%s6 + $0x20] sm:$0xf]
      %v706 = vld [vmem:[%s6 + $0x24] sm:$0xf]
      %v707 = vld [vmem:[%s6 + $0x28] sm:$0xf]
      %v708 = vld [vmem:[%s6 + $0x2c] sm:$0xf]
      %v709 = vld [vmem:[%s6 + $0x30] sm:$0xf]
      %v710 = vld [vmem:[%s6 + $0x34] sm:$0xf]
      %v711 = vld [vmem:[%s6 + $0x38] sm:$0xf]
      %v712 = vld [vmem:[%s6 + $0x3c] sm:$0xf]
      %v713 = vld [vmem:[%s7] sm:$0x1]
      %v715 = vlaneseq
      %v716 = vshrl.u32 %v715, 7
      %v717 = vsub.s32 0, %v716
      %v718 = vrot.slane %v713, %v717
      %v736 = vunpack.c.l.b16 %v697
      %v737 = vunpack.c.l.b16 %v698
      %v738 = vunpack.c.l.b16 %v699
      %v739 = vunpack.c.l.b16 %v700
      %v740 = vunpack.c.l.b16 %v701
      %v741 = vunpack.c.l.b16 %v702
      %v742 = vunpack.c.l.b16 %v703
      %v743 = vunpack.c.l.b16 %v704
      %v744 = vunpack.c.l.b16 %v705
      %v745 = vunpack.c.l.b16 %v706
      %v746 = vunpack.c.l.b16 %v707
      %v747 = vunpack.c.l.b16 %v708
      %v748 = vunpack.c.l.b16 %v709
      %v749 = vunpack.c.l.b16 %v710
      %v750 = vunpack.c.l.b16 %v711
      %v751 = vunpack.c.l.b16 %v712
      %v752 = vpack.c.b16 %v737, %v736
      %v753 = vpack.c.b16 %v739, %v738
      %v754 = vpack.c.b16 %v741, %v740
      %v755 = vpack.c.b16 %v743, %v742
      %v756 = vpack.c.b16 %v745, %v744
      %v757 = vpack.c.b16 %v747, %v746
      %v758 = vpack.c.b16 %v749, %v748
      %v759 = vpack.c.b16 %v751, %v750
      %768 = vmatprep.subr.bf16.mxu0 0
      %769 = vmatpush1.bf16.msra.mxu0 %v752
      %770 = vmatprep.subr.bf16.mxu0 0
      %771 = vmatpush1.bf16.msra.mxu0 %v753
      %772 = vmatprep.subr.bf16.mxu0 0
      %773 = vmatpush1.bf16.msra.mxu0 %v754
      %774 = vmatprep.subr.bf16.mxu0 0
      %775 = vmatpush1.bf16.msra.mxu0 %v755
      %776 = vmatprep.subr.bf16.mxu0 0
      %777 = vmatpush1.bf16.msra.mxu0 %v756
      %778 = vmatprep.subr.bf16.mxu0 0
      %779 = vmatpush1.bf16.msra.mxu0 %v757
      %780 = vmatprep.subr.bf16.mxu0 0
      %781 = vmatpush1.bf16.msra.mxu0 %v758
      %782 = vmatprep.subr.bf16.mxu0 0
      %783 = vmatpush1.bf16.msra.mxu0 %v759
      %784 = vmatprep.subr.bf16.mxu0 0
      %785 = vmatpush1.bf16.msra.mxu0 0
      %786 = vmatprep.subr.bf16.mxu0 0
      %787 = vmatpush1.bf16.msra.mxu0 0
      %788 = vmatprep.subr.bf16.mxu0 0
      %789 = vmatpush1.bf16.msra.mxu0 0
      %790 = vmatprep.subr.bf16.mxu0 0
      %791 = vmatpush1.bf16.msra.mxu0 0
      %792 = vmatprep.subr.bf16.mxu0 0
      %793 = vmatpush1.bf16.msra.mxu0 0
      %794 = vmatprep.subr.bf16.mxu0 0
      %795 = vmatpush1.bf16.msra.mxu0 0
      %796 = vmatprep.subr.bf16.mxu0 0
      %797 = vmatpush1.bf16.msra.mxu0 0
      %798 = vmatprep.subr.bf16.mxu0 0
      %799 = vmatpush1.bf16.msra.mxu0 0
      %800 = vmatprep.mubr.bf16.mxu0 0
      %801 = vmatmul.mubr.bf16.gmra.mrb[0].mxu0 %v696
      %v802 = vpop.f32.mrb[0].mxu0
      %v803 = vadd.f32 %v718, %v802
      %v804 = vpop.f32.mrb[0].mxu0
      %v805 = vpop.f32.mrb[0].mxu0
      %v806 = vpop.f32.mrb[0].mxu0
      %807 = vdwg.mxu0
      %vm808 = vcmask 517120
      %809 = vst.msk [vmem:[%s351] sm:$0x3] %vm808, %v803
      %p810 = scmp.lt.s32.totalorder %s19, 1
      %s811 = scalar_select %p810, %s19, 1
      %s812 = smul.addr %s811, 2
      %s813 = scalar_lea.vmem %s8, %s812
      // Predicated region
      $region53: #{unet_bin_forward.10} parent=51 // pred_check
        %p814 = pneg %p225
      $region54: #{unet_bin_forward.10} parent=51 // pred_check_branch
        %816 = sbr.rel (%p814) target = $region56
      $region55: #{unet_bin_forward.10} parent=51 // pred_region
        _
      $region56: #{unet_bin_forward.10} parent=51 // pred_fallthru
        _
    $region52: #{unet_bin_forward.10} parent=5 // pred_fallthru
      _
    %p817 = scmp.le.s32.totalorder 2, %s14
    // Predicated region
    $region57: #{unet_bin_forward.10} parent=5 // pred_check
      %p818 = pneg %p817
    $region58: #{unet_bin_forward.10} parent=5 // pred_check_branch
      %820 = sbr.rel (%p818) target = $region60
    $region59: #{unet_bin_forward.10} parent=5 // pred_region
      %s821 = ssub.s32 %s14, 2
      // Predicated region
      $region61: #{unet_bin_forward.10} parent=59 // pred_check
        %p822 = pneg %p231
      $region62: #{unet_bin_forward.10} parent=59 // pred_check_branch
        %824 = sbr.rel (%p822) target = $region64
      $region63: #{unet_bin_forward.10} parent=59 // pred_region
        %p825 = scmp.lt.s32.totalorder %s20, 1
        %s826 = scalar_select %p825, %s20, 1
        %s827 = smul.addr %s826, 2
        %s828 = scalar_lea.vmem %s8, %s827
      $region64: #{unet_bin_forward.10} parent=59 // pred_fallthru
        _
    $region60: #{unet_bin_forward.10} parent=5 // pred_fallthru
      _
  $region6: #{unet_bin_forward.10} parent=0 // loop_footer
    %s18 = sadd.s32 1, %s14
  $region7: #{unet_bin_forward.10} parent=0 // loop_footer_branch
    %13 = sbr.rel target = $region3
  $region8: #{unet_bin_forward.10} parent=0 // loop_exit
    _

// kernel: tile.98
$region0: #{tile.98}
  #allocation0 [shape = 's32[1]{0}', space=sflag, size = 0x4, scoped, tag = 'scoped memory for tile.98']
  %s0 = inlined_call_operand.vmem [shape: f32[8], index: 0, kind: input, shape index: {}]
  %s1 = inlined_call_operand.vmem [shape: f32[8,8], index: 1, kind: output, shape index: {}]
  // Predicated region
  $region2: #{tile.98} parent=0 // pred_check
    _
  $region3: #{tile.98} parent=0 // pred_check_branch
    %3 = sbr.rel (0) target = $region5
  $region4: #{tile.98} parent=0 // pred_region
    _
  $region5: #{tile.98} parent=0 // pred_fallthru
    _
  %v4 = vld [vmem:[%s0] ss:$0 sm:$0xff]
  %5 = vst [vmem:[%s1] sm:$0xff] %v4

// kernel: tile.99
$region0: #{tile.99}
  %s0 = inlined_call_operand.vmem [shape: f32[8,8], index: 0, kind: input, shape index: {}]
  %s1 = inlined_call_operand.vmem [shape: f32[1,64], index: 1, kind: output, shape index: {}]
  $region1: #{tile.99} parent=0
    #allocation0 [shape = 'u8[4096]{0}', space=vmem, size = 0x1000, scoped, tag = 'scoped mem for output reshape']
    %v2 = vld [vmem:[%s0] sm:$0x1]
    %vm3 = vcmask 64512
    %4 = vst.msk [vmem:[#allocation0] sm:$0x1] %vm3, %v2
    %s5 = scalar_lea.vmem %s0, 7
    %v6 = vld [vmem:[%s5] sm:$0x1]
    %7 = vrot.lane.b32.xlu0 %v6, 56
    %v8 = vpop.permute.xlu0 %7
    %vm9 = vcmask 523712
    %10 = vst.msk [vmem:[#allocation0] sm:$0x1] %vm9, %v8
    %s11 = scalar_lea.vmem %s0, 6
    %v12 = vld [vmem:[%s11] sm:$0x1]
    %13 = vrot.lane.b32.xlu0 %v12, 48
    %v14 = vpop.permute.xlu0 %13
    %vm15 = vcmask 458112
    %16 = vst.msk [vmem:[#allocation0] sm:$0x1] %vm15, %v14
    %s17 = scalar_lea.vmem %s0, 5
    %v18 = vld [vmem:[%s17] sm:$0x1]
    %19 = vrot.lane.b32.xlu0 %v18, 40
    %v20 = vpop.permute.xlu0 %19
    %vm21 = vcmask 392512
    %22 = vst.msk [vmem:[#allocation0] sm:$0x1] %vm21, %v20
    %s23 = scalar_lea.vmem %s0, 4
    %v24 = vld [vmem:[%s23] sm:$0x1]
    %25 = vrot.lane.b32.xlu0 %v24, 32
    %v26 = vpop.permute.xlu0 %25
    %vm27 = vcmask 326912
    %28 = vst.msk [vmem:[#allocation0] sm:$0x1] %vm27, %v26
    %s29 = scalar_lea.vmem %s0, 3
    %v30 = vld [vmem:[%s29] sm:$0x1]
    %31 = vrot.lane.b32.xlu0 %v30, 24
    %v32 = vpop.permute.xlu0 %31
    %vm33 = vcmask 261312
    %34 = vst.msk [vmem:[#allocation0] sm:$0x1] %vm33, %v32
    %s35 = scalar_lea.vmem %s0, 2
    %v36 = vld [vmem:[%s35] sm:$0x1]
    %37 = vrot.lane.b32.xlu0 %v36, 16
    %v38 = vpop.permute.xlu0 %37
    %vm39 = vcmask 195712
    %40 = vst.msk [vmem:[#allocation0] sm:$0x1] %vm39, %v38
    %s41 = scalar_lea.vmem %s0, 1
    %v42 = vld [vmem:[%s41] sm:$0x1]
    %43 = vrot.lane.b32.xlu0 %v42, 8
    %v44 = vpop.permute.xlu0 %43
    %vm45 = vcmask 130112
    %46 = vst.msk [vmem:[#allocation0] sm:$0x1] %vm45, %v44
    %s48 = sshllo.u32 0, 1
    %v50 = vld [vmem:[#allocation0] sm:%s48]
    %s51 = sshllo.u32 0, 1
    %52 = vst [vmem:[%s1] sm:%s51] %v50

// kernel: unet_bin_forward.12
$region0: #{unet_bin_forward.12}
  #allocation0 [shape = 'u32[]', space=smem, size = 0x4, offset = 0x4, fixed_abs, tag = 'smem constant byte address 0x4 - core index']
  #allocation1 [shape = 'u32[144,128]{1,0:T(1,128)}', space=vmem, size = 0x12000, scoped, tag = 'internal scratch']
  %s0 = inlined_call_operand.vmem [shape: f32[2,10,160], index: 0, kind: input, shape index: {}]
  %s1 = inlined_call_operand.vmem [shape: f32[2,10,160], index: 1, kind: input, shape index: {}]
  %s2 = inlined_call_operand.vmem [shape: bf16[3,160,128], index: 2, kind: input, shape index: {}]
  %s3 = inlined_call_operand.vmem [shape: bf16[3,160,128], index: 3, kind: input, shape index: {}]
  %s4 = inlined_call_operand.vmem [shape: f32[1,128], index: 4, kind: input, shape index: {}]
  %s5 = inlined_call_operand.vmem [shape: bf16[128,64], index: 5, kind: input, shape index: {}]
  %s6 = inlined_call_operand.vmem [shape: f32[1,64], index: 6, kind: input, shape index: {}]
  %s7 = inlined_call_operand.vmem [shape: f32[2,8,64], index: 7, kind: output, shape index: {}]
  %s8 = sld [smem:[#allocation0]]
  $region61: #{unet_bin_forward.12} parent=0
    _
  %s10 = ssub.s32 1, %s8
  %s11 = scalar_select 0, %s10, %s8
  loop: start=0, step=1, limit=4
  $region2: #{unet_bin_forward.12} parent=0 // loop_pre_header
    _
  $region3: #{unet_bin_forward.12} parent=0 // loop_header
    %s13 = sphi 0, %s17
    %p14 = scmp.ge.s32.totalorder %s13, 4
    %s23 = sphi 0, %s25
    %s26 = sphi 0, %s23
    %s27 = sphi 0, %s26
    %s43 = sphi 0, %s27
    %s49 = sphi 0, %s51
    %s52 = sphi 0, %s49
    %s53 = sphi 0, %s52
    %s69 = sphi 0, %s53
    %s73 = sphi 0, %s73
    %s75 = sphi 0, %s73
    %s76 = sphi 0, %s75
    %s90 = sphi 0, %s76
    %s94 = sphi 0, %s94
    %s96 = sphi 0, %s94
    %s97 = sphi 0, %s96
    %s111 = sphi 0, %s97
    %s115 = sphi 0, %s115
    %s117 = sphi 0, %s115
    %s118 = sphi 0, %s117
    %s132 = sphi 0, %s118
    %s136 = sphi 0, %s136
    %s138 = sphi 0, %s136
    %s139 = sphi 0, %s138
    %s153 = sphi 0, %s139
    %s157 = sphi 0, %s157
    %s159 = sphi 0, %s157
    %s160 = sphi 0, %s159
    %s174 = sphi 0, %s160
    %s180 = sphi 0, %s182
    %s183 = sphi 0, %s180
    %s184 = sphi 0, %s183
    %s200 = sphi 0, %s184
  $region4: #{unet_bin_forward.12} parent=0 // loop_header_branch
    %16 = sbr.rel (%p14) target = $region8
  $region5: #{unet_bin_forward.12} parent=0 // loop_body
    %s18 = ssub.s32 %s13, 1
    %s19 = ssub.s32 %s13, 2
    %s20 = sadd.s32 %s13, 1
    %s21 = ssub.s32 %s13, %s20
    %p22 = scmp.eq.s32.totalorder %s21, 0
    %s24 = sadd.s32 %s23, 1
    %s25 = scalar_select %p22, %s23, %s24
    %p28 = pneg %p22
    %p29 = scmp.eq.s32.totalorder %s13, 1
    %p30 = por %p28, %p29
    %p31 = scmp.ne.s32.totalorder %s23, %s26
    %p32 = scmp.eq.s32.totalorder %s13, 0
    %p33 = por %p31, %p32
    %p34 = scmp.ne.s32.totalorder %s23, %s26
    %p35 = scmp.eq.s32.totalorder %s18, 1
    %p36 = por %p34, %p35
    %p37 = scmp.ne.s32.totalorder %s26, %s27
    %p38 = scmp.eq.s32.totalorder %s18, 0
    %p39 = por %p37, %p38
    %p40 = scmp.ne.s32.totalorder %s26, %s27
    %p41 = scmp.eq.s32.totalorder %s19, 1
    %p42 = por %p40, %p41
    %p44 = scmp.ne.s32.totalorder %s27, %s43
    %p45 = scmp.eq.s32.totalorder %s19, 0
    %p46 = por %p44, %p45
    %s47 = ssub.s32 %s13, %s20
    %p48 = scmp.eq.s32.totalorder %s47, 0
    %s50 = sadd.s32 %s49, 1
    %s51 = scalar_select %p48, %s49, %s50
    %p54 = pneg %p48
    %p55 = scmp.eq.s32.totalorder %s13, 1
    %p56 = por %p54, %p55
    %p57 = scmp.ne.s32.totalorder %s49, %s52
    %p58 = scmp.eq.s32.totalorder %s13, 0
    %p59 = por %p57, %p58
    %p60 = scmp.ne.s32.totalorder %s49, %s52
    %p61 = scmp.eq.s32.totalorder %s18, 1
    %p62 = por %p60, %p61
    %p63 = scmp.ne.s32.totalorder %s52, %s53
    %p64 = scmp.eq.s32.totalorder %s18, 0
    %p65 = por %p63, %p64
    %p66 = scmp.ne.s32.totalorder %s52, %s53
    %p67 = scmp.eq.s32.totalorder %s19, 1
    %p68 = por %p66, %p67
    %p70 = scmp.ne.s32.totalorder %s53, %s69
    %p71 = scmp.eq.s32.totalorder %s19, 0
    %p72 = por %p70, %p71
    %s74 = sadd.s32 %s73, 1
    %p77 = scmp.eq.s32.totalorder %s13, 1
    %p78 = scmp.ne.s32.totalorder %s73, %s75
    %p79 = scmp.eq.s32.totalorder %s13, 0
    %p80 = por %p78, %p79
    %p81 = scmp.ne.s32.totalorder %s73, %s75
    %p82 = scmp.eq.s32.totalorder %s18, 1
    %p83 = por %p81, %p82
    %p84 = scmp.ne.s32.totalorder %s75, %s76
    %p85 = scmp.eq.s32.totalorder %s18, 0
    %p86 = por %p84, %p85
    %p87 = scmp.ne.s32.totalorder %s75, %s76
    %p88 = scmp.eq.s32.totalorder %s19, 1
    %p89 = por %p87, %p88
    %p91 = scmp.ne.s32.totalorder %s76, %s90
    %p92 = scmp.eq.s32.totalorder %s19, 0
    %p93 = por %p91, %p92
    %s95 = sadd.s32 %s94, 1
    %p98 = scmp.eq.s32.totalorder %s13, 1
    %p99 = scmp.ne.s32.totalorder %s94, %s96
    %p100 = scmp.eq.s32.totalorder %s13, 0
    %p101 = por %p99, %p100
    %p102 = scmp.ne.s32.totalorder %s94, %s96
    %p103 = scmp.eq.s32.totalorder %s18, 1
    %p104 = por %p102, %p103
    %p105 = scmp.ne.s32.totalorder %s96, %s97
    %p106 = scmp.eq.s32.totalorder %s18, 0
    %p107 = por %p105, %p106
    %p108 = scmp.ne.s32.totalorder %s96, %s97
    %p109 = scmp.eq.s32.totalorder %s19, 1
    %p110 = por %p108, %p109
    %p112 = scmp.ne.s32.totalorder %s97, %s111
    %p113 = scmp.eq.s32.totalorder %s19, 0
    %p114 = por %p112, %p113
    %s116 = sadd.s32 %s115, 1
    %p119 = scmp.eq.s32.totalorder %s13, 1
    %p120 = scmp.ne.s32.totalorder %s115, %s117
    %p121 = scmp.eq.s32.totalorder %s13, 0
    %p122 = por %p120, %p121
    %p123 = scmp.ne.s32.totalorder %s115, %s117
    %p124 = scmp.eq.s32.totalorder %s18, 1
    %p125 = por %p123, %p124
    %p126 = scmp.ne.s32.totalorder %s117, %s118
    %p127 = scmp.eq.s32.totalorder %s18, 0
    %p128 = por %p126, %p127
    %p129 = scmp.ne.s32.totalorder %s117, %s118
    %p130 = scmp.eq.s32.totalorder %s19, 1
    %p131 = por %p129, %p130
    %p133 = scmp.ne.s32.totalorder %s118, %s132
    %p134 = scmp.eq.s32.totalorder %s19, 0
    %p135 = por %p133, %p134
    %s137 = sadd.s32 %s136, 1
    %p140 = scmp.eq.s32.totalorder %s13, 1
    %p141 = scmp.ne.s32.totalorder %s136, %s138
    %p142 = scmp.eq.s32.totalorder %s13, 0
    %p143 = por %p141, %p142
    %p144 = scmp.ne.s32.totalorder %s136, %s138
    %p145 = scmp.eq.s32.totalorder %s18, 1
    %p146 = por %p144, %p145
    %p147 = scmp.ne.s32.totalorder %s138, %s139
    %p148 = scmp.eq.s32.totalorder %s18, 0
    %p149 = por %p147, %p148
    %p150 = scmp.ne.s32.totalorder %s138, %s139
    %p151 = scmp.eq.s32.totalorder %s19, 1
    %p152 = por %p150, %p151
    %p154 = scmp.ne.s32.totalorder %s139, %s153
    %p155 = scmp.eq.s32.totalorder %s19, 0
    %p156 = por %p154, %p155
    %s158 = sadd.s32 %s157, 1
    %p161 = scmp.eq.s32.totalorder %s13, 1
    %p162 = scmp.ne.s32.totalorder %s157, %s159
    %p163 = scmp.eq.s32.totalorder %s13, 0
    %p164 = por %p162, %p163
    %p165 = scmp.ne.s32.totalorder %s157, %s159
    %p166 = scmp.eq.s32.totalorder %s18, 1
    %p167 = por %p165, %p166
    %p168 = scmp.ne.s32.totalorder %s159, %s160
    %p169 = scmp.eq.s32.totalorder %s18, 0
    %p170 = por %p168, %p169
    %p171 = scmp.ne.s32.totalorder %s159, %s160
    %p172 = scmp.eq.s32.totalorder %s19, 1
    %p173 = por %p171, %p172
    %p175 = scmp.ne.s32.totalorder %s160, %s174
    %p176 = scmp.eq.s32.totalorder %s19, 0
    %p177 = por %p175, %p176
    %s178 = ssub.s32 %s13, %s20
    %p179 = scmp.eq.s32.totalorder %s178, 0
    %s181 = sadd.s32 %s180, 1
    %s182 = scalar_select %p179, %s180, %s181
    %p185 = pneg %p179
    %p186 = scmp.eq.s32.totalorder %s13, 1
    %p187 = por %p185, %p186
    %p188 = scmp.ne.s32.totalorder %s180, %s183
    %p189 = scmp.eq.s32.totalorder %s13, 0
    %p190 = por %p188, %p189
    %p191 = scmp.ne.s32.totalorder %s180, %s183
    %p192 = scmp.eq.s32.totalorder %s18, 1
    %p193 = por %p191, %p192
    %p194 = scmp.ne.s32.totalorder %s183, %s184
    %p195 = scmp.eq.s32.totalorder %s18, 0
    %p196 = por %p194, %p195
    %p197 = scmp.ne.s32.totalorder %s183, %s184
    %p198 = scmp.eq.s32.totalorder %s19, 1
    %p199 = por %p197, %p198
    %p201 = scmp.ne.s32.totalorder %s184, %s200
    %p202 = scmp.eq.s32.totalorder %s19, 0
    %p203 = por %p201, %p202
    %p204 = scmp.le.s32.totalorder 1, %s13
    %p205 = scmp.lt.s32.totalorder %s13, 3
    %p206 = pnand %p204, %p205
    %p207 = pneg %p206
    // Predicated region
    $region9: #{unet_bin_forward.12} parent=5 // pred_check
      _
    $region10: #{unet_bin_forward.12} parent=5 // pred_check_branch
      %209 = sbr.rel (%p206) target = $region12
    $region11: #{unet_bin_forward.12} parent=5 // pred_region
      %s210 = ssub.s32 %s13, 1
      // Predicated region
      $region13: #{unet_bin_forward.12} parent=11 // pred_check
        %p211 = pneg %p86
      $region14: #{unet_bin_forward.12} parent=11 // pred_check_branch
        %213 = sbr.rel (%p211) target = $region16
      $region15: #{unet_bin_forward.12} parent=11 // pred_region
        _
      $region16: #{unet_bin_forward.12} parent=11 // pred_fallthru
        _
      // Predicated region
      $region17: #{unet_bin_forward.12} parent=11 // pred_check
        %p214 = pneg %p107
      $region18: #{unet_bin_forward.12} parent=11 // pred_check_branch
        %216 = sbr.rel (%p214) target = $region20
      $region19: #{unet_bin_forward.12} parent=11 // pred_region
        _
      $region20: #{unet_bin_forward.12} parent=11 // pred_fallthru
        _
      // Predicated region
      $region21: #{unet_bin_forward.12} parent=11 // pred_check
        %p217 = pneg %p128
      $region22: #{unet_bin_forward.12} parent=11 // pred_check_branch
        %219 = sbr.rel (%p217) target = $region24
      $region23: #{unet_bin_forward.12} parent=11 // pred_region
        _
      $region24: #{unet_bin_forward.12} parent=11 // pred_fallthru
        _
      // Predicated region
      $region25: #{unet_bin_forward.12} parent=11 // pred_check
        %p220 = pneg %p149
      $region26: #{unet_bin_forward.12} parent=11 // pred_check_branch
        %222 = sbr.rel (%p220) target = $region28
      $region27: #{unet_bin_forward.12} parent=11 // pred_region
        _
      $region28: #{unet_bin_forward.12} parent=11 // pred_fallthru
        _
      // Predicated region
      $region29: #{unet_bin_forward.12} parent=11 // pred_check
        %p223 = pneg %p170
      $region30: #{unet_bin_forward.12} parent=11 // pred_check_branch
        %225 = sbr.rel (%p223) target = $region32
      $region31: #{unet_bin_forward.12} parent=11 // pred_region
        _
      $region32: #{unet_bin_forward.12} parent=11 // pred_fallthru
        _
    $region12: #{unet_bin_forward.12} parent=5 // pred_fallthru
      _
    %p226 = scmp.lt.s32.totalorder %s13, 2
    // Predicated region
    $region33: #{unet_bin_forward.12} parent=5 // pred_check
      %p227 = pneg %p226
    $region34: #{unet_bin_forward.12} parent=5 // pred_check_branch
      %229 = sbr.rel (%p227) target = $region36
    $region35: #{unet_bin_forward.12} parent=5 // pred_region
      // Predicated region
      $region37: #{unet_bin_forward.12} parent=35 // pred_check
        %p230 = pneg %p33
      $region38: #{unet_bin_forward.12} parent=35 // pred_check_branch
        %232 = sbr.rel (%p230) target = $region40
      $region39: #{unet_bin_forward.12} parent=35 // pred_region
        %p233 = scmp.lt.s32.totalorder %s13, 1
        %s234 = scalar_select %p233, %s13, 1
        %s235 = smul.addr %s234, 4
        %s236 = smul.addr %s235, 8
        %s237 = scalar_lea.vmem %s0, %s236
      $region40: #{unet_bin_forward.12} parent=35 // pred_fallthru
        _
      // Predicated region
      $region41: #{unet_bin_forward.12} parent=35 // pred_check
        %p238 = pneg %p59
      $region42: #{unet_bin_forward.12} parent=35 // pred_check_branch
        %240 = sbr.rel (%p238) target = $region44
      $region43: #{unet_bin_forward.12} parent=35 // pred_region
        %p241 = scmp.lt.s32.totalorder %s13, 1
        %s242 = scalar_select %p241, %s13, 1
        %s243 = smul.addr %s242, 4
        %s244 = smul.addr %s243, 8
        %s245 = scalar_lea.vmem %s1, %s244
      $region44: #{unet_bin_forward.12} parent=35 // pred_fallthru
        _
    $region36: #{unet_bin_forward.12} parent=5 // pred_fallthru
      _
    %p246 = scmp.le.s32.totalorder 1, %s13
    %p247 = scmp.lt.s32.totalorder %s13, 3
    %p248 = pnand %p246, %p247
    %p249 = pneg %p248
    // Predicated region
    $region45: #{unet_bin_forward.12} parent=5 // pred_check
      _
    $region46: #{unet_bin_forward.12} parent=5 // pred_check_branch
      %251 = sbr.rel (%p248) target = $region48
    $region47: #{unet_bin_forward.12} parent=5 // pred_region
      %s252 = ssub.s32 %s13, 1
      %p253 = scmp.lt.s32.totalorder %s18, 1
      %s254 = scalar_select %p253, %s18, 1
      %s255 = smul.addr %s254, 4
      %s256 = smul.addr %s255, 8
      %s257 = scalar_lea.vmem %s0, %s256
      %p258 = pneg %p39
      %p259 = pneg %p36
      %p260 = scmp.lt.s32.totalorder %s18, 1
      %s261 = scalar_select %p260, %s18, 1
      %s262 = smul.addr %s261, 4
      %s263 = smul.addr %s262, 8
      %s264 = scalar_lea.vmem %s1, %s263
      %p265 = pneg %p65
      %p266 = pneg %p62
      %p267 = pneg %p86
      %p268 = pneg %p83
      %p269 = pneg %p107
      %p270 = pneg %p104
      %p271 = pneg %p128
      %p272 = pneg %p125
      %p273 = pneg %p149
      %p274 = pneg %p146
      %p275 = pneg %p170
      %p276 = pneg %p167
      %p277 = pneg %p196
      %p278 = pneg %p193
      %p279 = scmp.lt.s32.totalorder %s18, 1
      %s280 = scalar_select %p279, %s18, 1
      %s281 = smul.addr %s280, 8
      %s282 = scalar_lea.vmem %s7, %s281
      %p283 = scmp.lt.s32.totalorder %s18, 1
      %s284 = scalar_select %p283, %s18, 1
      %s285 = smul.addr %s284, 4
      %s286 = smul.addr %s285, 8
      %s287 = scalar_lea.vmem %s0, %s286
      %p288 = scmp.lt.s32.totalorder %s18, 1
      %s289 = scalar_select %p288, %s18, 1
      %s290 = smul.addr %s289, 4
      %s291 = smul.addr %s290, 8
      %s292 = scalar_lea.vmem %s1, %s291
      %p293 = scmp.lt.s32.totalorder %s18, 1
      %s294 = scalar_select %p293, %s18, 1
      %s295 = smul.addr %s294, 8
      %s296 = scalar_lea.vmem %s7, %s295
      %v298 = vld [vmem:[%s287] sm:$0xff]
      %v299 = vld [vmem:[%s287 + $0x8] sm:$0xff]
      %v300 = vld [vmem:[%s287 + $0x10] sm:$0x3]
      %v301 = vld [vmem:[%s287 + $0x18] sm:$0x3]
      %v302 = vld [vmem:[%s292] sm:$0xff]
      %v303 = vld [vmem:[%s292 + $0x8] sm:$0xff]
      %v304 = vld [vmem:[%s292 + $0x10] sm:$0x3]
      %v305 = vld [vmem:[%s292 + $0x18] sm:$0x3]
      %v306 = vpack.c.bf16 %v298, %v298
      %v307 = vpack.c.bf16 %v299, %v299
      %v308 = vld [vmem:[%s2] sm:$0xf]
      %v309 = vld [vmem:[%s2 + $0x4] sm:$0xf]
      %v310 = vld [vmem:[%s2 + $0x8] sm:$0xf]
      %v311 = vld [vmem:[%s2 + $0xc] sm:$0xf]
      %v312 = vld [vmem:[%s2 + $0x10] sm:$0xf]
      %v313 = vld [vmem:[%s2 + $0x14] sm:$0xf]
      %v314 = vld [vmem:[%s2 + $0x18] sm:$0xf]
      %v315 = vld [vmem:[%s2 + $0x1c] sm:$0xf]
      %v316 = vld [vmem:[%s2 + $0x20] sm:$0xf]
      %v317 = vld [vmem:[%s2 + $0x24] sm:$0xf]
      %v318 = vld [vmem:[%s2 + $0x28] sm:$0xf]
      %v319 = vld [vmem:[%s2 + $0x2c] sm:$0xf]
      %v320 = vld [vmem:[%s2 + $0x30] sm:$0xf]
      %v321 = vld [vmem:[%s2 + $0x34] sm:$0xf]
      %v322 = vld [vmem:[%s2 + $0x38] sm:$0xf]
      %v323 = vld [vmem:[%s2 + $0x3c] sm:$0xf]
      %v324 = vld [vmem:[%s2 + $0x40] sm:$0xf]
      %v325 = vld [vmem:[%s2 + $0x44] sm:$0xf]
      %v326 = vld [vmem:[%s2 + $0x48] sm:$0xf]
      %v327 = vld [vmem:[%s2 + $0x4c] sm:$0xf]
      %v328 = vpack.c.bf16 %v300, %v298
      %v329 = vpack.c.bf16 %v301, %v299
      %s330 = scalar_lea.vmem %s2, 80
      %v331 = vld [vmem:[%s330] sm:$0xf]
      %v332 = vld [vmem:[%s330 + $0x4] sm:$0xf]
      %v333 = vld [vmem:[%s330 + $0x8] sm:$0xf]
      %v334 = vld [vmem:[%s330 + $0xc] sm:$0xf]
      %v335 = vld [vmem:[%s330 + $0x10] sm:$0xf]
      %v336 = vld [vmem:[%s330 + $0x14] sm:$0xf]
      %v337 = vld [vmem:[%s330 + $0x18] sm:$0xf]
      %v338 = vld [vmem:[%s330 + $0x1c] sm:$0xf]
      %v339 = vld [vmem:[%s330 + $0x20] sm:$0xf]
      %v340 = vld [vmem:[%s330 + $0x24] sm:$0xf]
      %v341 = vld [vmem:[%s330 + $0x28] sm:$0xf]
      %v342 = vld [vmem:[%s330 + $0x2c] sm:$0xf]
      %v343 = vld [vmem:[%s330 + $0x30] sm:$0xf]
      %v344 = vld [vmem:[%s330 + $0x34] sm:$0xf]
      %v345 = vld [vmem:[%s330 + $0x38] sm:$0xf]
      %v346 = vld [vmem:[%s330 + $0x3c] sm:$0xf]
      %v347 = vld [vmem:[%s330 + $0x40] sm:$0xf]
      %v348 = vld [vmem:[%s330 + $0x44] sm:$0xf]
      %v349 = vld [vmem:[%s330 + $0x48] sm:$0xf]
      %v350 = vld [vmem:[%s330 + $0x4c] sm:$0xf]
      %v352 = vshrl.u32 %v328, 16
      %v354 = vshll.u32 %v328, 16
      %v356 = vrot.slane %v354, 1
      %v357 = vor.u32 %v352, %v356
      %v359 = vshrl.u32 %v329, 16
      %v361 = vshll.u32 %v329, 16
      %v363 = vrot.slane %v361, 1
      %v364 = vor.u32 %v359, %v363
      %v386 = vunpack.c.l.b16 %v331
      %v387 = vunpack.c.l.b16 %v332
      %v388 = vunpack.c.l.b16 %v333
      %v389 = vunpack.c.l.b16 %v334
      %v390 = vunpack.c.l.b16 %v335
      %v391 = vunpack.c.l.b16 %v336
      %v392 = vunpack.c.l.b16 %v337
      %v393 = vunpack.c.l.b16 %v338
      %v394 = vunpack.c.l.b16 %v339
      %v395 = vunpack.c.l.b16 %v340
      %v396 = vunpack.c.l.b16 %v341
      %v397 = vunpack.c.l.b16 %v342
      %v398 = vunpack.c.l.b16 %v343
      %v399 = vunpack.c.l.b16 %v344
      %v400 = vunpack.c.l.b16 %v345
      %v401 = vunpack.c.l.b16 %v346
      %v402 = vunpack.c.l.b16 %v347
      %v403 = vunpack.c.l.b16 %v348
      %v404 = vunpack.c.l.b16 %v349
      %v405 = vunpack.c.l.b16 %v350
      %v406 = vpack.c.b16 %v387, %v386
      %v407 = vpack.c.b16 %v389, %v388
      %v408 = vpack.c.b16 %v391, %v390
      %v409 = vpack.c.b16 %v393, %v392
      %v410 = vpack.c.b16 %v395, %v394
      %v411 = vpack.c.b16 %v397, %v396
      %v412 = vpack.c.b16 %v399, %v398
      %v413 = vpack.c.b16 %v401, %v400
      %v414 = vpack.c.b16 %v403, %v402
      %v415 = vpack.c.b16 %v405, %v404
      %vm426 = vcmask 261120
      %v428 = vsel %vm426, %v364, 0
      %430 = vmatprep.subr.bf16.mxu0 0
      %431 = vmatpush1.bf16.msra.mxu0 %v406
      %432 = vmatprep.subr.bf16.mxu0 0
      %433 = vmatpush1.bf16.msra.mxu0 %v407
      %434 = vmatprep.subr.bf16.mxu0 0
      %435 = vmatpush1.bf16.msra.mxu0 %v408
      %436 = vmatprep.subr.bf16.mxu0 0
      %437 = vmatpush1.bf16.msra.mxu0 %v409
      %438 = vmatprep.subr.bf16.mxu0 0
      %439 = vmatpush1.bf16.msra.mxu0 %v410
      %440 = vmatprep.subr.bf16.mxu0 0
      %441 = vmatpush1.bf16.msra.mxu0 %v411
      %442 = vmatprep.subr.bf16.mxu0 0
      %443 = vmatpush1.bf16.msra.mxu0 %v412
      %444 = vmatprep.subr.bf16.mxu0 0
      %445 = vmatpush1.bf16.msra.mxu0 %v413
      %446 = vmatprep.subr.bf16.mxu0 0
      %447 = vmatpush1.bf16.msra.mxu0 %v414
      %448 = vmatprep.subr.bf16.mxu0 0
      %449 = vmatpush1.bf16.msra.mxu0 %v415
      %450 = vmatprep.subr.bf16.mxu0 0
      %451 = vmatpush1.bf16.msra.mxu0 0
      %452 = vmatprep.subr.bf16.mxu0 0
      %453 = vmatpush1.bf16.msra.mxu0 0
      %454 = vmatprep.subr.bf16.mxu0 0
      %455 = vmatpush1.bf16.msra.mxu0 0
      %456 = vmatprep.subr.bf16.mxu0 0
      %457 = vmatpush1.bf16.msra.mxu0 0
      %458 = vmatprep.subr.bf16.mxu0 0
      %459 = vmatpush1.bf16.msra.mxu0 0
      %460 = vmatprep.subr.bf16.mxu0 0
      %461 = vmatpush1.bf16.msra.mxu0 0
      %462 = vmatprep.mubr.bf16.mxu0 %v428
      %463 = vmatmul.mubr.bf16.gmra.mrb[0].mxu0 %v357
      %v464 = vpop.f32.mrb[0].mxu0
      %v465 = vadd.f32 0.0, %v464
      %v466 = vpop.f32.mrb[0].mxu0
      %v467 = vpop.f32.mrb[0].mxu0
      %v468 = vpop.f32.mrb[0].mxu0
      %469 = vdwg.mxu0
      %v490 = vunpack.c.l.b16 %v308
      %v491 = vunpack.c.l.b16 %v309
      %v492 = vunpack.c.l.b16 %v310
      %v493 = vunpack.c.l.b16 %v311
      %v494 = vunpack.c.l.b16 %v312
      %v495 = vunpack.c.l.b16 %v313
      %v496 = vunpack.c.l.b16 %v314
      %v497 = vunpack.c.l.b16 %v315
      %v498 = vunpack.c.l.b16 %v316
      %v499 = vunpack.c.l.b16 %v317
      %v500 = vunpack.c.l.b16 %v318
      %v501 = vunpack.c.l.b16 %v319
      %v502 = vunpack.c.l.b16 %v320
      %v503 = vunpack.c.l.b16 %v321
      %v504 = vunpack.c.l.b16 %v322
      %v505 = vunpack.c.l.b16 %v323
      %v506 = vunpack.c.l.b16 %v324
      %v507 = vunpack.c.l.b16 %v325
      %v508 = vunpack.c.l.b16 %v326
      %v509 = vunpack.c.l.b16 %v327
      %v510 = vpack.c.b16 %v491, %v490
      %v511 = vpack.c.b16 %v493, %v492
      %v512 = vpack.c.b16 %v495, %v494
      %v513 = vpack.c.b16 %v497, %v496
      %v514 = vpack.c.b16 %v499, %v498
      %v515 = vpack.c.b16 %v501, %v500
      %v516 = vpack.c.b16 %v503, %v502
      %v517 = vpack.c.b16 %v505, %v504
      %v518 = vpack.c.b16 %v507, %v506
      %v519 = vpack.c.b16 %v509, %v508
      %v531 = vsel %vm426, %v307, 0
      %533 = vmatprep.subr.bf16.mxu0 0
      %534 = vmatpush1.bf16.msra.mxu0 %v510
      %535 = vmatprep.subr.bf16.mxu0 0
      %536 = vmatpush1.bf16.msra.mxu0 %v511
      %537 = vmatprep.subr.bf16.mxu0 0
      %538 = vmatpush1.bf16.msra.mxu0 %v512
      %539 = vmatprep.subr.bf16.mxu0 0
      %540 = vmatpush1.bf16.msra.mxu0 %v513
      %541 = vmatprep.subr.bf16.mxu0 0
      %542 = vmatpush1.bf16.msra.mxu0 %v514
      %543 = vmatprep.subr.bf16.mxu0 0
      %544 = vmatpush1.bf16.msra.mxu0 %v515
      %545 = vmatprep.subr.bf16.mxu0 0
      %546 = vmatpush1.bf16.msra.mxu0 %v516
      %547 = vmatprep.subr.bf16.mxu0 0
      %548 = vmatpush1.bf16.msra.mxu0 %v517
      %549 = vmatprep.subr.bf16.mxu0 0
      %550 = vmatpush1.bf16.msra.mxu0 %v518
      %551 = vmatprep.subr.bf16.mxu0 0
      %552 = vmatpush1.bf16.msra.mxu0 %v519
      %553 = vmatprep.subr.bf16.mxu0 0
      %554 = vmatpush1.bf16.msra.mxu0 0
      %555 = vmatprep.subr.bf16.mxu0 0
      %556 = vmatpush1.bf16.msra.mxu0 0
      %557 = vmatprep.subr.bf16.mxu0 0
      %558 = vmatpush1.bf16.msra.mxu0 0
      %559 = vmatprep.subr.bf16.mxu0 0
      %560 = vmatpush1.bf16.msra.mxu0 0
      %561 = vmatprep.subr.bf16.mxu0 0
      %562 = vmatpush1.bf16.msra.mxu0 0
      %563 = vmatprep.subr.bf16.mxu0 0
      %564 = vmatpush1.bf16.msra.mxu0 0
      %565 = vmatprep.mubr.bf16.mxu0 %v531
      %566 = vmatmul.mubr.bf16.gmra.mrb[0].mxu0 %v306
      %v567 = vpop.f32.mrb[0].mxu0
      %v568 = vadd.f32 %v465, %v567
      %v569 = vpop.f32.mrb[0].mxu0
      %v570 = vpop.f32.mrb[0].mxu0
      %v571 = vpop.f32.mrb[0].mxu0
      %572 = vdwg.mxu0
      %s573 = scalar_lea.vmem %s2, 160
      %v574 = vld [vmem:[%s573] sm:$0xf]
      %v575 = vld [vmem:[%s573 + $0x4] sm:$0xf]
      %v576 = vld [vmem:[%s573 + $0x8] sm:$0xf]
      %v577 = vld [vmem:[%s573 + $0xc] sm:$0xf]
      %v578 = vld [vmem:[%s573 + $0x10] sm:$0xf]
      %v579 = vld [vmem:[%s573 + $0x14] sm:$0xf]
      %v580 = vld [vmem:[%s573 + $0x18] sm:$0xf]
      %v581 = vld [vmem:[%s573 + $0x1c] sm:$0xf]
      %v582 = vld [vmem:[%s573 + $0x20] sm:$0xf]
      %v583 = vld [vmem:[%s573 + $0x24] sm:$0xf]
      %v584 = vld [vmem:[%s573 + $0x28] sm:$0xf]
      %v585 = vld [vmem:[%s573 + $0x2c] sm:$0xf]
      %v586 = vld [vmem:[%s573 + $0x30] sm:$0xf]
      %v587 = vld [vmem:[%s573 + $0x34] sm:$0xf]
      %v588 = vld [vmem:[%s573 + $0x38] sm:$0xf]
      %v589 = vld [vmem:[%s573 + $0x3c] sm:$0xf]
      %v590 = vld [vmem:[%s573 + $0x40] sm:$0xf]
      %v591 = vld [vmem:[%s573 + $0x44] sm:$0xf]
      %v592 = vld [vmem:[%s573 + $0x48] sm:$0xf]
      %v593 = vld [vmem:[%s573 + $0x4c] sm:$0xf]
      %v596 = vrot.slane %v328, 1
      %v597 = vrot.slane %v329, 1
      %v619 = vunpack.c.l.b16 %v574
      %v620 = vunpack.c.l.b16 %v575
      %v621 = vunpack.c.l.b16 %v576
      %v622 = vunpack.c.l.b16 %v577
      %v623 = vunpack.c.l.b16 %v578
      %v624 = vunpack.c.l.b16 %v579
      %v625 = vunpack.c.l.b16 %v580
      %v626 = vunpack.c.l.b16 %v581
      %v627 = vunpack.c.l.b16 %v582
      %v628 = vunpack.c.l.b16 %v583
      %v629 = vunpack.c.l.b16 %v584
      %v630 = vunpack.c.l.b16 %v585
      %v631 = vunpack.c.l.b16 %v586
      %v632 = vunpack.c.l.b16 %v587
      %v633 = vunpack.c.l.b16 %v588
      %v634 = vunpack.c.l.b16 %v589
      %v635 = vunpack.c.l.b16 %v590
      %v636 = vunpack.c.l.b16 %v591
      %v637 = vunpack.c.l.b16 %v592
      %v638 = vunpack.c.l.b16 %v593
      %v639 = vpack.c.b16 %v620, %v619
      %v640 = vpack.c.b16 %v622, %v621
      %v641 = vpack.c.b16 %v624, %v623
      %v642 = vpack.c.b16 %v626, %v625
      %v643 = vpack.c.b16 %v628, %v627
      %v644 = vpack.c.b16 %v630, %v629
      %v645 = vpack.c.b16 %v632, %v631
      %v646 = vpack.c.b16 %v634, %v633
      %v647 = vpack.c.b16 %v636, %v635
      %v648 = vpack.c.b16 %v638, %v637
      %v660 = vsel %vm426, %v597, 0
      %662 = vmatprep.subr.bf16.mxu0 0
      %663 = vmatpush1.bf16.msra.mxu0 %v639
      %664 = vmatprep.subr.bf16.mxu0 0
      %665 = vmatpush1.bf16.msra.mxu0 %v640
      %666 = vmatprep.subr.bf16.mxu0 0
      %667 = vmatpush1.bf16.msra.mxu0 %v641
      %668 = vmatprep.subr.bf16.mxu0 0
      %669 = vmatpush1.bf16.msra.mxu0 %v642
      %670 = vmatprep.subr.bf16.mxu0 0
      %671 = vmatpush1.bf16.msra.mxu0 %v643
      %672 = vmatprep.subr.bf16.mxu0 0
      %673 = vmatpush1.bf16.msra.mxu0 %v644
      %674 = vmatprep.subr.bf16.mxu0 0
      %675 = vmatpush1.bf16.msra.mxu0 %v645
      %676 = vmatprep.subr.bf16.mxu0 0
      %677 = vmatpush1.bf16.msra.mxu0 %v646
      %678 = vmatprep.subr.bf16.mxu0 0
      %679 = vmatpush1.bf16.msra.mxu0 %v647
      %680 = vmatprep.subr.bf16.mxu0 0
      %681 = vmatpush1.bf16.msra.mxu0 %v648
      %682 = vmatprep.subr.bf16.mxu0 0
      %683 = vmatpush1.bf16.msra.mxu0 0
      %684 = vmatprep.subr.bf16.mxu0 0
      %685 = vmatpush1.bf16.msra.mxu0 0
      %686 = vmatprep.subr.bf16.mxu0 0
      %687 = vmatpush1.bf16.msra.mxu0 0
      %688 = vmatprep.subr.bf16.mxu0 0
      %689 = vmatpush1.bf16.msra.mxu0 0
      %690 = vmatprep.subr.bf16.mxu0 0
      %691 = vmatpush1.bf16.msra.mxu0 0
      %692 = vmatprep.subr.bf16.mxu0 0
      %693 = vmatpush1.bf16.msra.mxu0 0
      %694 = vmatprep.mubr.bf16.mxu0 %v660
      %695 = vmatmul.mubr.bf16.gmra.mrb[0].mxu0 %v596
      %v696 = vpop.f32.mrb[0].mxu0
      %v697 = vadd.f32 0.0, %v696
      %v698 = vpop.f32.mrb[0].mxu0
      %v699 = vpop.f32.mrb[0].mxu0
      %v700 = vpop.f32.mrb[0].mxu0
      %701 = vdwg.mxu0
      %v702 = vadd.f32 %v568, %v697
      %v703 = vpack.c.bf16 %v302, %v302
      %v704 = vpack.c.bf16 %v303, %v303
      %v705 = vld [vmem:[%s3] sm:$0xf]
      %v706 = vld [vmem:[%s3 + $0x4] sm:$0xf]
      %v707 = vld [vmem:[%s3 + $0x8] sm:$0xf]
      %v708 = vld [vmem:[%s3 + $0xc] sm:$0xf]
      %v709 = vld [vmem:[%s3 + $0x10] sm:$0xf]
      %v710 = vld [vmem:[%s3 + $0x14] sm:$0xf]
      %v711 = vld [vmem:[%s3 + $0x18] sm:$0xf]
      %v712 = vld [vmem:[%s3 + $0x1c] sm:$0xf]
      %v713 = vld [vmem:[%s3 + $0x20] sm:$0xf]
      %v714 = vld [vmem:[%s3 + $0x24] sm:$0xf]
      %v715 = vld [vmem:[%s3 + $0x28] sm:$0xf]
      %v716 = vld [vmem:[%s3 + $0x2c] sm:$0xf]
      %v717 = vld [vmem:[%s3 + $0x30] sm:$0xf]
      %v718 = vld [vmem:[%s3 + $0x34] sm:$0xf]
      %v719 = vld [vmem:[%s3 + $0x38] sm:$0xf]
      %v720 = vld [vmem:[%s3 + $0x3c] sm:$0xf]
      %v721 = vld [vmem:[%s3 + $0x40] sm:$0xf]
      %v722 = vld [vmem:[%s3 + $0x44] sm:$0xf]
      %v723 = vld [vmem:[%s3 + $0x48] sm:$0xf]
      %v724 = vld [vmem:[%s3 + $0x4c] sm:$0xf]
      %v745 = vunpack.c.l.b16 %v705
      %v746 = vunpack.c.l.b16 %v706
      %v747 = vunpack.c.l.b16 %v707
      %v748 = vunpack.c.l.b16 %v708
      %v749 = vunpack.c.l.b16 %v709
      %v750 = vunpack.c.l.b16 %v710
      %v751 = vunpack.c.l.b16 %v711
      %v752 = vunpack.c.l.b16 %v712
      %v753 = vunpack.c.l.b16 %v713
      %v754 = vunpack.c.l.b16 %v714
      %v755 = vunpack.c.l.b16 %v715
      %v756 = vunpack.c.l.b16 %v716
      %v757 = vunpack.c.l.b16 %v717
      %v758 = vunpack.c.l.b16 %v718
      %v759 = vunpack.c.l.b16 %v719
      %v760 = vunpack.c.l.b16 %v720
      %v761 = vunpack.c.l.b16 %v721
      %v762 = vunpack.c.l.b16 %v722
      %v763 = vunpack.c.l.b16 %v723
      %v764 = vunpack.c.l.b16 %v724
      %v765 = vpack.c.b16 %v746, %v745
      %v766 = vpack.c.b16 %v748, %v747
      %v767 = vpack.c.b16 %v750, %v749
      %v768 = vpack.c.b16 %v752, %v751
      %v769 = vpack.c.b16 %v754, %v753
      %v770 = vpack.c.b16 %v756, %v755
      %v771 = vpack.c.b16 %v758, %v757
      %v772 = vpack.c.b16 %v760, %v759
      %v773 = vpack.c.b16 %v762, %v761
      %v774 = vpack.c.b16 %v764, %v763
      %v786 = vsel %vm426, %v704, 0
      %788 = vmatprep.subr.bf16.mxu0 0
      %789 = vmatpush1.bf16.msra.mxu0 %v765
      %790 = vmatprep.subr.bf16.mxu0 0
      %791 = vmatpush1.bf16.msra.mxu0 %v766
      %792 = vmatprep.subr.bf16.mxu0 0
      %793 = vmatpush1.bf16.msra.mxu0 %v767
      %794 = vmatprep.subr.bf16.mxu0 0
      %795 = vmatpush1.bf16.msra.mxu0 %v768
      %796 = vmatprep.subr.bf16.mxu0 0
      %797 = vmatpush1.bf16.msra.mxu0 %v769
      %798 = vmatprep.subr.bf16.mxu0 0
      %799 = vmatpush1.bf16.msra.mxu0 %v770
      %800 = vmatprep.subr.bf16.mxu0 0
      %801 = vmatpush1.bf16.msra.mxu0 %v771
      %802 = vmatprep.subr.bf16.mxu0 0
      %803 = vmatpush1.bf16.msra.mxu0 %v772
      %804 = vmatprep.subr.bf16.mxu0 0
      %805 = vmatpush1.bf16.msra.mxu0 %v773
      %806 = vmatprep.subr.bf16.mxu0 0
      %807 = vmatpush1.bf16.msra.mxu0 %v774
      %808 = vmatprep.subr.bf16.mxu0 0
      %809 = vmatpush1.bf16.msra.mxu0 0
      %810 = vmatprep.subr.bf16.mxu0 0
      %811 = vmatpush1.bf16.msra.mxu0 0
      %812 = vmatprep.subr.bf16.mxu0 0
      %813 = vmatpush1.bf16.msra.mxu0 0
      %814 = vmatprep.subr.bf16.mxu0 0
      %815 = vmatpush1.bf16.msra.mxu0 0
      %816 = vmatprep.subr.bf16.mxu0 0
      %817 = vmatpush1.bf16.msra.mxu0 0
      %818 = vmatprep.subr.bf16.mxu0 0
      %819 = vmatpush1.bf16.msra.mxu0 0
      %820 = vmatprep.mubr.bf16.mxu0 %v786
      %821 = vmatmul.mubr.bf16.gmra.mrb[0].mxu0 %v703
      %v822 = vpop.f32.mrb[0].mxu0
      %v823 = vadd.f32 0.0, %v822
      %v824 = vpop.f32.mrb[0].mxu0
      %v825 = vpop.f32.mrb[0].mxu0
      %v826 = vpop.f32.mrb[0].mxu0
      %827 = vdwg.mxu0
      %v828 = vadd.f32 %v702, %v823
      %v829 = vpack.c.bf16 %v304, %v302
      %v830 = vpack.c.bf16 %v305, %v303
      %s831 = scalar_lea.vmem %s3, 80
      %v832 = vld [vmem:[%s831] sm:$0xf]
      %v833 = vld [vmem:[%s831 + $0x4] sm:$0xf]
      %v834 = vld [vmem:[%s831 + $0x8] sm:$0xf]
      %v835 = vld [vmem:[%s831 + $0xc] sm:$0xf]
      %v836 = vld [vmem:[%s831 + $0x10] sm:$0xf]
      %v837 = vld [vmem:[%s831 + $0x14] sm:$0xf]
      %v838 = vld [vmem:[%s831 + $0x18] sm:$0xf]
      %v839 = vld [vmem:[%s831 + $0x1c] sm:$0xf]
      %v840 = vld [vmem:[%s831 + $0x20] sm:$0xf]
      %v841 = vld [vmem:[%s831 + $0x24] sm:$0xf]
      %v842 = vld [vmem:[%s831 + $0x28] sm:$0xf]
      %v843 = vld [vmem:[%s831 + $0x2c] sm:$0xf]
      %v844 = vld [vmem:[%s831 + $0x30] sm:$0xf]
      %v845 = vld [vmem:[%s831 + $0x34] sm:$0xf]
      %v846 = vld [vmem:[%s831 + $0x38] sm:$0xf]
      %v847 = vld [vmem:[%s831 + $0x3c] sm:$0xf]
      %v848 = vld [vmem:[%s831 + $0x40] sm:$0xf]
      %v849 = vld [vmem:[%s831 + $0x44] sm:$0xf]
      %v850 = vld [vmem:[%s831 + $0x48] sm:$0xf]
      %v851 = vld [vmem:[%s831 + $0x4c] sm:$0xf]
      %v853 = vshrl.u32 %v829, 16
      %v855 = vshll.u32 %v829, 16
      %v857 = vrot.slane %v855, 1
      %v858 = vor.u32 %v853, %v857
      %v860 = vshrl.u32 %v830, 16
      %v862 = vshll.u32 %v830, 16
      %v864 = vrot.slane %v862, 1
      %v865 = vor.u32 %v860, %v864
      %v887 = vunpack.c.l.b16 %v832
      %v888 = vunpack.c.l.b16 %v833
      %v889 = vunpack.c.l.b16 %v834
      %v890 = vunpack.c.l.b16 %v835
      %v891 = vunpack.c.l.b16 %v836
      %v892 = vunpack.c.l.b16 %v837
      %v893 = vunpack.c.l.b16 %v838
      %v894 = vunpack.c.l.b16 %v839
      %v895 = vunpack.c.l.b16 %v840
      %v896 = vunpack.c.l.b16 %v841
      %v897 = vunpack.c.l.b16 %v842
      %v898 = vunpack.c.l.b16 %v843
      %v899 = vunpack.c.l.b16 %v844
      %v900 = vunpack.c.l.b16 %v845
      %v901 = vunpack.c.l.b16 %v846
      %v902 = vunpack.c.l.b16 %v847
      %v903 = vunpack.c.l.b16 %v848
      %v904 = vunpack.c.l.b16 %v849
      %v905 = vunpack.c.l.b16 %v850
      %v906 = vunpack.c.l.b16 %v851
      %v907 = vpack.c.b16 %v888, %v887
      %v908 = vpack.c.b16 %v890, %v889
      %v909 = vpack.c.b16 %v892, %v891
      %v910 = vpack.c.b16 %v894, %v893
      %v911 = vpack.c.b16 %v896, %v895
      %v912 = vpack.c.b16 %v898, %v897
      %v913 = vpack.c.b16 %v900, %v899
      %v914 = vpack.c.b16 %v902, %v901
      %v915 = vpack.c.b16 %v904, %v903
      %v916 = vpack.c.b16 %v906, %v905
      %v928 = vsel %vm426, %v865, 0
      %930 = vmatprep.subr.bf16.mxu0 0
      %931 = vmatpush1.bf16.msra.mxu0 %v907
      %932 = vmatprep.subr.bf16.mxu0 0
      %933 = vmatpush1.bf16.msra.mxu0 %v908
      %934 = vmatprep.subr.bf16.mxu0 0
      %935 = vmatpush1.bf16.msra.mxu0 %v909
      %936 = vmatprep.subr.bf16.mxu0 0
      %937 = vmatpush1.bf16.msra.mxu0 %v910
      %938 = vmatprep.subr.bf16.mxu0 0
      %939 = vmatpush1.bf16.msra.mxu0 %v911
      %940 = vmatprep.subr.bf16.mxu0 0
      %941 = vmatpush1.bf16.msra.mxu0 %v912
      %942 = vmatprep.subr.bf16.mxu0 0
      %943 = vmatpush1.bf16.msra.mxu0 %v913
      %944 = vmatprep.subr.bf16.mxu0 0
      %945 = vmatpush1.bf16.msra.mxu0 %v914
      %946 = vmatprep.subr.bf16.mxu0 0
      %947 = vmatpush1.bf16.msra.mxu0 %v915
      %948 = vmatprep.subr.bf16.mxu0 0
      %949 = vmatpush1.bf16.msra.mxu0 %v916
      %950 = vmatprep.subr.bf16.mxu0 0
      %951 = vmatpush1.bf16.msra.mxu0 0
      %952 = vmatprep.subr.bf16.mxu0 0
      %953 = vmatpush1.bf16.msra.mxu0 0
      %954 = vmatprep.subr.bf16.mxu0 0
      %955 = vmatpush1.bf16.msra.mxu0 0
      %956 = vmatprep.subr.bf16.mxu0 0
      %957 = vmatpush1.bf16.msra.mxu0 0
      %958 = vmatprep.subr.bf16.mxu0 0
      %959 = vmatpush1.bf16.msra.mxu0 0
      %960 = vmatprep.subr.bf16.mxu0 0
      %961 = vmatpush1.bf16.msra.mxu0 0
      %962 = vmatprep.mubr.bf16.mxu0 %v928
      %963 = vmatmul.mubr.bf16.gmra.mrb[0].mxu0 %v858
      %v964 = vpop.f32.mrb[0].mxu0
      %v965 = vadd.f32 0.0, %v964
      %v966 = vpop.f32.mrb[0].mxu0
      %v967 = vpop.f32.mrb[0].mxu0
      %v968 = vpop.f32.mrb[0].mxu0
      %969 = vdwg.mxu0
      %v970 = vadd.f32 %v828, %v965
      %s971 = scalar_lea.vmem %s3, 160
      %v972 = vld [vmem:[%s971] sm:$0xf]
      %v973 = vld [vmem:[%s971 + $0x4] sm:$0xf]
      %v974 = vld [vmem:[%s971 + $0x8] sm:$0xf]
      %v975 = vld [vmem:[%s971 + $0xc] sm:$0xf]
      %v976 = vld [vmem:[%s971 + $0x10] sm:$0xf]
      %v977 = vld [vmem:[%s971 + $0x14] sm:$0xf]
      %v978 = vld [vmem:[%s971 + $0x18] sm:$0xf]
      %v979 = vld [vmem:[%s971 + $0x1c] sm:$0xf]
      %v980 = vld [vmem:[%s971 + $0x20] sm:$0xf]
      %v981 = vld [vmem:[%s971 + $0x24] sm:$0xf]
      %v982 = vld [vmem:[%s971 + $0x28] sm:$0xf]
      %v983 = vld [vmem:[%s971 + $0x2c] sm:$0xf]
      %v984 = vld [vmem:[%s971 + $0x30] sm:$0xf]
      %v985 = vld [vmem:[%s971 + $0x34] sm:$0xf]
      %v986 = vld [vmem:[%s971 + $0x38] sm:$0xf]
      %v987 = vld [vmem:[%s971 + $0x3c] sm:$0xf]
      %v988 = vld [vmem:[%s971 + $0x40] sm:$0xf]
      %v989 = vld [vmem:[%s971 + $0x44] sm:$0xf]
      %v990 = vld [vmem:[%s971 + $0x48] sm:$0xf]
      %v991 = vld [vmem:[%s971 + $0x4c] sm:$0xf]
      %v994 = vrot.slane %v829, 1
      %v995 = vrot.slane %v830, 1
      %v1017 = vunpack.c.l.b16 %v972
      %v1018 = vunpack.c.l.b16 %v973
      %v1019 = vunpack.c.l.b16 %v974
      %v1020 = vunpack.c.l.b16 %v975
      %v1021 = vunpack.c.l.b16 %v976
      %v1022 = vunpack.c.l.b16 %v977
      %v1023 = vunpack.c.l.b16 %v978
      %v1024 = vunpack.c.l.b16 %v979
      %v1025 = vunpack.c.l.b16 %v980
      %v1026 = vunpack.c.l.b16 %v981
      %v1027 = vunpack.c.l.b16 %v982
      %v1028 = vunpack.c.l.b16 %v983
      %v1029 = vunpack.c.l.b16 %v984
      %v1030 = vunpack.c.l.b16 %v985
      %v1031 = vunpack.c.l.b16 %v986
      %v1032 = vunpack.c.l.b16 %v987
      %v1033 = vunpack.c.l.b16 %v988
      %v1034 = vunpack.c.l.b16 %v989
      %v1035 = vunpack.c.l.b16 %v990
      %v1036 = vunpack.c.l.b16 %v991
      %v1037 = vpack.c.b16 %v1018, %v1017
      %v1038 = vpack.c.b16 %v1020, %v1019
      %v1039 = vpack.c.b16 %v1022, %v1021
      %v1040 = vpack.c.b16 %v1024, %v1023
      %v1041 = vpack.c.b16 %v1026, %v1025
      %v1042 = vpack.c.b16 %v1028, %v1027
      %v1043 = vpack.c.b16 %v1030, %v1029
      %v1044 = vpack.c.b16 %v1032, %v1031
      %v1045 = vpack.c.b16 %v1034, %v1033
      %v1046 = vpack.c.b16 %v1036, %v1035
      %v1058 = vsel %vm426, %v995, 0
      %1060 = vmatprep.subr.bf16.mxu0 0
      %1061 = vmatpush1.bf16.msra.mxu0 %v1037
      %1062 = vmatprep.subr.bf16.mxu0 0
      %1063 = vmatpush1.bf16.msra.mxu0 %v1038
      %1064 = vmatprep.subr.bf16.mxu0 0
      %1065 = vmatpush1.bf16.msra.mxu0 %v1039
      %1066 = vmatprep.subr.bf16.mxu0 0
      %1067 = vmatpush1.bf16.msra.mxu0 %v1040
      %1068 = vmatprep.subr.bf16.mxu0 0
      %1069 = vmatpush1.bf16.msra.mxu0 %v1041
      %1070 = vmatprep.subr.bf16.mxu0 0
      %1071 = vmatpush1.bf16.msra.mxu0 %v1042
      %1072 = vmatprep.subr.bf16.mxu0 0
      %1073 = vmatpush1.bf16.msra.mxu0 %v1043
      %1074 = vmatprep.subr.bf16.mxu0 0
      %1075 = vmatpush1.bf16.msra.mxu0 %v1044
      %1076 = vmatprep.subr.bf16.mxu0 0
      %1077 = vmatpush1.bf16.msra.mxu0 %v1045
      %1078 = vmatprep.subr.bf16.mxu0 0
      %1079 = vmatpush1.bf16.msra.mxu0 %v1046
      %1080 = vmatprep.subr.bf16.mxu0 0
      %1081 = vmatpush1.bf16.msra.mxu0 0
      %1082 = vmatprep.subr.bf16.mxu0 0
      %1083 = vmatpush1.bf16.msra.mxu0 0
      %1084 = vmatprep.subr.bf16.mxu0 0
      %1085 = vmatpush1.bf16.msra.mxu0 0
      %1086 = vmatprep.subr.bf16.mxu0 0
      %1087 = vmatpush1.bf16.msra.mxu0 0
      %1088 = vmatprep.subr.bf16.mxu0 0
      %1089 = vmatpush1.bf16.msra.mxu0 0
      %1090 = vmatprep.subr.bf16.mxu0 0
      %1091 = vmatpush1.bf16.msra.mxu0 0
      %1092 = vmatprep.mubr.bf16.mxu0 %v1058
      %1093 = vmatmul.mubr.bf16.gmra.mrb[0].mxu0 %v994
      %v1094 = vpop.f32.mrb[0].mxu0
      %v1095 = vadd.f32 0.0, %v1094
      %v1096 = vpop.f32.mrb[0].mxu0
      %v1097 = vpop.f32.mrb[0].mxu0
      %v1098 = vpop.f32.mrb[0].mxu0
      %1099 = vdwg.mxu0
      %v1100 = vadd.f32 %v970, %v1095
      %v1101 = vld [vmem:[%s4] sm:$0x1]
      %v1103 = vlaneseq
      %v1104 = vshrl.u32 %v1103, 7
      %v1105 = vsub.s32 0, %v1104
      %v1106 = vrot.slane %v1101, %v1105
      %v1108 = vadd.f32 %v1100, %v1106
      %v1109 = vmax.f32 %v1108, 0.0
      %v1110 = vpack.c.bf16 %v1109, %v1109
      %v1111 = vld [vmem:[%s5] sm:$0xf]
      %v1112 = vld [vmem:[%s5 + $0x4] sm:$0xf]
      %v1113 = vld [vmem:[%s5 + $0x8] sm:$0xf]
      %v1114 = vld [vmem:[%s5 + $0xc] sm:$0xf]
      %v1115 = vld [vmem:[%s5 + $0x10] sm:$0xf]
      %v1116 = vld [vmem:[%s5 + $0x14] sm:$0xf]
      %v1117 = vld [vmem:[%s5 + $0x18] sm:$0xf]
      %v1118 = vld [vmem:[%s5 + $0x1c] sm:$0xf]
      %v1119 = vld [vmem:[%s5 + $0x20] sm:$0xf]
      %v1120 = vld [vmem:[%s5 + $0x24] sm:$0xf]
      %v1121 = vld [vmem:[%s5 + $0x28] sm:$0xf]
      %v1122 = vld [vmem:[%s5 + $0x2c] sm:$0xf]
      %v1123 = vld [vmem:[%s5 + $0x30] sm:$0xf]
      %v1124 = vld [vmem:[%s5 + $0x34] sm:$0xf]
      %v1125 = vld [vmem:[%s5 + $0x38] sm:$0xf]
      %v1126 = vld [vmem:[%s5 + $0x3c] sm:$0xf]
      %v1127 = vld [vmem:[%s6] sm:$0x1]
      %v1129 = vlaneseq
      %v1130 = vshrl.u32 %v1129, 7
      %v1131 = vsub.s32 0, %v1130
      %v1132 = vrot.slane %v1127, %v1131
      %v1150 = vunpack.c.l.b16 %v1111
      %v1151 = vunpack.c.l.b16 %v1112
      %v1152 = vunpack.c.l.b16 %v1113
      %v1153 = vunpack.c.l.b16 %v1114
      %v1154 = vunpack.c.l.b16 %v1115
      %v1155 = vunpack.c.l.b16 %v1116
      %v1156 = vunpack.c.l.b16 %v1117
      %v1157 = vunpack.c.l.b16 %v1118
      %v1158 = vunpack.c.l.b16 %v1119
      %v1159 = vunpack.c.l.b16 %v1120
      %v1160 = vunpack.c.l.b16 %v1121
      %v1161 = vunpack.c.l.b16 %v1122
      %v1162 = vunpack.c.l.b16 %v1123
      %v1163 = vunpack.c.l.b16 %v1124
      %v1164 = vunpack.c.l.b16 %v1125
      %v1165 = vunpack.c.l.b16 %v1126
      %v1166 = vpack.c.b16 %v1151, %v1150
      %v1167 = vpack.c.b16 %v1153, %v1152
      %v1168 = vpack.c.b16 %v1155, %v1154
      %v1169 = vpack.c.b16 %v1157, %v1156
      %v1170 = vpack.c.b16 %v1159, %v1158
      %v1171 = vpack.c.b16 %v1161, %v1160
      %v1172 = vpack.c.b16 %v1163, %v1162
      %v1173 = vpack.c.b16 %v1165, %v1164
      %1182 = vmatprep.subr.bf16.mxu0 0
      %1183 = vmatpush1.bf16.msra.mxu0 %v1166
      %1184 = vmatprep.subr.bf16.mxu0 0
      %1185 = vmatpush1.bf16.msra.mxu0 %v1167
      %1186 = vmatprep.subr.bf16.mxu0 0
      %1187 = vmatpush1.bf16.msra.mxu0 %v1168
      %1188 = vmatprep.subr.bf16.mxu0 0
      %1189 = vmatpush1.bf16.msra.mxu0 %v1169
      %1190 = vmatprep.subr.bf16.mxu0 0
      %1191 = vmatpush1.bf16.msra.mxu0 %v1170
      %1192 = vmatprep.subr.bf16.mxu0 0
      %1193 = vmatpush1.bf16.msra.mxu0 %v1171
      %1194 = vmatprep.subr.bf16.mxu0 0
      %1195 = vmatpush1.bf16.msra.mxu0 %v1172
      %1196 = vmatprep.subr.bf16.mxu0 0
      %1197 = vmatpush1.bf16.msra.mxu0 %v1173
      %1198 = vmatprep.subr.bf16.mxu0 0
      %1199 = vmatpush1.bf16.msra.mxu0 0
      %1200 = vmatprep.subr.bf16.mxu0 0
      %1201 = vmatpush1.bf16.msra.mxu0 0
      %1202 = vmatprep.subr.bf16.mxu0 0
      %1203 = vmatpush1.bf16.msra.mxu0 0
      %1204 = vmatprep.subr.bf16.mxu0 0
      %1205 = vmatpush1.bf16.msra.mxu0 0
      %1206 = vmatprep.subr.bf16.mxu0 0
      %1207 = vmatpush1.bf16.msra.mxu0 0
      %1208 = vmatprep.subr.bf16.mxu0 0
      %1209 = vmatpush1.bf16.msra.mxu0 0
      %1210 = vmatprep.subr.bf16.mxu0 0
      %1211 = vmatpush1.bf16.msra.mxu0 0
      %1212 = vmatprep.subr.bf16.mxu0 0
      %1213 = vmatpush1.bf16.msra.mxu0 0
      %1214 = vmatprep.mubr.bf16.mxu0 0
      %1215 = vmatmul.mubr.bf16.gmra.mrb[0].mxu0 %v1110
      %v1216 = vpop.f32.mrb[0].mxu0
      %v1217 = vadd.f32 %v1132, %v1216
      %v1218 = vpop.f32.mrb[0].mxu0
      %v1219 = vpop.f32.mrb[0].mxu0
      %v1220 = vpop.f32.mrb[0].mxu0
      %1221 = vdwg.mxu0
      %vm1222 = vcmask 523264
      %1223 = vst.msk [vmem:[%s296] sm:$0xff] %vm1222, %v1217
      %p1224 = scmp.lt.s32.totalorder %s18, 1
      %s1225 = scalar_select %p1224, %s18, 1
      %s1226 = smul.addr %s1225, 8
      %s1227 = scalar_lea.vmem %s7, %s1226
      // Predicated region
      $region49: #{unet_bin_forward.12} parent=47 // pred_check
        %p1228 = pneg %p193
      $region50: #{unet_bin_forward.12} parent=47 // pred_check_branch
        %1230 = sbr.rel (%p1228) target = $region52
      $region51: #{unet_bin_forward.12} parent=47 // pred_region
        _
      $region52: #{unet_bin_forward.12} parent=47 // pred_fallthru
        _
    $region48: #{unet_bin_forward.12} parent=5 // pred_fallthru
      _
    %p1231 = scmp.le.s32.totalorder 2, %s13
    // Predicated region
    $region53: #{unet_bin_forward.12} parent=5 // pred_check
      %p1232 = pneg %p1231
    $region54: #{unet_bin_forward.12} parent=5 // pred_check_branch
      %1234 = sbr.rel (%p1232) target = $region56
    $region55: #{unet_bin_forward.12} parent=5 // pred_region
      %s1235 = ssub.s32 %s13, 2
      // Predicated region
      $region57: #{unet_bin_forward.12} parent=55 // pred_check
        %p1236 = pneg %p199
      $region58: #{unet_bin_forward.12} parent=55 // pred_check_branch
        %1238 = sbr.rel (%p1236) target = $region60
      $region59: #{unet_bin_forward.12} parent=55 // pred_region
        %p1239 = scmp.lt.s32.totalorder %s19, 1
        %s1240 = scalar_select %p1239, %s19, 1
        %s1241 = smul.addr %s1240, 8
        %s1242 = scalar_lea.vmem %s7, %s1241
      $region60: #{unet_bin_forward.12} parent=55 // pred_fallthru
        _
    $region56: #{unet_bin_forward.12} parent=5 // pred_fallthru
      _
  $region6: #{unet_bin_forward.12} parent=0 // loop_footer
    %s17 = sadd.s32 1, %s13
  $region7: #{unet_bin_forward.12} parent=0 // loop_footer_branch
    %12 = sbr.rel target = $region3
  $region8: #{unet_bin_forward.12} parent=0 // loop_exit
    _

// kernel: unet_bin_forward.11
$region0: #{unet_bin_forward.11}
  #allocation0 [shape = 'u32[]', space=smem, size = 0x4, offset = 0x4, fixed_abs, tag = 'smem constant byte address 0x4 - core index']
  #allocation1 [shape = 'u32[144,128]{1,0:T(1,128)}', space=vmem, size = 0x12000, scoped, tag = 'internal scratch']
  %s0 = inlined_call_operand.vmem [shape: f32[2,6,192], index: 0, kind: input, shape index: {}]
  %s1 = inlined_call_operand.vmem [shape: f32[2,6,192], index: 1, kind: input, shape index: {}]
  %s2 = inlined_call_operand.vmem [shape: bf16[3,192,128], index: 2, kind: input, shape index: {}]
  %s3 = inlined_call_operand.vmem [shape: bf16[3,192,128], index: 3, kind: input, shape index: {}]
  %s4 = inlined_call_operand.vmem [shape: f32[1,128], index: 4, kind: input, shape index: {}]
  %s5 = inlined_call_operand.vmem [shape: bf16[128,64], index: 5, kind: input, shape index: {}]
  %s6 = inlined_call_operand.vmem [shape: f32[1,64], index: 6, kind: input, shape index: {}]
  %s7 = inlined_call_operand.vmem [shape: f32[2,4,64], index: 7, kind: output, shape index: {}]
  %s8 = sld [smem:[#allocation0]]
  $region61: #{unet_bin_forward.11} parent=0
    _
  %s10 = ssub.s32 1, %s8
  %s11 = scalar_select 0, %s10, %s8
  loop: start=0, step=1, limit=4
  $region2: #{unet_bin_forward.11} parent=0 // loop_pre_header
    _
  $region3: #{unet_bin_forward.11} parent=0 // loop_header
    %s13 = sphi 0, %s17
    %p14 = scmp.ge.s32.totalorder %s13, 4
    %s23 = sphi 0, %s25
    %s26 = sphi 0, %s23
    %s27 = sphi 0, %s26
    %s43 = sphi 0, %s27
    %s49 = sphi 0, %s51
    %s52 = sphi 0, %s49
    %s53 = sphi 0, %s52
    %s69 = sphi 0, %s53
    %s73 = sphi 0, %s73
    %s75 = sphi 0, %s73
    %s76 = sphi 0, %s75
    %s90 = sphi 0, %s76
    %s94 = sphi 0, %s94
    %s96 = sphi 0, %s94
    %s97 = sphi 0, %s96
    %s111 = sphi 0, %s97
    %s115 = sphi 0, %s115
    %s117 = sphi 0, %s115
    %s118 = sphi 0, %s117
    %s132 = sphi 0, %s118
    %s136 = sphi 0, %s136
    %s138 = sphi 0, %s136
    %s139 = sphi 0, %s138
    %s153 = sphi 0, %s139
    %s157 = sphi 0, %s157
    %s159 = sphi 0, %s157
    %s160 = sphi 0, %s159
    %s174 = sphi 0, %s160
    %s180 = sphi 0, %s182
    %s183 = sphi 0, %s180
    %s184 = sphi 0, %s183
    %s200 = sphi 0, %s184
  $region4: #{unet_bin_forward.11} parent=0 // loop_header_branch
    %16 = sbr.rel (%p14) target = $region8
  $region5: #{unet_bin_forward.11} parent=0 // loop_body
    %s18 = ssub.s32 %s13, 1
    %s19 = ssub.s32 %s13, 2
    %s20 = sadd.s32 %s13, 1
    %s21 = ssub.s32 %s13, %s20
    %p22 = scmp.eq.s32.totalorder %s21, 0
    %s24 = sadd.s32 %s23, 1
    %s25 = scalar_select %p22, %s23, %s24
    %p28 = pneg %p22
    %p29 = scmp.eq.s32.totalorder %s13, 1
    %p30 = por %p28, %p29
    %p31 = scmp.ne.s32.totalorder %s23, %s26
    %p32 = scmp.eq.s32.totalorder %s13, 0
    %p33 = por %p31, %p32
    %p34 = scmp.ne.s32.totalorder %s23, %s26
    %p35 = scmp.eq.s32.totalorder %s18, 1
    %p36 = por %p34, %p35
    %p37 = scmp.ne.s32.totalorder %s26, %s27
    %p38 = scmp.eq.s32.totalorder %s18, 0
    %p39 = por %p37, %p38
    %p40 = scmp.ne.s32.totalorder %s26, %s27
    %p41 = scmp.eq.s32.totalorder %s19, 1
    %p42 = por %p40, %p41
    %p44 = scmp.ne.s32.totalorder %s27, %s43
    %p45 = scmp.eq.s32.totalorder %s19, 0
    %p46 = por %p44, %p45
    %s47 = ssub.s32 %s13, %s20
    %p48 = scmp.eq.s32.totalorder %s47, 0
    %s50 = sadd.s32 %s49, 1
    %s51 = scalar_select %p48, %s49, %s50
    %p54 = pneg %p48
    %p55 = scmp.eq.s32.totalorder %s13, 1
    %p56 = por %p54, %p55
    %p57 = scmp.ne.s32.totalorder %s49, %s52
    %p58 = scmp.eq.s32.totalorder %s13, 0
    %p59 = por %p57, %p58
    %p60 = scmp.ne.s32.totalorder %s49, %s52
    %p61 = scmp.eq.s32.totalorder %s18, 1
    %p62 = por %p60, %p61
    %p63 = scmp.ne.s32.totalorder %s52, %s53
    %p64 = scmp.eq.s32.totalorder %s18, 0
    %p65 = por %p63, %p64
    %p66 = scmp.ne.s32.totalorder %s52, %s53
    %p67 = scmp.eq.s32.totalorder %s19, 1
    %p68 = por %p66, %p67
    %p70 = scmp.ne.s32.totalorder %s53, %s69
    %p71 = scmp.eq.s32.totalorder %s19, 0
    %p72 = por %p70, %p71
    %s74 = sadd.s32 %s73, 1
    %p77 = scmp.eq.s32.totalorder %s13, 1
    %p78 = scmp.ne.s32.totalorder %s73, %s75
    %p79 = scmp.eq.s32.totalorder %s13, 0
    %p80 = por %p78, %p79
    %p81 = scmp.ne.s32.totalorder %s73, %s75
    %p82 = scmp.eq.s32.totalorder %s18, 1
    %p83 = por %p81, %p82
    %p84 = scmp.ne.s32.totalorder %s75, %s76
    %p85 = scmp.eq.s32.totalorder %s18, 0
    %p86 = por %p84, %p85
    %p87 = scmp.ne.s32.totalorder %s75, %s76
    %p88 = scmp.eq.s32.totalorder %s19, 1
    %p89 = por %p87, %p88
    %p91 = scmp.ne.s32.totalorder %s76, %s90
    %p92 = scmp.eq.s32.totalorder %s19, 0
    %p93 = por %p91, %p92
    %s95 = sadd.s32 %s94, 1
    %p98 = scmp.eq.s32.totalorder %s13, 1
    %p99 = scmp.ne.s32.totalorder %s94, %s96
    %p100 = scmp.eq.s32.totalorder %s13, 0
    %p101 = por %p99, %p100
    %p102 = scmp.ne.s32.totalorder %s94, %s96
    %p103 = scmp.eq.s32.totalorder %s18, 1
    %p104 = por %p102, %p103
    %p105 = scmp.ne.s32.totalorder %s96, %s97
    %p106 = scmp.eq.s32.totalorder %s18, 0
    %p107 = por %p105, %p106
    %p108 = scmp.ne.s32.totalorder %s96, %s97
    %p109 = scmp.eq.s32.totalorder %s19, 1
    %p110 = por %p108, %p109
    %p112 = scmp.ne.s32.totalorder %s97, %s111
    %p113 = scmp.eq.s32.totalorder %s19, 0
    %p114 = por %p112, %p113
    %s116 = sadd.s32 %s115, 1
    %p119 = scmp.eq.s32.totalorder %s13, 1
    %p120 = scmp.ne.s32.totalorder %s115, %s117
    %p121 = scmp.eq.s32.totalorder %s13, 0
    %p122 = por %p120, %p121
    %p123 = scmp.ne.s32.totalorder %s115, %s117
    %p124 = scmp.eq.s32.totalorder %s18, 1
    %p125 = por %p123, %p124
    %p126 = scmp.ne.s32.totalorder %s117, %s118
    %p127 = scmp.eq.s32.totalorder %s18, 0
    %p128 = por %p126, %p127
    %p129 = scmp.ne.s32.totalorder %s117, %s118
    %p130 = scmp.eq.s32.totalorder %s19, 1
    %p131 = por %p129, %p130
    %p133 = scmp.ne.s32.totalorder %s118, %s132
    %p134 = scmp.eq.s32.totalorder %s19, 0
    %p135 = por %p133, %p134
    %s137 = sadd.s32 %s136, 1
    %p140 = scmp.eq.s32.totalorder %s13, 1
    %p141 = scmp.ne.s32.totalorder %s136, %s138
    %p142 = scmp.eq.s32.totalorder %s13, 0
    %p143 = por %p141, %p142
    %p144 = scmp.ne.s32.totalorder %s136, %s138
    %p145 = scmp.eq.s32.totalorder %s18, 1
    %p146 = por %p144, %p145
    %p147 = scmp.ne.s32.totalorder %s138, %s139
    %p148 = scmp.eq.s32.totalorder %s18, 0
    %p149 = por %p147, %p148
    %p150 = scmp.ne.s32.totalorder %s138, %s139
    %p151 = scmp.eq.s32.totalorder %s19, 1
    %p152 = por %p150, %p151
    %p154 = scmp.ne.s32.totalorder %s139, %s153
    %p155 = scmp.eq.s32.totalorder %s19, 0
    %p156 = por %p154, %p155
    %s158 = sadd.s32 %s157, 1
    %p161 = scmp.eq.s32.totalorder %s13, 1
    %p162 = scmp.ne.s32.totalorder %s157, %s159
    %p163 = scmp.eq.s32.totalorder %s13, 0
    %p164 = por %p162, %p163
    %p165 = scmp.ne.s32.totalorder %s157, %s159
    %p166 = scmp.eq.s32.totalorder %s18, 1
    %p167 = por %p165, %p166
    %p168 = scmp.ne.s32.totalorder %s159, %s160
    %p169 = scmp.eq.s32.totalorder %s18, 0
    %p170 = por %p168, %p169
    %p171 = scmp.ne.s32.totalorder %s159, %s160
    %p172 = scmp.eq.s32.totalorder %s19, 1
    %p173 = por %p171, %p172
    %p175 = scmp.ne.s32.totalorder %s160, %s174
    %p176 = scmp.eq.s32.totalorder %s19, 0
    %p177 = por %p175, %p176
    %s178 = ssub.s32 %s13, %s20
    %p179 = scmp.eq.s32.totalorder %s178, 0
    %s181 = sadd.s32 %s180, 1
    %s182 = scalar_select %p179, %s180, %s181
    %p185 = pneg %p179
    %p186 = scmp.eq.s32.totalorder %s13, 1
    %p187 = por %p185, %p186
    %p188 = scmp.ne.s32.totalorder %s180, %s183
    %p189 = scmp.eq.s32.totalorder %s13, 0
    %p190 = por %p188, %p189
    %p191 = scmp.ne.s32.totalorder %s180, %s183
    %p192 = scmp.eq.s32.totalorder %s18, 1
    %p193 = por %p191, %p192
    %p194 = scmp.ne.s32.totalorder %s183, %s184
    %p195 = scmp.eq.s32.totalorder %s18, 0
    %p196 = por %p194, %p195
    %p197 = scmp.ne.s32.totalorder %s183, %s184
    %p198 = scmp.eq.s32.totalorder %s19, 1
    %p199 = por %p197, %p198
    %p201 = scmp.ne.s32.totalorder %s184, %s200
    %p202 = scmp.eq.s32.totalorder %s19, 0
    %p203 = por %p201, %p202
    %p204 = scmp.le.s32.totalorder 1, %s13
    %p205 = scmp.lt.s32.totalorder %s13, 3
    %p206 = pnand %p204, %p205
    %p207 = pneg %p206
    // Predicated region
    $region9: #{unet_bin_forward.11} parent=5 // pred_check
      _
    $region10: #{unet_bin_forward.11} parent=5 // pred_check_branch
      %209 = sbr.rel (%p206) target = $region12
    $region11: #{unet_bin_forward.11} parent=5 // pred_region
      %s210 = ssub.s32 %s13, 1
      // Predicated region
      $region13: #{unet_bin_forward.11} parent=11 // pred_check
        %p211 = pneg %p86
      $region14: #{unet_bin_forward.11} parent=11 // pred_check_branch
        %213 = sbr.rel (%p211) target = $region16
      $region15: #{unet_bin_forward.11} parent=11 // pred_region
        _
      $region16: #{unet_bin_forward.11} parent=11 // pred_fallthru
        _
      // Predicated region
      $region17: #{unet_bin_forward.11} parent=11 // pred_check
        %p214 = pneg %p107
      $region18: #{unet_bin_forward.11} parent=11 // pred_check_branch
        %216 = sbr.rel (%p214) target = $region20
      $region19: #{unet_bin_forward.11} parent=11 // pred_region
        _
      $region20: #{unet_bin_forward.11} parent=11 // pred_fallthru
        _
      // Predicated region
      $region21: #{unet_bin_forward.11} parent=11 // pred_check
        %p217 = pneg %p128
      $region22: #{unet_bin_forward.11} parent=11 // pred_check_branch
        %219 = sbr.rel (%p217) target = $region24
      $region23: #{unet_bin_forward.11} parent=11 // pred_region
        _
      $region24: #{unet_bin_forward.11} parent=11 // pred_fallthru
        _
      // Predicated region
      $region25: #{unet_bin_forward.11} parent=11 // pred_check
        %p220 = pneg %p149
      $region26: #{unet_bin_forward.11} parent=11 // pred_check_branch
        %222 = sbr.rel (%p220) target = $region28
      $region27: #{unet_bin_forward.11} parent=11 // pred_region
        _
      $region28: #{unet_bin_forward.11} parent=11 // pred_fallthru
        _
      // Predicated region
      $region29: #{unet_bin_forward.11} parent=11 // pred_check
        %p223 = pneg %p170
      $region30: #{unet_bin_forward.11} parent=11 // pred_check_branch
        %225 = sbr.rel (%p223) target = $region32
      $region31: #{unet_bin_forward.11} parent=11 // pred_region
        _
      $region32: #{unet_bin_forward.11} parent=11 // pred_fallthru
        _
    $region12: #{unet_bin_forward.11} parent=5 // pred_fallthru
      _
    %p226 = scmp.lt.s32.totalorder %s13, 2
    // Predicated region
    $region33: #{unet_bin_forward.11} parent=5 // pred_check
      %p227 = pneg %p226
    $region34: #{unet_bin_forward.11} parent=5 // pred_check_branch
      %229 = sbr.rel (%p227) target = $region36
    $region35: #{unet_bin_forward.11} parent=5 // pred_region
      // Predicated region
      $region37: #{unet_bin_forward.11} parent=35 // pred_check
        %p230 = pneg %p33
      $region38: #{unet_bin_forward.11} parent=35 // pred_check_branch
        %232 = sbr.rel (%p230) target = $region40
      $region39: #{unet_bin_forward.11} parent=35 // pred_region
        %p233 = scmp.lt.s32.totalorder %s13, 1
        %s234 = scalar_select %p233, %s13, 1
        %s235 = smul.addr %s234, 2
        %s236 = smul.addr %s235, 8
        %s237 = scalar_lea.vmem %s0, %s236
      $region40: #{unet_bin_forward.11} parent=35 // pred_fallthru
        _
      // Predicated region
      $region41: #{unet_bin_forward.11} parent=35 // pred_check
        %p238 = pneg %p59
      $region42: #{unet_bin_forward.11} parent=35 // pred_check_branch
        %240 = sbr.rel (%p238) target = $region44
      $region43: #{unet_bin_forward.11} parent=35 // pred_region
        %p241 = scmp.lt.s32.totalorder %s13, 1
        %s242 = scalar_select %p241, %s13, 1
        %s243 = smul.addr %s242, 2
        %s244 = smul.addr %s243, 8
        %s245 = scalar_lea.vmem %s1, %s244
      $region44: #{unet_bin_forward.11} parent=35 // pred_fallthru
        _
    $region36: #{unet_bin_forward.11} parent=5 // pred_fallthru
      _
    %p246 = scmp.le.s32.totalorder 1, %s13
    %p247 = scmp.lt.s32.totalorder %s13, 3
    %p248 = pnand %p246, %p247
    %p249 = pneg %p248
    // Predicated region
    $region45: #{unet_bin_forward.11} parent=5 // pred_check
      _
    $region46: #{unet_bin_forward.11} parent=5 // pred_check_branch
      %251 = sbr.rel (%p248) target = $region48
    $region47: #{unet_bin_forward.11} parent=5 // pred_region
      %s252 = ssub.s32 %s13, 1
      %p253 = scmp.lt.s32.totalorder %s18, 1
      %s254 = scalar_select %p253, %s18, 1
      %s255 = smul.addr %s254, 2
      %s256 = smul.addr %s255, 8
      %s257 = scalar_lea.vmem %s0, %s256
      %p258 = pneg %p39
      %p259 = pneg %p36
      %p260 = scmp.lt.s32.totalorder %s18, 1
      %s261 = scalar_select %p260, %s18, 1
      %s262 = smul.addr %s261, 2
      %s263 = smul.addr %s262, 8
      %s264 = scalar_lea.vmem %s1, %s263
      %p265 = pneg %p65
      %p266 = pneg %p62
      %p267 = pneg %p86
      %p268 = pneg %p83
      %p269 = pneg %p107
      %p270 = pneg %p104
      %p271 = pneg %p128
      %p272 = pneg %p125
      %p273 = pneg %p149
      %p274 = pneg %p146
      %p275 = pneg %p170
      %p276 = pneg %p167
      %p277 = pneg %p196
      %p278 = pneg %p193
      %p279 = scmp.lt.s32.totalorder %s18, 1
      %s280 = scalar_select %p279, %s18, 1
      %s281 = smul.addr %s280, 4
      %s282 = scalar_lea.vmem %s7, %s281
      %p283 = scmp.lt.s32.totalorder %s18, 1
      %s284 = scalar_select %p283, %s18, 1
      %s285 = smul.addr %s284, 2
      %s286 = smul.addr %s285, 8
      %s287 = scalar_lea.vmem %s0, %s286
      %p288 = scmp.lt.s32.totalorder %s18, 1
      %s289 = scalar_select %p288, %s18, 1
      %s290 = smul.addr %s289, 2
      %s291 = smul.addr %s290, 8
      %s292 = scalar_lea.vmem %s1, %s291
      %p293 = scmp.lt.s32.totalorder %s18, 1
      %s294 = scalar_select %p293, %s18, 1
      %s295 = smul.addr %s294, 4
      %s296 = scalar_lea.vmem %s7, %s295
      %v298 = vld [vmem:[%s287] sm:$0x3f]
      %v299 = vld [vmem:[%s287 + $0x8] sm:$0x3f]
      %v300 = vld [vmem:[%s292] sm:$0x3f]
      %v301 = vld [vmem:[%s292 + $0x8] sm:$0x3f]
      %v302 = vpack.c.bf16 %v298, %v298
      %v303 = vpack.c.bf16 %v299, %v299
      %v304 = vld [vmem:[%s2] sm:$0xf]
      %v305 = vld [vmem:[%s2 + $0x4] sm:$0xf]
      %v306 = vld [vmem:[%s2 + $0x8] sm:$0xf]
      %v307 = vld [vmem:[%s2 + $0xc] sm:$0xf]
      %v308 = vld [vmem:[%s2 + $0x10] sm:$0xf]
      %v309 = vld [vmem:[%s2 + $0x14] sm:$0xf]
      %v310 = vld [vmem:[%s2 + $0x18] sm:$0xf]
      %v311 = vld [vmem:[%s2 + $0x1c] sm:$0xf]
      %v312 = vld [vmem:[%s2 + $0x20] sm:$0xf]
      %v313 = vld [vmem:[%s2 + $0x24] sm:$0xf]
      %v314 = vld [vmem:[%s2 + $0x28] sm:$0xf]
      %v315 = vld [vmem:[%s2 + $0x2c] sm:$0xf]
      %v316 = vld [vmem:[%s2 + $0x30] sm:$0xf]
      %v317 = vld [vmem:[%s2 + $0x34] sm:$0xf]
      %v318 = vld [vmem:[%s2 + $0x38] sm:$0xf]
      %v319 = vld [vmem:[%s2 + $0x3c] sm:$0xf]
      %v320 = vld [vmem:[%s2 + $0x40] sm:$0xf]
      %v321 = vld [vmem:[%s2 + $0x44] sm:$0xf]
      %v322 = vld [vmem:[%s2 + $0x48] sm:$0xf]
      %v323 = vld [vmem:[%s2 + $0x4c] sm:$0xf]
      %v324 = vld [vmem:[%s2 + $0x50] sm:$0xf]
      %v325 = vld [vmem:[%s2 + $0x54] sm:$0xf]
      %v326 = vld [vmem:[%s2 + $0x58] sm:$0xf]
      %v327 = vld [vmem:[%s2 + $0x5c] sm:$0xf]
      %s328 = scalar_lea.vmem %s2, 96
      %v329 = vld [vmem:[%s328] sm:$0xf]
      %v330 = vld [vmem:[%s328 + $0x4] sm:$0xf]
      %v331 = vld [vmem:[%s328 + $0x8] sm:$0xf]
      %v332 = vld [vmem:[%s328 + $0xc] sm:$0xf]
      %v333 = vld [vmem:[%s328 + $0x10] sm:$0xf]
      %v334 = vld [vmem:[%s328 + $0x14] sm:$0xf]
      %v335 = vld [vmem:[%s328 + $0x18] sm:$0xf]
      %v336 = vld [vmem:[%s328 + $0x1c] sm:$0xf]
      %v337 = vld [vmem:[%s328 + $0x20] sm:$0xf]
      %v338 = vld [vmem:[%s328 + $0x24] sm:$0xf]
      %v339 = vld [vmem:[%s328 + $0x28] sm:$0xf]
      %v340 = vld [vmem:[%s328 + $0x2c] sm:$0xf]
      %v341 = vld [vmem:[%s328 + $0x30] sm:$0xf]
      %v342 = vld [vmem:[%s328 + $0x34] sm:$0xf]
      %v343 = vld [vmem:[%s328 + $0x38] sm:$0xf]
      %v344 = vld [vmem:[%s328 + $0x3c] sm:$0xf]
      %v345 = vld [vmem:[%s328 + $0x40] sm:$0xf]
      %v346 = vld [vmem:[%s328 + $0x44] sm:$0xf]
      %v347 = vld [vmem:[%s328 + $0x48] sm:$0xf]
      %v348 = vld [vmem:[%s328 + $0x4c] sm:$0xf]
      %v349 = vld [vmem:[%s328 + $0x50] sm:$0xf]
      %v350 = vld [vmem:[%s328 + $0x54] sm:$0xf]
      %v351 = vld [vmem:[%s328 + $0x58] sm:$0xf]
      %v352 = vld [vmem:[%s328 + $0x5c] sm:$0xf]
      %v354 = vshrl.u32 %v302, 16
      %v356 = vshll.u32 %v302, 16
      %v358 = vrot.slane %v356, 1
      %v359 = vor.u32 %v354, %v358
      %v361 = vshrl.u32 %v303, 16
      %v363 = vshll.u32 %v303, 16
      %v365 = vrot.slane %v363, 1
      %v366 = vor.u32 %v361, %v365
      %v392 = vunpack.c.l.b16 %v329
      %v393 = vunpack.c.l.b16 %v330
      %v394 = vunpack.c.l.b16 %v331
      %v395 = vunpack.c.l.b16 %v332
      %v396 = vunpack.c.l.b16 %v333
      %v397 = vunpack.c.l.b16 %v334
      %v398 = vunpack.c.l.b16 %v335
      %v399 = vunpack.c.l.b16 %v336
      %v400 = vunpack.c.l.b16 %v337
      %v401 = vunpack.c.l.b16 %v338
      %v402 = vunpack.c.l.b16 %v339
      %v403 = vunpack.c.l.b16 %v340
      %v404 = vunpack.c.l.b16 %v341
      %v405 = vunpack.c.l.b16 %v342
      %v406 = vunpack.c.l.b16 %v343
      %v407 = vunpack.c.l.b16 %v344
      %v408 = vunpack.c.l.b16 %v345
      %v409 = vunpack.c.l.b16 %v346
      %v410 = vunpack.c.l.b16 %v347
      %v411 = vunpack.c.l.b16 %v348
      %v412 = vunpack.c.l.b16 %v349
      %v413 = vunpack.c.l.b16 %v350
      %v414 = vunpack.c.l.b16 %v351
      %v415 = vunpack.c.l.b16 %v352
      %v416 = vpack.c.b16 %v393, %v392
      %v417 = vpack.c.b16 %v395, %v394
      %v418 = vpack.c.b16 %v397, %v396
      %v419 = vpack.c.b16 %v399, %v398
      %v420 = vpack.c.b16 %v401, %v400
      %v421 = vpack.c.b16 %v403, %v402
      %v422 = vpack.c.b16 %v405, %v404
      %v423 = vpack.c.b16 %v407, %v406
      %v424 = vpack.c.b16 %v409, %v408
      %v425 = vpack.c.b16 %v411, %v410
      %v426 = vpack.c.b16 %v413, %v412
      %v427 = vpack.c.b16 %v415, %v414
      %vm440 = vcmask 523264
      %v442 = vsel %vm440, %v366, 0
      %444 = vmatprep.subr.bf16.mxu0 0
      %445 = vmatpush1.bf16.msra.mxu0 %v416
      %446 = vmatprep.subr.bf16.mxu0 0
      %447 = vmatpush1.bf16.msra.mxu0 %v417
      %448 = vmatprep.subr.bf16.mxu0 0
      %449 = vmatpush1.bf16.msra.mxu0 %v418
      %450 = vmatprep.subr.bf16.mxu0 0
      %451 = vmatpush1.bf16.msra.mxu0 %v419
      %452 = vmatprep.subr.bf16.mxu0 0
      %453 = vmatpush1.bf16.msra.mxu0 %v420
      %454 = vmatprep.subr.bf16.mxu0 0
      %455 = vmatpush1.bf16.msra.mxu0 %v421
      %456 = vmatprep.subr.bf16.mxu0 0
      %457 = vmatpush1.bf16.msra.mxu0 %v422
      %458 = vmatprep.subr.bf16.mxu0 0
      %459 = vmatpush1.bf16.msra.mxu0 %v423
      %460 = vmatprep.subr.bf16.mxu0 0
      %461 = vmatpush1.bf16.msra.mxu0 %v424
      %462 = vmatprep.subr.bf16.mxu0 0
      %463 = vmatpush1.bf16.msra.mxu0 %v425
      %464 = vmatprep.subr.bf16.mxu0 0
      %465 = vmatpush1.bf16.msra.mxu0 %v426
      %466 = vmatprep.subr.bf16.mxu0 0
      %467 = vmatpush1.bf16.msra.mxu0 %v427
      %468 = vmatprep.subr.bf16.mxu0 0
      %469 = vmatpush1.bf16.msra.mxu0 0
      %470 = vmatprep.subr.bf16.mxu0 0
      %471 = vmatpush1.bf16.msra.mxu0 0
      %472 = vmatprep.subr.bf16.mxu0 0
      %473 = vmatpush1.bf16.msra.mxu0 0
      %474 = vmatprep.subr.bf16.mxu0 0
      %475 = vmatpush1.bf16.msra.mxu0 0
      %476 = vmatprep.mubr.bf16.mxu0 %v442
      %477 = vmatmul.mubr.bf16.gmra.mrb[0].mxu0 %v359
      %v478 = vpop.f32.mrb[0].mxu0
      %v479 = vadd.f32 0.0, %v478
      %v480 = vpop.f32.mrb[0].mxu0
      %v481 = vpop.f32.mrb[0].mxu0
      %v482 = vpop.f32.mrb[0].mxu0
      %483 = vdwg.mxu0
      %v508 = vunpack.c.l.b16 %v304
      %v509 = vunpack.c.l.b16 %v305
      %v510 = vunpack.c.l.b16 %v306
      %v511 = vunpack.c.l.b16 %v307
      %v512 = vunpack.c.l.b16 %v308
      %v513 = vunpack.c.l.b16 %v309
      %v514 = vunpack.c.l.b16 %v310
      %v515 = vunpack.c.l.b16 %v311
      %v516 = vunpack.c.l.b16 %v312
      %v517 = vunpack.c.l.b16 %v313
      %v518 = vunpack.c.l.b16 %v314
      %v519 = vunpack.c.l.b16 %v315
      %v520 = vunpack.c.l.b16 %v316
      %v521 = vunpack.c.l.b16 %v317
      %v522 = vunpack.c.l.b16 %v318
      %v523 = vunpack.c.l.b16 %v319
      %v524 = vunpack.c.l.b16 %v320
      %v525 = vunpack.c.l.b16 %v321
      %v526 = vunpack.c.l.b16 %v322
      %v527 = vunpack.c.l.b16 %v323
      %v528 = vunpack.c.l.b16 %v324
      %v529 = vunpack.c.l.b16 %v325
      %v530 = vunpack.c.l.b16 %v326
      %v531 = vunpack.c.l.b16 %v327
      %v532 = vpack.c.b16 %v509, %v508
      %v533 = vpack.c.b16 %v511, %v510
      %v534 = vpack.c.b16 %v513, %v512
      %v535 = vpack.c.b16 %v515, %v514
      %v536 = vpack.c.b16 %v517, %v516
      %v537 = vpack.c.b16 %v519, %v518
      %v538 = vpack.c.b16 %v521, %v520
      %v539 = vpack.c.b16 %v523, %v522
      %v540 = vpack.c.b16 %v525, %v524
      %v541 = vpack.c.b16 %v527, %v526
      %v542 = vpack.c.b16 %v529, %v528
      %v543 = vpack.c.b16 %v531, %v530
      %v556 = vsel %vm440, %v303, 0
      %558 = vmatprep.subr.bf16.mxu0 0
      %559 = vmatpush1.bf16.msra.mxu0 %v532
      %560 = vmatprep.subr.bf16.mxu0 0
      %561 = vmatpush1.bf16.msra.mxu0 %v533
      %562 = vmatprep.subr.bf16.mxu0 0
      %563 = vmatpush1.bf16.msra.mxu0 %v534
      %564 = vmatprep.subr.bf16.mxu0 0
      %565 = vmatpush1.bf16.msra.mxu0 %v535
      %566 = vmatprep.subr.bf16.mxu0 0
      %567 = vmatpush1.bf16.msra.mxu0 %v536
      %568 = vmatprep.subr.bf16.mxu0 0
      %569 = vmatpush1.bf16.msra.mxu0 %v537
      %570 = vmatprep.subr.bf16.mxu0 0
      %571 = vmatpush1.bf16.msra.mxu0 %v538
      %572 = vmatprep.subr.bf16.mxu0 0
      %573 = vmatpush1.bf16.msra.mxu0 %v539
      %574 = vmatprep.subr.bf16.mxu0 0
      %575 = vmatpush1.bf16.msra.mxu0 %v540
      %576 = vmatprep.subr.bf16.mxu0 0
      %577 = vmatpush1.bf16.msra.mxu0 %v541
      %578 = vmatprep.subr.bf16.mxu0 0
      %579 = vmatpush1.bf16.msra.mxu0 %v542
      %580 = vmatprep.subr.bf16.mxu0 0
      %581 = vmatpush1.bf16.msra.mxu0 %v543
      %582 = vmatprep.subr.bf16.mxu0 0
      %583 = vmatpush1.bf16.msra.mxu0 0
      %584 = vmatprep.subr.bf16.mxu0 0
      %585 = vmatpush1.bf16.msra.mxu0 0
      %586 = vmatprep.subr.bf16.mxu0 0
      %587 = vmatpush1.bf16.msra.mxu0 0
      %588 = vmatprep.subr.bf16.mxu0 0
      %589 = vmatpush1.bf16.msra.mxu0 0
      %590 = vmatprep.mubr.bf16.mxu0 %v556
      %591 = vmatmul.mubr.bf16.gmra.mrb[0].mxu0 %v302
      %v592 = vpop.f32.mrb[0].mxu0
      %v593 = vadd.f32 %v479, %v592
      %v594 = vpop.f32.mrb[0].mxu0
      %v595 = vpop.f32.mrb[0].mxu0
      %v596 = vpop.f32.mrb[0].mxu0
      %597 = vdwg.mxu0
      %s598 = scalar_lea.vmem %s2, 192
      %v599 = vld [vmem:[%s598] sm:$0xf]
      %v600 = vld [vmem:[%s598 + $0x4] sm:$0xf]
      %v601 = vld [vmem:[%s598 + $0x8] sm:$0xf]
      %v602 = vld [vmem:[%s598 + $0xc] sm:$0xf]
      %v603 = vld [vmem:[%s598 + $0x10] sm:$0xf]
      %v604 = vld [vmem:[%s598 + $0x14] sm:$0xf]
      %v605 = vld [vmem:[%s598 + $0x18] sm:$0xf]
      %v606 = vld [vmem:[%s598 + $0x1c] sm:$0xf]
      %v607 = vld [vmem:[%s598 + $0x20] sm:$0xf]
      %v608 = vld [vmem:[%s598 + $0x24] sm:$0xf]
      %v609 = vld [vmem:[%s598 + $0x28] sm:$0xf]
      %v610 = vld [vmem:[%s598 + $0x2c] sm:$0xf]
      %v611 = vld [vmem:[%s598 + $0x30] sm:$0xf]
      %v612 = vld [vmem:[%s598 + $0x34] sm:$0xf]
      %v613 = vld [vmem:[%s598 + $0x38] sm:$0xf]
      %v614 = vld [vmem:[%s598 + $0x3c] sm:$0xf]
      %v615 = vld [vmem:[%s598 + $0x40] sm:$0xf]
      %v616 = vld [vmem:[%s598 + $0x44] sm:$0xf]
      %v617 = vld [vmem:[%s598 + $0x48] sm:$0xf]
      %v618 = vld [vmem:[%s598 + $0x4c] sm:$0xf]
      %v619 = vld [vmem:[%s598 + $0x50] sm:$0xf]
      %v620 = vld [vmem:[%s598 + $0x54] sm:$0xf]
      %v621 = vld [vmem:[%s598 + $0x58] sm:$0xf]
      %v622 = vld [vmem:[%s598 + $0x5c] sm:$0xf]
      %v625 = vrot.slane %v302, 1
      %v626 = vrot.slane %v303, 1
      %v652 = vunpack.c.l.b16 %v599
      %v653 = vunpack.c.l.b16 %v600
      %v654 = vunpack.c.l.b16 %v601
      %v655 = vunpack.c.l.b16 %v602
      %v656 = vunpack.c.l.b16 %v603
      %v657 = vunpack.c.l.b16 %v604
      %v658 = vunpack.c.l.b16 %v605
      %v659 = vunpack.c.l.b16 %v606
      %v660 = vunpack.c.l.b16 %v607
      %v661 = vunpack.c.l.b16 %v608
      %v662 = vunpack.c.l.b16 %v609
      %v663 = vunpack.c.l.b16 %v610
      %v664 = vunpack.c.l.b16 %v611
      %v665 = vunpack.c.l.b16 %v612
      %v666 = vunpack.c.l.b16 %v613
      %v667 = vunpack.c.l.b16 %v614
      %v668 = vunpack.c.l.b16 %v615
      %v669 = vunpack.c.l.b16 %v616
      %v670 = vunpack.c.l.b16 %v617
      %v671 = vunpack.c.l.b16 %v618
      %v672 = vunpack.c.l.b16 %v619
      %v673 = vunpack.c.l.b16 %v620
      %v674 = vunpack.c.l.b16 %v621
      %v675 = vunpack.c.l.b16 %v622
      %v676 = vpack.c.b16 %v653, %v652
      %v677 = vpack.c.b16 %v655, %v654
      %v678 = vpack.c.b16 %v657, %v656
      %v679 = vpack.c.b16 %v659, %v658
      %v680 = vpack.c.b16 %v661, %v660
      %v681 = vpack.c.b16 %v663, %v662
      %v682 = vpack.c.b16 %v665, %v664
      %v683 = vpack.c.b16 %v667, %v666
      %v684 = vpack.c.b16 %v669, %v668
      %v685 = vpack.c.b16 %v671, %v670
      %v686 = vpack.c.b16 %v673, %v672
      %v687 = vpack.c.b16 %v675, %v674
      %v701 = vsel %vm440, %v626, 0
      %703 = vmatprep.subr.bf16.mxu0 0
      %704 = vmatpush1.bf16.msra.mxu0 %v676
      %705 = vmatprep.subr.bf16.mxu0 0
      %706 = vmatpush1.bf16.msra.mxu0 %v677
      %707 = vmatprep.subr.bf16.mxu0 0
      %708 = vmatpush1.bf16.msra.mxu0 %v678
      %709 = vmatprep.subr.bf16.mxu0 0
      %710 = vmatpush1.bf16.msra.mxu0 %v679
      %711 = vmatprep.subr.bf16.mxu0 0
      %712 = vmatpush1.bf16.msra.mxu0 %v680
      %713 = vmatprep.subr.bf16.mxu0 0
      %714 = vmatpush1.bf16.msra.mxu0 %v681
      %715 = vmatprep.subr.bf16.mxu0 0
      %716 = vmatpush1.bf16.msra.mxu0 %v682
      %717 = vmatprep.subr.bf16.mxu0 0
      %718 = vmatpush1.bf16.msra.mxu0 %v683
      %719 = vmatprep.subr.bf16.mxu0 0
      %720 = vmatpush1.bf16.msra.mxu0 %v684
      %721 = vmatprep.subr.bf16.mxu0 0
      %722 = vmatpush1.bf16.msra.mxu0 %v685
      %723 = vmatprep.subr.bf16.mxu0 0
      %724 = vmatpush1.bf16.msra.mxu0 %v686
      %725 = vmatprep.subr.bf16.mxu0 0
      %726 = vmatpush1.bf16.msra.mxu0 %v687
      %727 = vmatprep.subr.bf16.mxu0 0
      %728 = vmatpush1.bf16.msra.mxu0 0
      %729 = vmatprep.subr.bf16.mxu0 0
      %730 = vmatpush1.bf16.msra.mxu0 0
      %731 = vmatprep.subr.bf16.mxu0 0
      %732 = vmatpush1.bf16.msra.mxu0 0
      %733 = vmatprep.subr.bf16.mxu0 0
      %734 = vmatpush1.bf16.msra.mxu0 0
      %735 = vmatprep.mubr.bf16.mxu0 %v701
      %736 = vmatmul.mubr.bf16.gmra.mrb[0].mxu0 %v625
      %v737 = vpop.f32.mrb[0].mxu0
      %v738 = vadd.f32 0.0, %v737
      %v739 = vpop.f32.mrb[0].mxu0
      %v740 = vpop.f32.mrb[0].mxu0
      %v741 = vpop.f32.mrb[0].mxu0
      %742 = vdwg.mxu0
      %v743 = vadd.f32 %v593, %v738
      %v744 = vpack.c.bf16 %v300, %v300
      %v745 = vpack.c.bf16 %v301, %v301
      %v746 = vld [vmem:[%s3] sm:$0xf]
      %v747 = vld [vmem:[%s3 + $0x4] sm:$0xf]
      %v748 = vld [vmem:[%s3 + $0x8] sm:$0xf]
      %v749 = vld [vmem:[%s3 + $0xc] sm:$0xf]
      %v750 = vld [vmem:[%s3 + $0x10] sm:$0xf]
      %v751 = vld [vmem:[%s3 + $0x14] sm:$0xf]
      %v752 = vld [vmem:[%s3 + $0x18] sm:$0xf]
      %v753 = vld [vmem:[%s3 + $0x1c] sm:$0xf]
      %v754 = vld [vmem:[%s3 + $0x20] sm:$0xf]
      %v755 = vld [vmem:[%s3 + $0x24] sm:$0xf]
      %v756 = vld [vmem:[%s3 + $0x28] sm:$0xf]
      %v757 = vld [vmem:[%s3 + $0x2c] sm:$0xf]
      %v758 = vld [vmem:[%s3 + $0x30] sm:$0xf]
      %v759 = vld [vmem:[%s3 + $0x34] sm:$0xf]
      %v760 = vld [vmem:[%s3 + $0x38] sm:$0xf]
      %v761 = vld [vmem:[%s3 + $0x3c] sm:$0xf]
      %v762 = vld [vmem:[%s3 + $0x40] sm:$0xf]
      %v763 = vld [vmem:[%s3 + $0x44] sm:$0xf]
      %v764 = vld [vmem:[%s3 + $0x48] sm:$0xf]
      %v765 = vld [vmem:[%s3 + $0x4c] sm:$0xf]
      %v766 = vld [vmem:[%s3 + $0x50] sm:$0xf]
      %v767 = vld [vmem:[%s3 + $0x54] sm:$0xf]
      %v768 = vld [vmem:[%s3 + $0x58] sm:$0xf]
      %v769 = vld [vmem:[%s3 + $0x5c] sm:$0xf]
      %v794 = vunpack.c.l.b16 %v746
      %v795 = vunpack.c.l.b16 %v747
      %v796 = vunpack.c.l.b16 %v748
      %v797 = vunpack.c.l.b16 %v749
      %v798 = vunpack.c.l.b16 %v750
      %v799 = vunpack.c.l.b16 %v751
      %v800 = vunpack.c.l.b16 %v752
      %v801 = vunpack.c.l.b16 %v753
      %v802 = vunpack.c.l.b16 %v754
      %v803 = vunpack.c.l.b16 %v755
      %v804 = vunpack.c.l.b16 %v756
      %v805 = vunpack.c.l.b16 %v757
      %v806 = vunpack.c.l.b16 %v758
      %v807 = vunpack.c.l.b16 %v759
      %v808 = vunpack.c.l.b16 %v760
      %v809 = vunpack.c.l.b16 %v761
      %v810 = vunpack.c.l.b16 %v762
      %v811 = vunpack.c.l.b16 %v763
      %v812 = vunpack.c.l.b16 %v764
      %v813 = vunpack.c.l.b16 %v765
      %v814 = vunpack.c.l.b16 %v766
      %v815 = vunpack.c.l.b16 %v767
      %v816 = vunpack.c.l.b16 %v768
      %v817 = vunpack.c.l.b16 %v769
      %v818 = vpack.c.b16 %v795, %v794
      %v819 = vpack.c.b16 %v797, %v796
      %v820 = vpack.c.b16 %v799, %v798
      %v821 = vpack.c.b16 %v801, %v800
      %v822 = vpack.c.b16 %v803, %v802
      %v823 = vpack.c.b16 %v805, %v804
      %v824 = vpack.c.b16 %v807, %v806
      %v825 = vpack.c.b16 %v809, %v808
      %v826 = vpack.c.b16 %v811, %v810
      %v827 = vpack.c.b16 %v813, %v812
      %v828 = vpack.c.b16 %v815, %v814
      %v829 = vpack.c.b16 %v817, %v816
      %v843 = vsel %vm440, %v745, 0
      %845 = vmatprep.subr.bf16.mxu0 0
      %846 = vmatpush1.bf16.msra.mxu0 %v818
      %847 = vmatprep.subr.bf16.mxu0 0
      %848 = vmatpush1.bf16.msra.mxu0 %v819
      %849 = vmatprep.subr.bf16.mxu0 0
      %850 = vmatpush1.bf16.msra.mxu0 %v820
      %851 = vmatprep.subr.bf16.mxu0 0
      %852 = vmatpush1.bf16.msra.mxu0 %v821
      %853 = vmatprep.subr.bf16.mxu0 0
      %854 = vmatpush1.bf16.msra.mxu0 %v822
      %855 = vmatprep.subr.bf16.mxu0 0
      %856 = vmatpush1.bf16.msra.mxu0 %v823
      %857 = vmatprep.subr.bf16.mxu0 0
      %858 = vmatpush1.bf16.msra.mxu0 %v824
      %859 = vmatprep.subr.bf16.mxu0 0
      %860 = vmatpush1.bf16.msra.mxu0 %v825
      %861 = vmatprep.subr.bf16.mxu0 0
      %862 = vmatpush1.bf16.msra.mxu0 %v826
      %863 = vmatprep.subr.bf16.mxu0 0
      %864 = vmatpush1.bf16.msra.mxu0 %v827
      %865 = vmatprep.subr.bf16.mxu0 0
      %866 = vmatpush1.bf16.msra.mxu0 %v828
      %867 = vmatprep.subr.bf16.mxu0 0
      %868 = vmatpush1.bf16.msra.mxu0 %v829
      %869 = vmatprep.subr.bf16.mxu0 0
      %870 = vmatpush1.bf16.msra.mxu0 0
      %871 = vmatprep.subr.bf16.mxu0 0
      %872 = vmatpush1.bf16.msra.mxu0 0
      %873 = vmatprep.subr.bf16.mxu0 0
      %874 = vmatpush1.bf16.msra.mxu0 0
      %875 = vmatprep.subr.bf16.mxu0 0
      %876 = vmatpush1.bf16.msra.mxu0 0
      %877 = vmatprep.mubr.bf16.mxu0 %v843
      %878 = vmatmul.mubr.bf16.gmra.mrb[0].mxu0 %v744
      %v879 = vpop.f32.mrb[0].mxu0
      %v880 = vadd.f32 0.0, %v879
      %v881 = vpop.f32.mrb[0].mxu0
      %v882 = vpop.f32.mrb[0].mxu0
      %v883 = vpop.f32.mrb[0].mxu0
      %884 = vdwg.mxu0
      %v885 = vadd.f32 %v743, %v880
      %s886 = scalar_lea.vmem %s3, 96
      %v887 = vld [vmem:[%s886] sm:$0xf]
      %v888 = vld [vmem:[%s886 + $0x4] sm:$0xf]
      %v889 = vld [vmem:[%s886 + $0x8] sm:$0xf]
      %v890 = vld [vmem:[%s886 + $0xc] sm:$0xf]
      %v891 = vld [vmem:[%s886 + $0x10] sm:$0xf]
      %v892 = vld [vmem:[%s886 + $0x14] sm:$0xf]
      %v893 = vld [vmem:[%s886 + $0x18] sm:$0xf]
      %v894 = vld [vmem:[%s886 + $0x1c] sm:$0xf]
      %v895 = vld [vmem:[%s886 + $0x20] sm:$0xf]
      %v896 = vld [vmem:[%s886 + $0x24] sm:$0xf]
      %v897 = vld [vmem:[%s886 + $0x28] sm:$0xf]
      %v898 = vld [vmem:[%s886 + $0x2c] sm:$0xf]
      %v899 = vld [vmem:[%s886 + $0x30] sm:$0xf]
      %v900 = vld [vmem:[%s886 + $0x34] sm:$0xf]
      %v901 = vld [vmem:[%s886 + $0x38] sm:$0xf]
      %v902 = vld [vmem:[%s886 + $0x3c] sm:$0xf]
      %v903 = vld [vmem:[%s886 + $0x40] sm:$0xf]
      %v904 = vld [vmem:[%s886 + $0x44] sm:$0xf]
      %v905 = vld [vmem:[%s886 + $0x48] sm:$0xf]
      %v906 = vld [vmem:[%s886 + $0x4c] sm:$0xf]
      %v907 = vld [vmem:[%s886 + $0x50] sm:$0xf]
      %v908 = vld [vmem:[%s886 + $0x54] sm:$0xf]
      %v909 = vld [vmem:[%s886 + $0x58] sm:$0xf]
      %v910 = vld [vmem:[%s886 + $0x5c] sm:$0xf]
      %v912 = vshrl.u32 %v744, 16
      %v914 = vshll.u32 %v744, 16
      %v916 = vrot.slane %v914, 1
      %v917 = vor.u32 %v912, %v916
      %v918 = vshrl.u32 %v745, 16
      %v920 = vshll.u32 %v745, 16
      %v922 = vrot.slane %v920, 1
      %v923 = vor.u32 %v918, %v922
      %v949 = vunpack.c.l.b16 %v887
      %v950 = vunpack.c.l.b16 %v888
      %v951 = vunpack.c.l.b16 %v889
      %v952 = vunpack.c.l.b16 %v890
      %v953 = vunpack.c.l.b16 %v891
      %v954 = vunpack.c.l.b16 %v892
      %v955 = vunpack.c.l.b16 %v893
      %v956 = vunpack.c.l.b16 %v894
      %v957 = vunpack.c.l.b16 %v895
      %v958 = vunpack.c.l.b16 %v896
      %v959 = vunpack.c.l.b16 %v897
      %v960 = vunpack.c.l.b16 %v898
      %v961 = vunpack.c.l.b16 %v899
      %v962 = vunpack.c.l.b16 %v900
      %v963 = vunpack.c.l.b16 %v901
      %v964 = vunpack.c.l.b16 %v902
      %v965 = vunpack.c.l.b16 %v903
      %v966 = vunpack.c.l.b16 %v904
      %v967 = vunpack.c.l.b16 %v905
      %v968 = vunpack.c.l.b16 %v906
      %v969 = vunpack.c.l.b16 %v907
      %v970 = vunpack.c.l.b16 %v908
      %v971 = vunpack.c.l.b16 %v909
      %v972 = vunpack.c.l.b16 %v910
      %v973 = vpack.c.b16 %v950, %v949
      %v974 = vpack.c.b16 %v952, %v951
      %v975 = vpack.c.b16 %v954, %v953
      %v976 = vpack.c.b16 %v956, %v955
      %v977 = vpack.c.b16 %v958, %v957
      %v978 = vpack.c.b16 %v960, %v959
      %v979 = vpack.c.b16 %v962, %v961
      %v980 = vpack.c.b16 %v964, %v963
      %v981 = vpack.c.b16 %v966, %v965
      %v982 = vpack.c.b16 %v968, %v967
      %v983 = vpack.c.b16 %v970, %v969
      %v984 = vpack.c.b16 %v972, %v971
      %v998 = vsel %vm440, %v923, 0
      %1000 = vmatprep.subr.bf16.mxu0 0
      %1001 = vmatpush1.bf16.msra.mxu0 %v973
      %1002 = vmatprep.subr.bf16.mxu0 0
      %1003 = vmatpush1.bf16.msra.mxu0 %v974
      %1004 = vmatprep.subr.bf16.mxu0 0
      %1005 = vmatpush1.bf16.msra.mxu0 %v975
      %1006 = vmatprep.subr.bf16.mxu0 0
      %1007 = vmatpush1.bf16.msra.mxu0 %v976
      %1008 = vmatprep.subr.bf16.mxu0 0
      %1009 = vmatpush1.bf16.msra.mxu0 %v977
      %1010 = vmatprep.subr.bf16.mxu0 0
      %1011 = vmatpush1.bf16.msra.mxu0 %v978
      %1012 = vmatprep.subr.bf16.mxu0 0
      %1013 = vmatpush1.bf16.msra.mxu0 %v979
      %1014 = vmatprep.subr.bf16.mxu0 0
      %1015 = vmatpush1.bf16.msra.mxu0 %v980
      %1016 = vmatprep.subr.bf16.mxu0 0
      %1017 = vmatpush1.bf16.msra.mxu0 %v981
      %1018 = vmatprep.subr.bf16.mxu0 0
      %1019 = vmatpush1.bf16.msra.mxu0 %v982
      %1020 = vmatprep.subr.bf16.mxu0 0
      %1021 = vmatpush1.bf16.msra.mxu0 %v983
      %1022 = vmatprep.subr.bf16.mxu0 0
      %1023 = vmatpush1.bf16.msra.mxu0 %v984
      %1024 = vmatprep.subr.bf16.mxu0 0
      %1025 = vmatpush1.bf16.msra.mxu0 0
      %1026 = vmatprep.subr.bf16.mxu0 0
      %1027 = vmatpush1.bf16.msra.mxu0 0
      %1028 = vmatprep.subr.bf16.mxu0 0
      %1029 = vmatpush1.bf16.msra.mxu0 0
      %1030 = vmatprep.subr.bf16.mxu0 0
      %1031 = vmatpush1.bf16.msra.mxu0 0
      %1032 = vmatprep.mubr.bf16.mxu0 %v998
      %1033 = vmatmul.mubr.bf16.gmra.mrb[0].mxu0 %v917
      %v1034 = vpop.f32.mrb[0].mxu0
      %v1035 = vadd.f32 0.0, %v1034
      %v1036 = vpop.f32.mrb[0].mxu0
      %v1037 = vpop.f32.mrb[0].mxu0
      %v1038 = vpop.f32.mrb[0].mxu0
      %1039 = vdwg.mxu0
      %v1040 = vadd.f32 %v885, %v1035
      %s1041 = scalar_lea.vmem %s3, 192
      %v1042 = vld [vmem:[%s1041] sm:$0xf]
      %v1043 = vld [vmem:[%s1041 + $0x4] sm:$0xf]
      %v1044 = vld [vmem:[%s1041 + $0x8] sm:$0xf]
      %v1045 = vld [vmem:[%s1041 + $0xc] sm:$0xf]
      %v1046 = vld [vmem:[%s1041 + $0x10] sm:$0xf]
      %v1047 = vld [vmem:[%s1041 + $0x14] sm:$0xf]
      %v1048 = vld [vmem:[%s1041 + $0x18] sm:$0xf]
      %v1049 = vld [vmem:[%s1041 + $0x1c] sm:$0xf]
      %v1050 = vld [vmem:[%s1041 + $0x20] sm:$0xf]
      %v1051 = vld [vmem:[%s1041 + $0x24] sm:$0xf]
      %v1052 = vld [vmem:[%s1041 + $0x28] sm:$0xf]
      %v1053 = vld [vmem:[%s1041 + $0x2c] sm:$0xf]
      %v1054 = vld [vmem:[%s1041 + $0x30] sm:$0xf]
      %v1055 = vld [vmem:[%s1041 + $0x34] sm:$0xf]
      %v1056 = vld [vmem:[%s1041 + $0x38] sm:$0xf]
      %v1057 = vld [vmem:[%s1041 + $0x3c] sm:$0xf]
      %v1058 = vld [vmem:[%s1041 + $0x40] sm:$0xf]
      %v1059 = vld [vmem:[%s1041 + $0x44] sm:$0xf]
      %v1060 = vld [vmem:[%s1041 + $0x48] sm:$0xf]
      %v1061 = vld [vmem:[%s1041 + $0x4c] sm:$0xf]
      %v1062 = vld [vmem:[%s1041 + $0x50] sm:$0xf]
      %v1063 = vld [vmem:[%s1041 + $0x54] sm:$0xf]
      %v1064 = vld [vmem:[%s1041 + $0x58] sm:$0xf]
      %v1065 = vld [vmem:[%s1041 + $0x5c] sm:$0xf]
      %v1068 = vrot.slane %v744, 1
      %v1069 = vrot.slane %v745, 1
      %v1095 = vunpack.c.l.b16 %v1042
      %v1096 = vunpack.c.l.b16 %v1043
      %v1097 = vunpack.c.l.b16 %v1044
      %v1098 = vunpack.c.l.b16 %v1045
      %v1099 = vunpack.c.l.b16 %v1046
      %v1100 = vunpack.c.l.b16 %v1047
      %v1101 = vunpack.c.l.b16 %v1048
      %v1102 = vunpack.c.l.b16 %v1049
      %v1103 = vunpack.c.l.b16 %v1050
      %v1104 = vunpack.c.l.b16 %v1051
      %v1105 = vunpack.c.l.b16 %v1052
      %v1106 = vunpack.c.l.b16 %v1053
      %v1107 = vunpack.c.l.b16 %v1054
      %v1108 = vunpack.c.l.b16 %v1055
      %v1109 = vunpack.c.l.b16 %v1056
      %v1110 = vunpack.c.l.b16 %v1057
      %v1111 = vunpack.c.l.b16 %v1058
      %v1112 = vunpack.c.l.b16 %v1059
      %v1113 = vunpack.c.l.b16 %v1060
      %v1114 = vunpack.c.l.b16 %v1061
      %v1115 = vunpack.c.l.b16 %v1062
      %v1116 = vunpack.c.l.b16 %v1063
      %v1117 = vunpack.c.l.b16 %v1064
      %v1118 = vunpack.c.l.b16 %v1065
      %v1119 = vpack.c.b16 %v1096, %v1095
      %v1120 = vpack.c.b16 %v1098, %v1097
      %v1121 = vpack.c.b16 %v1100, %v1099
      %v1122 = vpack.c.b16 %v1102, %v1101
      %v1123 = vpack.c.b16 %v1104, %v1103
      %v1124 = vpack.c.b16 %v1106, %v1105
      %v1125 = vpack.c.b16 %v1108, %v1107
      %v1126 = vpack.c.b16 %v1110, %v1109
      %v1127 = vpack.c.b16 %v1112, %v1111
      %v1128 = vpack.c.b16 %v1114, %v1113
      %v1129 = vpack.c.b16 %v1116, %v1115
      %v1130 = vpack.c.b16 %v1118, %v1117
      %v1144 = vsel %vm440, %v1069, 0
      %1146 = vmatprep.subr.bf16.mxu0 0
      %1147 = vmatpush1.bf16.msra.mxu0 %v1119
      %1148 = vmatprep.subr.bf16.mxu0 0
      %1149 = vmatpush1.bf16.msra.mxu0 %v1120
      %1150 = vmatprep.subr.bf16.mxu0 0
      %1151 = vmatpush1.bf16.msra.mxu0 %v1121
      %1152 = vmatprep.subr.bf16.mxu0 0
      %1153 = vmatpush1.bf16.msra.mxu0 %v1122
      %1154 = vmatprep.subr.bf16.mxu0 0
      %1155 = vmatpush1.bf16.msra.mxu0 %v1123
      %1156 = vmatprep.subr.bf16.mxu0 0
      %1157 = vmatpush1.bf16.msra.mxu0 %v1124
      %1158 = vmatprep.subr.bf16.mxu0 0
      %1159 = vmatpush1.bf16.msra.mxu0 %v1125
      %1160 = vmatprep.subr.bf16.mxu0 0
      %1161 = vmatpush1.bf16.msra.mxu0 %v1126
      %1162 = vmatprep.subr.bf16.mxu0 0
      %1163 = vmatpush1.bf16.msra.mxu0 %v1127
      %1164 = vmatprep.subr.bf16.mxu0 0
      %1165 = vmatpush1.bf16.msra.mxu0 %v1128
      %1166 = vmatprep.subr.bf16.mxu0 0
      %1167 = vmatpush1.bf16.msra.mxu0 %v1129
      %1168 = vmatprep.subr.bf16.mxu0 0
      %1169 = vmatpush1.bf16.msra.mxu0 %v1130
      %1170 = vmatprep.subr.bf16.mxu0 0
      %1171 = vmatpush1.bf16.msra.mxu0 0
      %1172 = vmatprep.subr.bf16.mxu0 0
      %1173 = vmatpush1.bf16.msra.mxu0 0
      %1174 = vmatprep.subr.bf16.mxu0 0
      %1175 = vmatpush1.bf16.msra.mxu0 0
      %1176 = vmatprep.subr.bf16.mxu0 0
      %1177 = vmatpush1.bf16.msra.mxu0 0
      %1178 = vmatprep.mubr.bf16.mxu0 %v1144
      %1179 = vmatmul.mubr.bf16.gmra.mrb[0].mxu0 %v1068
      %v1180 = vpop.f32.mrb[0].mxu0
      %v1181 = vadd.f32 0.0, %v1180
      %v1182 = vpop.f32.mrb[0].mxu0
      %v1183 = vpop.f32.mrb[0].mxu0
      %v1184 = vpop.f32.mrb[0].mxu0
      %1185 = vdwg.mxu0
      %v1186 = vadd.f32 %v1040, %v1181
      %v1187 = vld [vmem:[%s4] sm:$0x1]
      %v1189 = vlaneseq
      %v1190 = vshrl.u32 %v1189, 7
      %v1191 = vsub.s32 0, %v1190
      %v1192 = vrot.slane %v1187, %v1191
      %v1194 = vadd.f32 %v1186, %v1192
      %v1195 = vmax.f32 %v1194, 0.0
      %v1196 = vpack.c.bf16 %v1195, %v1195
      %v1197 = vld [vmem:[%s5] sm:$0xf]
      %v1198 = vld [vmem:[%s5 + $0x4] sm:$0xf]
      %v1199 = vld [vmem:[%s5 + $0x8] sm:$0xf]
      %v1200 = vld [vmem:[%s5 + $0xc] sm:$0xf]
      %v1201 = vld [vmem:[%s5 + $0x10] sm:$0xf]
      %v1202 = vld [vmem:[%s5 + $0x14] sm:$0xf]
      %v1203 = vld [vmem:[%s5 + $0x18] sm:$0xf]
      %v1204 = vld [vmem:[%s5 + $0x1c] sm:$0xf]
      %v1205 = vld [vmem:[%s5 + $0x20] sm:$0xf]
      %v1206 = vld [vmem:[%s5 + $0x24] sm:$0xf]
      %v1207 = vld [vmem:[%s5 + $0x28] sm:$0xf]
      %v1208 = vld [vmem:[%s5 + $0x2c] sm:$0xf]
      %v1209 = vld [vmem:[%s5 + $0x30] sm:$0xf]
      %v1210 = vld [vmem:[%s5 + $0x34] sm:$0xf]
      %v1211 = vld [vmem:[%s5 + $0x38] sm:$0xf]
      %v1212 = vld [vmem:[%s5 + $0x3c] sm:$0xf]
      %v1213 = vld [vmem:[%s6] sm:$0x1]
      %v1215 = vlaneseq
      %v1216 = vshrl.u32 %v1215, 7
      %v1217 = vsub.s32 0, %v1216
      %v1218 = vrot.slane %v1213, %v1217
      %v1236 = vunpack.c.l.b16 %v1197
      %v1237 = vunpack.c.l.b16 %v1198
      %v1238 = vunpack.c.l.b16 %v1199
      %v1239 = vunpack.c.l.b16 %v1200
      %v1240 = vunpack.c.l.b16 %v1201
      %v1241 = vunpack.c.l.b16 %v1202
      %v1242 = vunpack.c.l.b16 %v1203
      %v1243 = vunpack.c.l.b16 %v1204
      %v1244 = vunpack.c.l.b16 %v1205
      %v1245 = vunpack.c.l.b16 %v1206
      %v1246 = vunpack.c.l.b16 %v1207
      %v1247 = vunpack.c.l.b16 %v1208
      %v1248 = vunpack.c.l.b16 %v1209
      %v1249 = vunpack.c.l.b16 %v1210
      %v1250 = vunpack.c.l.b16 %v1211
      %v1251 = vunpack.c.l.b16 %v1212
      %v1252 = vpack.c.b16 %v1237, %v1236
      %v1253 = vpack.c.b16 %v1239, %v1238
      %v1254 = vpack.c.b16 %v1241, %v1240
      %v1255 = vpack.c.b16 %v1243, %v1242
      %v1256 = vpack.c.b16 %v1245, %v1244
      %v1257 = vpack.c.b16 %v1247, %v1246
      %v1258 = vpack.c.b16 %v1249, %v1248
      %v1259 = vpack.c.b16 %v1251, %v1250
      %1268 = vmatprep.subr.bf16.mxu0 0
      %1269 = vmatpush1.bf16.msra.mxu0 %v1252
      %1270 = vmatprep.subr.bf16.mxu0 0
      %1271 = vmatpush1.bf16.msra.mxu0 %v1253
      %1272 = vmatprep.subr.bf16.mxu0 0
      %1273 = vmatpush1.bf16.msra.mxu0 %v1254
      %1274 = vmatprep.subr.bf16.mxu0 0
      %1275 = vmatpush1.bf16.msra.mxu0 %v1255
      %1276 = vmatprep.subr.bf16.mxu0 0
      %1277 = vmatpush1.bf16.msra.mxu0 %v1256
      %1278 = vmatprep.subr.bf16.mxu0 0
      %1279 = vmatpush1.bf16.msra.mxu0 %v1257
      %1280 = vmatprep.subr.bf16.mxu0 0
      %1281 = vmatpush1.bf16.msra.mxu0 %v1258
      %1282 = vmatprep.subr.bf16.mxu0 0
      %1283 = vmatpush1.bf16.msra.mxu0 %v1259
      %1284 = vmatprep.subr.bf16.mxu0 0
      %1285 = vmatpush1.bf16.msra.mxu0 0
      %1286 = vmatprep.subr.bf16.mxu0 0
      %1287 = vmatpush1.bf16.msra.mxu0 0
      %1288 = vmatprep.subr.bf16.mxu0 0
      %1289 = vmatpush1.bf16.msra.mxu0 0
      %1290 = vmatprep.subr.bf16.mxu0 0
      %1291 = vmatpush1.bf16.msra.mxu0 0
      %1292 = vmatprep.subr.bf16.mxu0 0
      %1293 = vmatpush1.bf16.msra.mxu0 0
      %1294 = vmatprep.subr.bf16.mxu0 0
      %1295 = vmatpush1.bf16.msra.mxu0 0
      %1296 = vmatprep.subr.bf16.mxu0 0
      %1297 = vmatpush1.bf16.msra.mxu0 0
      %1298 = vmatprep.subr.bf16.mxu0 0
      %1299 = vmatpush1.bf16.msra.mxu0 0
      %1300 = vmatprep.mubr.bf16.mxu0 0
      %1301 = vmatmul.mubr.bf16.gmra.mrb[0].mxu0 %v1196
      %v1302 = vpop.f32.mrb[0].mxu0
      %v1303 = vadd.f32 %v1218, %v1302
      %v1304 = vpop.f32.mrb[0].mxu0
      %v1305 = vpop.f32.mrb[0].mxu0
      %v1306 = vpop.f32.mrb[0].mxu0
      %1307 = vdwg.mxu0
      %vm1308 = vcmask 519168
      %1309 = vst.msk [vmem:[%s296] sm:$0xf] %vm1308, %v1303
      %p1310 = scmp.lt.s32.totalorder %s18, 1
      %s1311 = scalar_select %p1310, %s18, 1
      %s1312 = smul.addr %s1311, 4
      %s1313 = scalar_lea.vmem %s7, %s1312
      // Predicated region
      $region49: #{unet_bin_forward.11} parent=47 // pred_check
        %p1314 = pneg %p193
      $region50: #{unet_bin_forward.11} parent=47 // pred_check_branch
        %1316 = sbr.rel (%p1314) target = $region52
      $region51: #{unet_bin_forward.11} parent=47 // pred_region
        _
      $region52: #{unet_bin_forward.11} parent=47 // pred_fallthru
        _
    $region48: #{unet_bin_forward.11} parent=5 // pred_fallthru
      _
    %p1317 = scmp.le.s32.totalorder 2, %s13
    // Predicated region
    $region53: #{unet_bin_forward.11} parent=5 // pred_check
      %p1318 = pneg %p1317
    $region54: #{unet_bin_forward.11} parent=5 // pred_check_branch
      %1320 = sbr.rel (%p1318) target = $region56
    $region55: #{unet_bin_forward.11} parent=5 // pred_region
      %s1321 = ssub.s32 %s13, 2
      // Predicated region
      $region57: #{unet_bin_forward.11} parent=55 // pred_check
        %p1322 = pneg %p199
      $region58: #{unet_bin_forward.11} parent=55 // pred_check_branch
        %1324 = sbr.rel (%p1322) target = $region60
      $region59: #{unet_bin_forward.11} parent=55 // pred_region
        %p1325 = scmp.lt.s32.totalorder %s19, 1
        %s1326 = scalar_select %p1325, %s19, 1
        %s1327 = smul.addr %s1326, 4
        %s1328 = scalar_lea.vmem %s7, %s1327
      $region60: #{unet_bin_forward.11} parent=55 // pred_fallthru
        _
    $region56: #{unet_bin_forward.11} parent=5 // pred_fallthru
      _
  $region6: #{unet_bin_forward.11} parent=0 // loop_footer
    %s17 = sadd.s32 1, %s13
  $region7: #{unet_bin_forward.11} parent=0 // loop_footer_branch
    %12 = sbr.rel target = $region3
  $region8: #{unet_bin_forward.11} parent=0 // loop_exit
    _

// kernel: tile.108
$region0: #{tile.108}
  #allocation0 [shape = 's32[1]{0}', space=sflag, size = 0x4, scoped, tag = 'scoped memory for tile.108']
  %s0 = inlined_call_operand.vmem [shape: f32[2], index: 0, kind: input, shape index: {}]
  %s1 = inlined_call_operand.vmem [shape: f32[16,2], index: 1, kind: output, shape index: {}]
  // Predicated region
  $region2: #{tile.108} parent=0 // pred_check
    _
  $region3: #{tile.108} parent=0 // pred_check_branch
    %3 = sbr.rel (0) target = $region5
  $region4: #{tile.108} parent=0 // pred_region
    _
  $region5: #{tile.108} parent=0 // pred_fallthru
    _
  %v4 = vld [vmem:[%s0] ss:$0 sm:$0xff]
  %5 = vst [vmem:[%s1] sm:$0xff] %v4
  %s6 = scalar_lea.vmem %s1, 8
  %7 = vst [vmem:[%s6] sm:$0xff] %v4

// kernel: tile.109
$region0: #{tile.109}
  %s0 = inlined_call_operand.vmem [shape: f32[16,2], index: 0, kind: input, shape index: {}]
  %s1 = inlined_call_operand.vmem [shape: f32[1,32], index: 1, kind: output, shape index: {}]
  $region1: #{tile.109} parent=0
    #allocation0 [shape = 'u8[4096]{0}', space=vmem, size = 0x1000, scoped, tag = 'scoped mem for output reshape']
    %v2 = vld [vmem:[%s0] sm:$0x1]
    %vm3 = vcmask 15360
    %4 = vst.msk [vmem:[#allocation0] sm:$0x1] %vm3, %v2
    %s5 = scalar_lea.vmem %s0, 15
    %v6 = vld [vmem:[%s5] sm:$0x1]
    %7 = vrot.lane.b32.xlu0 %v6, 30
    %v8 = vpop.permute.xlu0 %7
    %vm9 = vcmask 261360
    %10 = vst.msk [vmem:[#allocation0] sm:$0x1] %vm9, %v8
    %s11 = scalar_lea.vmem %s0, 14
    %v12 = vld [vmem:[%s11] sm:$0x1]
    %13 = vrot.lane.b32.xlu0 %v12, 28
    %v14 = vpop.permute.xlu0 %13
    %vm15 = vcmask 244960
    %16 = vst.msk [vmem:[#allocation0] sm:$0x1] %vm15, %v14
    %s17 = scalar_lea.vmem %s0, 13
    %v18 = vld [vmem:[%s17] sm:$0x1]
    %19 = vrot.lane.b32.xlu0 %v18, 26
    %v20 = vpop.permute.xlu0 %19
    %vm21 = vcmask 228560
    %22 = vst.msk [vmem:[#allocation0] sm:$0x1] %vm21, %v20
    %s23 = scalar_lea.vmem %s0, 12
    %v24 = vld [vmem:[%s23] sm:$0x1]
    %25 = vrot.lane.b32.xlu0 %v24, 24
    %v26 = vpop.permute.xlu0 %25
    %vm27 = vcmask 212160
    %28 = vst.msk [vmem:[#allocation0] sm:$0x1] %vm27, %v26
    %s29 = scalar_lea.vmem %s0, 11
    %v30 = vld [vmem:[%s29] sm:$0x1]
    %31 = vrot.lane.b32.xlu0 %v30, 22
    %v32 = vpop.permute.xlu0 %31
    %vm33 = vcmask 195760
    %34 = vst.msk [vmem:[#allocation0] sm:$0x1] %vm33, %v32
    %s35 = scalar_lea.vmem %s0, 10
    %v36 = vld [vmem:[%s35] sm:$0x1]
    %37 = vrot.lane.b32.xlu0 %v36, 20
    %v38 = vpop.permute.xlu0 %37
    %vm39 = vcmask 179360
    %40 = vst.msk [vmem:[#allocation0] sm:$0x1] %vm39, %v38
    %s41 = scalar_lea.vmem %s0, 9
    %v42 = vld [vmem:[%s41] sm:$0x1]
    %43 = vrot.lane.b32.xlu0 %v42, 18
    %v44 = vpop.permute.xlu0 %43
    %vm45 = vcmask 162960
    %46 = vst.msk [vmem:[#allocation0] sm:$0x1] %vm45, %v44
    %s47 = scalar_lea.vmem %s0, 8
    %v48 = vld [vmem:[%s47] sm:$0x1]
    %49 = vrot.lane.b32.xlu0 %v48, 16
    %v50 = vpop.permute.xlu0 %49
    %vm51 = vcmask 146560
    %52 = vst.msk [vmem:[#allocation0] sm:$0x1] %vm51, %v50
    %s53 = scalar_lea.vmem %s0, 7
    %v54 = vld [vmem:[%s53] sm:$0x1]
    %55 = vrot.lane.b32.xlu0 %v54, 14
    %v56 = vpop.permute.xlu0 %55
    %vm57 = vcmask 130160
    %58 = vst.msk [vmem:[#allocation0] sm:$0x1] %vm57, %v56
    %s59 = scalar_lea.vmem %s0, 6
    %v60 = vld [vmem:[%s59] sm:$0x1]
    %61 = vrot.lane.b32.xlu0 %v60, 12
    %v62 = vpop.permute.xlu0 %61
    %vm63 = vcmask 113760
    %64 = vst.msk [vmem:[#allocation0] sm:$0x1] %vm63, %v62
    %s65 = scalar_lea.vmem %s0, 5
    %v66 = vld [vmem:[%s65] sm:$0x1]
    %67 = vrot.lane.b32.xlu0 %v66, 10
    %v68 = vpop.permute.xlu0 %67
    %vm69 = vcmask 97360
    %70 = vst.msk [vmem:[#allocation0] sm:$0x1] %vm69, %v68
    %s71 = scalar_lea.vmem %s0, 4
    %v72 = vld [vmem:[%s71] sm:$0x1]
    %73 = vrot.lane.b32.xlu0 %v72, 8
    %v74 = vpop.permute.xlu0 %73
    %vm75 = vcmask 80960
    %76 = vst.msk [vmem:[#allocation0] sm:$0x1] %vm75, %v74
    %s77 = scalar_lea.vmem %s0, 3
    %v78 = vld [vmem:[%s77] sm:$0x1]
    %79 = vrot.lane.b32.xlu0 %v78, 6
    %v80 = vpop.permute.xlu0 %79
    %vm81 = vcmask 64560
    %82 = vst.msk [vmem:[#allocation0] sm:$0x1] %vm81, %v80
    %s83 = scalar_lea.vmem %s0, 2
    %v84 = vld [vmem:[%s83] sm:$0x1]
    %85 = vrot.lane.b32.xlu0 %v84, 4
    %v86 = vpop.permute.xlu0 %85
    %vm87 = vcmask 48160
    %88 = vst.msk [vmem:[#allocation0] sm:$0x1] %vm87, %v86
    %s89 = scalar_lea.vmem %s0, 1
    %v90 = vld [vmem:[%s89] sm:$0x1]
    %91 = vrot.lane.b32.xlu0 %v90, 2
    %v92 = vpop.permute.xlu0 %91
    %vm93 = vcmask 31760
    %94 = vst.msk [vmem:[#allocation0] sm:$0x1] %vm93, %v92
    %s96 = sshllo.u32 0, 1
    %v98 = vld [vmem:[#allocation0] sm:%s96]
    %s99 = sshllo.u32 0, 1
    %100 = vst [vmem:[%s1] sm:%s99] %v98

// kernel: unet_bin_forward.13
$region0: #{unet_bin_forward.13}
  #allocation0 [shape = 'u32[]', space=smem, size = 0x4, offset = 0x4, fixed_abs, tag = 'smem constant byte address 0x4 - core index']
  #allocation1 [shape = 'u32[144,128]{1,0:T(1,128)}', space=vmem, size = 0x12000, scoped, tag = 'internal scratch']
  %s0 = inlined_call_operand.vmem [shape: f32[2,18,144], index: 0, kind: input, shape index: {}]
  %s1 = inlined_call_operand.vmem [shape: f32[2,18,144], index: 1, kind: input, shape index: {}]
  %s2 = inlined_call_operand.vmem [shape: bf16[3,144,128], index: 2, kind: input, shape index: {}]
  %s3 = inlined_call_operand.vmem [shape: bf16[3,144,128], index: 3, kind: input, shape index: {}]
  %s4 = inlined_call_operand.vmem [shape: f32[1,128], index: 4, kind: input, shape index: {}]
  %s5 = inlined_call_operand.vmem [shape: bf16[128,32], index: 5, kind: input, shape index: {}]
  %s6 = inlined_call_operand.vmem [shape: f32[1,32], index: 6, kind: input, shape index: {}]
  %s7 = inlined_call_operand.vmem [shape: f32[2,16,32], index: 7, kind: output, shape index: {}]
  %s8 = sld [smem:[#allocation0]]
  $region61: #{unet_bin_forward.13} parent=0
    _
  %s10 = ssub.s32 1, %s8
  %s11 = scalar_select 0, %s10, %s8
  loop: start=0, step=1, limit=4
  $region2: #{unet_bin_forward.13} parent=0 // loop_pre_header
    _
  $region3: #{unet_bin_forward.13} parent=0 // loop_header
    %s13 = sphi 0, %s17
    %p14 = scmp.ge.s32.totalorder %s13, 4
    %s23 = sphi 0, %s25
    %s26 = sphi 0, %s23
    %s27 = sphi 0, %s26
    %s43 = sphi 0, %s27
    %s49 = sphi 0, %s51
    %s52 = sphi 0, %s49
    %s53 = sphi 0, %s52
    %s69 = sphi 0, %s53
    %s73 = sphi 0, %s73
    %s75 = sphi 0, %s73
    %s76 = sphi 0, %s75
    %s90 = sphi 0, %s76
    %s94 = sphi 0, %s94
    %s96 = sphi 0, %s94
    %s97 = sphi 0, %s96
    %s111 = sphi 0, %s97
    %s115 = sphi 0, %s115
    %s117 = sphi 0, %s115
    %s118 = sphi 0, %s117
    %s132 = sphi 0, %s118
    %s136 = sphi 0, %s136
    %s138 = sphi 0, %s136
    %s139 = sphi 0, %s138
    %s153 = sphi 0, %s139
    %s157 = sphi 0, %s157
    %s159 = sphi 0, %s157
    %s160 = sphi 0, %s159
    %s174 = sphi 0, %s160
    %s180 = sphi 0, %s182
    %s183 = sphi 0, %s180
    %s184 = sphi 0, %s183
    %s200 = sphi 0, %s184
  $region4: #{unet_bin_forward.13} parent=0 // loop_header_branch
    %16 = sbr.rel (%p14) target = $region8
  $region5: #{unet_bin_forward.13} parent=0 // loop_body
    %s18 = ssub.s32 %s13, 1
    %s19 = ssub.s32 %s13, 2
    %s20 = sadd.s32 %s13, 1
    %s21 = ssub.s32 %s13, %s20
    %p22 = scmp.eq.s32.totalorder %s21, 0
    %s24 = sadd.s32 %s23, 1
    %s25 = scalar_select %p22, %s23, %s24
    %p28 = pneg %p22
    %p29 = scmp.eq.s32.totalorder %s13, 1
    %p30 = por %p28, %p29
    %p31 = scmp.ne.s32.totalorder %s23, %s26
    %p32 = scmp.eq.s32.totalorder %s13, 0
    %p33 = por %p31, %p32
    %p34 = scmp.ne.s32.totalorder %s23, %s26
    %p35 = scmp.eq.s32.totalorder %s18, 1
    %p36 = por %p34, %p35
    %p37 = scmp.ne.s32.totalorder %s26, %s27
    %p38 = scmp.eq.s32.totalorder %s18, 0
    %p39 = por %p37, %p38
    %p40 = scmp.ne.s32.totalorder %s26, %s27
    %p41 = scmp.eq.s32.totalorder %s19, 1
    %p42 = por %p40, %p41
    %p44 = scmp.ne.s32.totalorder %s27, %s43
    %p45 = scmp.eq.s32.totalorder %s19, 0
    %p46 = por %p44, %p45
    %s47 = ssub.s32 %s13, %s20
    %p48 = scmp.eq.s32.totalorder %s47, 0
    %s50 = sadd.s32 %s49, 1
    %s51 = scalar_select %p48, %s49, %s50
    %p54 = pneg %p48
    %p55 = scmp.eq.s32.totalorder %s13, 1
    %p56 = por %p54, %p55
    %p57 = scmp.ne.s32.totalorder %s49, %s52
    %p58 = scmp.eq.s32.totalorder %s13, 0
    %p59 = por %p57, %p58
    %p60 = scmp.ne.s32.totalorder %s49, %s52
    %p61 = scmp.eq.s32.totalorder %s18, 1
    %p62 = por %p60, %p61
    %p63 = scmp.ne.s32.totalorder %s52, %s53
    %p64 = scmp.eq.s32.totalorder %s18, 0
    %p65 = por %p63, %p64
    %p66 = scmp.ne.s32.totalorder %s52, %s53
    %p67 = scmp.eq.s32.totalorder %s19, 1
    %p68 = por %p66, %p67
    %p70 = scmp.ne.s32.totalorder %s53, %s69
    %p71 = scmp.eq.s32.totalorder %s19, 0
    %p72 = por %p70, %p71
    %s74 = sadd.s32 %s73, 1
    %p77 = scmp.eq.s32.totalorder %s13, 1
    %p78 = scmp.ne.s32.totalorder %s73, %s75
    %p79 = scmp.eq.s32.totalorder %s13, 0
    %p80 = por %p78, %p79
    %p81 = scmp.ne.s32.totalorder %s73, %s75
    %p82 = scmp.eq.s32.totalorder %s18, 1
    %p83 = por %p81, %p82
    %p84 = scmp.ne.s32.totalorder %s75, %s76
    %p85 = scmp.eq.s32.totalorder %s18, 0
    %p86 = por %p84, %p85
    %p87 = scmp.ne.s32.totalorder %s75, %s76
    %p88 = scmp.eq.s32.totalorder %s19, 1
    %p89 = por %p87, %p88
    %p91 = scmp.ne.s32.totalorder %s76, %s90
    %p92 = scmp.eq.s32.totalorder %s19, 0
    %p93 = por %p91, %p92
    %s95 = sadd.s32 %s94, 1
    %p98 = scmp.eq.s32.totalorder %s13, 1
    %p99 = scmp.ne.s32.totalorder %s94, %s96
    %p100 = scmp.eq.s32.totalorder %s13, 0
    %p101 = por %p99, %p100
    %p102 = scmp.ne.s32.totalorder %s94, %s96
    %p103 = scmp.eq.s32.totalorder %s18, 1
    %p104 = por %p102, %p103
    %p105 = scmp.ne.s32.totalorder %s96, %s97
    %p106 = scmp.eq.s32.totalorder %s18, 0
    %p107 = por %p105, %p106
    %p108 = scmp.ne.s32.totalorder %s96, %s97
    %p109 = scmp.eq.s32.totalorder %s19, 1
    %p110 = por %p108, %p109
    %p112 = scmp.ne.s32.totalorder %s97, %s111
    %p113 = scmp.eq.s32.totalorder %s19, 0
    %p114 = por %p112, %p113
    %s116 = sadd.s32 %s115, 1
    %p119 = scmp.eq.s32.totalorder %s13, 1
    %p120 = scmp.ne.s32.totalorder %s115, %s117
    %p121 = scmp.eq.s32.totalorder %s13, 0
    %p122 = por %p120, %p121
    %p123 = scmp.ne.s32.totalorder %s115, %s117
    %p124 = scmp.eq.s32.totalorder %s18, 1
    %p125 = por %p123, %p124
    %p126 = scmp.ne.s32.totalorder %s117, %s118
    %p127 = scmp.eq.s32.totalorder %s18, 0
    %p128 = por %p126, %p127
    %p129 = scmp.ne.s32.totalorder %s117, %s118
    %p130 = scmp.eq.s32.totalorder %s19, 1
    %p131 = por %p129, %p130
    %p133 = scmp.ne.s32.totalorder %s118, %s132
    %p134 = scmp.eq.s32.totalorder %s19, 0
    %p135 = por %p133, %p134
    %s137 = sadd.s32 %s136, 1
    %p140 = scmp.eq.s32.totalorder %s13, 1
    %p141 = scmp.ne.s32.totalorder %s136, %s138
    %p142 = scmp.eq.s32.totalorder %s13, 0
    %p143 = por %p141, %p142
    %p144 = scmp.ne.s32.totalorder %s136, %s138
    %p145 = scmp.eq.s32.totalorder %s18, 1
    %p146 = por %p144, %p145
    %p147 = scmp.ne.s32.totalorder %s138, %s139
    %p148 = scmp.eq.s32.totalorder %s18, 0
    %p149 = por %p147, %p148
    %p150 = scmp.ne.s32.totalorder %s138, %s139
    %p151 = scmp.eq.s32.totalorder %s19, 1
    %p152 = por %p150, %p151
    %p154 = scmp.ne.s32.totalorder %s139, %s153
    %p155 = scmp.eq.s32.totalorder %s19, 0
    %p156 = por %p154, %p155
    %s158 = sadd.s32 %s157, 1
    %p161 = scmp.eq.s32.totalorder %s13, 1
    %p162 = scmp.ne.s32.totalorder %s157, %s159
    %p163 = scmp.eq.s32.totalorder %s13, 0
    %p164 = por %p162, %p163
    %p165 = scmp.ne.s32.totalorder %s157, %s159
    %p166 = scmp.eq.s32.totalorder %s18, 1
    %p167 = por %p165, %p166
    %p168 = scmp.ne.s32.totalorder %s159, %s160
    %p169 = scmp.eq.s32.totalorder %s18, 0
    %p170 = por %p168, %p169
    %p171 = scmp.ne.s32.totalorder %s159, %s160
    %p172 = scmp.eq.s32.totalorder %s19, 1
    %p173 = por %p171, %p172
    %p175 = scmp.ne.s32.totalorder %s160, %s174
    %p176 = scmp.eq.s32.totalorder %s19, 0
    %p177 = por %p175, %p176
    %s178 = ssub.s32 %s13, %s20
    %p179 = scmp.eq.s32.totalorder %s178, 0
    %s181 = sadd.s32 %s180, 1
    %s182 = scalar_select %p179, %s180, %s181
    %p185 = pneg %p179
    %p186 = scmp.eq.s32.totalorder %s13, 1
    %p187 = por %p185, %p186
    %p188 = scmp.ne.s32.totalorder %s180, %s183
    %p189 = scmp.eq.s32.totalorder %s13, 0
    %p190 = por %p188, %p189
    %p191 = scmp.ne.s32.totalorder %s180, %s183
    %p192 = scmp.eq.s32.totalorder %s18, 1
    %p193 = por %p191, %p192
    %p194 = scmp.ne.s32.totalorder %s183, %s184
    %p195 = scmp.eq.s32.totalorder %s18, 0
    %p196 = por %p194, %p195
    %p197 = scmp.ne.s32.totalorder %s183, %s184
    %p198 = scmp.eq.s32.totalorder %s19, 1
    %p199 = por %p197, %p198
    %p201 = scmp.ne.s32.totalorder %s184, %s200
    %p202 = scmp.eq.s32.totalorder %s19, 0
    %p203 = por %p201, %p202
    %p204 = scmp.le.s32.totalorder 1, %s13
    %p205 = scmp.lt.s32.totalorder %s13, 3
    %p206 = pnand %p204, %p205
    %p207 = pneg %p206
    // Predicated region
    $region9: #{unet_bin_forward.13} parent=5 // pred_check
      _
    $region10: #{unet_bin_forward.13} parent=5 // pred_check_branch
      %209 = sbr.rel (%p206) target = $region12
    $region11: #{unet_bin_forward.13} parent=5 // pred_region
      %s210 = ssub.s32 %s13, 1
      // Predicated region
      $region13: #{unet_bin_forward.13} parent=11 // pred_check
        %p211 = pneg %p86
      $region14: #{unet_bin_forward.13} parent=11 // pred_check_branch
        %213 = sbr.rel (%p211) target = $region16
      $region15: #{unet_bin_forward.13} parent=11 // pred_region
        _
      $region16: #{unet_bin_forward.13} parent=11 // pred_fallthru
        _
      // Predicated region
      $region17: #{unet_bin_forward.13} parent=11 // pred_check
        %p214 = pneg %p107
      $region18: #{unet_bin_forward.13} parent=11 // pred_check_branch
        %216 = sbr.rel (%p214) target = $region20
      $region19: #{unet_bin_forward.13} parent=11 // pred_region
        _
      $region20: #{unet_bin_forward.13} parent=11 // pred_fallthru
        _
      // Predicated region
      $region21: #{unet_bin_forward.13} parent=11 // pred_check
        %p217 = pneg %p128
      $region22: #{unet_bin_forward.13} parent=11 // pred_check_branch
        %219 = sbr.rel (%p217) target = $region24
      $region23: #{unet_bin_forward.13} parent=11 // pred_region
        _
      $region24: #{unet_bin_forward.13} parent=11 // pred_fallthru
        _
      // Predicated region
      $region25: #{unet_bin_forward.13} parent=11 // pred_check
        %p220 = pneg %p149
      $region26: #{unet_bin_forward.13} parent=11 // pred_check_branch
        %222 = sbr.rel (%p220) target = $region28
      $region27: #{unet_bin_forward.13} parent=11 // pred_region
        _
      $region28: #{unet_bin_forward.13} parent=11 // pred_fallthru
        _
      // Predicated region
      $region29: #{unet_bin_forward.13} parent=11 // pred_check
        %p223 = pneg %p170
      $region30: #{unet_bin_forward.13} parent=11 // pred_check_branch
        %225 = sbr.rel (%p223) target = $region32
      $region31: #{unet_bin_forward.13} parent=11 // pred_region
        _
      $region32: #{unet_bin_forward.13} parent=11 // pred_fallthru
        _
    $region12: #{unet_bin_forward.13} parent=5 // pred_fallthru
      _
    %p226 = scmp.lt.s32.totalorder %s13, 2
    // Predicated region
    $region33: #{unet_bin_forward.13} parent=5 // pred_check
      %p227 = pneg %p226
    $region34: #{unet_bin_forward.13} parent=5 // pred_check_branch
      %229 = sbr.rel (%p227) target = $region36
    $region35: #{unet_bin_forward.13} parent=5 // pred_region
      // Predicated region
      $region37: #{unet_bin_forward.13} parent=35 // pred_check
        %p230 = pneg %p33
      $region38: #{unet_bin_forward.13} parent=35 // pred_check_branch
        %232 = sbr.rel (%p230) target = $region40
      $region39: #{unet_bin_forward.13} parent=35 // pred_region
        %p233 = scmp.lt.s32.totalorder %s13, 1
        %s234 = scalar_select %p233, %s13, 1
        %s235 = smul.addr %s234, 6
        %s236 = smul.addr %s235, 8
        %s237 = scalar_lea.vmem %s0, %s236
      $region40: #{unet_bin_forward.13} parent=35 // pred_fallthru
        _
      // Predicated region
      $region41: #{unet_bin_forward.13} parent=35 // pred_check
        %p238 = pneg %p59
      $region42: #{unet_bin_forward.13} parent=35 // pred_check_branch
        %240 = sbr.rel (%p238) target = $region44
      $region43: #{unet_bin_forward.13} parent=35 // pred_region
        %p241 = scmp.lt.s32.totalorder %s13, 1
        %s242 = scalar_select %p241, %s13, 1
        %s243 = smul.addr %s242, 6
        %s244 = smul.addr %s243, 8
        %s245 = scalar_lea.vmem %s1, %s244
      $region44: #{unet_bin_forward.13} parent=35 // pred_fallthru
        _
    $region36: #{unet_bin_forward.13} parent=5 // pred_fallthru
      _
    %p246 = scmp.le.s32.totalorder 1, %s13
    %p247 = scmp.lt.s32.totalorder %s13, 3
    %p248 = pnand %p246, %p247
    %p249 = pneg %p248
    // Predicated region
    $region45: #{unet_bin_forward.13} parent=5 // pred_check
      _
    $region46: #{unet_bin_forward.13} parent=5 // pred_check_branch
      %251 = sbr.rel (%p248) target = $region48
    $region47: #{unet_bin_forward.13} parent=5 // pred_region
      %s252 = ssub.s32 %s13, 1
      %p253 = scmp.lt.s32.totalorder %s18, 1
      %s254 = scalar_select %p253, %s18, 1
      %s255 = smul.addr %s254, 6
      %s256 = smul.addr %s255, 8
      %s257 = scalar_lea.vmem %s0, %s256
      %p258 = pneg %p39
      %p259 = pneg %p36
      %p260 = scmp.lt.s32.totalorder %s18, 1
      %s261 = scalar_select %p260, %s18, 1
      %s262 = smul.addr %s261, 6
      %s263 = smul.addr %s262, 8
      %s264 = scalar_lea.vmem %s1, %s263
      %p265 = pneg %p65
      %p266 = pneg %p62
      %p267 = pneg %p86
      %p268 = pneg %p83
      %p269 = pneg %p107
      %p270 = pneg %p104
      %p271 = pneg %p128
      %p272 = pneg %p125
      %p273 = pneg %p149
      %p274 = pneg %p146
      %p275 = pneg %p170
      %p276 = pneg %p167
      %p277 = pneg %p196
      %p278 = pneg %p193
      %p279 = scmp.lt.s32.totalorder %s18, 1
      %s280 = scalar_select %p279, %s18, 1
      %s281 = smul.addr %s280, 2
      %s282 = smul.addr %s281, 8
      %s283 = scalar_lea.vmem %s7, %s282
      %p284 = scmp.lt.s32.totalorder %s18, 1
      %s285 = scalar_select %p284, %s18, 1
      %s286 = smul.addr %s285, 6
      %s287 = smul.addr %s286, 8
      %s288 = scalar_lea.vmem %s0, %s287
      %p289 = scmp.lt.s32.totalorder %s18, 1
      %s290 = scalar_select %p289, %s18, 1
      %s291 = smul.addr %s290, 6
      %s292 = smul.addr %s291, 8
      %s293 = scalar_lea.vmem %s1, %s292
      %p294 = scmp.lt.s32.totalorder %s18, 1
      %s295 = scalar_select %p294, %s18, 1
      %s296 = smul.addr %s295, 2
      %s297 = smul.addr %s296, 8
      %s298 = scalar_lea.vmem %s7, %s297
      %v300 = vld [vmem:[%s288] sm:$0xff]
      %v301 = vld [vmem:[%s288 + $0x8] sm:$0xff]
      %v302 = vld [vmem:[%s288 + $0x10] sm:$0xff]
      %v303 = vld [vmem:[%s288 + $0x18] sm:$0xff]
      %v304 = vld [vmem:[%s288 + $0x20] sm:$0x3]
      %v305 = vld [vmem:[%s288 + $0x28] sm:$0x3]
      %v306 = vld [vmem:[%s293] sm:$0xff]
      %v307 = vld [vmem:[%s293 + $0x8] sm:$0xff]
      %v308 = vld [vmem:[%s293 + $0x10] sm:$0xff]
      %v309 = vld [vmem:[%s293 + $0x18] sm:$0xff]
      %v310 = vld [vmem:[%s293 + $0x20] sm:$0x3]
      %v311 = vld [vmem:[%s293 + $0x28] sm:$0x3]
      %v312 = vpack.c.bf16 %v302, %v300
      %v313 = vpack.c.bf16 %v303, %v301
      %v314 = vld [vmem:[%s2] sm:$0xf]
      %v315 = vld [vmem:[%s2 + $0x4] sm:$0xf]
      %v316 = vld [vmem:[%s2 + $0x8] sm:$0xf]
      %v317 = vld [vmem:[%s2 + $0xc] sm:$0xf]
      %v318 = vld [vmem:[%s2 + $0x10] sm:$0xf]
      %v319 = vld [vmem:[%s2 + $0x14] sm:$0xf]
      %v320 = vld [vmem:[%s2 + $0x18] sm:$0xf]
      %v321 = vld [vmem:[%s2 + $0x1c] sm:$0xf]
      %v322 = vld [vmem:[%s2 + $0x20] sm:$0xf]
      %v323 = vld [vmem:[%s2 + $0x24] sm:$0xf]
      %v324 = vld [vmem:[%s2 + $0x28] sm:$0xf]
      %v325 = vld [vmem:[%s2 + $0x2c] sm:$0xf]
      %v326 = vld [vmem:[%s2 + $0x30] sm:$0xf]
      %v327 = vld [vmem:[%s2 + $0x34] sm:$0xf]
      %v328 = vld [vmem:[%s2 + $0x38] sm:$0xf]
      %v329 = vld [vmem:[%s2 + $0x3c] sm:$0xf]
      %v330 = vld [vmem:[%s2 + $0x40] sm:$0xf]
      %v331 = vld [vmem:[%s2 + $0x44] sm:$0xf]
      %v332 = vpack.c.bf16 %v304, %v304
      %v333 = vpack.c.bf16 %v305, %v305
      %s334 = scalar_lea.vmem %s2, 72
      %v335 = vld [vmem:[%s334] sm:$0xf]
      %v336 = vld [vmem:[%s334 + $0x4] sm:$0xf]
      %v337 = vld [vmem:[%s334 + $0x8] sm:$0xf]
      %v338 = vld [vmem:[%s334 + $0xc] sm:$0xf]
      %v339 = vld [vmem:[%s334 + $0x10] sm:$0xf]
      %v340 = vld [vmem:[%s334 + $0x14] sm:$0xf]
      %v341 = vld [vmem:[%s334 + $0x18] sm:$0xf]
      %v342 = vld [vmem:[%s334 + $0x1c] sm:$0xf]
      %v343 = vld [vmem:[%s334 + $0x20] sm:$0xf]
      %v344 = vld [vmem:[%s334 + $0x24] sm:$0xf]
      %v345 = vld [vmem:[%s334 + $0x28] sm:$0xf]
      %v346 = vld [vmem:[%s334 + $0x2c] sm:$0xf]
      %v347 = vld [vmem:[%s334 + $0x30] sm:$0xf]
      %v348 = vld [vmem:[%s334 + $0x34] sm:$0xf]
      %v349 = vld [vmem:[%s334 + $0x38] sm:$0xf]
      %v350 = vld [vmem:[%s334 + $0x3c] sm:$0xf]
      %v351 = vld [vmem:[%s334 + $0x40] sm:$0xf]
      %v352 = vld [vmem:[%s334 + $0x44] sm:$0xf]
      %vm353 = vsmask.f32 7424
      %v355 = vshrl.u32 %v312, 16
      %v357 = vshll.u32 %v312, 16
      %v359 = vrot.slane %v357, 1
      %v360 = vor.u32 %v355, %v359
      %v362 = vshll.u32 %v332, 16
      %v364 = vrot.slane %v362, 1
      %v365 = vsel %vm353, %v360, %v364
      %v367 = vshrl.u32 %v313, 16
      %v369 = vshll.u32 %v313, 16
      %v371 = vrot.slane %v369, 1
      %v372 = vor.u32 %v367, %v371
      %v374 = vshll.u32 %v333, 16
      %v376 = vrot.slane %v374, 1
      %v377 = vsel %vm353, %v372, %v376
      %v397 = vunpack.c.l.b16 %v335
      %v398 = vunpack.c.l.b16 %v336
      %v399 = vunpack.c.l.b16 %v337
      %v400 = vunpack.c.l.b16 %v338
      %v401 = vunpack.c.l.b16 %v339
      %v402 = vunpack.c.l.b16 %v340
      %v403 = vunpack.c.l.b16 %v341
      %v404 = vunpack.c.l.b16 %v342
      %v405 = vunpack.c.l.b16 %v343
      %v406 = vunpack.c.l.b16 %v344
      %v407 = vunpack.c.l.b16 %v345
      %v408 = vunpack.c.l.b16 %v346
      %v409 = vunpack.c.l.b16 %v347
      %v410 = vunpack.c.l.b16 %v348
      %v411 = vunpack.c.l.b16 %v349
      %v412 = vunpack.c.l.b16 %v350
      %v413 = vunpack.c.l.b16 %v351
      %v414 = vunpack.c.l.b16 %v352
      %v415 = vpack.c.b16 %v398, %v397
      %v416 = vpack.c.b16 %v400, %v399
      %v417 = vpack.c.b16 %v402, %v401
      %v418 = vpack.c.b16 %v404, %v403
      %v419 = vpack.c.b16 %v406, %v405
      %v420 = vpack.c.b16 %v408, %v407
      %v421 = vpack.c.b16 %v410, %v409
      %v422 = vpack.c.b16 %v412, %v411
      %v423 = vpack.c.b16 %v414, %v413
      %vm433 = vcmask 130048
      %v435 = vsel %vm433, %v377, 0
      %437 = vmatprep.subr.bf16.mxu0 0
      %438 = vmatpush1.bf16.msra.mxu0 %v415
      %439 = vmatprep.subr.bf16.mxu0 0
      %440 = vmatpush1.bf16.msra.mxu0 %v416
      %441 = vmatprep.subr.bf16.mxu0 0
      %442 = vmatpush1.bf16.msra.mxu0 %v417
      %443 = vmatprep.subr.bf16.mxu0 0
      %444 = vmatpush1.bf16.msra.mxu0 %v418
      %445 = vmatprep.subr.bf16.mxu0 0
      %446 = vmatpush1.bf16.msra.mxu0 %v419
      %447 = vmatprep.subr.bf16.mxu0 0
      %448 = vmatpush1.bf16.msra.mxu0 %v420
      %449 = vmatprep.subr.bf16.mxu0 0
      %450 = vmatpush1.bf16.msra.mxu0 %v421
      %451 = vmatprep.subr.bf16.mxu0 0
      %452 = vmatpush1.bf16.msra.mxu0 %v422
      %453 = vmatprep.subr.bf16.mxu0 0
      %454 = vmatpush1.bf16.msra.mxu0 %v423
      %455 = vmatprep.subr.bf16.mxu0 0
      %456 = vmatpush1.bf16.msra.mxu0 0
      %457 = vmatprep.subr.bf16.mxu0 0
      %458 = vmatpush1.bf16.msra.mxu0 0
      %459 = vmatprep.subr.bf16.mxu0 0
      %460 = vmatpush1.bf16.msra.mxu0 0
      %461 = vmatprep.subr.bf16.mxu0 0
      %462 = vmatpush1.bf16.msra.mxu0 0
      %463 = vmatprep.subr.bf16.mxu0 0
      %464 = vmatpush1.bf16.msra.mxu0 0
      %465 = vmatprep.subr.bf16.mxu0 0
      %466 = vmatpush1.bf16.msra.mxu0 0
      %467 = vmatprep.subr.bf16.mxu0 0
      %468 = vmatpush1.bf16.msra.mxu0 0
      %469 = vmatprep.mubr.bf16.mxu0 %v435
      %470 = vmatmul.mubr.bf16.gmra.mrb[0].mxu0 %v365
      %v471 = vpop.f32.mrb[0].mxu0
      %v472 = vadd.f32 0.0, %v471
      %v473 = vpop.f32.mrb[0].mxu0
      %v474 = vpop.f32.mrb[0].mxu0
      %v475 = vadd.f32 0.0, %v474
      %v476 = vpop.f32.mrb[0].mxu0
      %477 = vdwg.mxu0
      %v496 = vunpack.c.l.b16 %v314
      %v497 = vunpack.c.l.b16 %v315
      %v498 = vunpack.c.l.b16 %v316
      %v499 = vunpack.c.l.b16 %v317
      %v500 = vunpack.c.l.b16 %v318
      %v501 = vunpack.c.l.b16 %v319
      %v502 = vunpack.c.l.b16 %v320
      %v503 = vunpack.c.l.b16 %v321
      %v504 = vunpack.c.l.b16 %v322
      %v505 = vunpack.c.l.b16 %v323
      %v506 = vunpack.c.l.b16 %v324
      %v507 = vunpack.c.l.b16 %v325
      %v508 = vunpack.c.l.b16 %v326
      %v509 = vunpack.c.l.b16 %v327
      %v510 = vunpack.c.l.b16 %v328
      %v511 = vunpack.c.l.b16 %v329
      %v512 = vunpack.c.l.b16 %v330
      %v513 = vunpack.c.l.b16 %v331
      %v514 = vpack.c.b16 %v497, %v496
      %v515 = vpack.c.b16 %v499, %v498
      %v516 = vpack.c.b16 %v501, %v500
      %v517 = vpack.c.b16 %v503, %v502
      %v518 = vpack.c.b16 %v505, %v504
      %v519 = vpack.c.b16 %v507, %v506
      %v520 = vpack.c.b16 %v509, %v508
      %v521 = vpack.c.b16 %v511, %v510
      %v522 = vpack.c.b16 %v513, %v512
      %v532 = vsel %vm433, %v313, 0
      %534 = vmatprep.subr.bf16.mxu0 0
      %535 = vmatpush1.bf16.msra.mxu0 %v514
      %536 = vmatprep.subr.bf16.mxu0 0
      %537 = vmatpush1.bf16.msra.mxu0 %v515
      %538 = vmatprep.subr.bf16.mxu0 0
      %539 = vmatpush1.bf16.msra.mxu0 %v516
      %540 = vmatprep.subr.bf16.mxu0 0
      %541 = vmatpush1.bf16.msra.mxu0 %v517
      %542 = vmatprep.subr.bf16.mxu0 0
      %543 = vmatpush1.bf16.msra.mxu0 %v518
      %544 = vmatprep.subr.bf16.mxu0 0
      %545 = vmatpush1.bf16.msra.mxu0 %v519
      %546 = vmatprep.subr.bf16.mxu0 0
      %547 = vmatpush1.bf16.msra.mxu0 %v520
      %548 = vmatprep.subr.bf16.mxu0 0
      %549 = vmatpush1.bf16.msra.mxu0 %v521
      %550 = vmatprep.subr.bf16.mxu0 0
      %551 = vmatpush1.bf16.msra.mxu0 %v522
      %552 = vmatprep.subr.bf16.mxu0 0
      %553 = vmatpush1.bf16.msra.mxu0 0
      %554 = vmatprep.subr.bf16.mxu0 0
      %555 = vmatpush1.bf16.msra.mxu0 0
      %556 = vmatprep.subr.bf16.mxu0 0
      %557 = vmatpush1.bf16.msra.mxu0 0
      %558 = vmatprep.subr.bf16.mxu0 0
      %559 = vmatpush1.bf16.msra.mxu0 0
      %560 = vmatprep.subr.bf16.mxu0 0
      %561 = vmatpush1.bf16.msra.mxu0 0
      %562 = vmatprep.subr.bf16.mxu0 0
      %563 = vmatpush1.bf16.msra.mxu0 0
      %564 = vmatprep.subr.bf16.mxu0 0
      %565 = vmatpush1.bf16.msra.mxu0 0
      %566 = vmatprep.mubr.bf16.mxu0 %v532
      %567 = vmatmul.mubr.bf16.gmra.mrb[0].mxu0 %v312
      %v568 = vpop.f32.mrb[0].mxu0
      %v569 = vadd.f32 %v472, %v568
      %v570 = vpop.f32.mrb[0].mxu0
      %v571 = vpop.f32.mrb[0].mxu0
      %v572 = vadd.f32 %v475, %v571
      %v573 = vpop.f32.mrb[0].mxu0
      %574 = vdwg.mxu0
      %s575 = scalar_lea.vmem %s2, 144
      %v576 = vld [vmem:[%s575] sm:$0xf]
      %v577 = vld [vmem:[%s575 + $0x4] sm:$0xf]
      %v578 = vld [vmem:[%s575 + $0x8] sm:$0xf]
      %v579 = vld [vmem:[%s575 + $0xc] sm:$0xf]
      %v580 = vld [vmem:[%s575 + $0x10] sm:$0xf]
      %v581 = vld [vmem:[%s575 + $0x14] sm:$0xf]
      %v582 = vld [vmem:[%s575 + $0x18] sm:$0xf]
      %v583 = vld [vmem:[%s575 + $0x1c] sm:$0xf]
      %v584 = vld [vmem:[%s575 + $0x20] sm:$0xf]
      %v585 = vld [vmem:[%s575 + $0x24] sm:$0xf]
      %v586 = vld [vmem:[%s575 + $0x28] sm:$0xf]
      %v587 = vld [vmem:[%s575 + $0x2c] sm:$0xf]
      %v588 = vld [vmem:[%s575 + $0x30] sm:$0xf]
      %v589 = vld [vmem:[%s575 + $0x34] sm:$0xf]
      %v590 = vld [vmem:[%s575 + $0x38] sm:$0xf]
      %v591 = vld [vmem:[%s575 + $0x3c] sm:$0xf]
      %v592 = vld [vmem:[%s575 + $0x40] sm:$0xf]
      %v593 = vld [vmem:[%s575 + $0x44] sm:$0xf]
      %vm598 = vcmask 1046528
      %v599 = vrot.slane %v312, 1
      %v600 = vrot.slane %v332, 1
      %v601 = vsel %vm598, %v599, %v600
      %v602 = vrot.slane %v313, 1
      %v603 = vrot.slane %v333, 1
      %v604 = vsel %vm598, %v602, %v603
      %v624 = vunpack.c.l.b16 %v576
      %v625 = vunpack.c.l.b16 %v577
      %v626 = vunpack.c.l.b16 %v578
      %v627 = vunpack.c.l.b16 %v579
      %v628 = vunpack.c.l.b16 %v580
      %v629 = vunpack.c.l.b16 %v581
      %v630 = vunpack.c.l.b16 %v582
      %v631 = vunpack.c.l.b16 %v583
      %v632 = vunpack.c.l.b16 %v584
      %v633 = vunpack.c.l.b16 %v585
      %v634 = vunpack.c.l.b16 %v586
      %v635 = vunpack.c.l.b16 %v587
      %v636 = vunpack.c.l.b16 %v588
      %v637 = vunpack.c.l.b16 %v589
      %v638 = vunpack.c.l.b16 %v590
      %v639 = vunpack.c.l.b16 %v591
      %v640 = vunpack.c.l.b16 %v592
      %v641 = vunpack.c.l.b16 %v593
      %v642 = vpack.c.b16 %v625, %v624
      %v643 = vpack.c.b16 %v627, %v626
      %v644 = vpack.c.b16 %v629, %v628
      %v645 = vpack.c.b16 %v631, %v630
      %v646 = vpack.c.b16 %v633, %v632
      %v647 = vpack.c.b16 %v635, %v634
      %v648 = vpack.c.b16 %v637, %v636
      %v649 = vpack.c.b16 %v639, %v638
      %v650 = vpack.c.b16 %v641, %v640
      %v661 = vsel %vm433, %v604, 0
      %663 = vmatprep.subr.bf16.mxu0 0
      %664 = vmatpush1.bf16.msra.mxu0 %v642
      %665 = vmatprep.subr.bf16.mxu0 0
      %666 = vmatpush1.bf16.msra.mxu0 %v643
      %667 = vmatprep.subr.bf16.mxu0 0
      %668 = vmatpush1.bf16.msra.mxu0 %v644
      %669 = vmatprep.subr.bf16.mxu0 0
      %670 = vmatpush1.bf16.msra.mxu0 %v645
      %671 = vmatprep.subr.bf16.mxu0 0
      %672 = vmatpush1.bf16.msra.mxu0 %v646
      %673 = vmatprep.subr.bf16.mxu0 0
      %674 = vmatpush1.bf16.msra.mxu0 %v647
      %675 = vmatprep.subr.bf16.mxu0 0
      %676 = vmatpush1.bf16.msra.mxu0 %v648
      %677 = vmatprep.subr.bf16.mxu0 0
      %678 = vmatpush1.bf16.msra.mxu0 %v649
      %679 = vmatprep.subr.bf16.mxu0 0
      %680 = vmatpush1.bf16.msra.mxu0 %v650
      %681 = vmatprep.subr.bf16.mxu0 0
      %682 = vmatpush1.bf16.msra.mxu0 0
      %683 = vmatprep.subr.bf16.mxu0 0
      %684 = vmatpush1.bf16.msra.mxu0 0
      %685 = vmatprep.subr.bf16.mxu0 0
      %686 = vmatpush1.bf16.msra.mxu0 0
      %687 = vmatprep.subr.bf16.mxu0 0
      %688 = vmatpush1.bf16.msra.mxu0 0
      %689 = vmatprep.subr.bf16.mxu0 0
      %690 = vmatpush1.bf16.msra.mxu0 0
      %691 = vmatprep.subr.bf16.mxu0 0
      %692 = vmatpush1.bf16.msra.mxu0 0
      %693 = vmatprep.subr.bf16.mxu0 0
      %694 = vmatpush1.bf16.msra.mxu0 0
      %695 = vmatprep.mubr.bf16.mxu0 %v661
      %696 = vmatmul.mubr.bf16.gmra.mrb[0].mxu0 %v601
      %v697 = vpop.f32.mrb[0].mxu0
      %v698 = vadd.f32 0.0, %v697
      %v699 = vpop.f32.mrb[0].mxu0
      %v700 = vpop.f32.mrb[0].mxu0
      %v701 = vadd.f32 0.0, %v700
      %v702 = vpop.f32.mrb[0].mxu0
      %703 = vdwg.mxu0
      %v704 = vadd.f32 %v569, %v698
      %v705 = vadd.f32 %v572, %v701
      %v706 = vpack.c.bf16 %v308, %v306
      %v707 = vpack.c.bf16 %v309, %v307
      %v708 = vld [vmem:[%s3] sm:$0xf]
      %v709 = vld [vmem:[%s3 + $0x4] sm:$0xf]
      %v710 = vld [vmem:[%s3 + $0x8] sm:$0xf]
      %v711 = vld [vmem:[%s3 + $0xc] sm:$0xf]
      %v712 = vld [vmem:[%s3 + $0x10] sm:$0xf]
      %v713 = vld [vmem:[%s3 + $0x14] sm:$0xf]
      %v714 = vld [vmem:[%s3 + $0x18] sm:$0xf]
      %v715 = vld [vmem:[%s3 + $0x1c] sm:$0xf]
      %v716 = vld [vmem:[%s3 + $0x20] sm:$0xf]
      %v717 = vld [vmem:[%s3 + $0x24] sm:$0xf]
      %v718 = vld [vmem:[%s3 + $0x28] sm:$0xf]
      %v719 = vld [vmem:[%s3 + $0x2c] sm:$0xf]
      %v720 = vld [vmem:[%s3 + $0x30] sm:$0xf]
      %v721 = vld [vmem:[%s3 + $0x34] sm:$0xf]
      %v722 = vld [vmem:[%s3 + $0x38] sm:$0xf]
      %v723 = vld [vmem:[%s3 + $0x3c] sm:$0xf]
      %v724 = vld [vmem:[%s3 + $0x40] sm:$0xf]
      %v725 = vld [vmem:[%s3 + $0x44] sm:$0xf]
      %v744 = vunpack.c.l.b16 %v708
      %v745 = vunpack.c.l.b16 %v709
      %v746 = vunpack.c.l.b16 %v710
      %v747 = vunpack.c.l.b16 %v711
      %v748 = vunpack.c.l.b16 %v712
      %v749 = vunpack.c.l.b16 %v713
      %v750 = vunpack.c.l.b16 %v714
      %v751 = vunpack.c.l.b16 %v715
      %v752 = vunpack.c.l.b16 %v716
      %v753 = vunpack.c.l.b16 %v717
      %v754 = vunpack.c.l.b16 %v718
      %v755 = vunpack.c.l.b16 %v719
      %v756 = vunpack.c.l.b16 %v720
      %v757 = vunpack.c.l.b16 %v721
      %v758 = vunpack.c.l.b16 %v722
      %v759 = vunpack.c.l.b16 %v723
      %v760 = vunpack.c.l.b16 %v724
      %v761 = vunpack.c.l.b16 %v725
      %v762 = vpack.c.b16 %v745, %v744
      %v763 = vpack.c.b16 %v747, %v746
      %v764 = vpack.c.b16 %v749, %v748
      %v765 = vpack.c.b16 %v751, %v750
      %v766 = vpack.c.b16 %v753, %v752
      %v767 = vpack.c.b16 %v755, %v754
      %v768 = vpack.c.b16 %v757, %v756
      %v769 = vpack.c.b16 %v759, %v758
      %v770 = vpack.c.b16 %v761, %v760
      %v781 = vsel %vm433, %v707, 0
      %783 = vmatprep.subr.bf16.mxu0 0
      %784 = vmatpush1.bf16.msra.mxu0 %v762
      %785 = vmatprep.subr.bf16.mxu0 0
      %786 = vmatpush1.bf16.msra.mxu0 %v763
      %787 = vmatprep.subr.bf16.mxu0 0
      %788 = vmatpush1.bf16.msra.mxu0 %v764
      %789 = vmatprep.subr.bf16.mxu0 0
      %790 = vmatpush1.bf16.msra.mxu0 %v765
      %791 = vmatprep.subr.bf16.mxu0 0
      %792 = vmatpush1.bf16.msra.mxu0 %v766
      %793 = vmatprep.subr.bf16.mxu0 0
      %794 = vmatpush1.bf16.msra.mxu0 %v767
      %795 = vmatprep.subr.bf16.mxu0 0
      %796 = vmatpush1.bf16.msra.mxu0 %v768
      %797 = vmatprep.subr.bf16.mxu0 0
      %798 = vmatpush1.bf16.msra.mxu0 %v769
      %799 = vmatprep.subr.bf16.mxu0 0
      %800 = vmatpush1.bf16.msra.mxu0 %v770
      %801 = vmatprep.subr.bf16.mxu0 0
      %802 = vmatpush1.bf16.msra.mxu0 0
      %803 = vmatprep.subr.bf16.mxu0 0
      %804 = vmatpush1.bf16.msra.mxu0 0
      %805 = vmatprep.subr.bf16.mxu0 0
      %806 = vmatpush1.bf16.msra.mxu0 0
      %807 = vmatprep.subr.bf16.mxu0 0
      %808 = vmatpush1.bf16.msra.mxu0 0
      %809 = vmatprep.subr.bf16.mxu0 0
      %810 = vmatpush1.bf16.msra.mxu0 0
      %811 = vmatprep.subr.bf16.mxu0 0
      %812 = vmatpush1.bf16.msra.mxu0 0
      %813 = vmatprep.subr.bf16.mxu0 0
      %814 = vmatpush1.bf16.msra.mxu0 0
      %815 = vmatprep.mubr.bf16.mxu0 %v781
      %816 = vmatmul.mubr.bf16.gmra.mrb[0].mxu0 %v706
      %v817 = vpop.f32.mrb[0].mxu0
      %v818 = vadd.f32 0.0, %v817
      %v819 = vpop.f32.mrb[0].mxu0
      %v820 = vpop.f32.mrb[0].mxu0
      %v821 = vadd.f32 0.0, %v820
      %v822 = vpop.f32.mrb[0].mxu0
      %823 = vdwg.mxu0
      %v824 = vadd.f32 %v704, %v818
      %v825 = vadd.f32 %v705, %v821
      %v826 = vpack.c.bf16 %v310, %v310
      %v827 = vpack.c.bf16 %v311, %v311
      %s828 = scalar_lea.vmem %s3, 72
      %v829 = vld [vmem:[%s828] sm:$0xf]
      %v830 = vld [vmem:[%s828 + $0x4] sm:$0xf]
      %v831 = vld [vmem:[%s828 + $0x8] sm:$0xf]
      %v832 = vld [vmem:[%s828 + $0xc] sm:$0xf]
      %v833 = vld [vmem:[%s828 + $0x10] sm:$0xf]
      %v834 = vld [vmem:[%s828 + $0x14] sm:$0xf]
      %v835 = vld [vmem:[%s828 + $0x18] sm:$0xf]
      %v836 = vld [vmem:[%s828 + $0x1c] sm:$0xf]
      %v837 = vld [vmem:[%s828 + $0x20] sm:$0xf]
      %v838 = vld [vmem:[%s828 + $0x24] sm:$0xf]
      %v839 = vld [vmem:[%s828 + $0x28] sm:$0xf]
      %v840 = vld [vmem:[%s828 + $0x2c] sm:$0xf]
      %v841 = vld [vmem:[%s828 + $0x30] sm:$0xf]
      %v842 = vld [vmem:[%s828 + $0x34] sm:$0xf]
      %v843 = vld [vmem:[%s828 + $0x38] sm:$0xf]
      %v844 = vld [vmem:[%s828 + $0x3c] sm:$0xf]
      %v845 = vld [vmem:[%s828 + $0x40] sm:$0xf]
      %v846 = vld [vmem:[%s828 + $0x44] sm:$0xf]
      %v848 = vshrl.u32 %v706, 16
      %v850 = vshll.u32 %v706, 16
      %v852 = vrot.slane %v850, 1
      %v853 = vor.u32 %v848, %v852
      %v855 = vshll.u32 %v826, 16
      %v857 = vrot.slane %v855, 1
      %v858 = vsel %vm353, %v853, %v857
      %v859 = vshrl.u32 %v707, 16
      %v861 = vshll.u32 %v707, 16
      %v863 = vrot.slane %v861, 1
      %v864 = vor.u32 %v859, %v863
      %v866 = vshll.u32 %v827, 16
      %v868 = vrot.slane %v866, 1
      %v869 = vsel %vm353, %v864, %v868
      %v889 = vunpack.c.l.b16 %v829
      %v890 = vunpack.c.l.b16 %v830
      %v891 = vunpack.c.l.b16 %v831
      %v892 = vunpack.c.l.b16 %v832
      %v893 = vunpack.c.l.b16 %v833
      %v894 = vunpack.c.l.b16 %v834
      %v895 = vunpack.c.l.b16 %v835
      %v896 = vunpack.c.l.b16 %v836
      %v897 = vunpack.c.l.b16 %v837
      %v898 = vunpack.c.l.b16 %v838
      %v899 = vunpack.c.l.b16 %v839
      %v900 = vunpack.c.l.b16 %v840
      %v901 = vunpack.c.l.b16 %v841
      %v902 = vunpack.c.l.b16 %v842
      %v903 = vunpack.c.l.b16 %v843
      %v904 = vunpack.c.l.b16 %v844
      %v905 = vunpack.c.l.b16 %v845
      %v906 = vunpack.c.l.b16 %v846
      %v907 = vpack.c.b16 %v890, %v889
      %v908 = vpack.c.b16 %v892, %v891
      %v909 = vpack.c.b16 %v894, %v893
      %v910 = vpack.c.b16 %v896, %v895
      %v911 = vpack.c.b16 %v898, %v897
      %v912 = vpack.c.b16 %v900, %v899
      %v913 = vpack.c.b16 %v902, %v901
      %v914 = vpack.c.b16 %v904, %v903
      %v915 = vpack.c.b16 %v906, %v905
      %v926 = vsel %vm433, %v869, 0
      %928 = vmatprep.subr.bf16.mxu0 0
      %929 = vmatpush1.bf16.msra.mxu0 %v907
      %930 = vmatprep.subr.bf16.mxu0 0
      %931 = vmatpush1.bf16.msra.mxu0 %v908
      %932 = vmatprep.subr.bf16.mxu0 0
      %933 = vmatpush1.bf16.msra.mxu0 %v909
      %934 = vmatprep.subr.bf16.mxu0 0
      %935 = vmatpush1.bf16.msra.mxu0 %v910
      %936 = vmatprep.subr.bf16.mxu0 0
      %937 = vmatpush1.bf16.msra.mxu0 %v911
      %938 = vmatprep.subr.bf16.mxu0 0
      %939 = vmatpush1.bf16.msra.mxu0 %v912
      %940 = vmatprep.subr.bf16.mxu0 0
      %941 = vmatpush1.bf16.msra.mxu0 %v913
      %942 = vmatprep.subr.bf16.mxu0 0
      %943 = vmatpush1.bf16.msra.mxu0 %v914
      %944 = vmatprep.subr.bf16.mxu0 0
      %945 = vmatpush1.bf16.msra.mxu0 %v915
      %946 = vmatprep.subr.bf16.mxu0 0
      %947 = vmatpush1.bf16.msra.mxu0 0
      %948 = vmatprep.subr.bf16.mxu0 0
      %949 = vmatpush1.bf16.msra.mxu0 0
      %950 = vmatprep.subr.bf16.mxu0 0
      %951 = vmatpush1.bf16.msra.mxu0 0
      %952 = vmatprep.subr.bf16.mxu0 0
      %953 = vmatpush1.bf16.msra.mxu0 0
      %954 = vmatprep.subr.bf16.mxu0 0
      %955 = vmatpush1.bf16.msra.mxu0 0
      %956 = vmatprep.subr.bf16.mxu0 0
      %957 = vmatpush1.bf16.msra.mxu0 0
      %958 = vmatprep.subr.bf16.mxu0 0
      %959 = vmatpush1.bf16.msra.mxu0 0
      %960 = vmatprep.mubr.bf16.mxu0 %v926
      %961 = vmatmul.mubr.bf16.gmra.mrb[0].mxu0 %v858
      %v962 = vpop.f32.mrb[0].mxu0
      %v963 = vadd.f32 0.0, %v962
      %v964 = vpop.f32.mrb[0].mxu0
      %v965 = vpop.f32.mrb[0].mxu0
      %v966 = vadd.f32 0.0, %v965
      %v967 = vpop.f32.mrb[0].mxu0
      %968 = vdwg.mxu0
      %v969 = vadd.f32 %v824, %v963
      %v970 = vadd.f32 %v825, %v966
      %s971 = scalar_lea.vmem %s3, 144
      %v972 = vld [vmem:[%s971] sm:$0xf]
      %v973 = vld [vmem:[%s971 + $0x4] sm:$0xf]
      %v974 = vld [vmem:[%s971 + $0x8] sm:$0xf]
      %v975 = vld [vmem:[%s971 + $0xc] sm:$0xf]
      %v976 = vld [vmem:[%s971 + $0x10] sm:$0xf]
      %v977 = vld [vmem:[%s971 + $0x14] sm:$0xf]
      %v978 = vld [vmem:[%s971 + $0x18] sm:$0xf]
      %v979 = vld [vmem:[%s971 + $0x1c] sm:$0xf]
      %v980 = vld [vmem:[%s971 + $0x20] sm:$0xf]
      %v981 = vld [vmem:[%s971 + $0x24] sm:$0xf]
      %v982 = vld [vmem:[%s971 + $0x28] sm:$0xf]
      %v983 = vld [vmem:[%s971 + $0x2c] sm:$0xf]
      %v984 = vld [vmem:[%s971 + $0x30] sm:$0xf]
      %v985 = vld [vmem:[%s971 + $0x34] sm:$0xf]
      %v986 = vld [vmem:[%s971 + $0x38] sm:$0xf]
      %v987 = vld [vmem:[%s971 + $0x3c] sm:$0xf]
      %v988 = vld [vmem:[%s971 + $0x40] sm:$0xf]
      %v989 = vld [vmem:[%s971 + $0x44] sm:$0xf]
      %v994 = vrot.slane %v706, 1
      %v995 = vrot.slane %v826, 1
      %v996 = vsel %vm598, %v994, %v995
      %v997 = vrot.slane %v707, 1
      %v998 = vrot.slane %v827, 1
      %v999 = vsel %vm598, %v997, %v998
      %v1019 = vunpack.c.l.b16 %v972
      %v1020 = vunpack.c.l.b16 %v973
      %v1021 = vunpack.c.l.b16 %v974
      %v1022 = vunpack.c.l.b16 %v975
      %v1023 = vunpack.c.l.b16 %v976
      %v1024 = vunpack.c.l.b16 %v977
      %v1025 = vunpack.c.l.b16 %v978
      %v1026 = vunpack.c.l.b16 %v979
      %v1027 = vunpack.c.l.b16 %v980
      %v1028 = vunpack.c.l.b16 %v981
      %v1029 = vunpack.c.l.b16 %v982
      %v1030 = vunpack.c.l.b16 %v983
      %v1031 = vunpack.c.l.b16 %v984
      %v1032 = vunpack.c.l.b16 %v985
      %v1033 = vunpack.c.l.b16 %v986
      %v1034 = vunpack.c.l.b16 %v987
      %v1035 = vunpack.c.l.b16 %v988
      %v1036 = vunpack.c.l.b16 %v989
      %v1037 = vpack.c.b16 %v1020, %v1019
      %v1038 = vpack.c.b16 %v1022, %v1021
      %v1039 = vpack.c.b16 %v1024, %v1023
      %v1040 = vpack.c.b16 %v1026, %v1025
      %v1041 = vpack.c.b16 %v1028, %v1027
      %v1042 = vpack.c.b16 %v1030, %v1029
      %v1043 = vpack.c.b16 %v1032, %v1031
      %v1044 = vpack.c.b16 %v1034, %v1033
      %v1045 = vpack.c.b16 %v1036, %v1035
      %v1056 = vsel %vm433, %v999, 0
      %1058 = vmatprep.subr.bf16.mxu0 0
      %1059 = vmatpush1.bf16.msra.mxu0 %v1037
      %1060 = vmatprep.subr.bf16.mxu0 0
      %1061 = vmatpush1.bf16.msra.mxu0 %v1038
      %1062 = vmatprep.subr.bf16.mxu0 0
      %1063 = vmatpush1.bf16.msra.mxu0 %v1039
      %1064 = vmatprep.subr.bf16.mxu0 0
      %1065 = vmatpush1.bf16.msra.mxu0 %v1040
      %1066 = vmatprep.subr.bf16.mxu0 0
      %1067 = vmatpush1.bf16.msra.mxu0 %v1041
      %1068 = vmatprep.subr.bf16.mxu0 0
      %1069 = vmatpush1.bf16.msra.mxu0 %v1042
      %1070 = vmatprep.subr.bf16.mxu0 0
      %1071 = vmatpush1.bf16.msra.mxu0 %v1043
      %1072 = vmatprep.subr.bf16.mxu0 0
      %1073 = vmatpush1.bf16.msra.mxu0 %v1044
      %1074 = vmatprep.subr.bf16.mxu0 0
      %1075 = vmatpush1.bf16.msra.mxu0 %v1045
      %1076 = vmatprep.subr.bf16.mxu0 0
      %1077 = vmatpush1.bf16.msra.mxu0 0
      %1078 = vmatprep.subr.bf16.mxu0 0
      %1079 = vmatpush1.bf16.msra.mxu0 0
      %1080 = vmatprep.subr.bf16.mxu0 0
      %1081 = vmatpush1.bf16.msra.mxu0 0
      %1082 = vmatprep.subr.bf16.mxu0 0
      %1083 = vmatpush1.bf16.msra.mxu0 0
      %1084 = vmatprep.subr.bf16.mxu0 0
      %1085 = vmatpush1.bf16.msra.mxu0 0
      %1086 = vmatprep.subr.bf16.mxu0 0
      %1087 = vmatpush1.bf16.msra.mxu0 0
      %1088 = vmatprep.subr.bf16.mxu0 0
      %1089 = vmatpush1.bf16.msra.mxu0 0
      %1090 = vmatprep.mubr.bf16.mxu0 %v1056
      %1091 = vmatmul.mubr.bf16.gmra.mrb[0].mxu0 %v996
      %v1092 = vpop.f32.mrb[0].mxu0
      %v1093 = vadd.f32 0.0, %v1092
      %v1094 = vpop.f32.mrb[0].mxu0
      %v1095 = vpop.f32.mrb[0].mxu0
      %v1096 = vadd.f32 0.0, %v1095
      %v1097 = vpop.f32.mrb[0].mxu0
      %1098 = vdwg.mxu0
      %v1099 = vadd.f32 %v969, %v1093
      %v1100 = vadd.f32 %v970, %v1096
      %v1101 = vld [vmem:[%s4] sm:$0x1]
      %v1103 = vlaneseq
      %v1104 = vshrl.u32 %v1103, 7
      %v1105 = vsub.s32 0, %v1104
      %v1106 = vrot.slane %v1101, %v1105
      %v1108 = vadd.f32 %v1099, %v1106
      %v1109 = vadd.f32 %v1100, %v1106
      %v1110 = vmax.f32 %v1108, 0.0
      %v1111 = vmax.f32 %v1109, 0.0
      %v1112 = vpack.c.bf16 %v1111, %v1110
      %v1113 = vld [vmem:[%s5] sm:$0xf]
      %v1114 = vld [vmem:[%s5 + $0x4] sm:$0xf]
      %v1115 = vld [vmem:[%s5 + $0x8] sm:$0xf]
      %v1116 = vld [vmem:[%s5 + $0xc] sm:$0xf]
      %v1117 = vld [vmem:[%s5 + $0x10] sm:$0xf]
      %v1118 = vld [vmem:[%s5 + $0x14] sm:$0xf]
      %v1119 = vld [vmem:[%s5 + $0x18] sm:$0xf]
      %v1120 = vld [vmem:[%s5 + $0x1c] sm:$0xf]
      %v1121 = vld [vmem:[%s5 + $0x20] sm:$0xf]
      %v1122 = vld [vmem:[%s5 + $0x24] sm:$0xf]
      %v1123 = vld [vmem:[%s5 + $0x28] sm:$0xf]
      %v1124 = vld [vmem:[%s5 + $0x2c] sm:$0xf]
      %v1125 = vld [vmem:[%s5 + $0x30] sm:$0xf]
      %v1126 = vld [vmem:[%s5 + $0x34] sm:$0xf]
      %v1127 = vld [vmem:[%s5 + $0x38] sm:$0xf]
      %v1128 = vld [vmem:[%s5 + $0x3c] sm:$0xf]
      %v1129 = vld [vmem:[%s6] sm:$0x1]
      %v1131 = vlaneseq
      %v1132 = vshrl.u32 %v1131, 7
      %v1133 = vsub.s32 0, %v1132
      %v1134 = vrot.slane %v1129, %v1133
      %v1152 = vunpack.c.l.b16 %v1113
      %v1153 = vunpack.c.l.b16 %v1114
      %v1154 = vunpack.c.l.b16 %v1115
      %v1155 = vunpack.c.l.b16 %v1116
      %v1156 = vunpack.c.l.b16 %v1117
      %v1157 = vunpack.c.l.b16 %v1118
      %v1158 = vunpack.c.l.b16 %v1119
      %v1159 = vunpack.c.l.b16 %v1120
      %v1160 = vunpack.c.l.b16 %v1121
      %v1161 = vunpack.c.l.b16 %v1122
      %v1162 = vunpack.c.l.b16 %v1123
      %v1163 = vunpack.c.l.b16 %v1124
      %v1164 = vunpack.c.l.b16 %v1125
      %v1165 = vunpack.c.l.b16 %v1126
      %v1166 = vunpack.c.l.b16 %v1127
      %v1167 = vunpack.c.l.b16 %v1128
      %v1168 = vpack.c.b16 %v1153, %v1152
      %v1169 = vpack.c.b16 %v1155, %v1154
      %v1170 = vpack.c.b16 %v1157, %v1156
      %v1171 = vpack.c.b16 %v1159, %v1158
      %v1172 = vpack.c.b16 %v1161, %v1160
      %v1173 = vpack.c.b16 %v1163, %v1162
      %v1174 = vpack.c.b16 %v1165, %v1164
      %v1175 = vpack.c.b16 %v1167, %v1166
      %1184 = vmatprep.subr.bf16.mxu0 0
      %1185 = vmatpush1.bf16.msra.mxu0 %v1168
      %1186 = vmatprep.subr.bf16.mxu0 0
      %1187 = vmatpush1.bf16.msra.mxu0 %v1169
      %1188 = vmatprep.subr.bf16.mxu0 0
      %1189 = vmatpush1.bf16.msra.mxu0 %v1170
      %1190 = vmatprep.subr.bf16.mxu0 0
      %1191 = vmatpush1.bf16.msra.mxu0 %v1171
      %1192 = vmatprep.subr.bf16.mxu0 0
      %1193 = vmatpush1.bf16.msra.mxu0 %v1172
      %1194 = vmatprep.subr.bf16.mxu0 0
      %1195 = vmatpush1.bf16.msra.mxu0 %v1173
      %1196 = vmatprep.subr.bf16.mxu0 0
      %1197 = vmatpush1.bf16.msra.mxu0 %v1174
      %1198 = vmatprep.subr.bf16.mxu0 0
      %1199 = vmatpush1.bf16.msra.mxu0 %v1175
      %1200 = vmatprep.subr.bf16.mxu0 0
      %1201 = vmatpush1.bf16.msra.mxu0 0
      %1202 = vmatprep.subr.bf16.mxu0 0
      %1203 = vmatpush1.bf16.msra.mxu0 0
      %1204 = vmatprep.subr.bf16.mxu0 0
      %1205 = vmatpush1.bf16.msra.mxu0 0
      %1206 = vmatprep.subr.bf16.mxu0 0
      %1207 = vmatpush1.bf16.msra.mxu0 0
      %1208 = vmatprep.subr.bf16.mxu0 0
      %1209 = vmatpush1.bf16.msra.mxu0 0
      %1210 = vmatprep.subr.bf16.mxu0 0
      %1211 = vmatpush1.bf16.msra.mxu0 0
      %1212 = vmatprep.subr.bf16.mxu0 0
      %1213 = vmatpush1.bf16.msra.mxu0 0
      %1214 = vmatprep.subr.bf16.mxu0 0
      %1215 = vmatpush1.bf16.msra.mxu0 0
      %1216 = vmatprep.mubr.bf16.mxu0 0
      %1217 = vmatmul.mubr.bf16.gmra.mrb[0].mxu0 %v1112
      %v1218 = vpop.f32.mrb[0].mxu0
      %v1219 = vadd.f32 %v1134, %v1218
      %v1220 = vpop.f32.mrb[0].mxu0
      %v1221 = vpop.f32.mrb[0].mxu0
      %v1222 = vadd.f32 %v1134, %v1221
      %v1223 = vpop.f32.mrb[0].mxu0
      %1224 = vdwg.mxu0
      %v1225 = vxor.u32 %v1219, 2147483648
      %v1226 = vxor.u32 %v1222, 2147483648
      %v1227 = vmul.f32 %v1225, 1.442695
      %v1228 = vpow.pop %v1227
      %v1229 = vmul.f32 %v1226, 1.442695
      %v1230 = vpow.pop %v1229
      %v1231 = vadd.f32 %v1228, 1.0
      %v1232 = vadd.f32 %v1230, 1.0
      %v1233 = vrcp.pop %v1231
      %v1234 = vmul.f32 1.0, %v1233
      %v1235 = vrcp.pop %v1232
      %v1236 = vmul.f32 1.0, %v1235
      %vm1237 = vcmask 261120
      %1238 = vst.msk [vmem:[%s298] sm:$0xff] %vm1237, %v1234
      %1239 = vst.msk [vmem:[%s298 + $0x8] sm:$0xff] %vm1237, %v1236
      %p1240 = scmp.lt.s32.totalorder %s18, 1
      %s1241 = scalar_select %p1240, %s18, 1
      %s1242 = smul.addr %s1241, 2
      %s1243 = smul.addr %s1242, 8
      %s1244 = scalar_lea.vmem %s7, %s1243
      // Predicated region
      $region49: #{unet_bin_forward.13} parent=47 // pred_check
        %p1245 = pneg %p193
      $region50: #{unet_bin_forward.13} parent=47 // pred_check_branch
        %1247 = sbr.rel (%p1245) target = $region52
      $region51: #{unet_bin_forward.13} parent=47 // pred_region
        _
      $region52: #{unet_bin_forward.13} parent=47 // pred_fallthru
        _
    $region48: #{unet_bin_forward.13} parent=5 // pred_fallthru
      _
    %p1248 = scmp.le.s32.totalorder 2, %s13
    // Predicated region
    $region53: #{unet_bin_forward.13} parent=5 // pred_check
      %p1249 = pneg %p1248
    $region54: #{unet_bin_forward.13} parent=5 // pred_check_branch
      %1251 = sbr.rel (%p1249) target = $region56
    $region55: #{unet_bin_forward.13} parent=5 // pred_region
      %s1252 = ssub.s32 %s13, 2
      // Predicated region
      $region57: #{unet_bin_forward.13} parent=55 // pred_check
        %p1253 = pneg %p199
      $region58: #{unet_bin_forward.13} parent=55 // pred_check_branch
        %1255 = sbr.rel (%p1253) target = $region60
      $region59: #{unet_bin_forward.13} parent=55 // pred_region
        %p1256 = scmp.lt.s32.totalorder %s19, 1
        %s1257 = scalar_select %p1256, %s19, 1
        %s1258 = smul.addr %s1257, 2
        %s1259 = smul.addr %s1258, 8
        %s1260 = scalar_lea.vmem %s7, %s1259
      $region60: #{unet_bin_forward.13} parent=55 // pred_fallthru
        _
    $region56: #{unet_bin_forward.13} parent=5 // pred_fallthru
      _
  $region6: #{unet_bin_forward.13} parent=0 // loop_footer
    %s17 = sadd.s32 1, %s13
  $region7: #{unet_bin_forward.13} parent=0 // loop_footer_branch
    %12 = sbr.rel target = $region3
  $region8: #{unet_bin_forward.13} parent=0 // loop_exit
    _

</llo_original>
